<compile_context>
chip_gen: v5e
topology: v5e:2x2
jax: 0.10.0
libtpu: 0.0.40
codegen_flags: <defaults>
</compile_context>

<pallas_src>
import functools

import jax
import jax.numpy as jnp
from jax.experimental import pallas as pl
from jax.experimental.pallas import tpu as pltpu

# reduced DCGAN generator sizes for a quick demo (structure identical to the
# original: 5 conv-transpose layers, spatial 1 -> 4 -> 8 -> 16 -> 32 -> 64)
NZ = 16       # latent dim      (nz  = 100 in the original)
NGF = 16      # base width      (ngf = 64  in the original)
NC = 3        # output channels (nc  = 3)
BN_EPS = 1e-5

LANE = 128      # TPU lane width
SUB = 8         # f32 sublane tile
TM_MAX = 2048   # max GEMM rows per block (raised: larger tiles amortize ~0.35us/step)


def _rup(x, m):
    return -(-x // m) * m


def _pad_to(x, shape):
    return jnp.pad(x, [(0, t - s) for s, t in zip(x.shape, shape)])


# ----------------------------- Pallas kernel --------------------------------
# Grouped GEMM: `gps` groups are processed per grid step (unrolled in the
# body), the whole (K, N) weight panel is VMEM-resident (no K reduction axis,
# no accumulator scratch), with optional fused BatchNorm partial statistics.

def _gemm_kernel(a_ref, b_ref, *out_refs, gps, with_stats):
    y_ref = out_refs[0]
    stat_blocks = []
    for g in range(gps):                                   # unrolled group loop
        acc = jnp.dot(a_ref[g], b_ref[g], preferred_element_type=jnp.float32)
        if with_stats:
            s = jnp.sum(acc, axis=0, keepdims=True)        # (1, N) column sums
            ss = jnp.sum(acc * acc, axis=0, keepdims=True)  # (1, N) column sumsq
            stat_blocks.append(jnp.concatenate([s, ss], axis=0))
        y_ref[g] = acc.astype(y_ref.dtype)
    if with_stats:
        # single full-block store: (gps, 2, N) -- no uninitialized sublanes.
        out_refs[1][...] = jnp.stack(stat_blocks, axis=0)


def grouped_gemm(a, b, *, with_stats=True, out_dtype=jnp.bfloat16):
    """a: (G, M, K), b: (G, K, N).

    Returns y (G, Mp, Np) in out_dtype and, if with_stats, stats
    (G, Mb, 2, Np) f32 where stats[..., 0, :] / stats[..., 1, :] hold per-block
    column sums / sums of squares of the f32 GEMM output (pre-cast).
    """
    g, m, k = a.shape
    gb, kb, n = b.shape
    assert gb == g and kb == k

    kp = _rup(k, LANE)
    np_ = _rup(n, LANE)
    mp = _rup(m, SUB)
    if mp > TM_MAX:
        mp = _rup(m, TM_MAX)
        tm = TM_MAX
    else:
        tm = mp
    mb = mp // tm

    # groups folded into each kernel step; keep a 2-wide "parallel" leading
    # grid axis when possible so v7x's 2 TensorCores both get work.
    gps = 2 if g % 2 == 0 else 1
    gsteps = g // gps

    # cast to bf16 *before* zero-padding so padded regions stay exactly zero
    a = _pad_to(a.astype(jnp.bfloat16), (g, mp, kp))
    b = _pad_to(b.astype(jnp.bfloat16), (g, kp, np_))

    out_shapes = (jax.ShapeDtypeStruct((g, mp, np_), out_dtype),)
    out_specs = (pl.BlockSpec((gps, tm, np_), lambda gi, mi: (gi, mi, 0)),)
    if with_stats:
        out_shapes += (jax.ShapeDtypeStruct((g, mb, 2, np_), jnp.float32),)
        out_specs += (pl.BlockSpec((gps, None, 2, np_),
                                   lambda gi, mi: (gi, mi, 0, 0)),)

    # per-step VMEM footprint (double-buffered inputs/outputs) + slack; keeps
    # headroom on v7x's 64 MiB physical VMEM while never under-provisioning
    # at demo size (a few MiB per layer).
    step_bytes = gps * (tm * kp * 2 + kp * np_ * 2
                        + tm * np_ * jnp.dtype(out_dtype).itemsize
                        + (2 * np_ * 4 if with_stats else 0))
    vmem_bytes = min(2 * step_bytes + (4 << 20), 48 << 20)

    outs = pl.pallas_call(
        functools.partial(_gemm_kernel, gps=gps, with_stats=with_stats),
        out_shape=out_shapes,
        grid_spec=pltpu.PrefetchScalarGridSpec(
            num_scalar_prefetch=0,
            grid=(gsteps, mb),
            in_specs=[
                pl.BlockSpec((gps, tm, kp), lambda gi, mi: (gi, mi, 0)),
                pl.BlockSpec((gps, kp, np_), lambda gi, mi: (gi, 0, 0)),
            ],
            out_specs=out_specs),
        compiler_params=pltpu.CompilerParams(
            dimension_semantics=("parallel", "parallel"),
            vmem_limit_bytes=vmem_bytes),
    )(a, b)

    if with_stats:
        y, stats = outs
    else:
        (y,) = outs
        stats = None
    return y, stats


# ------------------------------- JAX glue -----------------------------------

def _bn_from_sums(s, ss, count):
    """Training-mode BN (gamma=1, beta=0, biased variance) from fused sums."""
    mean = s / count
    var = jnp.maximum(ss / count - mean * mean, 0.0)
    inv_std = jax.lax.rsqrt(var + BN_EPS)
    return inv_std, -mean * inv_std          # scale, shift


def _normalize_relu(y_raw, scale, shift):
    # Applied while building the next layer's patch operands (fused by XLA).
    return jnp.maximum(y_raw.astype(jnp.float32) * scale + shift, 0.0)


def _convt1(z_flat, w):
    """ConvTranspose2d(nz, cout, 4, 1, 0) on a 1x1 input: a single GEMM with
    all 16 output pixels packed along N (lane-dense 16*cout panel)."""
    n, _ = z_flat.shape
    nz, cout = w.shape[0], w.shape[1]
    b = w.transpose(0, 2, 3, 1).reshape(1, nz, 16 * cout)    # [zc, (ky,kx,c)]
    y, stats = grouped_gemm(z_flat[None], b)
    y = y[0, :n, :16 * cout].reshape(n, 4, 4, cout)          # (N, ky, kx, cout), pre-BN
    s = jnp.sum(stats[:, :, 0, :16 * cout], axis=(0, 1)).reshape(16, cout).sum(0)
    ss = jnp.sum(stats[:, :, 1, :16 * cout], axis=(0, 1)).reshape(16, cout).sum(0)
    scale, shift = _bn_from_sums(s, ss, n * 16)
    return y, scale, shift


def _convt_s2(x_act, w, *, with_stats):
    """ConvTranspose2d(cin, cout, 4, 2, 1) via the 4-parity sub-pixel GEMMs.

    x_act: post-BN-ReLU input (N, H, W, Cin); w: (Cin, Cout, 4, 4) (torch layout).
    Output parity (ry, rx):  Y[2q+ry, 2p+rx] = sum_{a,b in {0,1}}
        Xpad[q+ry+a, p+rx+b] . W[:, :, 3-ry-2a, 3-rx-2b]
    """
    n, h, wd, cin = x_act.shape
    cout = w.shape[1]
    xp = jnp.pad(x_act.astype(jnp.bfloat16), ((0, 0), (1, 1), (1, 1), (0, 0)))

    # TODO(synk): build the 4 parity taps in-kernel from the padded activation
    # (the concatenated patch tensor below round-trips ~4x the activation bytes
    # through HBM); kept in XLA here for lowering simplicity.
    a_g, b_g = [], []
    for ry in (0, 1):
        for rx in (0, 1):
            taps, wsub = [], []
            for ta in (0, 1):
                for tb in (0, 1):
                    taps.append(xp[:, ry + ta:ry + ta + h, rx + tb:rx + tb + wd, :])
                    wsub.append(w[:, :, 3 - ry - 2 * ta, 3 - rx - 2 * tb])
            a_g.append(jnp.concatenate(taps, axis=-1).reshape(n * h * wd, 4 * cin))
            b_g.append(jnp.concatenate(wsub, axis=0))            # (4*cin, cout)
    a = jnp.stack(a_g)                                           # (4, M, 4*cin)
    b = jnp.stack(b_g)                                           # (4, 4*cin, cout)

    y, stats = grouped_gemm(a, b, with_stats=with_stats)
    m = n * h * wd
    y = y[:, :m, :cout].reshape(2, 2, n, h, wd, cout)            # (ry, rx, n, q, p, c)
    y = y.transpose(2, 3, 0, 4, 1, 5).reshape(n, 2 * h, 2 * wd, cout)
    return y, stats


def _convt_s2_bn(y_prev, scale, shift, w):
    x = _normalize_relu(y_prev, scale, shift)   # prev layer's BN+ReLU, fused into patch build
    y, stats = _convt_s2(x, w, with_stats=True)
    n, ho, wo, cout = y.shape
    s = jnp.sum(stats[:, :, 0, :cout], axis=(0, 1))
    ss = jnp.sum(stats[:, :, 1, :cout], axis=(0, 1))
    sc, sh = _bn_from_sums(s, ss, n * ho * wo)
    return y, sc, sh


def _convt_s2_tanh(y_prev, scale, shift, w):
    x = _normalize_relu(y_prev, scale, shift)
    y, _ = _convt_s2(x, w, with_stats=False)
    # tanh applied in XLA after the cout=3 slice (no padded EUP/f32 writeback)
    return jnp.tanh(y.astype(jnp.float32))


def generator_forward(z, params):
    n = z.shape[0]
    y, sc, sh = _convt1(z.reshape(n, -1), params["w1"])      # 1x1   -> 4x4
    for name in ("w2", "w3", "w4"):                          # 4->8->16->32
        y, sc, sh = _convt_s2_bn(y, sc, sh, params[name])
    img = _convt_s2_tanh(y, sc, sh, params["w5"])            # 32x32 -> 64x64, tanh
    return img.transpose(0, 3, 1, 2)                         # NCHW, f32


def init_params(key):
    ks = jax.random.split(key, 5)

    def w(k, cin, cout):
        return jax.random.normal(k, (cin, cout, 4, 4), jnp.float32) * 0.02

    return {"w1": w(ks[0], NZ, NGF * 8),
            "w2": w(ks[1], NGF * 8, NGF * 4),
            "w3": w(ks[2], NGF * 4, NGF * 2),
            "w4": w(ks[3], NGF * 2, NGF),
            "w5": w(ks[4], NGF, NC)}


if __name__ == "__main__":
    key = jax.random.PRNGKey(0)
    pkey, zkey = jax.random.split(key)
    params = init_params(pkey)

    batch = 2
    z = jax.random.normal(zkey, (batch, NZ, 1, 1), jnp.float32)  # (N, nz, 1, 1)

    fwd = jax.jit(generator_forward)
    out = jax.block_until_ready(fwd(z, params))

    assert out.shape == (batch, NC, 64, 64), out.shape
    assert bool(jnp.all(jnp.isfinite(out)))
    assert bool(jnp.max(jnp.abs(out)) <= 1.0 + 1e-6)   # tanh range
    print("KERNEL_OK")
</pallas_src>

<mosaic_0001>
module attributes {stable_mosaic.version = 11 : i64} {
  func.func @_gemm_kernel(%arg0: i32, %arg1: i32, %arg2: memref<1x8x128xbf16, #tpu.memory_space<vmem>>, %arg3: memref<1x128x2048xbf16, #tpu.memory_space<vmem>>, %arg4: memref<1x8x2048xbf16, #tpu.memory_space<vmem>>, %arg5: memref<1x1x2x2048xf32, #tpu.memory_space<vmem>>) attributes {dimension_semantics = [#tpu.dimension_semantics<parallel>, #tpu.dimension_semantics<parallel>], iteration_bounds = array<i64: 1, 1>, scalar_prefetch = 0 : i64, scratch_operands = 0 : i64, tpu.core_type = #tpu.core_type<tc>, window_params = [{transform_indices = @transform_0, window_bounds = array<i64: 1, 8, 128>}, {transform_indices = @transform_1, window_bounds = array<i64: 1, 128, 2048>}, {transform_indices = @transform_2, window_bounds = array<i64: 1, 8, 2048>}, {transform_indices = @transform_3, window_bounds = array<i64: 1, 1, 2, 2048>}]} {
    %c0 = arith.constant 0 : index
    %c0_0 = arith.constant 0 : index
    %c0_1 = arith.constant 0 : index
    %0 = vector.load %arg2[%c0, %c0_0, %c0_1] : memref<1x8x128xbf16, #tpu.memory_space<vmem>>, vector<1x8x128xbf16>
    %1 = vector.shape_cast %0 : vector<1x8x128xbf16> to vector<8x128xbf16>
    %c0_2 = arith.constant 0 : index
    %c0_3 = arith.constant 0 : index
    %c0_4 = arith.constant 0 : index
    %2 = vector.load %arg3[%c0_2, %c0_3, %c0_4] : memref<1x128x2048xbf16, #tpu.memory_space<vmem>>, vector<1x128x2048xbf16>
    %3 = vector.shape_cast %2 : vector<1x128x2048xbf16> to vector<128x2048xbf16>
    %cst = arith.constant dense<0.000000e+00> : vector<8x2048xf32>
    %4 = tpu.matmul %1, %3, %cst {dimension_numbers = #tpu.dot_dimension_numbers<[1], [0], [0], [1], [0, 0, 1, 1], [], []>} : vector<8x128xbf16>, vector<128x2048xbf16>, vector<8x2048xf32> -> vector<8x2048xf32>
    %cst_5 = arith.constant dense<0.000000e+00> : vector<2048xf32>
    %5 = vector.multi_reduction <add>, %4, %cst_5 [0] : vector<8x2048xf32> to vector<2048xf32>
    %6 = vector.shape_cast %5 : vector<2048xf32> to vector<1x2048xf32>
    %7 = arith.mulf %4, %4 : vector<8x2048xf32>
    %cst_6 = arith.constant dense<0.000000e+00> : vector<2048xf32>
    %8 = vector.multi_reduction <add>, %7, %cst_6 [0] : vector<8x2048xf32> to vector<2048xf32>
    %9 = vector.shape_cast %8 : vector<2048xf32> to vector<1x2048xf32>
    %10 = tpu.concatenate %6, %9 in 0 : vector<1x2048xf32>, vector<1x2048xf32> -> vector<2x2048xf32>
    %11 = arith.truncf %4 : vector<8x2048xf32> to vector<8x2048xbf16>
    %c0_7 = arith.constant 0 : index
    %c0_8 = arith.constant 0 : index
    %c0_9 = arith.constant 0 : index
    %12 = vector.load %arg4[%c0_7, %c0_8, %c0_9] : memref<1x8x2048xbf16, #tpu.memory_space<vmem>>, vector<1x8x2048xbf16>
    %13 = vector.shape_cast %12 : vector<1x8x2048xbf16> to vector<8x2048xbf16>
    %14 = vector.shape_cast %11 : vector<8x2048xbf16> to vector<1x8x2048xbf16>
    tpu.vector_store %arg4[%c0_7, %c0_8, %c0_9], %14 {strides = array<i32>} : memref<1x8x2048xbf16, #tpu.memory_space<vmem>>, vector<1x8x2048xbf16>,
    %15 = vector.shape_cast %10 : vector<2x2048xf32> to vector<1x2x2048xf32>
    %c0_10 = arith.constant 0 : index
    %c0_11 = arith.constant 0 : index
    %c0_12 = arith.constant 0 : index
    %c0_13 = arith.constant 0 : index
    %16 = vector.load %arg5[%c0_10, %c0_11, %c0_12, %c0_13] : memref<1x1x2x2048xf32, #tpu.memory_space<vmem>>, vector<1x1x2x2048xf32>
    %17 = vector.shape_cast %16 : vector<1x1x2x2048xf32> to vector<1x2x2048xf32>
    %18 = vector.shape_cast %15 : vector<1x2x2048xf32> to vector<1x1x2x2048xf32>
    tpu.vector_store %arg5[%c0_10, %c0_11, %c0_12, %c0_13], %18 {strides = array<i32>} : memref<1x1x2x2048xf32, #tpu.memory_space<vmem>>, vector<1x1x2x2048xf32>,
    return
  }
  func.func @transform_0(%arg0: i32, %arg1: i32) -> (i32, i32, i32) {
    %c0_i32 = arith.constant 0 : i32
    %c0_i32_0 = arith.constant 0 : i32
    return %arg0, %arg1, %c0_i32 : i32, i32, i32
  }
  func.func @transform_1(%arg0: i32, %arg1: i32) -> (i32, i32, i32) {
    %c0_i32 = arith.constant 0 : i32
    %c0_i32_0 = arith.constant 0 : i32
    %c0_i32_1 = arith.constant 0 : i32
    return %arg0, %c0_i32, %c0_i32_0 : i32, i32, i32
  }
  func.func @transform_2(%arg0: i32, %arg1: i32) -> (i32, i32, i32) {
    %c0_i32 = arith.constant 0 : i32
    %c0_i32_0 = arith.constant 0 : i32
    return %arg0, %arg1, %c0_i32 : i32, i32, i32
  }
  func.func @transform_3(%arg0: i32, %arg1: i32) -> (i32, i32, i32, i32) {
    %c0_i32 = arith.constant 0 : i32
    %c0_i32_0 = arith.constant 0 : i32
    %c0_i32_1 = arith.constant 0 : i32
    return %arg0, %arg1, %c0_i32, %c0_i32_0 : i32, i32, i32, i32
  }
}

module attributes {stable_mosaic.version = 11 : i64} {
  func.func @_gemm_kernel(%arg0: i32, %arg1: i32, %arg2: memref<2x32x512xbf16, #tpu.memory_space<vmem>>, %arg3: memref<2x512x128xbf16, #tpu.memory_space<vmem>>, %arg4: memref<2x32x128xbf16, #tpu.memory_space<vmem>>, %arg5: memref<2x1x2x128xf32, #tpu.memory_space<vmem>>) attributes {dimension_semantics = [#tpu.dimension_semantics<parallel>, #tpu.dimension_semantics<parallel>], iteration_bounds = array<i64: 2, 1>, scalar_prefetch = 0 : i64, scratch_operands = 0 : i64, tpu.core_type = #tpu.core_type<tc>, window_params = [{transform_indices = @transform_0, window_bounds = array<i64: 2, 32, 512>}, {transform_indices = @transform_1, window_bounds = array<i64: 2, 512, 128>}, {transform_indices = @transform_2, window_bounds = array<i64: 2, 32, 128>}, {transform_indices = @transform_3, window_bounds = array<i64: 2, 1, 2, 128>}]} {
    %c0 = arith.constant 0 : index
    %c0_0 = arith.constant 0 : index
    %c0_1 = arith.constant 0 : index
    %0 = vector.load %arg2[%c0, %c0_0, %c0_1] : memref<2x32x512xbf16, #tpu.memory_space<vmem>>, vector<1x32x512xbf16>
    %1 = vector.shape_cast %0 : vector<1x32x512xbf16> to vector<32x512xbf16>
    %c0_2 = arith.constant 0 : index
    %c0_3 = arith.constant 0 : index
    %c0_4 = arith.constant 0 : index
    %2 = vector.load %arg3[%c0_2, %c0_3, %c0_4] : memref<2x512x128xbf16, #tpu.memory_space<vmem>>, vector<1x512x128xbf16>
    %3 = vector.shape_cast %2 : vector<1x512x128xbf16> to vector<512x128xbf16>
    %cst = arith.constant dense<0.000000e+00> : vector<32x128xf32>
    %4 = tpu.matmul %1, %3, %cst {dimension_numbers = #tpu.dot_dimension_numbers<[1], [0], [0], [1], [0, 0, 1, 1], [], []>} : vector<32x512xbf16>, vector<512x128xbf16>, vector<32x128xf32> -> vector<32x128xf32>
    %cst_5 = arith.constant dense<0.000000e+00> : vector<128xf32>
    %5 = vector.multi_reduction <add>, %4, %cst_5 [0] : vector<32x128xf32> to vector<128xf32>
    %6 = vector.shape_cast %5 : vector<128xf32> to vector<1x128xf32>
    %7 = arith.mulf %4, %4 : vector<32x128xf32>
    %cst_6 = arith.constant dense<0.000000e+00> : vector<128xf32>
    %8 = vector.multi_reduction <add>, %7, %cst_6 [0] : vector<32x128xf32> to vector<128xf32>
    %9 = vector.shape_cast %8 : vector<128xf32> to vector<1x128xf32>
    %10 = tpu.concatenate %6, %9 in 0 : vector<1x128xf32>, vector<1x128xf32> -> vector<2x128xf32>
    %11 = arith.truncf %4 : vector<32x128xf32> to vector<32x128xbf16>
    %c0_7 = arith.constant 0 : index
    %c0_8 = arith.constant 0 : index
    %c0_9 = arith.constant 0 : index
    %12 = vector.load %arg4[%c0_7, %c0_8, %c0_9] : memref<2x32x128xbf16, #tpu.memory_space<vmem>>, vector<1x32x128xbf16>
    %13 = vector.shape_cast %12 : vector<1x32x128xbf16> to vector<32x128xbf16>
    %14 = vector.shape_cast %11 : vector<32x128xbf16> to vector<1x32x128xbf16>
    tpu.vector_store %arg4[%c0_7, %c0_8, %c0_9], %14 {strides = array<i32>} : memref<2x32x128xbf16, #tpu.memory_space<vmem>>, vector<1x32x128xbf16>,
    %c1 = arith.constant 1 : index
    %c0_10 = arith.constant 0 : index
    %c0_11 = arith.constant 0 : index
    %15 = vector.load %arg2[%c1, %c0_10, %c0_11] : memref<2x32x512xbf16, #tpu.memory_space<vmem>>, vector<1x32x512xbf16>
    %16 = vector.shape_cast %15 : vector<1x32x512xbf16> to vector<32x512xbf16>
    %c1_12 = arith.constant 1 : index
    %c0_13 = arith.constant 0 : index
    %c0_14 = arith.constant 0 : index
    %17 = vector.load %arg3[%c1_12, %c0_13, %c0_14] : memref<2x512x128xbf16, #tpu.memory_space<vmem>>, vector<1x512x128xbf16>
    %18 = vector.shape_cast %17 : vector<1x512x128xbf16> to vector<512x128xbf16>
    %cst_15 = arith.constant dense<0.000000e+00> : vector<32x128xf32>
    %19 = tpu.matmul %16, %18, %cst_15 {dimension_numbers = #tpu.dot_dimension_numbers<[1], [0], [0], [1], [0, 0, 1, 1], [], []>} : vector<32x512xbf16>, vector<512x128xbf16>, vector<32x128xf32> -> vector<32x128xf32>
    %cst_16 = arith.constant dense<0.000000e+00> : vector<128xf32>
    %20 = vector.multi_reduction <add>, %19, %cst_16 [0] : vector<32x128xf32> to vector<128xf32>
    %21 = vector.shape_cast %20 : vector<128xf32> to vector<1x128xf32>
    %22 = arith.mulf %19, %19 : vector<32x128xf32>
    %cst_17 = arith.constant dense<0.000000e+00> : vector<128xf32>
    %23 = vector.multi_reduction <add>, %22, %cst_17 [0] : vector<32x128xf32> to vector<128xf32>
    %24 = vector.shape_cast %23 : vector<128xf32> to vector<1x128xf32>
    %25 = tpu.concatenate %21, %24 in 0 : vector<1x128xf32>, vector<1x128xf32> -> vector<2x128xf32>
    %26 = arith.truncf %19 : vector<32x128xf32> to vector<32x128xbf16>
    %c1_18 = arith.constant 1 : index
    %c0_19 = arith.constant 0 : index
    %c0_20 = arith.constant 0 : index
    %27 = vector.load %arg4[%c1_18, %c0_19, %c0_20] : memref<2x32x128xbf16, #tpu.memory_space<vmem>>, vector<1x32x128xbf16>
    %28 = vector.shape_cast %27 : vector<1x32x128xbf16> to vector<32x128xbf16>
    %29 = vector.shape_cast %26 : vector<32x128xbf16> to vector<1x32x128xbf16>
    tpu.vector_store %arg4[%c1_18, %c0_19, %c0_20], %29 {strides = array<i32>} : memref<2x32x128xbf16, #tpu.memory_space<vmem>>, vector<1x32x128xbf16>,
    %30 = vector.shape_cast %10 : vector<2x128xf32> to vector<1x2x128xf32>
    %31 = vector.shape_cast %25 : vector<2x128xf32> to vector<1x2x128xf32>
    %32 = tpu.concatenate %30, %31 in 0 : vector<1x2x128xf32>, vector<1x2x128xf32> -> vector<2x2x128xf32>
    %c0_21 = arith.constant 0 : index
    %c0_22 = arith.constant 0 : index
    %c0_23 = arith.constant 0 : index
    %c0_24 = arith.constant 0 : index
    %33 = vector.load %arg5[%c0_21, %c0_22, %c0_23, %c0_24] : memref<2x1x2x128xf32, #tpu.memory_space<vmem>>, vector<2x1x2x128xf32>
    %34 = vector.shape_cast %33 : vector<2x1x2x128xf32> to vector<2x2x128xf32>
    %35 = vector.shape_cast %32 : vector<2x2x128xf32> to vector<2x1x2x128xf32>
    tpu.vector_store %arg5[%c0_21, %c0_22, %c0_23, %c0_24], %35 {strides = array<i32>} : memref<2x1x2x128xf32, #tpu.memory_space<vmem>>, vector<2x1x2x128xf32>,
    return
  }
  func.func @transform_0(%arg0: i32, %arg1: i32) -> (i32, i32, i32) {
    %c0_i32 = arith.constant 0 : i32
    %c0_i32_0 = arith.constant 0 : i32
    return %arg0, %arg1, %c0_i32 : i32, i32, i32
  }
  func.func @transform_1(%arg0: i32, %arg1: i32) -> (i32, i32, i32) {
    %c0_i32 = arith.constant 0 : i32
    %c0_i32_0 = arith.constant 0 : i32
    %c0_i32_1 = arith.constant 0 : i32
    return %arg0, %c0_i32, %c0_i32_0 : i32, i32, i32
  }
  func.func @transform_2(%arg0: i32, %arg1: i32) -> (i32, i32, i32) {
    %c0_i32 = arith.constant 0 : i32
    %c0_i32_0 = arith.constant 0 : i32
    return %arg0, %arg1, %c0_i32 : i32, i32, i32
  }
  func.func @transform_3(%arg0: i32, %arg1: i32) -> (i32, i32, i32, i32) {
    %c0_i32 = arith.constant 0 : i32
    %c0_i32_0 = arith.constant 0 : i32
    %c0_i32_1 = arith.constant 0 : i32
    return %arg0, %arg1, %c0_i32, %c0_i32_0 : i32, i32, i32, i32
  }
}

module attributes {stable_mosaic.version = 11 : i64} {
  func.func @_gemm_kernel(%arg0: i32, %arg1: i32, %arg2: memref<2x128x256xbf16, #tpu.memory_space<vmem>>, %arg3: memref<2x256x128xbf16, #tpu.memory_space<vmem>>, %arg4: memref<2x128x128xbf16, #tpu.memory_space<vmem>>, %arg5: memref<2x1x2x128xf32, #tpu.memory_space<vmem>>) attributes {dimension_semantics = [#tpu.dimension_semantics<parallel>, #tpu.dimension_semantics<parallel>], iteration_bounds = array<i64: 2, 1>, scalar_prefetch = 0 : i64, scratch_operands = 0 : i64, tpu.core_type = #tpu.core_type<tc>, window_params = [{transform_indices = @transform_0, window_bounds = array<i64: 2, 128, 256>}, {transform_indices = @transform_1, window_bounds = array<i64: 2, 256, 128>}, {transform_indices = @transform_2, window_bounds = array<i64: 2, 128, 128>}, {transform_indices = @transform_3, window_bounds = array<i64: 2, 1, 2, 128>}]} {
    %c0 = arith.constant 0 : index
    %c0_0 = arith.constant 0 : index
    %c0_1 = arith.constant 0 : index
    %0 = vector.load %arg2[%c0, %c0_0, %c0_1] : memref<2x128x256xbf16, #tpu.memory_space<vmem>>, vector<1x128x256xbf16>
    %1 = vector.shape_cast %0 : vector<1x128x256xbf16> to vector<128x256xbf16>
    %c0_2 = arith.constant 0 : index
    %c0_3 = arith.constant 0 : index
    %c0_4 = arith.constant 0 : index
    %2 = vector.load %arg3[%c0_2, %c0_3, %c0_4] : memref<2x256x128xbf16, #tpu.memory_space<vmem>>, vector<1x256x128xbf16>
    %3 = vector.shape_cast %2 : vector<1x256x128xbf16> to vector<256x128xbf16>
    %cst = arith.constant dense<0.000000e+00> : vector<128x128xf32>
    %4 = tpu.matmul %1, %3, %cst {dimension_numbers = #tpu.dot_dimension_numbers<[1], [0], [0], [1], [0, 0, 1, 1], [], []>} : vector<128x256xbf16>, vector<256x128xbf16>, vector<128x128xf32> -> vector<128x128xf32>
    %cst_5 = arith.constant dense<0.000000e+00> : vector<128xf32>
    %5 = vector.multi_reduction <add>, %4, %cst_5 [0] : vector<128x128xf32> to vector<128xf32>
    %6 = vector.shape_cast %5 : vector<128xf32> to vector<1x128xf32>
    %7 = arith.mulf %4, %4 : vector<128x128xf32>
    %cst_6 = arith.constant dense<0.000000e+00> : vector<128xf32>
    %8 = vector.multi_reduction <add>, %7, %cst_6 [0] : vector<128x128xf32> to vector<128xf32>
    %9 = vector.shape_cast %8 : vector<128xf32> to vector<1x128xf32>
    %10 = tpu.concatenate %6, %9 in 0 : vector<1x128xf32>, vector<1x128xf32> -> vector<2x128xf32>
    %11 = arith.truncf %4 : vector<128x128xf32> to vector<128x128xbf16>
    %c0_7 = arith.constant 0 : index
    %c0_8 = arith.constant 0 : index
    %c0_9 = arith.constant 0 : index
    %12 = vector.load %arg4[%c0_7, %c0_8, %c0_9] : memref<2x128x128xbf16, #tpu.memory_space<vmem>>, vector<1x128x128xbf16>
    %13 = vector.shape_cast %12 : vector<1x128x128xbf16> to vector<128x128xbf16>
    %14 = vector.shape_cast %11 : vector<128x128xbf16> to vector<1x128x128xbf16>
    tpu.vector_store %arg4[%c0_7, %c0_8, %c0_9], %14 {strides = array<i32>} : memref<2x128x128xbf16, #tpu.memory_space<vmem>>, vector<1x128x128xbf16>,
    %c1 = arith.constant 1 : index
    %c0_10 = arith.constant 0 : index
    %c0_11 = arith.constant 0 : index
    %15 = vector.load %arg2[%c1, %c0_10, %c0_11] : memref<2x128x256xbf16, #tpu.memory_space<vmem>>, vector<1x128x256xbf16>
    %16 = vector.shape_cast %15 : vector<1x128x256xbf16> to vector<128x256xbf16>
    %c1_12 = arith.constant 1 : index
    %c0_13 = arith.constant 0 : index
    %c0_14 = arith.constant 0 : index
    %17 = vector.load %arg3[%c1_12, %c0_13, %c0_14] : memref<2x256x128xbf16, #tpu.memory_space<vmem>>, vector<1x256x128xbf16>
    %18 = vector.shape_cast %17 : vector<1x256x128xbf16> to vector<256x128xbf16>
    %cst_15 = arith.constant dense<0.000000e+00> : vector<128x128xf32>
    %19 = tpu.matmul %16, %18, %cst_15 {dimension_numbers = #tpu.dot_dimension_numbers<[1], [0], [0], [1], [0, 0, 1, 1], [], []>} : vector<128x256xbf16>, vector<256x128xbf16>, vector<128x128xf32> -> vector<128x128xf32>
    %cst_16 = arith.constant dense<0.000000e+00> : vector<128xf32>
    %20 = vector.multi_reduction <add>, %19, %cst_16 [0] : vector<128x128xf32> to vector<128xf32>
    %21 = vector.shape_cast %20 : vector<128xf32> to vector<1x128xf32>
    %22 = arith.mulf %19, %19 : vector<128x128xf32>
    %cst_17 = arith.constant dense<0.000000e+00> : vector<128xf32>
    %23 = vector.multi_reduction <add>, %22, %cst_17 [0] : vector<128x128xf32> to vector<128xf32>
    %24 = vector.shape_cast %23 : vector<128xf32> to vector<1x128xf32>
    %25 = tpu.concatenate %21, %24 in 0 : vector<1x128xf32>, vector<1x128xf32> -> vector<2x128xf32>
    %26 = arith.truncf %19 : vector<128x128xf32> to vector<128x128xbf16>
    %c1_18 = arith.constant 1 : index
    %c0_19 = arith.constant 0 : index
    %c0_20 = arith.constant 0 : index
    %27 = vector.load %arg4[%c1_18, %c0_19, %c0_20] : memref<2x128x128xbf16, #tpu.memory_space<vmem>>, vector<1x128x128xbf16>
    %28 = vector.shape_cast %27 : vector<1x128x128xbf16> to vector<128x128xbf16>
    %29 = vector.shape_cast %26 : vector<128x128xbf16> to vector<1x128x128xbf16>
    tpu.vector_store %arg4[%c1_18, %c0_19, %c0_20], %29 {strides = array<i32>} : memref<2x128x128xbf16, #tpu.memory_space<vmem>>, vector<1x128x128xbf16>,
    %30 = vector.shape_cast %10 : vector<2x128xf32> to vector<1x2x128xf32>
    %31 = vector.shape_cast %25 : vector<2x128xf32> to vector<1x2x128xf32>
    %32 = tpu.concatenate %30, %31 in 0 : vector<1x2x128xf32>, vector<1x2x128xf32> -> vector<2x2x128xf32>
    %c0_21 = arith.constant 0 : index
    %c0_22 = arith.constant 0 : index
    %c0_23 = arith.constant 0 : index
    %c0_24 = arith.constant 0 : index
    %33 = vector.load %arg5[%c0_21, %c0_22, %c0_23, %c0_24] : memref<2x1x2x128xf32, #tpu.memory_space<vmem>>, vector<2x1x2x128xf32>
    %34 = vector.shape_cast %33 : vector<2x1x2x128xf32> to vector<2x2x128xf32>
    %35 = vector.shape_cast %32 : vector<2x2x128xf32> to vector<2x1x2x128xf32>
    tpu.vector_store %arg5[%c0_21, %c0_22, %c0_23, %c0_24], %35 {strides = array<i32>} : memref<2x1x2x128xf32, #tpu.memory_space<vmem>>, vector<2x1x2x128xf32>,
    return
  }
  func.func @transform_0(%arg0: i32, %arg1: i32) -> (i32, i32, i32) {
    %c0_i32 = arith.constant 0 : i32
    %c0_i32_0 = arith.constant 0 : i32
    return %arg0, %arg1, %c0_i32 : i32, i32, i32
  }
  func.func @transform_1(%arg0: i32, %arg1: i32) -> (i32, i32, i32) {
    %c0_i32 = arith.constant 0 : i32
    %c0_i32_0 = arith.constant 0 : i32
    %c0_i32_1 = arith.constant 0 : i32
    return %arg0, %c0_i32, %c0_i32_0 : i32, i32, i32
  }
  func.func @transform_2(%arg0: i32, %arg1: i32) -> (i32, i32, i32) {
    %c0_i32 = arith.constant 0 : i32
    %c0_i32_0 = arith.constant 0 : i32
    return %arg0, %arg1, %c0_i32 : i32, i32, i32
  }
  func.func @transform_3(%arg0: i32, %arg1: i32) -> (i32, i32, i32, i32) {
    %c0_i32 = arith.constant 0 : i32
    %c0_i32_0 = arith.constant 0 : i32
    %c0_i32_1 = arith.constant 0 : i32
    return %arg0, %arg1, %c0_i32, %c0_i32_0 : i32, i32, i32, i32
  }
}

module attributes {stable_mosaic.version = 11 : i64} {
  func.func @_gemm_kernel(%arg0: i32, %arg1: i32, %arg2: memref<2x512x128xbf16, #tpu.memory_space<vmem>>, %arg3: memref<2x128x128xbf16, #tpu.memory_space<vmem>>, %arg4: memref<2x512x128xbf16, #tpu.memory_space<vmem>>, %arg5: memref<2x1x2x128xf32, #tpu.memory_space<vmem>>) attributes {dimension_semantics = [#tpu.dimension_semantics<parallel>, #tpu.dimension_semantics<parallel>], iteration_bounds = array<i64: 2, 1>, scalar_prefetch = 0 : i64, scratch_operands = 0 : i64, tpu.core_type = #tpu.core_type<tc>, window_params = [{transform_indices = @transform_0, window_bounds = array<i64: 2, 512, 128>}, {transform_indices = @transform_1, window_bounds = array<i64: 2, 128, 128>}, {transform_indices = @transform_2, window_bounds = array<i64: 2, 512, 128>}, {transform_indices = @transform_3, window_bounds = array<i64: 2, 1, 2, 128>}]} {
    %c0 = arith.constant 0 : index
    %c0_0 = arith.constant 0 : index
    %c0_1 = arith.constant 0 : index
    %0 = vector.load %arg2[%c0, %c0_0, %c0_1] : memref<2x512x128xbf16, #tpu.memory_space<vmem>>, vector<1x512x128xbf16>
    %1 = vector.shape_cast %0 : vector<1x512x128xbf16> to vector<512x128xbf16>
    %c0_2 = arith.constant 0 : index
    %c0_3 = arith.constant 0 : index
    %c0_4 = arith.constant 0 : index
    %2 = vector.load %arg3[%c0_2, %c0_3, %c0_4] : memref<2x128x128xbf16, #tpu.memory_space<vmem>>, vector<1x128x128xbf16>
    %3 = vector.shape_cast %2 : vector<1x128x128xbf16> to vector<128x128xbf16>
    %cst = arith.constant dense<0.000000e+00> : vector<512x128xf32>
    %4 = tpu.matmul %1, %3, %cst {dimension_numbers = #tpu.dot_dimension_numbers<[1], [0], [0], [1], [0, 0, 1, 1], [], []>} : vector<512x128xbf16>, vector<128x128xbf16>, vector<512x128xf32> -> vector<512x128xf32>
    %cst_5 = arith.constant dense<0.000000e+00> : vector<128xf32>
    %5 = vector.multi_reduction <add>, %4, %cst_5 [0] : vector<512x128xf32> to vector<128xf32>
    %6 = vector.shape_cast %5 : vector<128xf32> to vector<1x128xf32>
    %7 = arith.mulf %4, %4 : vector<512x128xf32>
    %cst_6 = arith.constant dense<0.000000e+00> : vector<128xf32>
    %8 = vector.multi_reduction <add>, %7, %cst_6 [0] : vector<512x128xf32> to vector<128xf32>
    %9 = vector.shape_cast %8 : vector<128xf32> to vector<1x128xf32>
    %10 = tpu.concatenate %6, %9 in 0 : vector<1x128xf32>, vector<1x128xf32> -> vector<2x128xf32>
    %11 = arith.truncf %4 : vector<512x128xf32> to vector<512x128xbf16>
    %c0_7 = arith.constant 0 : index
    %c0_8 = arith.constant 0 : index
    %c0_9 = arith.constant 0 : index
    %12 = vector.load %arg4[%c0_7, %c0_8, %c0_9] : memref<2x512x128xbf16, #tpu.memory_space<vmem>>, vector<1x512x128xbf16>
    %13 = vector.shape_cast %12 : vector<1x512x128xbf16> to vector<512x128xbf16>
    %14 = vector.shape_cast %11 : vector<512x128xbf16> to vector<1x512x128xbf16>
    tpu.vector_store %arg4[%c0_7, %c0_8, %c0_9], %14 {strides = array<i32>} : memref<2x512x128xbf16, #tpu.memory_space<vmem>>, vector<1x512x128xbf16>,
    %c1 = arith.constant 1 : index
    %c0_10 = arith.constant 0 : index
    %c0_11 = arith.constant 0 : index
    %15 = vector.load %arg2[%c1, %c0_10, %c0_11] : memref<2x512x128xbf16, #tpu.memory_space<vmem>>, vector<1x512x128xbf16>
    %16 = vector.shape_cast %15 : vector<1x512x128xbf16> to vector<512x128xbf16>
    %c1_12 = arith.constant 1 : index
    %c0_13 = arith.constant 0 : index
    %c0_14 = arith.constant 0 : index
    %17 = vector.load %arg3[%c1_12, %c0_13, %c0_14] : memref<2x128x128xbf16, #tpu.memory_space<vmem>>, vector<1x128x128xbf16>
    %18 = vector.shape_cast %17 : vector<1x128x128xbf16> to vector<128x128xbf16>
    %cst_15 = arith.constant dense<0.000000e+00> : vector<512x128xf32>
    %19 = tpu.matmul %16, %18, %cst_15 {dimension_numbers = #tpu.dot_dimension_numbers<[1], [0], [0], [1], [0, 0, 1, 1], [], []>} : vector<512x128xbf16>, vector<128x128xbf16>, vector<512x128xf32> -> vector<512x128xf32>
    %cst_16 = arith.constant dense<0.000000e+00> : vector<128xf32>
    %20 = vector.multi_reduction <add>, %19, %cst_16 [0] : vector<512x128xf32> to vector<128xf32>
    %21 = vector.shape_cast %20 : vector<128xf32> to vector<1x128xf32>
    %22 = arith.mulf %19, %19 : vector<512x128xf32>
    %cst_17 = arith.constant dense<0.000000e+00> : vector<128xf32>
    %23 = vector.multi_reduction <add>, %22, %cst_17 [0] : vector<512x128xf32> to vector<128xf32>
    %24 = vector.shape_cast %23 : vector<128xf32> to vector<1x128xf32>
    %25 = tpu.concatenate %21, %24 in 0 : vector<1x128xf32>, vector<1x128xf32> -> vector<2x128xf32>
    %26 = arith.truncf %19 : vector<512x128xf32> to vector<512x128xbf16>
    %c1_18 = arith.constant 1 : index
    %c0_19 = arith.constant 0 : index
    %c0_20 = arith.constant 0 : index
    %27 = vector.load %arg4[%c1_18, %c0_19, %c0_20] : memref<2x512x128xbf16, #tpu.memory_space<vmem>>, vector<1x512x128xbf16>
    %28 = vector.shape_cast %27 : vector<1x512x128xbf16> to vector<512x128xbf16>
    %29 = vector.shape_cast %26 : vector<512x128xbf16> to vector<1x512x128xbf16>
    tpu.vector_store %arg4[%c1_18, %c0_19, %c0_20], %29 {strides = array<i32>} : memref<2x512x128xbf16, #tpu.memory_space<vmem>>, vector<1x512x128xbf16>,
    %30 = vector.shape_cast %10 : vector<2x128xf32> to vector<1x2x128xf32>
    %31 = vector.shape_cast %25 : vector<2x128xf32> to vector<1x2x128xf32>
    %32 = tpu.concatenate %30, %31 in 0 : vector<1x2x128xf32>, vector<1x2x128xf32> -> vector<2x2x128xf32>
    %c0_21 = arith.constant 0 : index
    %c0_22 = arith.constant 0 : index
    %c0_23 = arith.constant 0 : index
    %c0_24 = arith.constant 0 : index
    %33 = vector.load %arg5[%c0_21, %c0_22, %c0_23, %c0_24] : memref<2x1x2x128xf32, #tpu.memory_space<vmem>>, vector<2x1x2x128xf32>
    %34 = vector.shape_cast %33 : vector<2x1x2x128xf32> to vector<2x2x128xf32>
    %35 = vector.shape_cast %32 : vector<2x2x128xf32> to vector<2x1x2x128xf32>
    tpu.vector_store %arg5[%c0_21, %c0_22, %c0_23, %c0_24], %35 {strides = array<i32>} : memref<2x1x2x128xf32, #tpu.memory_space<vmem>>, vector<2x1x2x128xf32>,
    return
  }
  func.func @transform_0(%arg0: i32, %arg1: i32) -> (i32, i32, i32) {
    %c0_i32 = arith.constant 0 : i32
    %c0_i32_0 = arith.constant 0 : i32
    return %arg0, %arg1, %c0_i32 : i32, i32, i32
  }
  func.func @transform_1(%arg0: i32, %arg1: i32) -> (i32, i32, i32) {
    %c0_i32 = arith.constant 0 : i32
    %c0_i32_0 = arith.constant 0 : i32
    %c0_i32_1 = arith.constant 0 : i32
    return %arg0, %c0_i32, %c0_i32_0 : i32, i32, i32
  }
  func.func @transform_2(%arg0: i32, %arg1: i32) -> (i32, i32, i32) {
    %c0_i32 = arith.constant 0 : i32
    %c0_i32_0 = arith.constant 0 : i32
    return %arg0, %arg1, %c0_i32 : i32, i32, i32
  }
  func.func @transform_3(%arg0: i32, %arg1: i32) -> (i32, i32, i32, i32) {
    %c0_i32 = arith.constant 0 : i32
    %c0_i32_0 = arith.constant 0 : i32
    %c0_i32_1 = arith.constant 0 : i32
    return %arg0, %arg1, %c0_i32, %c0_i32_0 : i32, i32, i32, i32
  }
}

module attributes {stable_mosaic.version = 11 : i64} {
  func.func @_gemm_kernel(%arg0: i32, %arg1: i32, %arg2: memref<2x2048x128xbf16, #tpu.memory_space<vmem>>, %arg3: memref<2x128x128xbf16, #tpu.memory_space<vmem>>, %arg4: memref<2x2048x128xbf16, #tpu.memory_space<vmem>>) attributes {dimension_semantics = [#tpu.dimension_semantics<parallel>, #tpu.dimension_semantics<parallel>], iteration_bounds = array<i64: 2, 1>, scalar_prefetch = 0 : i64, scratch_operands = 0 : i64, tpu.core_type = #tpu.core_type<tc>, window_params = [{transform_indices = @transform_0, window_bounds = array<i64: 2, 2048, 128>}, {transform_indices = @transform_1, window_bounds = array<i64: 2, 128, 128>}, {transform_indices = @transform_2, window_bounds = array<i64: 2, 2048, 128>}]} {
    %c0 = arith.constant 0 : index
    %c0_0 = arith.constant 0 : index
    %c0_1 = arith.constant 0 : index
    %0 = vector.load %arg2[%c0, %c0_0, %c0_1] : memref<2x2048x128xbf16, #tpu.memory_space<vmem>>, vector<1x2048x128xbf16>
    %1 = vector.shape_cast %0 : vector<1x2048x128xbf16> to vector<2048x128xbf16>
    %c0_2 = arith.constant 0 : index
    %c0_3 = arith.constant 0 : index
    %c0_4 = arith.constant 0 : index
    %2 = vector.load %arg3[%c0_2, %c0_3, %c0_4] : memref<2x128x128xbf16, #tpu.memory_space<vmem>>, vector<1x128x128xbf16>
    %3 = vector.shape_cast %2 : vector<1x128x128xbf16> to vector<128x128xbf16>
    %cst = arith.constant dense<0.000000e+00> : vector<2048x128xf32>
    %4 = tpu.matmul %1, %3, %cst {dimension_numbers = #tpu.dot_dimension_numbers<[1], [0], [0], [1], [0, 0, 1, 1], [], []>} : vector<2048x128xbf16>, vector<128x128xbf16>, vector<2048x128xf32> -> vector<2048x128xf32>
    %5 = arith.truncf %4 : vector<2048x128xf32> to vector<2048x128xbf16>
    %c0_5 = arith.constant 0 : index
    %c0_6 = arith.constant 0 : index
    %c0_7 = arith.constant 0 : index
    %6 = vector.load %arg4[%c0_5, %c0_6, %c0_7] : memref<2x2048x128xbf16, #tpu.memory_space<vmem>>, vector<1x2048x128xbf16>
    %7 = vector.shape_cast %6 : vector<1x2048x128xbf16> to vector<2048x128xbf16>
    %8 = vector.shape_cast %5 : vector<2048x128xbf16> to vector<1x2048x128xbf16>
    tpu.vector_store %arg4[%c0_5, %c0_6, %c0_7], %8 {strides = array<i32>} : memref<2x2048x128xbf16, #tpu.memory_space<vmem>>, vector<1x2048x128xbf16>,
    %c1 = arith.constant 1 : index
    %c0_8 = arith.constant 0 : index
    %c0_9 = arith.constant 0 : index
    %9 = vector.load %arg2[%c1, %c0_8, %c0_9] : memref<2x2048x128xbf16, #tpu.memory_space<vmem>>, vector<1x2048x128xbf16>
    %10 = vector.shape_cast %9 : vector<1x2048x128xbf16> to vector<2048x128xbf16>
    %c1_10 = arith.constant 1 : index
    %c0_11 = arith.constant 0 : index
    %c0_12 = arith.constant 0 : index
    %11 = vector.load %arg3[%c1_10, %c0_11, %c0_12] : memref<2x128x128xbf16, #tpu.memory_space<vmem>>, vector<1x128x128xbf16>
    %12 = vector.shape_cast %11 : vector<1x128x128xbf16> to vector<128x128xbf16>
    %cst_13 = arith.constant dense<0.000000e+00> : vector<2048x128xf32>
    %13 = tpu.matmul %10, %12, %cst_13 {dimension_numbers = #tpu.dot_dimension_numbers<[1], [0], [0], [1], [0, 0, 1, 1], [], []>} : vector<2048x128xbf16>, vector<128x128xbf16>, vector<2048x128xf32> -> vector<2048x128xf32>
    %14 = arith.truncf %13 : vector<2048x128xf32> to vector<2048x128xbf16>
    %c1_14 = arith.constant 1 : index
    %c0_15 = arith.constant 0 : index
    %c0_16 = arith.constant 0 : index
    %15 = vector.load %arg4[%c1_14, %c0_15, %c0_16] : memref<2x2048x128xbf16, #tpu.memory_space<vmem>>, vector<1x2048x128xbf16>
    %16 = vector.shape_cast %15 : vector<1x2048x128xbf16> to vector<2048x128xbf16>
    %17 = vector.shape_cast %14 : vector<2048x128xbf16> to vector<1x2048x128xbf16>
    tpu.vector_store %arg4[%c1_14, %c0_15, %c0_16], %17 {strides = array<i32>} : memref<2x2048x128xbf16, #tpu.memory_space<vmem>>, vector<1x2048x128xbf16>,
    return
  }
  func.func @transform_0(%arg0: i32, %arg1: i32) -> (i32, i32, i32) {
    %c0_i32 = arith.constant 0 : i32
    %c0_i32_0 = arith.constant 0 : i32
    return %arg0, %arg1, %c0_i32 : i32, i32, i32
  }
  func.func @transform_1(%arg0: i32, %arg1: i32) -> (i32, i32, i32) {
    %c0_i32 = arith.constant 0 : i32
    %c0_i32_0 = arith.constant 0 : i32
    %c0_i32_1 = arith.constant 0 : i32
    return %arg0, %c0_i32, %c0_i32_0 : i32, i32, i32
  }
  func.func @transform_2(%arg0: i32, %arg1: i32) -> (i32, i32, i32) {
    %c0_i32 = arith.constant 0 : i32
    %c0_i32_0 = arith.constant 0 : i32
    return %arg0, %arg1, %c0_i32 : i32, i32, i32
  }
}

</mosaic_0001>

<llo_original>
// kernel: generator_forward.5
$region0: #{generator_forward.5}
  #allocation0 [shape = 'u32[]', space=smem, size = 0x4, offset = 0x4, fixed_abs, tag = 'smem constant byte address 0x4 - core index']
  #allocation1 [shape = 'u32[72,128]{1,0:T(1,128)}', space=vmem, size = 0x9000, scoped, tag = 'internal scratch']
  %s0 = inlined_call_operand.vmem [shape: bf16[1,8,128], index: 0, kind: input, shape index: {}]
  %s1 = inlined_call_operand.vmem [shape: bf16[1,128,2048], index: 1, kind: input, shape index: {}]
  %s2 = inlined_call_operand.vmem [shape: bf16[1,8,2048], index: 2, kind: output, shape index: {0}]
  %s3 = inlined_call_operand.vmem [shape: f32[1,1,2,2048], index: 3, kind: output, shape index: {1}]
  %4 = xla_tuple %s2, %s3
  %s5 = sld [smem:[#allocation0]]
  $region26: #{generator_forward.5} parent=0
    _
  %s7 = ssub.s32 1, %s5
  %s8 = scalar_select 0, %s7, %s5
  // Predicated region
  $region2: #{generator_forward.5} parent=0 // pred_check
    _
  $region3: #{generator_forward.5} parent=0 // pred_check_branch
    %10 = sbr.rel (0) target = $region5
  $region4: #{generator_forward.5} parent=0 // pred_region
    _
  $region5: #{generator_forward.5} parent=0 // pred_fallthru
    _
  // Predicated region
  $region6: #{generator_forward.5} parent=0 // pred_check
    _
  $region7: #{generator_forward.5} parent=0 // pred_check_branch
    %12 = sbr.rel (0) target = $region9
  $region8: #{generator_forward.5} parent=0 // pred_region
    _
  $region9: #{generator_forward.5} parent=0 // pred_fallthru
    _
  %v13 = vld [vmem:[%s0] sm:$0xf]
  %v14 = vld [vmem:[%s1] sm:$0xff]
  %v15 = vld [vmem:[%s1 + $0x8] sm:$0xff]
  %v16 = vld [vmem:[%s1 + $0x10] sm:$0xff]
  %v17 = vld [vmem:[%s1 + $0x18] sm:$0xff]
  %v18 = vld [vmem:[%s1 + $0x20] sm:$0xff]
  %v19 = vld [vmem:[%s1 + $0x28] sm:$0xff]
  %v20 = vld [vmem:[%s1 + $0x30] sm:$0xff]
  %v21 = vld [vmem:[%s1 + $0x38] sm:$0xff]
  %v22 = vld [vmem:[%s1 + $0x40] sm:$0xff]
  %v23 = vld [vmem:[%s1 + $0x48] sm:$0xff]
  %v24 = vld [vmem:[%s1 + $0x50] sm:$0xff]
  %v25 = vld [vmem:[%s1 + $0x58] sm:$0xff]
  %v26 = vld [vmem:[%s1 + $0x60] sm:$0xff]
  %v27 = vld [vmem:[%s1 + $0x68] sm:$0xff]
  %v28 = vld [vmem:[%s1 + $0x70] sm:$0xff]
  %v29 = vld [vmem:[%s1 + $0x78] sm:$0xff]
  %v30 = vld [vmem:[%s1 + $0x80] sm:$0xff]
  %v31 = vld [vmem:[%s1 + $0x88] sm:$0xff]
  %v32 = vld [vmem:[%s1 + $0x90] sm:$0xff]
  %v33 = vld [vmem:[%s1 + $0x98] sm:$0xff]
  %v34 = vld [vmem:[%s1 + $0xa0] sm:$0xff]
  %v35 = vld [vmem:[%s1 + $0xa8] sm:$0xff]
  %v36 = vld [vmem:[%s1 + $0xb0] sm:$0xff]
  %v37 = vld [vmem:[%s1 + $0xb8] sm:$0xff]
  %v38 = vld [vmem:[%s1 + $0xc0] sm:$0xff]
  %v39 = vld [vmem:[%s1 + $0xc8] sm:$0xff]
  %v40 = vld [vmem:[%s1 + $0xd0] sm:$0xff]
  %v41 = vld [vmem:[%s1 + $0xd8] sm:$0xff]
  %v42 = vld [vmem:[%s1 + $0xe0] sm:$0xff]
  %v43 = vld [vmem:[%s1 + $0xe8] sm:$0xff]
  %v44 = vld [vmem:[%s1 + $0xf0] sm:$0xff]
  %v45 = vld [vmem:[%s1 + $0xf8] sm:$0xff]
  %v46 = vld [vmem:[%s1 + $0x100] sm:$0xff]
  %v47 = vld [vmem:[%s1 + $0x108] sm:$0xff]
  %v48 = vld [vmem:[%s1 + $0x110] sm:$0xff]
  %v49 = vld [vmem:[%s1 + $0x118] sm:$0xff]
  %v50 = vld [vmem:[%s1 + $0x120] sm:$0xff]
  %v51 = vld [vmem:[%s1 + $0x128] sm:$0xff]
  %v52 = vld [vmem:[%s1 + $0x130] sm:$0xff]
  %v53 = vld [vmem:[%s1 + $0x138] sm:$0xff]
  %v54 = vld [vmem:[%s1 + $0x140] sm:$0xff]
  %v55 = vld [vmem:[%s1 + $0x148] sm:$0xff]
  %v56 = vld [vmem:[%s1 + $0x150] sm:$0xff]
  %v57 = vld [vmem:[%s1 + $0x158] sm:$0xff]
  %v58 = vld [vmem:[%s1 + $0x160] sm:$0xff]
  %v59 = vld [vmem:[%s1 + $0x168] sm:$0xff]
  %v60 = vld [vmem:[%s1 + $0x170] sm:$0xff]
  %v61 = vld [vmem:[%s1 + $0x178] sm:$0xff]
  %v62 = vld [vmem:[%s1 + $0x180] sm:$0xff]
  %v63 = vld [vmem:[%s1 + $0x188] sm:$0xff]
  %v64 = vld [vmem:[%s1 + $0x190] sm:$0xff]
  %v65 = vld [vmem:[%s1 + $0x198] sm:$0xff]
  %v66 = vld [vmem:[%s1 + $0x1a0] sm:$0xff]
  %v67 = vld [vmem:[%s1 + $0x1a8] sm:$0xff]
  %v68 = vld [vmem:[%s1 + $0x1b0] sm:$0xff]
  %v69 = vld [vmem:[%s1 + $0x1b8] sm:$0xff]
  %v70 = vld [vmem:[%s1 + $0x1c0] sm:$0xff]
  %v71 = vld [vmem:[%s1 + $0x1c8] sm:$0xff]
  %v72 = vld [vmem:[%s1 + $0x1d0] sm:$0xff]
  %v73 = vld [vmem:[%s1 + $0x1d8] sm:$0xff]
  %v74 = vld [vmem:[%s1 + $0x1e0] sm:$0xff]
  %v75 = vld [vmem:[%s1 + $0x1e8] sm:$0xff]
  %v76 = vld [vmem:[%s1 + $0x1f0] sm:$0xff]
  %v77 = vld [vmem:[%s1 + $0x1f8] sm:$0xff]
  %v78 = vld [vmem:[%s1 + $0x200] sm:$0xff]
  %v79 = vld [vmem:[%s1 + $0x208] sm:$0xff]
  %v80 = vld [vmem:[%s1 + $0x210] sm:$0xff]
  %v81 = vld [vmem:[%s1 + $0x218] sm:$0xff]
  %v82 = vld [vmem:[%s1 + $0x220] sm:$0xff]
  %v83 = vld [vmem:[%s1 + $0x228] sm:$0xff]
  %v84 = vld [vmem:[%s1 + $0x230] sm:$0xff]
  %v85 = vld [vmem:[%s1 + $0x238] sm:$0xff]
  %v86 = vld [vmem:[%s1 + $0x240] sm:$0xff]
  %v87 = vld [vmem:[%s1 + $0x248] sm:$0xff]
  %v88 = vld [vmem:[%s1 + $0x250] sm:$0xff]
  %v89 = vld [vmem:[%s1 + $0x258] sm:$0xff]
  %v90 = vld [vmem:[%s1 + $0x260] sm:$0xff]
  %v91 = vld [vmem:[%s1 + $0x268] sm:$0xff]
  %v92 = vld [vmem:[%s1 + $0x270] sm:$0xff]
  %v93 = vld [vmem:[%s1 + $0x278] sm:$0xff]
  %v94 = vld [vmem:[%s1 + $0x280] sm:$0xff]
  %v95 = vld [vmem:[%s1 + $0x288] sm:$0xff]
  %v96 = vld [vmem:[%s1 + $0x290] sm:$0xff]
  %v97 = vld [vmem:[%s1 + $0x298] sm:$0xff]
  %v98 = vld [vmem:[%s1 + $0x2a0] sm:$0xff]
  %v99 = vld [vmem:[%s1 + $0x2a8] sm:$0xff]
  %v100 = vld [vmem:[%s1 + $0x2b0] sm:$0xff]
  %v101 = vld [vmem:[%s1 + $0x2b8] sm:$0xff]
  %v102 = vld [vmem:[%s1 + $0x2c0] sm:$0xff]
  %v103 = vld [vmem:[%s1 + $0x2c8] sm:$0xff]
  %v104 = vld [vmem:[%s1 + $0x2d0] sm:$0xff]
  %v105 = vld [vmem:[%s1 + $0x2d8] sm:$0xff]
  %v106 = vld [vmem:[%s1 + $0x2e0] sm:$0xff]
  %v107 = vld [vmem:[%s1 + $0x2e8] sm:$0xff]
  %v108 = vld [vmem:[%s1 + $0x2f0] sm:$0xff]
  %v109 = vld [vmem:[%s1 + $0x2f8] sm:$0xff]
  %v110 = vld [vmem:[%s1 + $0x300] sm:$0xff]
  %v111 = vld [vmem:[%s1 + $0x308] sm:$0xff]
  %v112 = vld [vmem:[%s1 + $0x310] sm:$0xff]
  %v113 = vld [vmem:[%s1 + $0x318] sm:$0xff]
  %v114 = vld [vmem:[%s1 + $0x320] sm:$0xff]
  %v115 = vld [vmem:[%s1 + $0x328] sm:$0xff]
  %v116 = vld [vmem:[%s1 + $0x330] sm:$0xff]
  %v117 = vld [vmem:[%s1 + $0x338] sm:$0xff]
  %v118 = vld [vmem:[%s1 + $0x340] sm:$0xff]
  %v119 = vld [vmem:[%s1 + $0x348] sm:$0xff]
  %v120 = vld [vmem:[%s1 + $0x350] sm:$0xff]
  %v121 = vld [vmem:[%s1 + $0x358] sm:$0xff]
  %v122 = vld [vmem:[%s1 + $0x360] sm:$0xff]
  %v123 = vld [vmem:[%s1 + $0x368] sm:$0xff]
  %v124 = vld [vmem:[%s1 + $0x370] sm:$0xff]
  %v125 = vld [vmem:[%s1 + $0x378] sm:$0xff]
  %v126 = vld [vmem:[%s1 + $0x380] sm:$0xff]
  %v127 = vld [vmem:[%s1 + $0x388] sm:$0xff]
  %v128 = vld [vmem:[%s1 + $0x390] sm:$0xff]
  %v129 = vld [vmem:[%s1 + $0x398] sm:$0xff]
  %v130 = vld [vmem:[%s1 + $0x3a0] sm:$0xff]
  %v131 = vld [vmem:[%s1 + $0x3a8] sm:$0xff]
  %v132 = vld [vmem:[%s1 + $0x3b0] sm:$0xff]
  %v133 = vld [vmem:[%s1 + $0x3b8] sm:$0xff]
  %v134 = vld [vmem:[%s1 + $0x3c0] sm:$0xff]
  %v135 = vld [vmem:[%s1 + $0x3c8] sm:$0xff]
  %v136 = vld [vmem:[%s1 + $0x3d0] sm:$0xff]
  %v137 = vld [vmem:[%s1 + $0x3d8] sm:$0xff]
  %v138 = vld [vmem:[%s1 + $0x3e0] sm:$0xff]
  %v139 = vld [vmem:[%s1 + $0x3e8] sm:$0xff]
  %v140 = vld [vmem:[%s1 + $0x3f0] sm:$0xff]
  %v141 = vld [vmem:[%s1 + $0x3f8] sm:$0xff]
  %v270 = vunpack.c.l.b16 %v14
  %v271 = vunpack.c.h.b16 %v14
  %v272 = vunpack.c.l.b16 %v15
  %v273 = vunpack.c.h.b16 %v15
  %v274 = vunpack.c.l.b16 %v16
  %v275 = vunpack.c.h.b16 %v16
  %v276 = vunpack.c.l.b16 %v17
  %v277 = vunpack.c.h.b16 %v17
  %v278 = vunpack.c.l.b16 %v18
  %v279 = vunpack.c.h.b16 %v18
  %v280 = vunpack.c.l.b16 %v19
  %v281 = vunpack.c.h.b16 %v19
  %v282 = vunpack.c.l.b16 %v20
  %v283 = vunpack.c.h.b16 %v20
  %v284 = vunpack.c.l.b16 %v21
  %v285 = vunpack.c.h.b16 %v21
  %v286 = vunpack.c.l.b16 %v22
  %v287 = vunpack.c.h.b16 %v22
  %v288 = vunpack.c.l.b16 %v23
  %v289 = vunpack.c.h.b16 %v23
  %v290 = vunpack.c.l.b16 %v24
  %v291 = vunpack.c.h.b16 %v24
  %v292 = vunpack.c.l.b16 %v25
  %v293 = vunpack.c.h.b16 %v25
  %v294 = vunpack.c.l.b16 %v26
  %v295 = vunpack.c.h.b16 %v26
  %v296 = vunpack.c.l.b16 %v27
  %v297 = vunpack.c.h.b16 %v27
  %v298 = vunpack.c.l.b16 %v28
  %v299 = vunpack.c.h.b16 %v28
  %v300 = vunpack.c.l.b16 %v29
  %v301 = vunpack.c.h.b16 %v29
  %v302 = vunpack.c.l.b16 %v30
  %v303 = vunpack.c.h.b16 %v30
  %v304 = vunpack.c.l.b16 %v31
  %v305 = vunpack.c.h.b16 %v31
  %v306 = vunpack.c.l.b16 %v32
  %v307 = vunpack.c.h.b16 %v32
  %v308 = vunpack.c.l.b16 %v33
  %v309 = vunpack.c.h.b16 %v33
  %v310 = vunpack.c.l.b16 %v34
  %v311 = vunpack.c.h.b16 %v34
  %v312 = vunpack.c.l.b16 %v35
  %v313 = vunpack.c.h.b16 %v35
  %v314 = vunpack.c.l.b16 %v36
  %v315 = vunpack.c.h.b16 %v36
  %v316 = vunpack.c.l.b16 %v37
  %v317 = vunpack.c.h.b16 %v37
  %v318 = vunpack.c.l.b16 %v38
  %v319 = vunpack.c.h.b16 %v38
  %v320 = vunpack.c.l.b16 %v39
  %v321 = vunpack.c.h.b16 %v39
  %v322 = vunpack.c.l.b16 %v40
  %v323 = vunpack.c.h.b16 %v40
  %v324 = vunpack.c.l.b16 %v41
  %v325 = vunpack.c.h.b16 %v41
  %v326 = vunpack.c.l.b16 %v42
  %v327 = vunpack.c.h.b16 %v42
  %v328 = vunpack.c.l.b16 %v43
  %v329 = vunpack.c.h.b16 %v43
  %v330 = vunpack.c.l.b16 %v44
  %v331 = vunpack.c.h.b16 %v44
  %v332 = vunpack.c.l.b16 %v45
  %v333 = vunpack.c.h.b16 %v45
  %v334 = vunpack.c.l.b16 %v46
  %v335 = vunpack.c.h.b16 %v46
  %v336 = vunpack.c.l.b16 %v47
  %v337 = vunpack.c.h.b16 %v47
  %v338 = vunpack.c.l.b16 %v48
  %v339 = vunpack.c.h.b16 %v48
  %v340 = vunpack.c.l.b16 %v49
  %v341 = vunpack.c.h.b16 %v49
  %v342 = vunpack.c.l.b16 %v50
  %v343 = vunpack.c.h.b16 %v50
  %v344 = vunpack.c.l.b16 %v51
  %v345 = vunpack.c.h.b16 %v51
  %v346 = vunpack.c.l.b16 %v52
  %v347 = vunpack.c.h.b16 %v52
  %v348 = vunpack.c.l.b16 %v53
  %v349 = vunpack.c.h.b16 %v53
  %v350 = vunpack.c.l.b16 %v54
  %v351 = vunpack.c.h.b16 %v54
  %v352 = vunpack.c.l.b16 %v55
  %v353 = vunpack.c.h.b16 %v55
  %v354 = vunpack.c.l.b16 %v56
  %v355 = vunpack.c.h.b16 %v56
  %v356 = vunpack.c.l.b16 %v57
  %v357 = vunpack.c.h.b16 %v57
  %v358 = vunpack.c.l.b16 %v58
  %v359 = vunpack.c.h.b16 %v58
  %v360 = vunpack.c.l.b16 %v59
  %v361 = vunpack.c.h.b16 %v59
  %v362 = vunpack.c.l.b16 %v60
  %v363 = vunpack.c.h.b16 %v60
  %v364 = vunpack.c.l.b16 %v61
  %v365 = vunpack.c.h.b16 %v61
  %v366 = vunpack.c.l.b16 %v62
  %v367 = vunpack.c.h.b16 %v62
  %v368 = vunpack.c.l.b16 %v63
  %v369 = vunpack.c.h.b16 %v63
  %v370 = vunpack.c.l.b16 %v64
  %v371 = vunpack.c.h.b16 %v64
  %v372 = vunpack.c.l.b16 %v65
  %v373 = vunpack.c.h.b16 %v65
  %v374 = vunpack.c.l.b16 %v66
  %v375 = vunpack.c.h.b16 %v66
  %v376 = vunpack.c.l.b16 %v67
  %v377 = vunpack.c.h.b16 %v67
  %v378 = vunpack.c.l.b16 %v68
  %v379 = vunpack.c.h.b16 %v68
  %v380 = vunpack.c.l.b16 %v69
  %v381 = vunpack.c.h.b16 %v69
  %v382 = vunpack.c.l.b16 %v70
  %v383 = vunpack.c.h.b16 %v70
  %v384 = vunpack.c.l.b16 %v71
  %v385 = vunpack.c.h.b16 %v71
  %v386 = vunpack.c.l.b16 %v72
  %v387 = vunpack.c.h.b16 %v72
  %v388 = vunpack.c.l.b16 %v73
  %v389 = vunpack.c.h.b16 %v73
  %v390 = vunpack.c.l.b16 %v74
  %v391 = vunpack.c.h.b16 %v74
  %v392 = vunpack.c.l.b16 %v75
  %v393 = vunpack.c.h.b16 %v75
  %v394 = vunpack.c.l.b16 %v76
  %v395 = vunpack.c.h.b16 %v76
  %v396 = vunpack.c.l.b16 %v77
  %v397 = vunpack.c.h.b16 %v77
  %v398 = vunpack.c.l.b16 %v78
  %v399 = vunpack.c.h.b16 %v78
  %v400 = vunpack.c.l.b16 %v79
  %v401 = vunpack.c.h.b16 %v79
  %v402 = vunpack.c.l.b16 %v80
  %v403 = vunpack.c.h.b16 %v80
  %v404 = vunpack.c.l.b16 %v81
  %v405 = vunpack.c.h.b16 %v81
  %v406 = vunpack.c.l.b16 %v82
  %v407 = vunpack.c.h.b16 %v82
  %v408 = vunpack.c.l.b16 %v83
  %v409 = vunpack.c.h.b16 %v83
  %v410 = vunpack.c.l.b16 %v84
  %v411 = vunpack.c.h.b16 %v84
  %v412 = vunpack.c.l.b16 %v85
  %v413 = vunpack.c.h.b16 %v85
  %v414 = vunpack.c.l.b16 %v86
  %v415 = vunpack.c.h.b16 %v86
  %v416 = vunpack.c.l.b16 %v87
  %v417 = vunpack.c.h.b16 %v87
  %v418 = vunpack.c.l.b16 %v88
  %v419 = vunpack.c.h.b16 %v88
  %v420 = vunpack.c.l.b16 %v89
  %v421 = vunpack.c.h.b16 %v89
  %v422 = vunpack.c.l.b16 %v90
  %v423 = vunpack.c.h.b16 %v90
  %v424 = vunpack.c.l.b16 %v91
  %v425 = vunpack.c.h.b16 %v91
  %v426 = vunpack.c.l.b16 %v92
  %v427 = vunpack.c.h.b16 %v92
  %v428 = vunpack.c.l.b16 %v93
  %v429 = vunpack.c.h.b16 %v93
  %v430 = vunpack.c.l.b16 %v94
  %v431 = vunpack.c.h.b16 %v94
  %v432 = vunpack.c.l.b16 %v95
  %v433 = vunpack.c.h.b16 %v95
  %v434 = vunpack.c.l.b16 %v96
  %v435 = vunpack.c.h.b16 %v96
  %v436 = vunpack.c.l.b16 %v97
  %v437 = vunpack.c.h.b16 %v97
  %v438 = vunpack.c.l.b16 %v98
  %v439 = vunpack.c.h.b16 %v98
  %v440 = vunpack.c.l.b16 %v99
  %v441 = vunpack.c.h.b16 %v99
  %v442 = vunpack.c.l.b16 %v100
  %v443 = vunpack.c.h.b16 %v100
  %v444 = vunpack.c.l.b16 %v101
  %v445 = vunpack.c.h.b16 %v101
  %v446 = vunpack.c.l.b16 %v102
  %v447 = vunpack.c.h.b16 %v102
  %v448 = vunpack.c.l.b16 %v103
  %v449 = vunpack.c.h.b16 %v103
  %v450 = vunpack.c.l.b16 %v104
  %v451 = vunpack.c.h.b16 %v104
  %v452 = vunpack.c.l.b16 %v105
  %v453 = vunpack.c.h.b16 %v105
  %v454 = vunpack.c.l.b16 %v106
  %v455 = vunpack.c.h.b16 %v106
  %v456 = vunpack.c.l.b16 %v107
  %v457 = vunpack.c.h.b16 %v107
  %v458 = vunpack.c.l.b16 %v108
  %v459 = vunpack.c.h.b16 %v108
  %v460 = vunpack.c.l.b16 %v109
  %v461 = vunpack.c.h.b16 %v109
  %v462 = vunpack.c.l.b16 %v110
  %v463 = vunpack.c.h.b16 %v110
  %v464 = vunpack.c.l.b16 %v111
  %v465 = vunpack.c.h.b16 %v111
  %v466 = vunpack.c.l.b16 %v112
  %v467 = vunpack.c.h.b16 %v112
  %v468 = vunpack.c.l.b16 %v113
  %v469 = vunpack.c.h.b16 %v113
  %v470 = vunpack.c.l.b16 %v114
  %v471 = vunpack.c.h.b16 %v114
  %v472 = vunpack.c.l.b16 %v115
  %v473 = vunpack.c.h.b16 %v115
  %v474 = vunpack.c.l.b16 %v116
  %v475 = vunpack.c.h.b16 %v116
  %v476 = vunpack.c.l.b16 %v117
  %v477 = vunpack.c.h.b16 %v117
  %v478 = vunpack.c.l.b16 %v118
  %v479 = vunpack.c.h.b16 %v118
  %v480 = vunpack.c.l.b16 %v119
  %v481 = vunpack.c.h.b16 %v119
  %v482 = vunpack.c.l.b16 %v120
  %v483 = vunpack.c.h.b16 %v120
  %v484 = vunpack.c.l.b16 %v121
  %v485 = vunpack.c.h.b16 %v121
  %v486 = vunpack.c.l.b16 %v122
  %v487 = vunpack.c.h.b16 %v122
  %v488 = vunpack.c.l.b16 %v123
  %v489 = vunpack.c.h.b16 %v123
  %v490 = vunpack.c.l.b16 %v124
  %v491 = vunpack.c.h.b16 %v124
  %v492 = vunpack.c.l.b16 %v125
  %v493 = vunpack.c.h.b16 %v125
  %v494 = vunpack.c.l.b16 %v126
  %v495 = vunpack.c.h.b16 %v126
  %v496 = vunpack.c.l.b16 %v127
  %v497 = vunpack.c.h.b16 %v127
  %v498 = vunpack.c.l.b16 %v128
  %v499 = vunpack.c.h.b16 %v128
  %v500 = vunpack.c.l.b16 %v129
  %v501 = vunpack.c.h.b16 %v129
  %v502 = vunpack.c.l.b16 %v130
  %v503 = vunpack.c.h.b16 %v130
  %v504 = vunpack.c.l.b16 %v131
  %v505 = vunpack.c.h.b16 %v131
  %v506 = vunpack.c.l.b16 %v132
  %v507 = vunpack.c.h.b16 %v132
  %v508 = vunpack.c.l.b16 %v133
  %v509 = vunpack.c.h.b16 %v133
  %v510 = vunpack.c.l.b16 %v134
  %v511 = vunpack.c.h.b16 %v134
  %v512 = vunpack.c.l.b16 %v135
  %v513 = vunpack.c.h.b16 %v135
  %v514 = vunpack.c.l.b16 %v136
  %v515 = vunpack.c.h.b16 %v136
  %v516 = vunpack.c.l.b16 %v137
  %v517 = vunpack.c.h.b16 %v137
  %v518 = vunpack.c.l.b16 %v138
  %v519 = vunpack.c.h.b16 %v138
  %v520 = vunpack.c.l.b16 %v139
  %v521 = vunpack.c.h.b16 %v139
  %v522 = vunpack.c.l.b16 %v140
  %v523 = vunpack.c.h.b16 %v140
  %v524 = vunpack.c.l.b16 %v141
  %v525 = vunpack.c.h.b16 %v141
  %v526 = vpack.c.b16 %v286, %v270
  %v527 = vpack.c.b16 %v287, %v271
  %v528 = vpack.c.b16 %v288, %v272
  %v529 = vpack.c.b16 %v289, %v273
  %v530 = vpack.c.b16 %v290, %v274
  %v531 = vpack.c.b16 %v291, %v275
  %v532 = vpack.c.b16 %v292, %v276
  %v533 = vpack.c.b16 %v293, %v277
  %v534 = vpack.c.b16 %v294, %v278
  %v535 = vpack.c.b16 %v295, %v279
  %v536 = vpack.c.b16 %v296, %v280
  %v537 = vpack.c.b16 %v297, %v281
  %v538 = vpack.c.b16 %v298, %v282
  %v539 = vpack.c.b16 %v299, %v283
  %v540 = vpack.c.b16 %v300, %v284
  %v541 = vpack.c.b16 %v301, %v285
  %v542 = vpack.c.b16 %v318, %v302
  %v543 = vpack.c.b16 %v319, %v303
  %v544 = vpack.c.b16 %v320, %v304
  %v545 = vpack.c.b16 %v321, %v305
  %v546 = vpack.c.b16 %v322, %v306
  %v547 = vpack.c.b16 %v323, %v307
  %v548 = vpack.c.b16 %v324, %v308
  %v549 = vpack.c.b16 %v325, %v309
  %v550 = vpack.c.b16 %v326, %v310
  %v551 = vpack.c.b16 %v327, %v311
  %v552 = vpack.c.b16 %v328, %v312
  %v553 = vpack.c.b16 %v329, %v313
  %v554 = vpack.c.b16 %v330, %v314
  %v555 = vpack.c.b16 %v331, %v315
  %v556 = vpack.c.b16 %v332, %v316
  %v557 = vpack.c.b16 %v333, %v317
  %v558 = vpack.c.b16 %v350, %v334
  %v559 = vpack.c.b16 %v351, %v335
  %v560 = vpack.c.b16 %v352, %v336
  %v561 = vpack.c.b16 %v353, %v337
  %v562 = vpack.c.b16 %v354, %v338
  %v563 = vpack.c.b16 %v355, %v339
  %v564 = vpack.c.b16 %v356, %v340
  %v565 = vpack.c.b16 %v357, %v341
  %v566 = vpack.c.b16 %v358, %v342
  %v567 = vpack.c.b16 %v359, %v343
  %v568 = vpack.c.b16 %v360, %v344
  %v569 = vpack.c.b16 %v361, %v345
  %v570 = vpack.c.b16 %v362, %v346
  %v571 = vpack.c.b16 %v363, %v347
  %v572 = vpack.c.b16 %v364, %v348
  %v573 = vpack.c.b16 %v365, %v349
  %v574 = vpack.c.b16 %v382, %v366
  %v575 = vpack.c.b16 %v383, %v367
  %v576 = vpack.c.b16 %v384, %v368
  %v577 = vpack.c.b16 %v385, %v369
  %v578 = vpack.c.b16 %v386, %v370
  %v579 = vpack.c.b16 %v387, %v371
  %v580 = vpack.c.b16 %v388, %v372
  %v581 = vpack.c.b16 %v389, %v373
  %v582 = vpack.c.b16 %v390, %v374
  %v583 = vpack.c.b16 %v391, %v375
  %v584 = vpack.c.b16 %v392, %v376
  %v585 = vpack.c.b16 %v393, %v377
  %v586 = vpack.c.b16 %v394, %v378
  %v587 = vpack.c.b16 %v395, %v379
  %v588 = vpack.c.b16 %v396, %v380
  %v589 = vpack.c.b16 %v397, %v381
  %v590 = vpack.c.b16 %v414, %v398
  %v591 = vpack.c.b16 %v415, %v399
  %v592 = vpack.c.b16 %v416, %v400
  %v593 = vpack.c.b16 %v417, %v401
  %v594 = vpack.c.b16 %v418, %v402
  %v595 = vpack.c.b16 %v419, %v403
  %v596 = vpack.c.b16 %v420, %v404
  %v597 = vpack.c.b16 %v421, %v405
  %v598 = vpack.c.b16 %v422, %v406
  %v599 = vpack.c.b16 %v423, %v407
  %v600 = vpack.c.b16 %v424, %v408
  %v601 = vpack.c.b16 %v425, %v409
  %v602 = vpack.c.b16 %v426, %v410
  %v603 = vpack.c.b16 %v427, %v411
  %v604 = vpack.c.b16 %v428, %v412
  %v605 = vpack.c.b16 %v429, %v413
  %v606 = vpack.c.b16 %v446, %v430
  %v607 = vpack.c.b16 %v447, %v431
  %v608 = vpack.c.b16 %v448, %v432
  %v609 = vpack.c.b16 %v449, %v433
  %v610 = vpack.c.b16 %v450, %v434
  %v611 = vpack.c.b16 %v451, %v435
  %v612 = vpack.c.b16 %v452, %v436
  %v613 = vpack.c.b16 %v453, %v437
  %v614 = vpack.c.b16 %v454, %v438
  %v615 = vpack.c.b16 %v455, %v439
  %v616 = vpack.c.b16 %v456, %v440
  %v617 = vpack.c.b16 %v457, %v441
  %v618 = vpack.c.b16 %v458, %v442
  %v619 = vpack.c.b16 %v459, %v443
  %v620 = vpack.c.b16 %v460, %v444
  %v621 = vpack.c.b16 %v461, %v445
  %v622 = vpack.c.b16 %v478, %v462
  %v623 = vpack.c.b16 %v479, %v463
  %v624 = vpack.c.b16 %v480, %v464
  %v625 = vpack.c.b16 %v481, %v465
  %v626 = vpack.c.b16 %v482, %v466
  %v627 = vpack.c.b16 %v483, %v467
  %v628 = vpack.c.b16 %v484, %v468
  %v629 = vpack.c.b16 %v485, %v469
  %v630 = vpack.c.b16 %v486, %v470
  %v631 = vpack.c.b16 %v487, %v471
  %v632 = vpack.c.b16 %v488, %v472
  %v633 = vpack.c.b16 %v489, %v473
  %v634 = vpack.c.b16 %v490, %v474
  %v635 = vpack.c.b16 %v491, %v475
  %v636 = vpack.c.b16 %v492, %v476
  %v637 = vpack.c.b16 %v493, %v477
  %v638 = vpack.c.b16 %v510, %v494
  %v639 = vpack.c.b16 %v511, %v495
  %v640 = vpack.c.b16 %v512, %v496
  %v641 = vpack.c.b16 %v513, %v497
  %v642 = vpack.c.b16 %v514, %v498
  %v643 = vpack.c.b16 %v515, %v499
  %v644 = vpack.c.b16 %v516, %v500
  %v645 = vpack.c.b16 %v517, %v501
  %v646 = vpack.c.b16 %v518, %v502
  %v647 = vpack.c.b16 %v519, %v503
  %v648 = vpack.c.b16 %v520, %v504
  %v649 = vpack.c.b16 %v521, %v505
  %v650 = vpack.c.b16 %v522, %v506
  %v651 = vpack.c.b16 %v523, %v507
  %v652 = vpack.c.b16 %v524, %v508
  %v653 = vpack.c.b16 %v525, %v509
  %782 = vmatpush.bf16.msra.mxu0 %v638
  %783 = vmatpush.bf16.msra.mxu0 %v622
  %784 = vmatpush.bf16.msra.mxu0 %v606
  %785 = vmatpush.bf16.msra.mxu0 %v590
  %786 = vmatpush.bf16.msra.mxu0 %v574
  %787 = vmatpush.bf16.msra.mxu0 %v558
  %788 = vmatpush.bf16.msra.mxu0 %v542
  %789 = vmatpush.bf16.msra.mxu0 %v526
  %790 = vmatmul.bf16.gmra.mxu0 %v13
  %v791 = vpop.f32.mrf.mxu0
  %v792 = vadd.f32 0.0, %v791
  %v793 = vpop.f32.mrf.mxu0
  %794 = vdwg.mxu0
  %795 = vmatpush.bf16.msra.mxu0 %v639
  %796 = vmatpush.bf16.msra.mxu0 %v623
  %797 = vmatpush.bf16.msra.mxu0 %v607
  %798 = vmatpush.bf16.msra.mxu0 %v591
  %799 = vmatpush.bf16.msra.mxu0 %v575
  %800 = vmatpush.bf16.msra.mxu0 %v559
  %801 = vmatpush.bf16.msra.mxu0 %v543
  %802 = vmatpush.bf16.msra.mxu0 %v527
  %803 = vmatmul.bf16.gmra.mxu0 %v13
  %v804 = vpop.f32.mrf.mxu0
  %v805 = vadd.f32 0.0, %v804
  %v806 = vpop.f32.mrf.mxu0
  %807 = vdwg.mxu0
  %808 = vmatpush.bf16.msra.mxu0 %v640
  %809 = vmatpush.bf16.msra.mxu0 %v624
  %810 = vmatpush.bf16.msra.mxu0 %v608
  %811 = vmatpush.bf16.msra.mxu0 %v592
  %812 = vmatpush.bf16.msra.mxu0 %v576
  %813 = vmatpush.bf16.msra.mxu0 %v560
  %814 = vmatpush.bf16.msra.mxu0 %v544
  %815 = vmatpush.bf16.msra.mxu0 %v528
  %816 = vmatmul.bf16.gmra.mxu0 %v13
  %v817 = vpop.f32.mrf.mxu0
  %v818 = vadd.f32 0.0, %v817
  %v819 = vpop.f32.mrf.mxu0
  %820 = vdwg.mxu0
  %821 = vmatpush.bf16.msra.mxu0 %v641
  %822 = vmatpush.bf16.msra.mxu0 %v625
  %823 = vmatpush.bf16.msra.mxu0 %v609
  %824 = vmatpush.bf16.msra.mxu0 %v593
  %825 = vmatpush.bf16.msra.mxu0 %v577
  %826 = vmatpush.bf16.msra.mxu0 %v561
  %827 = vmatpush.bf16.msra.mxu0 %v545
  %828 = vmatpush.bf16.msra.mxu0 %v529
  %829 = vmatmul.bf16.gmra.mxu0 %v13
  %v830 = vpop.f32.mrf.mxu0
  %v831 = vadd.f32 0.0, %v830
  %v832 = vpop.f32.mrf.mxu0
  %833 = vdwg.mxu0
  %834 = vmatpush.bf16.msra.mxu0 %v642
  %835 = vmatpush.bf16.msra.mxu0 %v626
  %836 = vmatpush.bf16.msra.mxu0 %v610
  %837 = vmatpush.bf16.msra.mxu0 %v594
  %838 = vmatpush.bf16.msra.mxu0 %v578
  %839 = vmatpush.bf16.msra.mxu0 %v562
  %840 = vmatpush.bf16.msra.mxu0 %v546
  %841 = vmatpush.bf16.msra.mxu0 %v530
  %842 = vmatmul.bf16.gmra.mxu0 %v13
  %v843 = vpop.f32.mrf.mxu0
  %v844 = vadd.f32 0.0, %v843
  %v845 = vpop.f32.mrf.mxu0
  %846 = vdwg.mxu0
  %847 = vmatpush.bf16.msra.mxu0 %v643
  %848 = vmatpush.bf16.msra.mxu0 %v627
  %849 = vmatpush.bf16.msra.mxu0 %v611
  %850 = vmatpush.bf16.msra.mxu0 %v595
  %851 = vmatpush.bf16.msra.mxu0 %v579
  %852 = vmatpush.bf16.msra.mxu0 %v563
  %853 = vmatpush.bf16.msra.mxu0 %v547
  %854 = vmatpush.bf16.msra.mxu0 %v531
  %855 = vmatmul.bf16.gmra.mxu0 %v13
  %v856 = vpop.f32.mrf.mxu0
  %v857 = vadd.f32 0.0, %v856
  %v858 = vpop.f32.mrf.mxu0
  %859 = vdwg.mxu0
  %860 = vmatpush.bf16.msra.mxu0 %v644
  %861 = vmatpush.bf16.msra.mxu0 %v628
  %862 = vmatpush.bf16.msra.mxu0 %v612
  %863 = vmatpush.bf16.msra.mxu0 %v596
  %864 = vmatpush.bf16.msra.mxu0 %v580
  %865 = vmatpush.bf16.msra.mxu0 %v564
  %866 = vmatpush.bf16.msra.mxu0 %v548
  %867 = vmatpush.bf16.msra.mxu0 %v532
  %868 = vmatmul.bf16.gmra.mxu0 %v13
  %v869 = vpop.f32.mrf.mxu0
  %v870 = vadd.f32 0.0, %v869
  %v871 = vpop.f32.mrf.mxu0
  %872 = vdwg.mxu0
  %873 = vmatpush.bf16.msra.mxu0 %v645
  %874 = vmatpush.bf16.msra.mxu0 %v629
  %875 = vmatpush.bf16.msra.mxu0 %v613
  %876 = vmatpush.bf16.msra.mxu0 %v597
  %877 = vmatpush.bf16.msra.mxu0 %v581
  %878 = vmatpush.bf16.msra.mxu0 %v565
  %879 = vmatpush.bf16.msra.mxu0 %v549
  %880 = vmatpush.bf16.msra.mxu0 %v533
  %881 = vmatmul.bf16.gmra.mxu0 %v13
  %v882 = vpop.f32.mrf.mxu0
  %v883 = vadd.f32 0.0, %v882
  %v884 = vpop.f32.mrf.mxu0
  %885 = vdwg.mxu0
  %886 = vmatpush.bf16.msra.mxu0 %v646
  %887 = vmatpush.bf16.msra.mxu0 %v630
  %888 = vmatpush.bf16.msra.mxu0 %v614
  %889 = vmatpush.bf16.msra.mxu0 %v598
  %890 = vmatpush.bf16.msra.mxu0 %v582
  %891 = vmatpush.bf16.msra.mxu0 %v566
  %892 = vmatpush.bf16.msra.mxu0 %v550
  %893 = vmatpush.bf16.msra.mxu0 %v534
  %894 = vmatmul.bf16.gmra.mxu0 %v13
  %v895 = vpop.f32.mrf.mxu0
  %v896 = vadd.f32 0.0, %v895
  %v897 = vpop.f32.mrf.mxu0
  %898 = vdwg.mxu0
  %899 = vmatpush.bf16.msra.mxu0 %v647
  %900 = vmatpush.bf16.msra.mxu0 %v631
  %901 = vmatpush.bf16.msra.mxu0 %v615
  %902 = vmatpush.bf16.msra.mxu0 %v599
  %903 = vmatpush.bf16.msra.mxu0 %v583
  %904 = vmatpush.bf16.msra.mxu0 %v567
  %905 = vmatpush.bf16.msra.mxu0 %v551
  %906 = vmatpush.bf16.msra.mxu0 %v535
  %907 = vmatmul.bf16.gmra.mxu0 %v13
  %v908 = vpop.f32.mrf.mxu0
  %v909 = vadd.f32 0.0, %v908
  %v910 = vpop.f32.mrf.mxu0
  %911 = vdwg.mxu0
  %912 = vmatpush.bf16.msra.mxu0 %v648
  %913 = vmatpush.bf16.msra.mxu0 %v632
  %914 = vmatpush.bf16.msra.mxu0 %v616
  %915 = vmatpush.bf16.msra.mxu0 %v600
  %916 = vmatpush.bf16.msra.mxu0 %v584
  %917 = vmatpush.bf16.msra.mxu0 %v568
  %918 = vmatpush.bf16.msra.mxu0 %v552
  %919 = vmatpush.bf16.msra.mxu0 %v536
  %920 = vmatmul.bf16.gmra.mxu0 %v13
  %v921 = vpop.f32.mrf.mxu0
  %v922 = vadd.f32 0.0, %v921
  %v923 = vpop.f32.mrf.mxu0
  %924 = vdwg.mxu0
  %925 = vmatpush.bf16.msra.mxu0 %v649
  %926 = vmatpush.bf16.msra.mxu0 %v633
  %927 = vmatpush.bf16.msra.mxu0 %v617
  %928 = vmatpush.bf16.msra.mxu0 %v601
  %929 = vmatpush.bf16.msra.mxu0 %v585
  %930 = vmatpush.bf16.msra.mxu0 %v569
  %931 = vmatpush.bf16.msra.mxu0 %v553
  %932 = vmatpush.bf16.msra.mxu0 %v537
  %933 = vmatmul.bf16.gmra.mxu0 %v13
  %v934 = vpop.f32.mrf.mxu0
  %v935 = vadd.f32 0.0, %v934
  %v936 = vpop.f32.mrf.mxu0
  %937 = vdwg.mxu0
  %938 = vmatpush.bf16.msra.mxu0 %v650
  %939 = vmatpush.bf16.msra.mxu0 %v634
  %940 = vmatpush.bf16.msra.mxu0 %v618
  %941 = vmatpush.bf16.msra.mxu0 %v602
  %942 = vmatpush.bf16.msra.mxu0 %v586
  %943 = vmatpush.bf16.msra.mxu0 %v570
  %944 = vmatpush.bf16.msra.mxu0 %v554
  %945 = vmatpush.bf16.msra.mxu0 %v538
  %946 = vmatmul.bf16.gmra.mxu0 %v13
  %v947 = vpop.f32.mrf.mxu0
  %v948 = vadd.f32 0.0, %v947
  %v949 = vpop.f32.mrf.mxu0
  %950 = vdwg.mxu0
  %951 = vmatpush.bf16.msra.mxu0 %v651
  %952 = vmatpush.bf16.msra.mxu0 %v635
  %953 = vmatpush.bf16.msra.mxu0 %v619
  %954 = vmatpush.bf16.msra.mxu0 %v603
  %955 = vmatpush.bf16.msra.mxu0 %v587
  %956 = vmatpush.bf16.msra.mxu0 %v571
  %957 = vmatpush.bf16.msra.mxu0 %v555
  %958 = vmatpush.bf16.msra.mxu0 %v539
  %959 = vmatmul.bf16.gmra.mxu0 %v13
  %v960 = vpop.f32.mrf.mxu0
  %v961 = vadd.f32 0.0, %v960
  %v962 = vpop.f32.mrf.mxu0
  %963 = vdwg.mxu0
  %964 = vmatpush.bf16.msra.mxu0 %v652
  %965 = vmatpush.bf16.msra.mxu0 %v636
  %966 = vmatpush.bf16.msra.mxu0 %v620
  %967 = vmatpush.bf16.msra.mxu0 %v604
  %968 = vmatpush.bf16.msra.mxu0 %v588
  %969 = vmatpush.bf16.msra.mxu0 %v572
  %970 = vmatpush.bf16.msra.mxu0 %v556
  %971 = vmatpush.bf16.msra.mxu0 %v540
  %972 = vmatmul.bf16.gmra.mxu0 %v13
  %v973 = vpop.f32.mrf.mxu0
  %v974 = vadd.f32 0.0, %v973
  %v975 = vpop.f32.mrf.mxu0
  %976 = vdwg.mxu0
  %977 = vmatpush.bf16.msra.mxu0 %v653
  %978 = vmatpush.bf16.msra.mxu0 %v637
  %979 = vmatpush.bf16.msra.mxu0 %v621
  %980 = vmatpush.bf16.msra.mxu0 %v605
  %981 = vmatpush.bf16.msra.mxu0 %v589
  %982 = vmatpush.bf16.msra.mxu0 %v573
  %983 = vmatpush.bf16.msra.mxu0 %v557
  %984 = vmatpush.bf16.msra.mxu0 %v541
  %985 = vmatmul.bf16.gmra.mxu0 %v13
  %v986 = vpop.f32.mrf.mxu0
  %v987 = vadd.f32 0.0, %v986
  %v988 = vpop.f32.mrf.mxu0
  %989 = vdwg.mxu0
  %v990 = vrot.slane %v792, 4
  %v991 = vadd.f32 %v792, %v990
  %v992 = vrot.slane %v991, 2
  %v993 = vadd.f32 %v991, %v992
  %v994 = vrot.slane %v993, 1
  %v995 = vadd.f32 %v993, %v994
  %v996 = vrot.slane %v805, 4
  %v997 = vadd.f32 %v805, %v996
  %v998 = vrot.slane %v997, 2
  %v999 = vadd.f32 %v997, %v998
  %v1000 = vrot.slane %v999, 1
  %v1001 = vadd.f32 %v999, %v1000
  %v1002 = vrot.slane %v818, 4
  %v1003 = vadd.f32 %v818, %v1002
  %v1004 = vrot.slane %v1003, 2
  %v1005 = vadd.f32 %v1003, %v1004
  %v1006 = vrot.slane %v1005, 1
  %v1007 = vadd.f32 %v1005, %v1006
  %v1008 = vrot.slane %v831, 4
  %v1009 = vadd.f32 %v831, %v1008
  %v1010 = vrot.slane %v1009, 2
  %v1011 = vadd.f32 %v1009, %v1010
  %v1012 = vrot.slane %v1011, 1
  %v1013 = vadd.f32 %v1011, %v1012
  %v1014 = vrot.slane %v844, 4
  %v1015 = vadd.f32 %v844, %v1014
  %v1016 = vrot.slane %v1015, 2
  %v1017 = vadd.f32 %v1015, %v1016
  %v1018 = vrot.slane %v1017, 1
  %v1019 = vadd.f32 %v1017, %v1018
  %v1020 = vrot.slane %v857, 4
  %v1021 = vadd.f32 %v857, %v1020
  %v1022 = vrot.slane %v1021, 2
  %v1023 = vadd.f32 %v1021, %v1022
  %v1024 = vrot.slane %v1023, 1
  %v1025 = vadd.f32 %v1023, %v1024
  %v1026 = vrot.slane %v870, 4
  %v1027 = vadd.f32 %v870, %v1026
  %v1028 = vrot.slane %v1027, 2
  %v1029 = vadd.f32 %v1027, %v1028
  %v1030 = vrot.slane %v1029, 1
  %v1031 = vadd.f32 %v1029, %v1030
  %v1032 = vrot.slane %v883, 4
  %v1033 = vadd.f32 %v883, %v1032
  %v1034 = vrot.slane %v1033, 2
  %v1035 = vadd.f32 %v1033, %v1034
  %v1036 = vrot.slane %v1035, 1
  %v1037 = vadd.f32 %v1035, %v1036
  %v1038 = vrot.slane %v896, 4
  %v1039 = vadd.f32 %v896, %v1038
  %v1040 = vrot.slane %v1039, 2
  %v1041 = vadd.f32 %v1039, %v1040
  %v1042 = vrot.slane %v1041, 1
  %v1043 = vadd.f32 %v1041, %v1042
  %v1044 = vrot.slane %v909, 4
  %v1045 = vadd.f32 %v909, %v1044
  %v1046 = vrot.slane %v1045, 2
  %v1047 = vadd.f32 %v1045, %v1046
  %v1048 = vrot.slane %v1047, 1
  %v1049 = vadd.f32 %v1047, %v1048
  %v1050 = vrot.slane %v922, 4
  %v1051 = vadd.f32 %v922, %v1050
  %v1052 = vrot.slane %v1051, 2
  %v1053 = vadd.f32 %v1051, %v1052
  %v1054 = vrot.slane %v1053, 1
  %v1055 = vadd.f32 %v1053, %v1054
  %v1056 = vrot.slane %v935, 4
  %v1057 = vadd.f32 %v935, %v1056
  %v1058 = vrot.slane %v1057, 2
  %v1059 = vadd.f32 %v1057, %v1058
  %v1060 = vrot.slane %v1059, 1
  %v1061 = vadd.f32 %v1059, %v1060
  %v1062 = vrot.slane %v948, 4
  %v1063 = vadd.f32 %v948, %v1062
  %v1064 = vrot.slane %v1063, 2
  %v1065 = vadd.f32 %v1063, %v1064
  %v1066 = vrot.slane %v1065, 1
  %v1067 = vadd.f32 %v1065, %v1066
  %v1068 = vrot.slane %v961, 4
  %v1069 = vadd.f32 %v961, %v1068
  %v1070 = vrot.slane %v1069, 2
  %v1071 = vadd.f32 %v1069, %v1070
  %v1072 = vrot.slane %v1071, 1
  %v1073 = vadd.f32 %v1071, %v1072
  %v1074 = vrot.slane %v974, 4
  %v1075 = vadd.f32 %v974, %v1074
  %v1076 = vrot.slane %v1075, 2
  %v1077 = vadd.f32 %v1075, %v1076
  %v1078 = vrot.slane %v1077, 1
  %v1079 = vadd.f32 %v1077, %v1078
  %v1080 = vrot.slane %v987, 4
  %v1081 = vadd.f32 %v987, %v1080
  %v1082 = vrot.slane %v1081, 2
  %v1083 = vadd.f32 %v1081, %v1082
  %v1084 = vrot.slane %v1083, 1
  %v1085 = vadd.f32 %v1083, %v1084
  %v1086 = vmul.f32 %v792, %v792
  %v1087 = vmul.f32 %v805, %v805
  %v1088 = vmul.f32 %v818, %v818
  %v1089 = vmul.f32 %v831, %v831
  %v1090 = vmul.f32 %v844, %v844
  %v1091 = vmul.f32 %v857, %v857
  %v1092 = vmul.f32 %v870, %v870
  %v1093 = vmul.f32 %v883, %v883
  %v1094 = vmul.f32 %v896, %v896
  %v1095 = vmul.f32 %v909, %v909
  %v1096 = vmul.f32 %v922, %v922
  %v1097 = vmul.f32 %v935, %v935
  %v1098 = vmul.f32 %v948, %v948
  %v1099 = vmul.f32 %v961, %v961
  %v1100 = vmul.f32 %v974, %v974
  %v1101 = vmul.f32 %v987, %v987
  %v1102 = vrot.slane %v1086, 4
  %v1103 = vadd.f32 %v1086, %v1102
  %v1104 = vrot.slane %v1103, 2
  %v1105 = vadd.f32 %v1103, %v1104
  %v1106 = vrot.slane %v1105, 1
  %v1107 = vadd.f32 %v1105, %v1106
  %v1108 = vrot.slane %v1087, 4
  %v1109 = vadd.f32 %v1087, %v1108
  %v1110 = vrot.slane %v1109, 2
  %v1111 = vadd.f32 %v1109, %v1110
  %v1112 = vrot.slane %v1111, 1
  %v1113 = vadd.f32 %v1111, %v1112
  %v1114 = vrot.slane %v1088, 4
  %v1115 = vadd.f32 %v1088, %v1114
  %v1116 = vrot.slane %v1115, 2
  %v1117 = vadd.f32 %v1115, %v1116
  %v1118 = vrot.slane %v1117, 1
  %v1119 = vadd.f32 %v1117, %v1118
  %v1120 = vrot.slane %v1089, 4
  %v1121 = vadd.f32 %v1089, %v1120
  %v1122 = vrot.slane %v1121, 2
  %v1123 = vadd.f32 %v1121, %v1122
  %v1124 = vrot.slane %v1123, 1
  %v1125 = vadd.f32 %v1123, %v1124
  %v1126 = vrot.slane %v1090, 4
  %v1127 = vadd.f32 %v1090, %v1126
  %v1128 = vrot.slane %v1127, 2
  %v1129 = vadd.f32 %v1127, %v1128
  %v1130 = vrot.slane %v1129, 1
  %v1131 = vadd.f32 %v1129, %v1130
  %v1132 = vrot.slane %v1091, 4
  %v1133 = vadd.f32 %v1091, %v1132
  %v1134 = vrot.slane %v1133, 2
  %v1135 = vadd.f32 %v1133, %v1134
  %v1136 = vrot.slane %v1135, 1
  %v1137 = vadd.f32 %v1135, %v1136
  %v1138 = vrot.slane %v1092, 4
  %v1139 = vadd.f32 %v1092, %v1138
  %v1140 = vrot.slane %v1139, 2
  %v1141 = vadd.f32 %v1139, %v1140
  %v1142 = vrot.slane %v1141, 1
  %v1143 = vadd.f32 %v1141, %v1142
  %v1144 = vrot.slane %v1093, 4
  %v1145 = vadd.f32 %v1093, %v1144
  %v1146 = vrot.slane %v1145, 2
  %v1147 = vadd.f32 %v1145, %v1146
  %v1148 = vrot.slane %v1147, 1
  %v1149 = vadd.f32 %v1147, %v1148
  %v1150 = vrot.slane %v1094, 4
  %v1151 = vadd.f32 %v1094, %v1150
  %v1152 = vrot.slane %v1151, 2
  %v1153 = vadd.f32 %v1151, %v1152
  %v1154 = vrot.slane %v1153, 1
  %v1155 = vadd.f32 %v1153, %v1154
  %v1156 = vrot.slane %v1095, 4
  %v1157 = vadd.f32 %v1095, %v1156
  %v1158 = vrot.slane %v1157, 2
  %v1159 = vadd.f32 %v1157, %v1158
  %v1160 = vrot.slane %v1159, 1
  %v1161 = vadd.f32 %v1159, %v1160
  %v1162 = vrot.slane %v1096, 4
  %v1163 = vadd.f32 %v1096, %v1162
  %v1164 = vrot.slane %v1163, 2
  %v1165 = vadd.f32 %v1163, %v1164
  %v1166 = vrot.slane %v1165, 1
  %v1167 = vadd.f32 %v1165, %v1166
  %v1168 = vrot.slane %v1097, 4
  %v1169 = vadd.f32 %v1097, %v1168
  %v1170 = vrot.slane %v1169, 2
  %v1171 = vadd.f32 %v1169, %v1170
  %v1172 = vrot.slane %v1171, 1
  %v1173 = vadd.f32 %v1171, %v1172
  %v1174 = vrot.slane %v1098, 4
  %v1175 = vadd.f32 %v1098, %v1174
  %v1176 = vrot.slane %v1175, 2
  %v1177 = vadd.f32 %v1175, %v1176
  %v1178 = vrot.slane %v1177, 1
  %v1179 = vadd.f32 %v1177, %v1178
  %v1180 = vrot.slane %v1099, 4
  %v1181 = vadd.f32 %v1099, %v1180
  %v1182 = vrot.slane %v1181, 2
  %v1183 = vadd.f32 %v1181, %v1182
  %v1184 = vrot.slane %v1183, 1
  %v1185 = vadd.f32 %v1183, %v1184
  %v1186 = vrot.slane %v1100, 4
  %v1187 = vadd.f32 %v1100, %v1186
  %v1188 = vrot.slane %v1187, 2
  %v1189 = vadd.f32 %v1187, %v1188
  %v1190 = vrot.slane %v1189, 1
  %v1191 = vadd.f32 %v1189, %v1190
  %v1192 = vrot.slane %v1101, 4
  %v1193 = vadd.f32 %v1101, %v1192
  %v1194 = vrot.slane %v1193, 2
  %v1195 = vadd.f32 %v1193, %v1194
  %v1196 = vrot.slane %v1195, 1
  %v1197 = vadd.f32 %v1195, %v1196
  %vm1198 = vcmask 1040384
  %v1199 = vsel %vm1198, %v995, %v1107
  %v1200 = vsel %vm1198, %v1001, %v1113
  %v1201 = vsel %vm1198, %v1007, %v1119
  %v1202 = vsel %vm1198, %v1013, %v1125
  %v1203 = vsel %vm1198, %v1019, %v1131
  %v1204 = vsel %vm1198, %v1025, %v1137
  %v1205 = vsel %vm1198, %v1031, %v1143
  %v1206 = vsel %vm1198, %v1037, %v1149
  %v1207 = vsel %vm1198, %v1043, %v1155
  %v1208 = vsel %vm1198, %v1049, %v1161
  %v1209 = vsel %vm1198, %v1055, %v1167
  %v1210 = vsel %vm1198, %v1061, %v1173
  %v1211 = vsel %vm1198, %v1067, %v1179
  %v1212 = vsel %vm1198, %v1073, %v1185
  %v1213 = vsel %vm1198, %v1079, %v1191
  %v1214 = vsel %vm1198, %v1085, %v1197
  %v1215 = vpack.c.bf16 %v805, %v792
  %v1216 = vpack.c.bf16 %v831, %v818
  %v1217 = vpack.c.bf16 %v857, %v844
  %v1218 = vpack.c.bf16 %v883, %v870
  %v1219 = vpack.c.bf16 %v909, %v896
  %v1220 = vpack.c.bf16 %v935, %v922
  %v1221 = vpack.c.bf16 %v961, %v948
  %v1222 = vpack.c.bf16 %v987, %v974
  %1223 = vst [vmem:[%s2] sm:$0xff] %v1215
  %1224 = vst [vmem:[%s2 + $0x8] sm:$0xff] %v1216
  %1225 = vst [vmem:[%s2 + $0x10] sm:$0xff] %v1217
  %1226 = vst [vmem:[%s2 + $0x18] sm:$0xff] %v1218
  %1227 = vst [vmem:[%s2 + $0x20] sm:$0xff] %v1219
  %1228 = vst [vmem:[%s2 + $0x28] sm:$0xff] %v1220
  %1229 = vst [vmem:[%s2 + $0x30] sm:$0xff] %v1221
  %1230 = vst [vmem:[%s2 + $0x38] sm:$0xff] %v1222
  %v1247 = vrot.slane %v1200, 6
  %v1248 = vrot.slane %v1201, 4
  %v1249 = vrot.slane %v1202, 2
  %v1250 = vrot.slane %v1204, 6
  %v1251 = vrot.slane %v1205, 4
  %v1252 = vrot.slane %v1206, 2
  %v1253 = vrot.slane %v1208, 6
  %v1254 = vrot.slane %v1209, 4
  %v1255 = vrot.slane %v1210, 2
  %v1256 = vrot.slane %v1212, 6
  %v1257 = vrot.slane %v1213, 4
  %v1258 = vrot.slane %v1214, 2
  %vm1259 = vcmask 1041408
  %v1260 = vsel %vm1259, %v1199, %v1247
  %vm1261 = vcmask 1045508
  %v1262 = vsel %vm1261, %v1248, %v1249
  %vm1263 = vcmask 1043456
  %v1264 = vsel %vm1263, %v1260, %v1262
  %v1265 = vsel %vm1259, %v1203, %v1250
  %v1266 = vsel %vm1261, %v1251, %v1252
  %v1267 = vsel %vm1263, %v1265, %v1266
  %v1268 = vsel %vm1259, %v1207, %v1253
  %v1269 = vsel %vm1261, %v1254, %v1255
  %v1270 = vsel %vm1263, %v1268, %v1269
  %v1271 = vsel %vm1259, %v1211, %v1256
  %v1272 = vsel %vm1261, %v1257, %v1258
  %v1273 = vsel %vm1263, %v1271, %v1272
  %1278 = vst [vmem:[%s3] sm:$0xff] %v1264
  %1279 = vst [vmem:[%s3 + $0x8] sm:$0xff] %v1267
  %1280 = vst [vmem:[%s3 + $0x10] sm:$0xff] %v1270
  %1281 = vst [vmem:[%s3 + $0x18] sm:$0xff] %v1273
  // Predicated region
  $region10: #{generator_forward.5} parent=0 // pred_check
    _
  $region11: #{generator_forward.5} parent=0 // pred_check_branch
    %1283 = sbr.rel (0) target = $region13
  $region12: #{generator_forward.5} parent=0 // pred_region
    _
  $region13: #{generator_forward.5} parent=0 // pred_fallthru
    _
  // Predicated region
  $region14: #{generator_forward.5} parent=0 // pred_check
    _
  $region15: #{generator_forward.5} parent=0 // pred_check_branch
    %1285 = sbr.rel (0) target = $region17
  $region16: #{generator_forward.5} parent=0 // pred_region
    _
  $region17: #{generator_forward.5} parent=0 // pred_fallthru
    _
  // Predicated region
  $region18: #{generator_forward.5} parent=0 // pred_check
    _
  $region19: #{generator_forward.5} parent=0 // pred_check_branch
    %1287 = sbr.rel (0) target = $region21
  $region20: #{generator_forward.5} parent=0 // pred_region
    _
  $region21: #{generator_forward.5} parent=0 // pred_fallthru
    _
  // Predicated region
  $region22: #{generator_forward.5} parent=0 // pred_check
    _
  $region23: #{generator_forward.5} parent=0 // pred_check_branch
    %1289 = sbr.rel (0) target = $region25
  $region24: #{generator_forward.5} parent=0 // pred_region
    _
  $region25: #{generator_forward.5} parent=0 // pred_fallthru
    _

// kernel: generator_forward.6
$region0: #{generator_forward.6}
  #allocation0 [shape = 'u32[]', space=smem, size = 0x4, offset = 0x4, fixed_abs, tag = 'smem constant byte address 0x4 - core index']
  #allocation1 [shape = 'u32[72,128]{1,0:T(1,128)}', space=vmem, size = 0x9000, scoped, tag = 'internal scratch']
  %s0 = inlined_call_operand.vmem [shape: bf16[4,32,512], index: 0, kind: input, shape index: {}]
  %s1 = inlined_call_operand.vmem [shape: bf16[4,512,128], index: 1, kind: input, shape index: {}]
  %s2 = inlined_call_operand.vmem [shape: bf16[4,32,128], index: 2, kind: output, shape index: {0}]
  %s3 = inlined_call_operand.vmem [shape: f32[4,1,2,128], index: 3, kind: output, shape index: {1}]
  %4 = xla_tuple %s2, %s3
  %s5 = sld [smem:[#allocation0]]
  $region49: #{generator_forward.6} parent=0
    _
  %s7 = ssub.s32 1, %s5
  %s8 = scalar_select 0, %s7, %s5
  loop: start=0, step=1, limit=4
  $region2: #{generator_forward.6} parent=0 // loop_pre_header
    _
  $region3: #{generator_forward.6} parent=0 // loop_header
    %s10 = sphi 0, %s14
    %p11 = scmp.ge.s32.totalorder %s10, 4
    %s17 = sphi 0, %s29
    %s18 = sphi 0, %s25
    %s19 = sphi 0, %s17
    %s20 = sphi 0, %s18
    %s21 = sphi 0, %s19
    %s22 = sphi 0, %s20
    %s34 = sphi 0, %s36
    %s37 = sphi 0, %s34
    %s38 = sphi 0, %s37
    %s54 = sphi 0, %s38
    %s60 = sphi 0, %s62
    %s63 = sphi 0, %s60
    %s64 = sphi 0, %s63
    %s80 = sphi 0, %s64
    %s88 = sphi 0, %s90
    %s91 = sphi 0, %s88
    %s92 = sphi 0, %s91
    %s108 = sphi 0, %s92
    %s116 = sphi 0, %s118
    %s119 = sphi 0, %s116
    %s120 = sphi 0, %s119
    %s136 = sphi 0, %s120
  $region4: #{generator_forward.6} parent=0 // loop_header_branch
    %13 = sbr.rel (%p11) target = $region8
  $region5: #{generator_forward.6} parent=0 // loop_body
    %s15 = ssub.s32 %s10, 1
    %s16 = ssub.s32 %s10, 2
    %s23 = sadd.s32 1, %s18
    %p24 = scmp.ge.s32.totalorder %s23, 1
    %s25 = scalar_select %p24, 0, %s23
    %s26 = sadd.s32 1, %s17
    %s27 = scalar_select %p24, %s26, %s17
    %p28 = scmp.ge.s32.totalorder %s27, 2
    %s29 = scalar_select %p28, 0, %s27
    %s30 = ssub.s32 %s17, %s29
    %s31 = ssub.s32 %s18, %s25
    %s32 = sor.u32 %s30, %s31
    %p33 = scmp.eq.s32.totalorder %s32, 0
    %s35 = sadd.s32 %s34, 1
    %s36 = scalar_select %p33, %s34, %s35
    %p39 = pneg %p33
    %p40 = scmp.eq.s32.totalorder %s10, 1
    %p41 = por %p39, %p40
    %p42 = scmp.ne.s32.totalorder %s34, %s37
    %p43 = scmp.eq.s32.totalorder %s10, 0
    %p44 = por %p42, %p43
    %p45 = scmp.ne.s32.totalorder %s34, %s37
    %p46 = scmp.eq.s32.totalorder %s15, 1
    %p47 = por %p45, %p46
    %p48 = scmp.ne.s32.totalorder %s37, %s38
    %p49 = scmp.eq.s32.totalorder %s15, 0
    %p50 = por %p48, %p49
    %p51 = scmp.ne.s32.totalorder %s37, %s38
    %p52 = scmp.eq.s32.totalorder %s16, 1
    %p53 = por %p51, %p52
    %p55 = scmp.ne.s32.totalorder %s38, %s54
    %p56 = scmp.eq.s32.totalorder %s16, 0
    %p57 = por %p55, %p56
    %s58 = ssub.s32 %s17, %s29
    %p59 = scmp.eq.s32.totalorder %s58, 0
    %s61 = sadd.s32 %s60, 1
    %s62 = scalar_select %p59, %s60, %s61
    %p65 = pneg %p59
    %p66 = scmp.eq.s32.totalorder %s10, 1
    %p67 = por %p65, %p66
    %p68 = scmp.ne.s32.totalorder %s60, %s63
    %p69 = scmp.eq.s32.totalorder %s10, 0
    %p70 = por %p68, %p69
    %p71 = scmp.ne.s32.totalorder %s60, %s63
    %p72 = scmp.eq.s32.totalorder %s15, 1
    %p73 = por %p71, %p72
    %p74 = scmp.ne.s32.totalorder %s63, %s64
    %p75 = scmp.eq.s32.totalorder %s15, 0
    %p76 = por %p74, %p75
    %p77 = scmp.ne.s32.totalorder %s63, %s64
    %p78 = scmp.eq.s32.totalorder %s16, 1
    %p79 = por %p77, %p78
    %p81 = scmp.ne.s32.totalorder %s64, %s80
    %p82 = scmp.eq.s32.totalorder %s16, 0
    %p83 = por %p81, %p82
    %s84 = ssub.s32 %s17, %s29
    %s85 = ssub.s32 %s18, %s25
    %s86 = sor.u32 %s84, %s85
    %p87 = scmp.eq.s32.totalorder %s86, 0
    %s89 = sadd.s32 %s88, 1
    %s90 = scalar_select %p87, %s88, %s89
    %p93 = pneg %p87
    %p94 = scmp.eq.s32.totalorder %s10, 1
    %p95 = por %p93, %p94
    %p96 = scmp.ne.s32.totalorder %s88, %s91
    %p97 = scmp.eq.s32.totalorder %s10, 0
    %p98 = por %p96, %p97
    %p99 = scmp.ne.s32.totalorder %s88, %s91
    %p100 = scmp.eq.s32.totalorder %s15, 1
    %p101 = por %p99, %p100
    %p102 = scmp.ne.s32.totalorder %s91, %s92
    %p103 = scmp.eq.s32.totalorder %s15, 0
    %p104 = por %p102, %p103
    %p105 = scmp.ne.s32.totalorder %s91, %s92
    %p106 = scmp.eq.s32.totalorder %s16, 1
    %p107 = por %p105, %p106
    %p109 = scmp.ne.s32.totalorder %s92, %s108
    %p110 = scmp.eq.s32.totalorder %s16, 0
    %p111 = por %p109, %p110
    %s112 = ssub.s32 %s17, %s29
    %s113 = ssub.s32 %s18, %s25
    %s114 = sor.u32 %s112, %s113
    %p115 = scmp.eq.s32.totalorder %s114, 0
    %s117 = sadd.s32 %s116, 1
    %s118 = scalar_select %p115, %s116, %s117
    %p121 = pneg %p115
    %p122 = scmp.eq.s32.totalorder %s10, 1
    %p123 = por %p121, %p122
    %p124 = scmp.ne.s32.totalorder %s116, %s119
    %p125 = scmp.eq.s32.totalorder %s10, 0
    %p126 = por %p124, %p125
    %p127 = scmp.ne.s32.totalorder %s116, %s119
    %p128 = scmp.eq.s32.totalorder %s15, 1
    %p129 = por %p127, %p128
    %p130 = scmp.ne.s32.totalorder %s119, %s120
    %p131 = scmp.eq.s32.totalorder %s15, 0
    %p132 = por %p130, %p131
    %p133 = scmp.ne.s32.totalorder %s119, %s120
    %p134 = scmp.eq.s32.totalorder %s16, 1
    %p135 = por %p133, %p134
    %p137 = scmp.ne.s32.totalorder %s120, %s136
    %p138 = scmp.eq.s32.totalorder %s16, 0
    %p139 = por %p137, %p138
    %p140 = scmp.le.s32.totalorder 1, %s10
    %p141 = scmp.lt.s32.totalorder %s10, 3
    %p142 = pnand %p140, %p141
    %p143 = pneg %p142
    // Predicated region
    $region9: #{generator_forward.6} parent=5 // pred_check
      _
    $region10: #{generator_forward.6} parent=5 // pred_check_branch
      %145 = sbr.rel (%p142) target = $region12
    $region11: #{generator_forward.6} parent=5 // pred_region
      %s146 = ssub.s32 %s10, 1
    $region12: #{generator_forward.6} parent=5 // pred_fallthru
      _
    %p147 = scmp.lt.s32.totalorder %s10, 2
    // Predicated region
    $region13: #{generator_forward.6} parent=5 // pred_check
      %p148 = pneg %p147
    $region14: #{generator_forward.6} parent=5 // pred_check_branch
      %150 = sbr.rel (%p148) target = $region16
    $region15: #{generator_forward.6} parent=5 // pred_region
      // Predicated region
      $region17: #{generator_forward.6} parent=15 // pred_check
        %p151 = pneg %p44
      $region18: #{generator_forward.6} parent=15 // pred_check_branch
        %153 = sbr.rel (%p151) target = $region20
      $region19: #{generator_forward.6} parent=15 // pred_region
        %s154 = smul.u32 2, %s17
        %s155 = smul.u32 4, %s18
        %p156 = scmp.lt.s32.totalorder %s154, 3
        %s157 = scalar_select %p156, %s154, 3
        %p158 = scmp.lt.s32.totalorder %s155, 3
        %s159 = scalar_select %p158, %s155, 3
        %s160 = smul.addr %s159, 4
        %s161 = smul.addr %s157, 16
        %s162 = sadd.s32 %s160, %s161
        %s163 = smul.addr %s162, 4
        %s164 = scalar_lea.vmem %s0, %s163
        %s165 = smul.u32 2, %s17
        %s166 = smul.u32 4, %s18
      $region20: #{generator_forward.6} parent=15 // pred_fallthru
        _
      // Predicated region
      $region21: #{generator_forward.6} parent=15 // pred_check
        %p167 = pneg %p70
      $region22: #{generator_forward.6} parent=15 // pred_check_branch
        %169 = sbr.rel (%p167) target = $region24
      $region23: #{generator_forward.6} parent=15 // pred_region
        %s170 = smul.u32 2, %s17
        %p171 = scmp.lt.s32.totalorder %s170, 3
        %s172 = scalar_select %p171, %s170, 3
        %s173 = smul.addr %s172, 64
        %s174 = smul.addr %s173, 4
        %s175 = scalar_lea.vmem %s1, %s174
        %s176 = smul.u32 2, %s17
      $region24: #{generator_forward.6} parent=15 // pred_fallthru
        _
    $region16: #{generator_forward.6} parent=5 // pred_fallthru
      _
    %p177 = scmp.le.s32.totalorder 1, %s10
    %p178 = scmp.lt.s32.totalorder %s10, 3
    %p179 = pnand %p177, %p178
    %p180 = pneg %p179
    // Predicated region
    $region25: #{generator_forward.6} parent=5 // pred_check
      _
    $region26: #{generator_forward.6} parent=5 // pred_check_branch
      %182 = sbr.rel (%p179) target = $region28
    $region27: #{generator_forward.6} parent=5 // pred_region
      %s183 = ssub.s32 %s10, 1
      %s184 = smul.u32 2, %s19
      %s185 = smul.u32 4, %s20
      %p186 = scmp.lt.s32.totalorder %s184, 3
      %s187 = scalar_select %p186, %s184, 3
      %p188 = scmp.lt.s32.totalorder %s185, 3
      %s189 = scalar_select %p188, %s185, 3
      %s190 = smul.addr %s189, 4
      %s191 = smul.addr %s187, 16
      %s192 = sadd.s32 %s190, %s191
      %s193 = smul.addr %s192, 4
      %s194 = scalar_lea.vmem %s0, %s193
      %p195 = pneg %p50
      %p196 = pneg %p47
      %s197 = smul.u32 2, %s19
      %p198 = scmp.lt.s32.totalorder %s197, 3
      %s199 = scalar_select %p198, %s197, 3
      %s200 = smul.addr %s199, 64
      %s201 = smul.addr %s200, 4
      %s202 = scalar_lea.vmem %s1, %s201
      %p203 = pneg %p76
      %p204 = pneg %p73
      %p205 = pneg %p104
      %p206 = pneg %p101
      %s207 = smul.u32 2, %s19
      %s208 = smul.u32 4, %s20
      %p209 = scmp.lt.s32.totalorder %s207, 3
      %s210 = scalar_select %p209, %s207, 3
      %p211 = scmp.lt.s32.totalorder %s208, 3
      %s212 = scalar_select %p211, %s208, 3
      %s213 = smul.addr %s210, 4
      %s214 = sadd.s32 %s212, %s213
      %s215 = smul.addr %s214, 4
      %s216 = scalar_lea.vmem %s2, %s215
      %p217 = pneg %p132
      %p218 = pneg %p129
      %s219 = smul.u32 2, %s19
      %p220 = scmp.lt.s32.totalorder %s219, 3
      %s221 = scalar_select %p220, %s219, 3
      %p222 = scmp.lt.s32.totalorder %s20, 0
      %s223 = scalar_select %p222, %s20, 0
      %s224 = sadd.s32 %s223, %s221
      %s225 = smul.addr %s224, 2
      %s226 = scalar_lea.vmem %s3, %s225
      %s227 = smul.u32 2, %s19
      %s228 = smul.u32 4, %s20
      %p229 = scmp.lt.s32.totalorder %s227, 3
      %s230 = scalar_select %p229, %s227, 3
      %p231 = scmp.lt.s32.totalorder %s228, 3
      %s232 = scalar_select %p231, %s228, 3
      %s233 = smul.addr %s232, 4
      %s234 = smul.addr %s230, 16
      %s235 = sadd.s32 %s233, %s234
      %s236 = smul.addr %s235, 4
      %s237 = scalar_lea.vmem %s0, %s236
      %s238 = smul.u32 2, %s19
      %s239 = smul.u32 4, %s20
      %s240 = smul.u32 2, %s19
      %p241 = scmp.lt.s32.totalorder %s240, 3
      %s242 = scalar_select %p241, %s240, 3
      %s243 = smul.addr %s242, 64
      %s244 = smul.addr %s243, 4
      %s245 = scalar_lea.vmem %s1, %s244
      %s246 = smul.u32 2, %s19
      %s247 = smul.u32 2, %s19
      %s248 = smul.u32 4, %s20
      %p249 = scmp.lt.s32.totalorder %s247, 3
      %s250 = scalar_select %p249, %s247, 3
      %p251 = scmp.lt.s32.totalorder %s248, 3
      %s252 = scalar_select %p251, %s248, 3
      %s253 = smul.addr %s250, 4
      %s254 = sadd.s32 %s252, %s253
      %s255 = smul.addr %s254, 4
      %s256 = scalar_lea.vmem %s2, %s255
      %s257 = smul.u32 2, %s19
      %s258 = smul.u32 4, %s20
      %s259 = smul.u32 2, %s19
      %p260 = scmp.lt.s32.totalorder %s259, 3
      %s261 = scalar_select %p260, %s259, 3
      %p262 = scmp.lt.s32.totalorder %s20, 0
      %s263 = scalar_select %p262, %s20, 0
      %s264 = sadd.s32 %s263, %s261
      %s265 = smul.addr %s264, 2
      %s266 = scalar_lea.vmem %s3, %s265
      %s267 = smul.u32 2, %s19
      %v268 = vld [vmem:[%s237] sm:$0xff]
      %v269 = vld [vmem:[%s237 + $0x8] sm:$0xff]
      %v270 = vld [vmem:[%s237 + $0x10] sm:$0xff]
      %v271 = vld [vmem:[%s237 + $0x18] sm:$0xff]
      %v272 = vld [vmem:[%s237 + $0x20] sm:$0xff]
      %v273 = vld [vmem:[%s237 + $0x28] sm:$0xff]
      %v274 = vld [vmem:[%s237 + $0x30] sm:$0xff]
      %v275 = vld [vmem:[%s237 + $0x38] sm:$0xff]
      %v276 = vld [vmem:[%s245] sm:$0xf]
      %v277 = vld [vmem:[%s245 + $0x4] sm:$0xf]
      %v278 = vld [vmem:[%s245 + $0x8] sm:$0xf]
      %v279 = vld [vmem:[%s245 + $0xc] sm:$0xf]
      %v280 = vld [vmem:[%s245 + $0x10] sm:$0xf]
      %v281 = vld [vmem:[%s245 + $0x14] sm:$0xf]
      %v282 = vld [vmem:[%s245 + $0x18] sm:$0xf]
      %v283 = vld [vmem:[%s245 + $0x1c] sm:$0xf]
      %v284 = vld [vmem:[%s245 + $0x20] sm:$0xf]
      %v285 = vld [vmem:[%s245 + $0x24] sm:$0xf]
      %v286 = vld [vmem:[%s245 + $0x28] sm:$0xf]
      %v287 = vld [vmem:[%s245 + $0x2c] sm:$0xf]
      %v288 = vld [vmem:[%s245 + $0x30] sm:$0xf]
      %v289 = vld [vmem:[%s245 + $0x34] sm:$0xf]
      %v290 = vld [vmem:[%s245 + $0x38] sm:$0xf]
      %v291 = vld [vmem:[%s245 + $0x3c] sm:$0xf]
      %v292 = vld [vmem:[%s245 + $0x40] sm:$0xf]
      %v293 = vld [vmem:[%s245 + $0x44] sm:$0xf]
      %v294 = vld [vmem:[%s245 + $0x48] sm:$0xf]
      %v295 = vld [vmem:[%s245 + $0x4c] sm:$0xf]
      %v296 = vld [vmem:[%s245 + $0x50] sm:$0xf]
      %v297 = vld [vmem:[%s245 + $0x54] sm:$0xf]
      %v298 = vld [vmem:[%s245 + $0x58] sm:$0xf]
      %v299 = vld [vmem:[%s245 + $0x5c] sm:$0xf]
      %v300 = vld [vmem:[%s245 + $0x60] sm:$0xf]
      %v301 = vld [vmem:[%s245 + $0x64] sm:$0xf]
      %v302 = vld [vmem:[%s245 + $0x68] sm:$0xf]
      %v303 = vld [vmem:[%s245 + $0x6c] sm:$0xf]
      %v304 = vld [vmem:[%s245 + $0x70] sm:$0xf]
      %v305 = vld [vmem:[%s245 + $0x74] sm:$0xf]
      %v306 = vld [vmem:[%s245 + $0x78] sm:$0xf]
      %v307 = vld [vmem:[%s245 + $0x7c] sm:$0xf]
      %v308 = vld [vmem:[%s245 + $0x80] sm:$0xf]
      %v309 = vld [vmem:[%s245 + $0x84] sm:$0xf]
      %v310 = vld [vmem:[%s245 + $0x88] sm:$0xf]
      %v311 = vld [vmem:[%s245 + $0x8c] sm:$0xf]
      %v312 = vld [vmem:[%s245 + $0x90] sm:$0xf]
      %v313 = vld [vmem:[%s245 + $0x94] sm:$0xf]
      %v314 = vld [vmem:[%s245 + $0x98] sm:$0xf]
      %v315 = vld [vmem:[%s245 + $0x9c] sm:$0xf]
      %v316 = vld [vmem:[%s245 + $0xa0] sm:$0xf]
      %v317 = vld [vmem:[%s245 + $0xa4] sm:$0xf]
      %v318 = vld [vmem:[%s245 + $0xa8] sm:$0xf]
      %v319 = vld [vmem:[%s245 + $0xac] sm:$0xf]
      %v320 = vld [vmem:[%s245 + $0xb0] sm:$0xf]
      %v321 = vld [vmem:[%s245 + $0xb4] sm:$0xf]
      %v322 = vld [vmem:[%s245 + $0xb8] sm:$0xf]
      %v323 = vld [vmem:[%s245 + $0xbc] sm:$0xf]
      %v324 = vld [vmem:[%s245 + $0xc0] sm:$0xf]
      %v325 = vld [vmem:[%s245 + $0xc4] sm:$0xf]
      %v326 = vld [vmem:[%s245 + $0xc8] sm:$0xf]
      %v327 = vld [vmem:[%s245 + $0xcc] sm:$0xf]
      %v328 = vld [vmem:[%s245 + $0xd0] sm:$0xf]
      %v329 = vld [vmem:[%s245 + $0xd4] sm:$0xf]
      %v330 = vld [vmem:[%s245 + $0xd8] sm:$0xf]
      %v331 = vld [vmem:[%s245 + $0xdc] sm:$0xf]
      %v332 = vld [vmem:[%s245 + $0xe0] sm:$0xf]
      %v333 = vld [vmem:[%s245 + $0xe4] sm:$0xf]
      %v334 = vld [vmem:[%s245 + $0xe8] sm:$0xf]
      %v335 = vld [vmem:[%s245 + $0xec] sm:$0xf]
      %v336 = vld [vmem:[%s245 + $0xf0] sm:$0xf]
      %v337 = vld [vmem:[%s245 + $0xf4] sm:$0xf]
      %v338 = vld [vmem:[%s245 + $0xf8] sm:$0xf]
      %v339 = vld [vmem:[%s245 + $0xfc] sm:$0xf]
      %v348 = vunpack.c.l.b16 %v268
      %v349 = vunpack.c.h.b16 %v268
      %v350 = vunpack.c.l.b16 %v269
      %v351 = vunpack.c.h.b16 %v269
      %v352 = vunpack.c.l.b16 %v270
      %v353 = vunpack.c.h.b16 %v270
      %v354 = vunpack.c.l.b16 %v271
      %v355 = vunpack.c.h.b16 %v271
      %v356 = vunpack.c.l.b16 %v272
      %v357 = vunpack.c.h.b16 %v272
      %v358 = vunpack.c.l.b16 %v273
      %v359 = vunpack.c.h.b16 %v273
      %v360 = vunpack.c.l.b16 %v274
      %v361 = vunpack.c.h.b16 %v274
      %v362 = vunpack.c.l.b16 %v275
      %v363 = vunpack.c.h.b16 %v275
      %v364 = vpack.c.b16 %v352, %v348
      %v365 = vpack.c.b16 %v353, %v349
      %v366 = vpack.c.b16 %v354, %v350
      %v367 = vpack.c.b16 %v355, %v351
      %v368 = vpack.c.b16 %v360, %v356
      %v369 = vpack.c.b16 %v361, %v357
      %v370 = vpack.c.b16 %v362, %v358
      %v371 = vpack.c.b16 %v363, %v359
      %v444 = vunpack.c.l.b16 %v276
      %v445 = vunpack.c.l.b16 %v277
      %v446 = vunpack.c.l.b16 %v278
      %v447 = vunpack.c.l.b16 %v279
      %v448 = vunpack.c.l.b16 %v280
      %v449 = vunpack.c.l.b16 %v281
      %v450 = vunpack.c.l.b16 %v282
      %v451 = vunpack.c.l.b16 %v283
      %v452 = vunpack.c.l.b16 %v284
      %v453 = vunpack.c.l.b16 %v285
      %v454 = vunpack.c.l.b16 %v286
      %v455 = vunpack.c.l.b16 %v287
      %v456 = vunpack.c.l.b16 %v288
      %v457 = vunpack.c.l.b16 %v289
      %v458 = vunpack.c.l.b16 %v290
      %v459 = vunpack.c.l.b16 %v291
      %v460 = vunpack.c.l.b16 %v292
      %v461 = vunpack.c.l.b16 %v293
      %v462 = vunpack.c.l.b16 %v294
      %v463 = vunpack.c.l.b16 %v295
      %v464 = vunpack.c.l.b16 %v296
      %v465 = vunpack.c.l.b16 %v297
      %v466 = vunpack.c.l.b16 %v298
      %v467 = vunpack.c.l.b16 %v299
      %v468 = vunpack.c.l.b16 %v300
      %v469 = vunpack.c.l.b16 %v301
      %v470 = vunpack.c.l.b16 %v302
      %v471 = vunpack.c.l.b16 %v303
      %v472 = vunpack.c.l.b16 %v304
      %v473 = vunpack.c.l.b16 %v305
      %v474 = vunpack.c.l.b16 %v306
      %v475 = vunpack.c.l.b16 %v307
      %v476 = vunpack.c.l.b16 %v308
      %v477 = vunpack.c.l.b16 %v309
      %v478 = vunpack.c.l.b16 %v310
      %v479 = vunpack.c.l.b16 %v311
      %v480 = vunpack.c.l.b16 %v312
      %v481 = vunpack.c.l.b16 %v313
      %v482 = vunpack.c.l.b16 %v314
      %v483 = vunpack.c.l.b16 %v315
      %v484 = vunpack.c.l.b16 %v316
      %v485 = vunpack.c.l.b16 %v317
      %v486 = vunpack.c.l.b16 %v318
      %v487 = vunpack.c.l.b16 %v319
      %v488 = vunpack.c.l.b16 %v320
      %v489 = vunpack.c.l.b16 %v321
      %v490 = vunpack.c.l.b16 %v322
      %v491 = vunpack.c.l.b16 %v323
      %v492 = vunpack.c.l.b16 %v324
      %v493 = vunpack.c.l.b16 %v325
      %v494 = vunpack.c.l.b16 %v326
      %v495 = vunpack.c.l.b16 %v327
      %v496 = vunpack.c.l.b16 %v328
      %v497 = vunpack.c.l.b16 %v329
      %v498 = vunpack.c.l.b16 %v330
      %v499 = vunpack.c.l.b16 %v331
      %v500 = vunpack.c.l.b16 %v332
      %v501 = vunpack.c.l.b16 %v333
      %v502 = vunpack.c.l.b16 %v334
      %v503 = vunpack.c.l.b16 %v335
      %v504 = vunpack.c.l.b16 %v336
      %v505 = vunpack.c.l.b16 %v337
      %v506 = vunpack.c.l.b16 %v338
      %v507 = vunpack.c.l.b16 %v339
      %v508 = vpack.c.b16 %v445, %v444
      %v509 = vpack.c.b16 %v447, %v446
      %v510 = vpack.c.b16 %v449, %v448
      %v511 = vpack.c.b16 %v451, %v450
      %v512 = vpack.c.b16 %v453, %v452
      %v513 = vpack.c.b16 %v455, %v454
      %v514 = vpack.c.b16 %v457, %v456
      %v515 = vpack.c.b16 %v459, %v458
      %v516 = vpack.c.b16 %v461, %v460
      %v517 = vpack.c.b16 %v463, %v462
      %v518 = vpack.c.b16 %v465, %v464
      %v519 = vpack.c.b16 %v467, %v466
      %v520 = vpack.c.b16 %v469, %v468
      %v521 = vpack.c.b16 %v471, %v470
      %v522 = vpack.c.b16 %v473, %v472
      %v523 = vpack.c.b16 %v475, %v474
      %v524 = vpack.c.b16 %v477, %v476
      %v525 = vpack.c.b16 %v479, %v478
      %v526 = vpack.c.b16 %v481, %v480
      %v527 = vpack.c.b16 %v483, %v482
      %v528 = vpack.c.b16 %v485, %v484
      %v529 = vpack.c.b16 %v487, %v486
      %v530 = vpack.c.b16 %v489, %v488
      %v531 = vpack.c.b16 %v491, %v490
      %v532 = vpack.c.b16 %v493, %v492
      %v533 = vpack.c.b16 %v495, %v494
      %v534 = vpack.c.b16 %v497, %v496
      %v535 = vpack.c.b16 %v499, %v498
      %v536 = vpack.c.b16 %v501, %v500
      %v537 = vpack.c.b16 %v503, %v502
      %v538 = vpack.c.b16 %v505, %v504
      %v539 = vpack.c.b16 %v507, %v506
      %572 = vmatpush.bf16.msra.mxu0 %v515
      %573 = vmatpush.bf16.msra.mxu0 %v514
      %574 = vmatpush.bf16.msra.mxu0 %v513
      %575 = vmatpush.bf16.msra.mxu0 %v512
      %576 = vmatpush.bf16.msra.mxu0 %v511
      %577 = vmatpush.bf16.msra.mxu0 %v510
      %578 = vmatpush.bf16.msra.mxu0 %v509
      %579 = vmatpush.bf16.msra.mxu0 %v508
      %580 = vmatmul.bf16.gmra.mxu0 %v364
      %v581 = vpop.f32.mrf.mxu0
      %v582 = vadd.f32 0.0, %v581
      %v583 = vpop.f32.mrf.mxu0
      %v584 = vadd.f32 0.0, %v583
      %585 = vmatmul.bf16.gmra.mxu0 %v368
      %v586 = vpop.f32.mrf.mxu0
      %v587 = vadd.f32 0.0, %v586
      %v588 = vpop.f32.mrf.mxu0
      %v589 = vadd.f32 0.0, %v588
      %590 = vdwg.mxu0
      %591 = vmatpush.bf16.msra.mxu0 %v523
      %592 = vmatpush.bf16.msra.mxu0 %v522
      %593 = vmatpush.bf16.msra.mxu0 %v521
      %594 = vmatpush.bf16.msra.mxu0 %v520
      %595 = vmatpush.bf16.msra.mxu0 %v519
      %596 = vmatpush.bf16.msra.mxu0 %v518
      %597 = vmatpush.bf16.msra.mxu0 %v517
      %598 = vmatpush.bf16.msra.mxu0 %v516
      %599 = vmatmul.bf16.gmra.mxu0 %v365
      %v600 = vpop.f32.mrf.mxu0
      %v601 = vadd.f32 %v582, %v600
      %v602 = vpop.f32.mrf.mxu0
      %v603 = vadd.f32 %v584, %v602
      %604 = vmatmul.bf16.gmra.mxu0 %v369
      %v605 = vpop.f32.mrf.mxu0
      %v606 = vadd.f32 %v587, %v605
      %v607 = vpop.f32.mrf.mxu0
      %v608 = vadd.f32 %v589, %v607
      %609 = vdwg.mxu0
      %610 = vmatpush.bf16.msra.mxu0 %v531
      %611 = vmatpush.bf16.msra.mxu0 %v530
      %612 = vmatpush.bf16.msra.mxu0 %v529
      %613 = vmatpush.bf16.msra.mxu0 %v528
      %614 = vmatpush.bf16.msra.mxu0 %v527
      %615 = vmatpush.bf16.msra.mxu0 %v526
      %616 = vmatpush.bf16.msra.mxu0 %v525
      %617 = vmatpush.bf16.msra.mxu0 %v524
      %618 = vmatmul.bf16.gmra.mxu0 %v366
      %v619 = vpop.f32.mrf.mxu0
      %v620 = vadd.f32 %v601, %v619
      %v621 = vpop.f32.mrf.mxu0
      %v622 = vadd.f32 %v603, %v621
      %623 = vmatmul.bf16.gmra.mxu0 %v370
      %v624 = vpop.f32.mrf.mxu0
      %v625 = vadd.f32 %v606, %v624
      %v626 = vpop.f32.mrf.mxu0
      %v627 = vadd.f32 %v608, %v626
      %628 = vdwg.mxu0
      %629 = vmatpush.bf16.msra.mxu0 %v539
      %630 = vmatpush.bf16.msra.mxu0 %v538
      %631 = vmatpush.bf16.msra.mxu0 %v537
      %632 = vmatpush.bf16.msra.mxu0 %v536
      %633 = vmatpush.bf16.msra.mxu0 %v535
      %634 = vmatpush.bf16.msra.mxu0 %v534
      %635 = vmatpush.bf16.msra.mxu0 %v533
      %636 = vmatpush.bf16.msra.mxu0 %v532
      %637 = vmatmul.bf16.gmra.mxu0 %v367
      %v638 = vpop.f32.mrf.mxu0
      %v639 = vadd.f32 %v620, %v638
      %v640 = vpop.f32.mrf.mxu0
      %v641 = vadd.f32 %v622, %v640
      %642 = vmatmul.bf16.gmra.mxu0 %v371
      %v643 = vpop.f32.mrf.mxu0
      %v644 = vadd.f32 %v625, %v643
      %v645 = vpop.f32.mrf.mxu0
      %v646 = vadd.f32 %v627, %v645
      %647 = vdwg.mxu0
      %v648 = vadd.f32 %v639, %v641
      %v649 = vadd.f32 %v648, %v644
      %v650 = vadd.f32 %v649, %v646
      %v651 = vrot.slane %v650, 4
      %v652 = vadd.f32 %v650, %v651
      %v653 = vrot.slane %v652, 2
      %v654 = vadd.f32 %v652, %v653
      %v655 = vrot.slane %v654, 1
      %v656 = vadd.f32 %v654, %v655
      %v657 = vmul.f32 %v639, %v639
      %v658 = vmul.f32 %v641, %v641
      %v659 = vmul.f32 %v644, %v644
      %v660 = vmul.f32 %v646, %v646
      %v661 = vadd.f32 %v657, %v658
      %v662 = vadd.f32 %v661, %v659
      %v663 = vadd.f32 %v662, %v660
      %v664 = vrot.slane %v663, 4
      %v665 = vadd.f32 %v663, %v664
      %v666 = vrot.slane %v665, 2
      %v667 = vadd.f32 %v665, %v666
      %v668 = vrot.slane %v667, 1
      %v669 = vadd.f32 %v667, %v668
      %vm670 = vcmask 1040384
      %v671 = vsel %vm670, %v656, %v669
      %v672 = vpack.c.bf16 %v639, %v639
      %v673 = vpack.c.bf16 %v641, %v641
      %v674 = vpack.c.bf16 %v644, %v644
      %v675 = vpack.c.bf16 %v646, %v646
      %676 = vst [vmem:[%s256] sm:$0xf] %v672
      %677 = vst [vmem:[%s256 + $0x4] sm:$0xf] %v673
      %678 = vst [vmem:[%s256 + $0x8] sm:$0xf] %v674
      %679 = vst [vmem:[%s256 + $0xc] sm:$0xf] %v675
      %s680 = scalar_lea.vmem %s237, 64
      %v681 = vld [vmem:[%s680] sm:$0xff]
      %v682 = vld [vmem:[%s680 + $0x8] sm:$0xff]
      %v683 = vld [vmem:[%s680 + $0x10] sm:$0xff]
      %v684 = vld [vmem:[%s680 + $0x18] sm:$0xff]
      %v685 = vld [vmem:[%s680 + $0x20] sm:$0xff]
      %v686 = vld [vmem:[%s680 + $0x28] sm:$0xff]
      %v687 = vld [vmem:[%s680 + $0x30] sm:$0xff]
      %v688 = vld [vmem:[%s680 + $0x38] sm:$0xff]
      %s689 = scalar_lea.vmem %s245, 256
      %v690 = vld [vmem:[%s689] sm:$0xf]
      %v691 = vld [vmem:[%s689 + $0x4] sm:$0xf]
      %v692 = vld [vmem:[%s689 + $0x8] sm:$0xf]
      %v693 = vld [vmem:[%s689 + $0xc] sm:$0xf]
      %v694 = vld [vmem:[%s689 + $0x10] sm:$0xf]
      %v695 = vld [vmem:[%s689 + $0x14] sm:$0xf]
      %v696 = vld [vmem:[%s689 + $0x18] sm:$0xf]
      %v697 = vld [vmem:[%s689 + $0x1c] sm:$0xf]
      %v698 = vld [vmem:[%s689 + $0x20] sm:$0xf]
      %v699 = vld [vmem:[%s689 + $0x24] sm:$0xf]
      %v700 = vld [vmem:[%s689 + $0x28] sm:$0xf]
      %v701 = vld [vmem:[%s689 + $0x2c] sm:$0xf]
      %v702 = vld [vmem:[%s689 + $0x30] sm:$0xf]
      %v703 = vld [vmem:[%s689 + $0x34] sm:$0xf]
      %v704 = vld [vmem:[%s689 + $0x38] sm:$0xf]
      %v705 = vld [vmem:[%s689 + $0x3c] sm:$0xf]
      %v706 = vld [vmem:[%s689 + $0x40] sm:$0xf]
      %v707 = vld [vmem:[%s689 + $0x44] sm:$0xf]
      %v708 = vld [vmem:[%s689 + $0x48] sm:$0xf]
      %v709 = vld [vmem:[%s689 + $0x4c] sm:$0xf]
      %v710 = vld [vmem:[%s689 + $0x50] sm:$0xf]
      %v711 = vld [vmem:[%s689 + $0x54] sm:$0xf]
      %v712 = vld [vmem:[%s689 + $0x58] sm:$0xf]
      %v713 = vld [vmem:[%s689 + $0x5c] sm:$0xf]
      %v714 = vld [vmem:[%s689 + $0x60] sm:$0xf]
      %v715 = vld [vmem:[%s689 + $0x64] sm:$0xf]
      %v716 = vld [vmem:[%s689 + $0x68] sm:$0xf]
      %v717 = vld [vmem:[%s689 + $0x6c] sm:$0xf]
      %v718 = vld [vmem:[%s689 + $0x70] sm:$0xf]
      %v719 = vld [vmem:[%s689 + $0x74] sm:$0xf]
      %v720 = vld [vmem:[%s689 + $0x78] sm:$0xf]
      %v721 = vld [vmem:[%s689 + $0x7c] sm:$0xf]
      %v722 = vld [vmem:[%s689 + $0x80] sm:$0xf]
      %v723 = vld [vmem:[%s689 + $0x84] sm:$0xf]
      %v724 = vld [vmem:[%s689 + $0x88] sm:$0xf]
      %v725 = vld [vmem:[%s689 + $0x8c] sm:$0xf]
      %v726 = vld [vmem:[%s689 + $0x90] sm:$0xf]
      %v727 = vld [vmem:[%s689 + $0x94] sm:$0xf]
      %v728 = vld [vmem:[%s689 + $0x98] sm:$0xf]
      %v729 = vld [vmem:[%s689 + $0x9c] sm:$0xf]
      %v730 = vld [vmem:[%s689 + $0xa0] sm:$0xf]
      %v731 = vld [vmem:[%s689 + $0xa4] sm:$0xf]
      %v732 = vld [vmem:[%s689 + $0xa8] sm:$0xf]
      %v733 = vld [vmem:[%s689 + $0xac] sm:$0xf]
      %v734 = vld [vmem:[%s689 + $0xb0] sm:$0xf]
      %v735 = vld [vmem:[%s689 + $0xb4] sm:$0xf]
      %v736 = vld [vmem:[%s689 + $0xb8] sm:$0xf]
      %v737 = vld [vmem:[%s689 + $0xbc] sm:$0xf]
      %v738 = vld [vmem:[%s689 + $0xc0] sm:$0xf]
      %v739 = vld [vmem:[%s689 + $0xc4] sm:$0xf]
      %v740 = vld [vmem:[%s689 + $0xc8] sm:$0xf]
      %v741 = vld [vmem:[%s689 + $0xcc] sm:$0xf]
      %v742 = vld [vmem:[%s689 + $0xd0] sm:$0xf]
      %v743 = vld [vmem:[%s689 + $0xd4] sm:$0xf]
      %v744 = vld [vmem:[%s689 + $0xd8] sm:$0xf]
      %v745 = vld [vmem:[%s689 + $0xdc] sm:$0xf]
      %v746 = vld [vmem:[%s689 + $0xe0] sm:$0xf]
      %v747 = vld [vmem:[%s689 + $0xe4] sm:$0xf]
      %v748 = vld [vmem:[%s689 + $0xe8] sm:$0xf]
      %v749 = vld [vmem:[%s689 + $0xec] sm:$0xf]
      %v750 = vld [vmem:[%s689 + $0xf0] sm:$0xf]
      %v751 = vld [vmem:[%s689 + $0xf4] sm:$0xf]
      %v752 = vld [vmem:[%s689 + $0xf8] sm:$0xf]
      %v753 = vld [vmem:[%s689 + $0xfc] sm:$0xf]
      %v762 = vunpack.c.l.b16 %v681
      %v763 = vunpack.c.h.b16 %v681
      %v764 = vunpack.c.l.b16 %v682
      %v765 = vunpack.c.h.b16 %v682
      %v766 = vunpack.c.l.b16 %v683
      %v767 = vunpack.c.h.b16 %v683
      %v768 = vunpack.c.l.b16 %v684
      %v769 = vunpack.c.h.b16 %v684
      %v770 = vunpack.c.l.b16 %v685
      %v771 = vunpack.c.h.b16 %v685
      %v772 = vunpack.c.l.b16 %v686
      %v773 = vunpack.c.h.b16 %v686
      %v774 = vunpack.c.l.b16 %v687
      %v775 = vunpack.c.h.b16 %v687
      %v776 = vunpack.c.l.b16 %v688
      %v777 = vunpack.c.h.b16 %v688
      %v778 = vpack.c.b16 %v766, %v762
      %v779 = vpack.c.b16 %v767, %v763
      %v780 = vpack.c.b16 %v768, %v764
      %v781 = vpack.c.b16 %v769, %v765
      %v782 = vpack.c.b16 %v774, %v770
      %v783 = vpack.c.b16 %v775, %v771
      %v784 = vpack.c.b16 %v776, %v772
      %v785 = vpack.c.b16 %v777, %v773
      %v858 = vunpack.c.l.b16 %v690
      %v859 = vunpack.c.l.b16 %v691
      %v860 = vunpack.c.l.b16 %v692
      %v861 = vunpack.c.l.b16 %v693
      %v862 = vunpack.c.l.b16 %v694
      %v863 = vunpack.c.l.b16 %v695
      %v864 = vunpack.c.l.b16 %v696
      %v865 = vunpack.c.l.b16 %v697
      %v866 = vunpack.c.l.b16 %v698
      %v867 = vunpack.c.l.b16 %v699
      %v868 = vunpack.c.l.b16 %v700
      %v869 = vunpack.c.l.b16 %v701
      %v870 = vunpack.c.l.b16 %v702
      %v871 = vunpack.c.l.b16 %v703
      %v872 = vunpack.c.l.b16 %v704
      %v873 = vunpack.c.l.b16 %v705
      %v874 = vunpack.c.l.b16 %v706
      %v875 = vunpack.c.l.b16 %v707
      %v876 = vunpack.c.l.b16 %v708
      %v877 = vunpack.c.l.b16 %v709
      %v878 = vunpack.c.l.b16 %v710
      %v879 = vunpack.c.l.b16 %v711
      %v880 = vunpack.c.l.b16 %v712
      %v881 = vunpack.c.l.b16 %v713
      %v882 = vunpack.c.l.b16 %v714
      %v883 = vunpack.c.l.b16 %v715
      %v884 = vunpack.c.l.b16 %v716
      %v885 = vunpack.c.l.b16 %v717
      %v886 = vunpack.c.l.b16 %v718
      %v887 = vunpack.c.l.b16 %v719
      %v888 = vunpack.c.l.b16 %v720
      %v889 = vunpack.c.l.b16 %v721
      %v890 = vunpack.c.l.b16 %v722
      %v891 = vunpack.c.l.b16 %v723
      %v892 = vunpack.c.l.b16 %v724
      %v893 = vunpack.c.l.b16 %v725
      %v894 = vunpack.c.l.b16 %v726
      %v895 = vunpack.c.l.b16 %v727
      %v896 = vunpack.c.l.b16 %v728
      %v897 = vunpack.c.l.b16 %v729
      %v898 = vunpack.c.l.b16 %v730
      %v899 = vunpack.c.l.b16 %v731
      %v900 = vunpack.c.l.b16 %v732
      %v901 = vunpack.c.l.b16 %v733
      %v902 = vunpack.c.l.b16 %v734
      %v903 = vunpack.c.l.b16 %v735
      %v904 = vunpack.c.l.b16 %v736
      %v905 = vunpack.c.l.b16 %v737
      %v906 = vunpack.c.l.b16 %v738
      %v907 = vunpack.c.l.b16 %v739
      %v908 = vunpack.c.l.b16 %v740
      %v909 = vunpack.c.l.b16 %v741
      %v910 = vunpack.c.l.b16 %v742
      %v911 = vunpack.c.l.b16 %v743
      %v912 = vunpack.c.l.b16 %v744
      %v913 = vunpack.c.l.b16 %v745
      %v914 = vunpack.c.l.b16 %v746
      %v915 = vunpack.c.l.b16 %v747
      %v916 = vunpack.c.l.b16 %v748
      %v917 = vunpack.c.l.b16 %v749
      %v918 = vunpack.c.l.b16 %v750
      %v919 = vunpack.c.l.b16 %v751
      %v920 = vunpack.c.l.b16 %v752
      %v921 = vunpack.c.l.b16 %v753
      %v922 = vpack.c.b16 %v859, %v858
      %v923 = vpack.c.b16 %v861, %v860
      %v924 = vpack.c.b16 %v863, %v862
      %v925 = vpack.c.b16 %v865, %v864
      %v926 = vpack.c.b16 %v867, %v866
      %v927 = vpack.c.b16 %v869, %v868
      %v928 = vpack.c.b16 %v871, %v870
      %v929 = vpack.c.b16 %v873, %v872
      %v930 = vpack.c.b16 %v875, %v874
      %v931 = vpack.c.b16 %v877, %v876
      %v932 = vpack.c.b16 %v879, %v878
      %v933 = vpack.c.b16 %v881, %v880
      %v934 = vpack.c.b16 %v883, %v882
      %v935 = vpack.c.b16 %v885, %v884
      %v936 = vpack.c.b16 %v887, %v886
      %v937 = vpack.c.b16 %v889, %v888
      %v938 = vpack.c.b16 %v891, %v890
      %v939 = vpack.c.b16 %v893, %v892
      %v940 = vpack.c.b16 %v895, %v894
      %v941 = vpack.c.b16 %v897, %v896
      %v942 = vpack.c.b16 %v899, %v898
      %v943 = vpack.c.b16 %v901, %v900
      %v944 = vpack.c.b16 %v903, %v902
      %v945 = vpack.c.b16 %v905, %v904
      %v946 = vpack.c.b16 %v907, %v906
      %v947 = vpack.c.b16 %v909, %v908
      %v948 = vpack.c.b16 %v911, %v910
      %v949 = vpack.c.b16 %v913, %v912
      %v950 = vpack.c.b16 %v915, %v914
      %v951 = vpack.c.b16 %v917, %v916
      %v952 = vpack.c.b16 %v919, %v918
      %v953 = vpack.c.b16 %v921, %v920
      %986 = vmatpush.bf16.msra.mxu0 %v929
      %987 = vmatpush.bf16.msra.mxu0 %v928
      %988 = vmatpush.bf16.msra.mxu0 %v927
      %989 = vmatpush.bf16.msra.mxu0 %v926
      %990 = vmatpush.bf16.msra.mxu0 %v925
      %991 = vmatpush.bf16.msra.mxu0 %v924
      %992 = vmatpush.bf16.msra.mxu0 %v923
      %993 = vmatpush.bf16.msra.mxu0 %v922
      %994 = vmatmul.bf16.gmra.mxu0 %v778
      %v995 = vpop.f32.mrf.mxu0
      %v996 = vadd.f32 0.0, %v995
      %v997 = vpop.f32.mrf.mxu0
      %v998 = vadd.f32 0.0, %v997
      %999 = vmatmul.bf16.gmra.mxu0 %v782
      %v1000 = vpop.f32.mrf.mxu0
      %v1001 = vadd.f32 0.0, %v1000
      %v1002 = vpop.f32.mrf.mxu0
      %v1003 = vadd.f32 0.0, %v1002
      %1004 = vdwg.mxu0
      %1005 = vmatpush.bf16.msra.mxu0 %v937
      %1006 = vmatpush.bf16.msra.mxu0 %v936
      %1007 = vmatpush.bf16.msra.mxu0 %v935
      %1008 = vmatpush.bf16.msra.mxu0 %v934
      %1009 = vmatpush.bf16.msra.mxu0 %v933
      %1010 = vmatpush.bf16.msra.mxu0 %v932
      %1011 = vmatpush.bf16.msra.mxu0 %v931
      %1012 = vmatpush.bf16.msra.mxu0 %v930
      %1013 = vmatmul.bf16.gmra.mxu0 %v779
      %v1014 = vpop.f32.mrf.mxu0
      %v1015 = vadd.f32 %v996, %v1014
      %v1016 = vpop.f32.mrf.mxu0
      %v1017 = vadd.f32 %v998, %v1016
      %1018 = vmatmul.bf16.gmra.mxu0 %v783
      %v1019 = vpop.f32.mrf.mxu0
      %v1020 = vadd.f32 %v1001, %v1019
      %v1021 = vpop.f32.mrf.mxu0
      %v1022 = vadd.f32 %v1003, %v1021
      %1023 = vdwg.mxu0
      %1024 = vmatpush.bf16.msra.mxu0 %v945
      %1025 = vmatpush.bf16.msra.mxu0 %v944
      %1026 = vmatpush.bf16.msra.mxu0 %v943
      %1027 = vmatpush.bf16.msra.mxu0 %v942
      %1028 = vmatpush.bf16.msra.mxu0 %v941
      %1029 = vmatpush.bf16.msra.mxu0 %v940
      %1030 = vmatpush.bf16.msra.mxu0 %v939
      %1031 = vmatpush.bf16.msra.mxu0 %v938
      %1032 = vmatmul.bf16.gmra.mxu0 %v780
      %v1033 = vpop.f32.mrf.mxu0
      %v1034 = vadd.f32 %v1015, %v1033
      %v1035 = vpop.f32.mrf.mxu0
      %v1036 = vadd.f32 %v1017, %v1035
      %1037 = vmatmul.bf16.gmra.mxu0 %v784
      %v1038 = vpop.f32.mrf.mxu0
      %v1039 = vadd.f32 %v1020, %v1038
      %v1040 = vpop.f32.mrf.mxu0
      %v1041 = vadd.f32 %v1022, %v1040
      %1042 = vdwg.mxu0
      %1043 = vmatpush.bf16.msra.mxu0 %v953
      %1044 = vmatpush.bf16.msra.mxu0 %v952
      %1045 = vmatpush.bf16.msra.mxu0 %v951
      %1046 = vmatpush.bf16.msra.mxu0 %v950
      %1047 = vmatpush.bf16.msra.mxu0 %v949
      %1048 = vmatpush.bf16.msra.mxu0 %v948
      %1049 = vmatpush.bf16.msra.mxu0 %v947
      %1050 = vmatpush.bf16.msra.mxu0 %v946
      %1051 = vmatmul.bf16.gmra.mxu0 %v781
      %v1052 = vpop.f32.mrf.mxu0
      %v1053 = vadd.f32 %v1034, %v1052
      %v1054 = vpop.f32.mrf.mxu0
      %v1055 = vadd.f32 %v1036, %v1054
      %1056 = vmatmul.bf16.gmra.mxu0 %v785
      %v1057 = vpop.f32.mrf.mxu0
      %v1058 = vadd.f32 %v1039, %v1057
      %v1059 = vpop.f32.mrf.mxu0
      %v1060 = vadd.f32 %v1041, %v1059
      %1061 = vdwg.mxu0
      %v1062 = vadd.f32 %v1053, %v1055
      %v1063 = vadd.f32 %v1062, %v1058
      %v1064 = vadd.f32 %v1063, %v1060
      %v1065 = vrot.slane %v1064, 4
      %v1066 = vadd.f32 %v1064, %v1065
      %v1067 = vrot.slane %v1066, 2
      %v1068 = vadd.f32 %v1066, %v1067
      %v1069 = vrot.slane %v1068, 1
      %v1070 = vadd.f32 %v1068, %v1069
      %v1071 = vmul.f32 %v1053, %v1053
      %v1072 = vmul.f32 %v1055, %v1055
      %v1073 = vmul.f32 %v1058, %v1058
      %v1074 = vmul.f32 %v1060, %v1060
      %v1075 = vadd.f32 %v1071, %v1072
      %v1076 = vadd.f32 %v1075, %v1073
      %v1077 = vadd.f32 %v1076, %v1074
      %v1078 = vrot.slane %v1077, 4
      %v1079 = vadd.f32 %v1077, %v1078
      %v1080 = vrot.slane %v1079, 2
      %v1081 = vadd.f32 %v1079, %v1080
      %v1082 = vrot.slane %v1081, 1
      %v1083 = vadd.f32 %v1081, %v1082
      %v1084 = vsel %vm670, %v1070, %v1083
      %v1085 = vpack.c.bf16 %v1053, %v1053
      %v1086 = vpack.c.bf16 %v1055, %v1055
      %v1087 = vpack.c.bf16 %v1058, %v1058
      %v1088 = vpack.c.bf16 %v1060, %v1060
      %s1089 = scalar_lea.vmem %s256, 16
      %1090 = vst [vmem:[%s1089] sm:$0xf] %v1085
      %1091 = vst [vmem:[%s1089 + $0x4] sm:$0xf] %v1086
      %1092 = vst [vmem:[%s1089 + $0x8] sm:$0xf] %v1087
      %1093 = vst [vmem:[%s1089 + $0xc] sm:$0xf] %v1088
      %1094 = vst [vmem:[%s266] sm:$0x3] %v671
      %1095 = vst [vmem:[%s266 + $0x2] sm:$0x3] %v1084
      %s1096 = smul.u32 2, %s19
      %s1097 = smul.u32 4, %s20
      %p1098 = scmp.lt.s32.totalorder %s1096, 3
      %s1099 = scalar_select %p1098, %s1096, 3
      %p1100 = scmp.lt.s32.totalorder %s1097, 3
      %s1101 = scalar_select %p1100, %s1097, 3
      %s1102 = smul.addr %s1099, 4
      %s1103 = sadd.s32 %s1101, %s1102
      %s1104 = smul.addr %s1103, 4
      %s1105 = scalar_lea.vmem %s2, %s1104
      %s1106 = smul.u32 2, %s19
      %p1107 = scmp.lt.s32.totalorder %s1106, 3
      %s1108 = scalar_select %p1107, %s1106, 3
      %p1109 = scmp.lt.s32.totalorder %s20, 0
      %s1110 = scalar_select %p1109, %s20, 0
      %s1111 = sadd.s32 %s1110, %s1108
      %s1112 = smul.addr %s1111, 2
      %s1113 = scalar_lea.vmem %s3, %s1112
      // Predicated region
      $region29: #{generator_forward.6} parent=27 // pred_check
        %p1114 = pneg %p101
      $region30: #{generator_forward.6} parent=27 // pred_check_branch
        %1116 = sbr.rel (%p1114) target = $region32
      $region31: #{generator_forward.6} parent=27 // pred_region
        %s1117 = smul.u32 2, %s19
        %s1118 = smul.u32 4, %s20
      $region32: #{generator_forward.6} parent=27 // pred_fallthru
        _
      // Predicated region
      $region33: #{generator_forward.6} parent=27 // pred_check
        %p1119 = pneg %p129
      $region34: #{generator_forward.6} parent=27 // pred_check_branch
        %1121 = sbr.rel (%p1119) target = $region36
      $region35: #{generator_forward.6} parent=27 // pred_region
        %s1122 = smul.u32 2, %s19
      $region36: #{generator_forward.6} parent=27 // pred_fallthru
        _
    $region28: #{generator_forward.6} parent=5 // pred_fallthru
      _
    %p1123 = scmp.le.s32.totalorder 2, %s10
    // Predicated region
    $region37: #{generator_forward.6} parent=5 // pred_check
      %p1124 = pneg %p1123
    $region38: #{generator_forward.6} parent=5 // pred_check_branch
      %1126 = sbr.rel (%p1124) target = $region40
    $region39: #{generator_forward.6} parent=5 // pred_region
      %s1127 = ssub.s32 %s10, 2
      // Predicated region
      $region41: #{generator_forward.6} parent=39 // pred_check
        %p1128 = pneg %p107
      $region42: #{generator_forward.6} parent=39 // pred_check_branch
        %1130 = sbr.rel (%p1128) target = $region44
      $region43: #{generator_forward.6} parent=39 // pred_region
        %s1131 = smul.u32 2, %s21
        %s1132 = smul.u32 4, %s22
        %p1133 = scmp.lt.s32.totalorder %s1131, 3
        %s1134 = scalar_select %p1133, %s1131, 3
        %p1135 = scmp.lt.s32.totalorder %s1132, 3
        %s1136 = scalar_select %p1135, %s1132, 3
        %s1137 = smul.addr %s1134, 4
        %s1138 = sadd.s32 %s1136, %s1137
        %s1139 = smul.addr %s1138, 4
        %s1140 = scalar_lea.vmem %s2, %s1139
      $region44: #{generator_forward.6} parent=39 // pred_fallthru
        _
      // Predicated region
      $region45: #{generator_forward.6} parent=39 // pred_check
        %p1141 = pneg %p135
      $region46: #{generator_forward.6} parent=39 // pred_check_branch
        %1143 = sbr.rel (%p1141) target = $region48
      $region47: #{generator_forward.6} parent=39 // pred_region
        %s1144 = smul.u32 2, %s21
        %p1145 = scmp.lt.s32.totalorder %s1144, 3
        %s1146 = scalar_select %p1145, %s1144, 3
        %p1147 = scmp.lt.s32.totalorder %s22, 0
        %s1148 = scalar_select %p1147, %s22, 0
        %s1149 = sadd.s32 %s1148, %s1146
        %s1150 = smul.addr %s1149, 2
        %s1151 = scalar_lea.vmem %s3, %s1150
      $region48: #{generator_forward.6} parent=39 // pred_fallthru
        _
    $region40: #{generator_forward.6} parent=5 // pred_fallthru
      _
  $region6: #{generator_forward.6} parent=0 // loop_footer
    %s14 = sadd.s32 1, %s10
  $region7: #{generator_forward.6} parent=0 // loop_footer_branch
    %9 = sbr.rel target = $region3
  $region8: #{generator_forward.6} parent=0 // loop_exit
    _

// kernel: generator_forward.7
$region0: #{generator_forward.7}
  #allocation0 [shape = 'u32[]', space=smem, size = 0x4, offset = 0x4, fixed_abs, tag = 'smem constant byte address 0x4 - core index']
  #allocation1 [shape = 'u32[72,128]{1,0:T(1,128)}', space=vmem, size = 0x9000, scoped, tag = 'internal scratch']
  %s0 = inlined_call_operand.vmem [shape: bf16[4,128,256], index: 0, kind: input, shape index: {}]
  %s1 = inlined_call_operand.vmem [shape: bf16[4,256,128], index: 1, kind: input, shape index: {}]
  %s2 = inlined_call_operand.vmem [shape: bf16[4,128,128], index: 2, kind: output, shape index: {0}]
  %s3 = inlined_call_operand.vmem [shape: f32[4,1,2,128], index: 3, kind: output, shape index: {1}]
  %4 = xla_tuple %s2, %s3
  %s5 = sld [smem:[#allocation0]]
  $region49: #{generator_forward.7} parent=0
    _
  %s7 = ssub.s32 1, %s5
  %s8 = scalar_select 0, %s7, %s5
  loop: start=0, step=1, limit=4
  $region2: #{generator_forward.7} parent=0 // loop_pre_header
    _
  $region3: #{generator_forward.7} parent=0 // loop_header
    %s10 = sphi 0, %s14
    %p11 = scmp.ge.s32.totalorder %s10, 4
    %s17 = sphi 0, %s29
    %s18 = sphi 0, %s25
    %s19 = sphi 0, %s17
    %s20 = sphi 0, %s18
    %s21 = sphi 0, %s19
    %s22 = sphi 0, %s20
    %s34 = sphi 0, %s36
    %s37 = sphi 0, %s34
    %s38 = sphi 0, %s37
    %s54 = sphi 0, %s38
    %s60 = sphi 0, %s62
    %s63 = sphi 0, %s60
    %s64 = sphi 0, %s63
    %s80 = sphi 0, %s64
    %s88 = sphi 0, %s90
    %s91 = sphi 0, %s88
    %s92 = sphi 0, %s91
    %s108 = sphi 0, %s92
    %s116 = sphi 0, %s118
    %s119 = sphi 0, %s116
    %s120 = sphi 0, %s119
    %s136 = sphi 0, %s120
  $region4: #{generator_forward.7} parent=0 // loop_header_branch
    %13 = sbr.rel (%p11) target = $region8
  $region5: #{generator_forward.7} parent=0 // loop_body
    %s15 = ssub.s32 %s10, 1
    %s16 = ssub.s32 %s10, 2
    %s23 = sadd.s32 1, %s18
    %p24 = scmp.ge.s32.totalorder %s23, 1
    %s25 = scalar_select %p24, 0, %s23
    %s26 = sadd.s32 1, %s17
    %s27 = scalar_select %p24, %s26, %s17
    %p28 = scmp.ge.s32.totalorder %s27, 2
    %s29 = scalar_select %p28, 0, %s27
    %s30 = ssub.s32 %s17, %s29
    %s31 = ssub.s32 %s18, %s25
    %s32 = sor.u32 %s30, %s31
    %p33 = scmp.eq.s32.totalorder %s32, 0
    %s35 = sadd.s32 %s34, 1
    %s36 = scalar_select %p33, %s34, %s35
    %p39 = pneg %p33
    %p40 = scmp.eq.s32.totalorder %s10, 1
    %p41 = por %p39, %p40
    %p42 = scmp.ne.s32.totalorder %s34, %s37
    %p43 = scmp.eq.s32.totalorder %s10, 0
    %p44 = por %p42, %p43
    %p45 = scmp.ne.s32.totalorder %s34, %s37
    %p46 = scmp.eq.s32.totalorder %s15, 1
    %p47 = por %p45, %p46
    %p48 = scmp.ne.s32.totalorder %s37, %s38
    %p49 = scmp.eq.s32.totalorder %s15, 0
    %p50 = por %p48, %p49
    %p51 = scmp.ne.s32.totalorder %s37, %s38
    %p52 = scmp.eq.s32.totalorder %s16, 1
    %p53 = por %p51, %p52
    %p55 = scmp.ne.s32.totalorder %s38, %s54
    %p56 = scmp.eq.s32.totalorder %s16, 0
    %p57 = por %p55, %p56
    %s58 = ssub.s32 %s17, %s29
    %p59 = scmp.eq.s32.totalorder %s58, 0
    %s61 = sadd.s32 %s60, 1
    %s62 = scalar_select %p59, %s60, %s61
    %p65 = pneg %p59
    %p66 = scmp.eq.s32.totalorder %s10, 1
    %p67 = por %p65, %p66
    %p68 = scmp.ne.s32.totalorder %s60, %s63
    %p69 = scmp.eq.s32.totalorder %s10, 0
    %p70 = por %p68, %p69
    %p71 = scmp.ne.s32.totalorder %s60, %s63
    %p72 = scmp.eq.s32.totalorder %s15, 1
    %p73 = por %p71, %p72
    %p74 = scmp.ne.s32.totalorder %s63, %s64
    %p75 = scmp.eq.s32.totalorder %s15, 0
    %p76 = por %p74, %p75
    %p77 = scmp.ne.s32.totalorder %s63, %s64
    %p78 = scmp.eq.s32.totalorder %s16, 1
    %p79 = por %p77, %p78
    %p81 = scmp.ne.s32.totalorder %s64, %s80
    %p82 = scmp.eq.s32.totalorder %s16, 0
    %p83 = por %p81, %p82
    %s84 = ssub.s32 %s17, %s29
    %s85 = ssub.s32 %s18, %s25
    %s86 = sor.u32 %s84, %s85
    %p87 = scmp.eq.s32.totalorder %s86, 0
    %s89 = sadd.s32 %s88, 1
    %s90 = scalar_select %p87, %s88, %s89
    %p93 = pneg %p87
    %p94 = scmp.eq.s32.totalorder %s10, 1
    %p95 = por %p93, %p94
    %p96 = scmp.ne.s32.totalorder %s88, %s91
    %p97 = scmp.eq.s32.totalorder %s10, 0
    %p98 = por %p96, %p97
    %p99 = scmp.ne.s32.totalorder %s88, %s91
    %p100 = scmp.eq.s32.totalorder %s15, 1
    %p101 = por %p99, %p100
    %p102 = scmp.ne.s32.totalorder %s91, %s92
    %p103 = scmp.eq.s32.totalorder %s15, 0
    %p104 = por %p102, %p103
    %p105 = scmp.ne.s32.totalorder %s91, %s92
    %p106 = scmp.eq.s32.totalorder %s16, 1
    %p107 = por %p105, %p106
    %p109 = scmp.ne.s32.totalorder %s92, %s108
    %p110 = scmp.eq.s32.totalorder %s16, 0
    %p111 = por %p109, %p110
    %s112 = ssub.s32 %s17, %s29
    %s113 = ssub.s32 %s18, %s25
    %s114 = sor.u32 %s112, %s113
    %p115 = scmp.eq.s32.totalorder %s114, 0
    %s117 = sadd.s32 %s116, 1
    %s118 = scalar_select %p115, %s116, %s117
    %p121 = pneg %p115
    %p122 = scmp.eq.s32.totalorder %s10, 1
    %p123 = por %p121, %p122
    %p124 = scmp.ne.s32.totalorder %s116, %s119
    %p125 = scmp.eq.s32.totalorder %s10, 0
    %p126 = por %p124, %p125
    %p127 = scmp.ne.s32.totalorder %s116, %s119
    %p128 = scmp.eq.s32.totalorder %s15, 1
    %p129 = por %p127, %p128
    %p130 = scmp.ne.s32.totalorder %s119, %s120
    %p131 = scmp.eq.s32.totalorder %s15, 0
    %p132 = por %p130, %p131
    %p133 = scmp.ne.s32.totalorder %s119, %s120
    %p134 = scmp.eq.s32.totalorder %s16, 1
    %p135 = por %p133, %p134
    %p137 = scmp.ne.s32.totalorder %s120, %s136
    %p138 = scmp.eq.s32.totalorder %s16, 0
    %p139 = por %p137, %p138
    %p140 = scmp.le.s32.totalorder 1, %s10
    %p141 = scmp.lt.s32.totalorder %s10, 3
    %p142 = pnand %p140, %p141
    %p143 = pneg %p142
    // Predicated region
    $region9: #{generator_forward.7} parent=5 // pred_check
      _
    $region10: #{generator_forward.7} parent=5 // pred_check_branch
      %145 = sbr.rel (%p142) target = $region12
    $region11: #{generator_forward.7} parent=5 // pred_region
      %s146 = ssub.s32 %s10, 1
    $region12: #{generator_forward.7} parent=5 // pred_fallthru
      _
    %p147 = scmp.lt.s32.totalorder %s10, 2
    // Predicated region
    $region13: #{generator_forward.7} parent=5 // pred_check
      %p148 = pneg %p147
    $region14: #{generator_forward.7} parent=5 // pred_check_branch
      %150 = sbr.rel (%p148) target = $region16
    $region15: #{generator_forward.7} parent=5 // pred_region
      // Predicated region
      $region17: #{generator_forward.7} parent=15 // pred_check
        %p151 = pneg %p44
      $region18: #{generator_forward.7} parent=15 // pred_check_branch
        %153 = sbr.rel (%p151) target = $region20
      $region19: #{generator_forward.7} parent=15 // pred_region
        %s154 = smul.u32 2, %s17
        %s155 = smul.u32 16, %s18
        %p156 = scmp.lt.s32.totalorder %s154, 3
        %s157 = scalar_select %p156, %s154, 3
        %p158 = scmp.lt.s32.totalorder %s155, 15
        %s159 = scalar_select %p158, %s155, 15
        %s160 = smul.addr %s159, 2
        %s161 = smul.addr %s157, 32
        %s162 = sadd.s32 %s160, %s161
        %s163 = smul.addr %s162, 4
        %s164 = scalar_lea.vmem %s0, %s163
        %s165 = smul.u32 2, %s17
        %s166 = smul.u32 16, %s18
      $region20: #{generator_forward.7} parent=15 // pred_fallthru
        _
      // Predicated region
      $region21: #{generator_forward.7} parent=15 // pred_check
        %p167 = pneg %p70
      $region22: #{generator_forward.7} parent=15 // pred_check_branch
        %169 = sbr.rel (%p167) target = $region24
      $region23: #{generator_forward.7} parent=15 // pred_region
        %s170 = smul.u32 2, %s17
        %p171 = scmp.lt.s32.totalorder %s170, 3
        %s172 = scalar_select %p171, %s170, 3
        %s173 = smul.addr %s172, 32
        %s174 = smul.addr %s173, 4
        %s175 = scalar_lea.vmem %s1, %s174
        %s176 = smul.u32 2, %s17
      $region24: #{generator_forward.7} parent=15 // pred_fallthru
        _
    $region16: #{generator_forward.7} parent=5 // pred_fallthru
      _
    %p177 = scmp.le.s32.totalorder 1, %s10
    %p178 = scmp.lt.s32.totalorder %s10, 3
    %p179 = pnand %p177, %p178
    %p180 = pneg %p179
    // Predicated region
    $region25: #{generator_forward.7} parent=5 // pred_check
      _
    $region26: #{generator_forward.7} parent=5 // pred_check_branch
      %182 = sbr.rel (%p179) target = $region28
    $region27: #{generator_forward.7} parent=5 // pred_region
      %s183 = ssub.s32 %s10, 1
      %s184 = smul.u32 2, %s19
      %s185 = smul.u32 16, %s20
      %p186 = scmp.lt.s32.totalorder %s184, 3
      %s187 = scalar_select %p186, %s184, 3
      %p188 = scmp.lt.s32.totalorder %s185, 15
      %s189 = scalar_select %p188, %s185, 15
      %s190 = smul.addr %s189, 2
      %s191 = smul.addr %s187, 32
      %s192 = sadd.s32 %s190, %s191
      %s193 = smul.addr %s192, 4
      %s194 = scalar_lea.vmem %s0, %s193
      %p195 = pneg %p50
      %p196 = pneg %p47
      %s197 = smul.u32 2, %s19
      %p198 = scmp.lt.s32.totalorder %s197, 3
      %s199 = scalar_select %p198, %s197, 3
      %s200 = smul.addr %s199, 32
      %s201 = smul.addr %s200, 4
      %s202 = scalar_lea.vmem %s1, %s201
      %p203 = pneg %p76
      %p204 = pneg %p73
      %p205 = pneg %p104
      %p206 = pneg %p101
      %s207 = smul.u32 2, %s19
      %s208 = smul.u32 16, %s20
      %p209 = scmp.lt.s32.totalorder %s207, 3
      %s210 = scalar_select %p209, %s207, 3
      %p211 = scmp.lt.s32.totalorder %s208, 15
      %s212 = scalar_select %p211, %s208, 15
      %s213 = smul.addr %s210, 16
      %s214 = sadd.s32 %s212, %s213
      %s215 = smul.addr %s214, 4
      %s216 = scalar_lea.vmem %s2, %s215
      %p217 = pneg %p132
      %p218 = pneg %p129
      %s219 = smul.u32 2, %s19
      %p220 = scmp.lt.s32.totalorder %s219, 3
      %s221 = scalar_select %p220, %s219, 3
      %p222 = scmp.lt.s32.totalorder %s20, 0
      %s223 = scalar_select %p222, %s20, 0
      %s224 = sadd.s32 %s223, %s221
      %s225 = smul.addr %s224, 2
      %s226 = scalar_lea.vmem %s3, %s225
      %s227 = smul.u32 2, %s19
      %s228 = smul.u32 16, %s20
      %p229 = scmp.lt.s32.totalorder %s227, 3
      %s230 = scalar_select %p229, %s227, 3
      %p231 = scmp.lt.s32.totalorder %s228, 15
      %s232 = scalar_select %p231, %s228, 15
      %s233 = smul.addr %s232, 2
      %s234 = smul.addr %s230, 32
      %s235 = sadd.s32 %s233, %s234
      %s236 = smul.addr %s235, 4
      %s237 = scalar_lea.vmem %s0, %s236
      %s238 = smul.u32 2, %s19
      %s239 = smul.u32 16, %s20
      %s240 = smul.u32 2, %s19
      %p241 = scmp.lt.s32.totalorder %s240, 3
      %s242 = scalar_select %p241, %s240, 3
      %s243 = smul.addr %s242, 32
      %s244 = smul.addr %s243, 4
      %s245 = scalar_lea.vmem %s1, %s244
      %s246 = smul.u32 2, %s19
      %s247 = smul.u32 2, %s19
      %s248 = smul.u32 16, %s20
      %p249 = scmp.lt.s32.totalorder %s247, 3
      %s250 = scalar_select %p249, %s247, 3
      %p251 = scmp.lt.s32.totalorder %s248, 15
      %s252 = scalar_select %p251, %s248, 15
      %s253 = smul.addr %s250, 16
      %s254 = sadd.s32 %s252, %s253
      %s255 = smul.addr %s254, 4
      %s256 = scalar_lea.vmem %s2, %s255
      %s257 = smul.u32 2, %s19
      %s258 = smul.u32 16, %s20
      %s259 = smul.u32 2, %s19
      %p260 = scmp.lt.s32.totalorder %s259, 3
      %s261 = scalar_select %p260, %s259, 3
      %p262 = scmp.lt.s32.totalorder %s20, 0
      %s263 = scalar_select %p262, %s20, 0
      %s264 = sadd.s32 %s263, %s261
      %s265 = smul.addr %s264, 2
      %s266 = scalar_lea.vmem %s3, %s265
      %s267 = smul.u32 2, %s19
      %v268 = vld [vmem:[%s237] sm:$0xff]
      %v269 = vld [vmem:[%s237 + $0x8] sm:$0xff]
      %v270 = vld [vmem:[%s237 + $0x10] sm:$0xff]
      %v271 = vld [vmem:[%s237 + $0x18] sm:$0xff]
      %v272 = vld [vmem:[%s237 + $0x20] sm:$0xff]
      %v273 = vld [vmem:[%s237 + $0x28] sm:$0xff]
      %v274 = vld [vmem:[%s237 + $0x30] sm:$0xff]
      %v275 = vld [vmem:[%s237 + $0x38] sm:$0xff]
      %v276 = vld [vmem:[%s237 + $0x40] sm:$0xff]
      %v277 = vld [vmem:[%s237 + $0x48] sm:$0xff]
      %v278 = vld [vmem:[%s237 + $0x50] sm:$0xff]
      %v279 = vld [vmem:[%s237 + $0x58] sm:$0xff]
      %v280 = vld [vmem:[%s237 + $0x60] sm:$0xff]
      %v281 = vld [vmem:[%s237 + $0x68] sm:$0xff]
      %v282 = vld [vmem:[%s237 + $0x70] sm:$0xff]
      %v283 = vld [vmem:[%s237 + $0x78] sm:$0xff]
      %v284 = vld [vmem:[%s245] sm:$0xf]
      %v285 = vld [vmem:[%s245 + $0x4] sm:$0xf]
      %v286 = vld [vmem:[%s245 + $0x8] sm:$0xf]
      %v287 = vld [vmem:[%s245 + $0xc] sm:$0xf]
      %v288 = vld [vmem:[%s245 + $0x10] sm:$0xf]
      %v289 = vld [vmem:[%s245 + $0x14] sm:$0xf]
      %v290 = vld [vmem:[%s245 + $0x18] sm:$0xf]
      %v291 = vld [vmem:[%s245 + $0x1c] sm:$0xf]
      %v292 = vld [vmem:[%s245 + $0x20] sm:$0xf]
      %v293 = vld [vmem:[%s245 + $0x24] sm:$0xf]
      %v294 = vld [vmem:[%s245 + $0x28] sm:$0xf]
      %v295 = vld [vmem:[%s245 + $0x2c] sm:$0xf]
      %v296 = vld [vmem:[%s245 + $0x30] sm:$0xf]
      %v297 = vld [vmem:[%s245 + $0x34] sm:$0xf]
      %v298 = vld [vmem:[%s245 + $0x38] sm:$0xf]
      %v299 = vld [vmem:[%s245 + $0x3c] sm:$0xf]
      %v300 = vld [vmem:[%s245 + $0x40] sm:$0xf]
      %v301 = vld [vmem:[%s245 + $0x44] sm:$0xf]
      %v302 = vld [vmem:[%s245 + $0x48] sm:$0xf]
      %v303 = vld [vmem:[%s245 + $0x4c] sm:$0xf]
      %v304 = vld [vmem:[%s245 + $0x50] sm:$0xf]
      %v305 = vld [vmem:[%s245 + $0x54] sm:$0xf]
      %v306 = vld [vmem:[%s245 + $0x58] sm:$0xf]
      %v307 = vld [vmem:[%s245 + $0x5c] sm:$0xf]
      %v308 = vld [vmem:[%s245 + $0x60] sm:$0xf]
      %v309 = vld [vmem:[%s245 + $0x64] sm:$0xf]
      %v310 = vld [vmem:[%s245 + $0x68] sm:$0xf]
      %v311 = vld [vmem:[%s245 + $0x6c] sm:$0xf]
      %v312 = vld [vmem:[%s245 + $0x70] sm:$0xf]
      %v313 = vld [vmem:[%s245 + $0x74] sm:$0xf]
      %v314 = vld [vmem:[%s245 + $0x78] sm:$0xf]
      %v315 = vld [vmem:[%s245 + $0x7c] sm:$0xf]
      %v332 = vunpack.c.l.b16 %v268
      %v333 = vunpack.c.h.b16 %v268
      %v334 = vunpack.c.l.b16 %v269
      %v335 = vunpack.c.h.b16 %v269
      %v336 = vunpack.c.l.b16 %v270
      %v337 = vunpack.c.h.b16 %v270
      %v338 = vunpack.c.l.b16 %v271
      %v339 = vunpack.c.h.b16 %v271
      %v340 = vunpack.c.l.b16 %v272
      %v341 = vunpack.c.h.b16 %v272
      %v342 = vunpack.c.l.b16 %v273
      %v343 = vunpack.c.h.b16 %v273
      %v344 = vunpack.c.l.b16 %v274
      %v345 = vunpack.c.h.b16 %v274
      %v346 = vunpack.c.l.b16 %v275
      %v347 = vunpack.c.h.b16 %v275
      %v348 = vunpack.c.l.b16 %v276
      %v349 = vunpack.c.h.b16 %v276
      %v350 = vunpack.c.l.b16 %v277
      %v351 = vunpack.c.h.b16 %v277
      %v352 = vunpack.c.l.b16 %v278
      %v353 = vunpack.c.h.b16 %v278
      %v354 = vunpack.c.l.b16 %v279
      %v355 = vunpack.c.h.b16 %v279
      %v356 = vunpack.c.l.b16 %v280
      %v357 = vunpack.c.h.b16 %v280
      %v358 = vunpack.c.l.b16 %v281
      %v359 = vunpack.c.h.b16 %v281
      %v360 = vunpack.c.l.b16 %v282
      %v361 = vunpack.c.h.b16 %v282
      %v362 = vunpack.c.l.b16 %v283
      %v363 = vunpack.c.h.b16 %v283
      %v364 = vpack.c.b16 %v334, %v332
      %v365 = vpack.c.b16 %v335, %v333
      %v366 = vpack.c.b16 %v338, %v336
      %v367 = vpack.c.b16 %v339, %v337
      %v368 = vpack.c.b16 %v342, %v340
      %v369 = vpack.c.b16 %v343, %v341
      %v370 = vpack.c.b16 %v346, %v344
      %v371 = vpack.c.b16 %v347, %v345
      %v372 = vpack.c.b16 %v350, %v348
      %v373 = vpack.c.b16 %v351, %v349
      %v374 = vpack.c.b16 %v354, %v352
      %v375 = vpack.c.b16 %v355, %v353
      %v376 = vpack.c.b16 %v358, %v356
      %v377 = vpack.c.b16 %v359, %v357
      %v378 = vpack.c.b16 %v362, %v360
      %v379 = vpack.c.b16 %v363, %v361
      %v428 = vunpack.c.l.b16 %v284
      %v429 = vunpack.c.l.b16 %v285
      %v430 = vunpack.c.l.b16 %v286
      %v431 = vunpack.c.l.b16 %v287
      %v432 = vunpack.c.l.b16 %v288
      %v433 = vunpack.c.l.b16 %v289
      %v434 = vunpack.c.l.b16 %v290
      %v435 = vunpack.c.l.b16 %v291
      %v436 = vunpack.c.l.b16 %v292
      %v437 = vunpack.c.l.b16 %v293
      %v438 = vunpack.c.l.b16 %v294
      %v439 = vunpack.c.l.b16 %v295
      %v440 = vunpack.c.l.b16 %v296
      %v441 = vunpack.c.l.b16 %v297
      %v442 = vunpack.c.l.b16 %v298
      %v443 = vunpack.c.l.b16 %v299
      %v444 = vunpack.c.l.b16 %v300
      %v445 = vunpack.c.l.b16 %v301
      %v446 = vunpack.c.l.b16 %v302
      %v447 = vunpack.c.l.b16 %v303
      %v448 = vunpack.c.l.b16 %v304
      %v449 = vunpack.c.l.b16 %v305
      %v450 = vunpack.c.l.b16 %v306
      %v451 = vunpack.c.l.b16 %v307
      %v452 = vunpack.c.l.b16 %v308
      %v453 = vunpack.c.l.b16 %v309
      %v454 = vunpack.c.l.b16 %v310
      %v455 = vunpack.c.l.b16 %v311
      %v456 = vunpack.c.l.b16 %v312
      %v457 = vunpack.c.l.b16 %v313
      %v458 = vunpack.c.l.b16 %v314
      %v459 = vunpack.c.l.b16 %v315
      %v460 = vpack.c.b16 %v429, %v428
      %v461 = vpack.c.b16 %v431, %v430
      %v462 = vpack.c.b16 %v433, %v432
      %v463 = vpack.c.b16 %v435, %v434
      %v464 = vpack.c.b16 %v437, %v436
      %v465 = vpack.c.b16 %v439, %v438
      %v466 = vpack.c.b16 %v441, %v440
      %v467 = vpack.c.b16 %v443, %v442
      %v468 = vpack.c.b16 %v445, %v444
      %v469 = vpack.c.b16 %v447, %v446
      %v470 = vpack.c.b16 %v449, %v448
      %v471 = vpack.c.b16 %v451, %v450
      %v472 = vpack.c.b16 %v453, %v452
      %v473 = vpack.c.b16 %v455, %v454
      %v474 = vpack.c.b16 %v457, %v456
      %v475 = vpack.c.b16 %v459, %v458
      %492 = vmatpush.bf16.msra.mxu0 %v467
      %493 = vmatpush.bf16.msra.mxu0 %v466
      %494 = vmatpush.bf16.msra.mxu0 %v465
      %495 = vmatpush.bf16.msra.mxu0 %v464
      %496 = vmatpush.bf16.msra.mxu0 %v463
      %497 = vmatpush.bf16.msra.mxu0 %v462
      %498 = vmatpush.bf16.msra.mxu0 %v461
      %499 = vmatpush.bf16.msra.mxu0 %v460
      %500 = vmatmul.bf16.gmra.mxu0 %v364
      %v501 = vpop.f32.mrf.mxu0
      %v502 = vadd.f32 0.0, %v501
      %v503 = vpop.f32.mrf.mxu0
      %v504 = vadd.f32 0.0, %v503
      %505 = vmatmul.bf16.gmra.mxu0 %v366
      %v506 = vpop.f32.mrf.mxu0
      %v507 = vadd.f32 0.0, %v506
      %v508 = vpop.f32.mrf.mxu0
      %v509 = vadd.f32 0.0, %v508
      %510 = vmatmul.bf16.gmra.mxu0 %v368
      %v511 = vpop.f32.mrf.mxu0
      %v512 = vadd.f32 0.0, %v511
      %v513 = vpop.f32.mrf.mxu0
      %v514 = vadd.f32 0.0, %v513
      %515 = vmatmul.bf16.gmra.mxu0 %v370
      %v516 = vpop.f32.mrf.mxu0
      %v517 = vadd.f32 0.0, %v516
      %v518 = vpop.f32.mrf.mxu0
      %v519 = vadd.f32 0.0, %v518
      %520 = vmatmul.bf16.gmra.mxu0 %v372
      %v521 = vpop.f32.mrf.mxu0
      %v522 = vadd.f32 0.0, %v521
      %v523 = vpop.f32.mrf.mxu0
      %v524 = vadd.f32 0.0, %v523
      %525 = vmatmul.bf16.gmra.mxu0 %v374
      %v526 = vpop.f32.mrf.mxu0
      %v527 = vadd.f32 0.0, %v526
      %v528 = vpop.f32.mrf.mxu0
      %v529 = vadd.f32 0.0, %v528
      %530 = vmatmul.bf16.gmra.mxu0 %v376
      %v531 = vpop.f32.mrf.mxu0
      %v532 = vadd.f32 0.0, %v531
      %v533 = vpop.f32.mrf.mxu0
      %v534 = vadd.f32 0.0, %v533
      %535 = vmatmul.bf16.gmra.mxu0 %v378
      %v536 = vpop.f32.mrf.mxu0
      %v537 = vadd.f32 0.0, %v536
      %v538 = vpop.f32.mrf.mxu0
      %v539 = vadd.f32 0.0, %v538
      %540 = vdwg.mxu0
      %541 = vmatpush.bf16.msra.mxu0 %v475
      %542 = vmatpush.bf16.msra.mxu0 %v474
      %543 = vmatpush.bf16.msra.mxu0 %v473
      %544 = vmatpush.bf16.msra.mxu0 %v472
      %545 = vmatpush.bf16.msra.mxu0 %v471
      %546 = vmatpush.bf16.msra.mxu0 %v470
      %547 = vmatpush.bf16.msra.mxu0 %v469
      %548 = vmatpush.bf16.msra.mxu0 %v468
      %549 = vmatmul.bf16.gmra.mxu0 %v365
      %v550 = vpop.f32.mrf.mxu0
      %v551 = vadd.f32 %v502, %v550
      %v552 = vpop.f32.mrf.mxu0
      %v553 = vadd.f32 %v504, %v552
      %554 = vmatmul.bf16.gmra.mxu0 %v367
      %v555 = vpop.f32.mrf.mxu0
      %v556 = vadd.f32 %v507, %v555
      %v557 = vpop.f32.mrf.mxu0
      %v558 = vadd.f32 %v509, %v557
      %559 = vmatmul.bf16.gmra.mxu0 %v369
      %v560 = vpop.f32.mrf.mxu0
      %v561 = vadd.f32 %v512, %v560
      %v562 = vpop.f32.mrf.mxu0
      %v563 = vadd.f32 %v514, %v562
      %564 = vmatmul.bf16.gmra.mxu0 %v371
      %v565 = vpop.f32.mrf.mxu0
      %v566 = vadd.f32 %v517, %v565
      %v567 = vpop.f32.mrf.mxu0
      %v568 = vadd.f32 %v519, %v567
      %569 = vmatmul.bf16.gmra.mxu0 %v373
      %v570 = vpop.f32.mrf.mxu0
      %v571 = vadd.f32 %v522, %v570
      %v572 = vpop.f32.mrf.mxu0
      %v573 = vadd.f32 %v524, %v572
      %574 = vmatmul.bf16.gmra.mxu0 %v375
      %v575 = vpop.f32.mrf.mxu0
      %v576 = vadd.f32 %v527, %v575
      %v577 = vpop.f32.mrf.mxu0
      %v578 = vadd.f32 %v529, %v577
      %579 = vmatmul.bf16.gmra.mxu0 %v377
      %v580 = vpop.f32.mrf.mxu0
      %v581 = vadd.f32 %v532, %v580
      %v582 = vpop.f32.mrf.mxu0
      %v583 = vadd.f32 %v534, %v582
      %584 = vmatmul.bf16.gmra.mxu0 %v379
      %v585 = vpop.f32.mrf.mxu0
      %v586 = vadd.f32 %v537, %v585
      %v587 = vpop.f32.mrf.mxu0
      %v588 = vadd.f32 %v539, %v587
      %589 = vdwg.mxu0
      %v590 = vadd.f32 %v551, %v553
      %v591 = vadd.f32 %v590, %v556
      %v592 = vadd.f32 %v591, %v558
      %v593 = vadd.f32 %v592, %v561
      %v594 = vadd.f32 %v593, %v563
      %v595 = vadd.f32 %v594, %v566
      %v596 = vadd.f32 %v595, %v568
      %v597 = vadd.f32 %v596, %v571
      %v598 = vadd.f32 %v597, %v573
      %v599 = vadd.f32 %v598, %v576
      %v600 = vadd.f32 %v599, %v578
      %v601 = vadd.f32 %v600, %v581
      %v602 = vadd.f32 %v601, %v583
      %v603 = vadd.f32 %v602, %v586
      %v604 = vadd.f32 %v603, %v588
      %v605 = vrot.slane %v604, 4
      %v606 = vadd.f32 %v604, %v605
      %v607 = vrot.slane %v606, 2
      %v608 = vadd.f32 %v606, %v607
      %v609 = vrot.slane %v608, 1
      %v610 = vadd.f32 %v608, %v609
      %v611 = vmul.f32 %v551, %v551
      %v612 = vmul.f32 %v553, %v553
      %v613 = vmul.f32 %v556, %v556
      %v614 = vmul.f32 %v558, %v558
      %v615 = vmul.f32 %v561, %v561
      %v616 = vmul.f32 %v563, %v563
      %v617 = vmul.f32 %v566, %v566
      %v618 = vmul.f32 %v568, %v568
      %v619 = vmul.f32 %v571, %v571
      %v620 = vmul.f32 %v573, %v573
      %v621 = vmul.f32 %v576, %v576
      %v622 = vmul.f32 %v578, %v578
      %v623 = vmul.f32 %v581, %v581
      %v624 = vmul.f32 %v583, %v583
      %v625 = vmul.f32 %v586, %v586
      %v626 = vmul.f32 %v588, %v588
      %v627 = vadd.f32 %v611, %v612
      %v628 = vadd.f32 %v627, %v613
      %v629 = vadd.f32 %v628, %v614
      %v630 = vadd.f32 %v629, %v615
      %v631 = vadd.f32 %v630, %v616
      %v632 = vadd.f32 %v631, %v617
      %v633 = vadd.f32 %v632, %v618
      %v634 = vadd.f32 %v633, %v619
      %v635 = vadd.f32 %v634, %v620
      %v636 = vadd.f32 %v635, %v621
      %v637 = vadd.f32 %v636, %v622
      %v638 = vadd.f32 %v637, %v623
      %v639 = vadd.f32 %v638, %v624
      %v640 = vadd.f32 %v639, %v625
      %v641 = vadd.f32 %v640, %v626
      %v642 = vrot.slane %v641, 4
      %v643 = vadd.f32 %v641, %v642
      %v644 = vrot.slane %v643, 2
      %v645 = vadd.f32 %v643, %v644
      %v646 = vrot.slane %v645, 1
      %v647 = vadd.f32 %v645, %v646
      %vm648 = vcmask 1040384
      %v649 = vsel %vm648, %v610, %v647
      %v650 = vpack.c.bf16 %v551, %v551
      %v651 = vpack.c.bf16 %v553, %v553
      %v652 = vpack.c.bf16 %v556, %v556
      %v653 = vpack.c.bf16 %v558, %v558
      %v654 = vpack.c.bf16 %v561, %v561
      %v655 = vpack.c.bf16 %v563, %v563
      %v656 = vpack.c.bf16 %v566, %v566
      %v657 = vpack.c.bf16 %v568, %v568
      %v658 = vpack.c.bf16 %v571, %v571
      %v659 = vpack.c.bf16 %v573, %v573
      %v660 = vpack.c.bf16 %v576, %v576
      %v661 = vpack.c.bf16 %v578, %v578
      %v662 = vpack.c.bf16 %v581, %v581
      %v663 = vpack.c.bf16 %v583, %v583
      %v664 = vpack.c.bf16 %v586, %v586
      %v665 = vpack.c.bf16 %v588, %v588
      %666 = vst [vmem:[%s256] sm:$0xf] %v650
      %667 = vst [vmem:[%s256 + $0x4] sm:$0xf] %v651
      %668 = vst [vmem:[%s256 + $0x8] sm:$0xf] %v652
      %669 = vst [vmem:[%s256 + $0xc] sm:$0xf] %v653
      %670 = vst [vmem:[%s256 + $0x10] sm:$0xf] %v654
      %671 = vst [vmem:[%s256 + $0x14] sm:$0xf] %v655
      %672 = vst [vmem:[%s256 + $0x18] sm:$0xf] %v656
      %673 = vst [vmem:[%s256 + $0x1c] sm:$0xf] %v657
      %674 = vst [vmem:[%s256 + $0x20] sm:$0xf] %v658
      %675 = vst [vmem:[%s256 + $0x24] sm:$0xf] %v659
      %676 = vst [vmem:[%s256 + $0x28] sm:$0xf] %v660
      %677 = vst [vmem:[%s256 + $0x2c] sm:$0xf] %v661
      %678 = vst [vmem:[%s256 + $0x30] sm:$0xf] %v662
      %679 = vst [vmem:[%s256 + $0x34] sm:$0xf] %v663
      %680 = vst [vmem:[%s256 + $0x38] sm:$0xf] %v664
      %681 = vst [vmem:[%s256 + $0x3c] sm:$0xf] %v665
      %s682 = scalar_lea.vmem %s237, 128
      %v683 = vld [vmem:[%s682] sm:$0xff]
      %v684 = vld [vmem:[%s682 + $0x8] sm:$0xff]
      %v685 = vld [vmem:[%s682 + $0x10] sm:$0xff]
      %v686 = vld [vmem:[%s682 + $0x18] sm:$0xff]
      %v687 = vld [vmem:[%s682 + $0x20] sm:$0xff]
      %v688 = vld [vmem:[%s682 + $0x28] sm:$0xff]
      %v689 = vld [vmem:[%s682 + $0x30] sm:$0xff]
      %v690 = vld [vmem:[%s682 + $0x38] sm:$0xff]
      %v691 = vld [vmem:[%s682 + $0x40] sm:$0xff]
      %v692 = vld [vmem:[%s682 + $0x48] sm:$0xff]
      %v693 = vld [vmem:[%s682 + $0x50] sm:$0xff]
      %v694 = vld [vmem:[%s682 + $0x58] sm:$0xff]
      %v695 = vld [vmem:[%s682 + $0x60] sm:$0xff]
      %v696 = vld [vmem:[%s682 + $0x68] sm:$0xff]
      %v697 = vld [vmem:[%s682 + $0x70] sm:$0xff]
      %v698 = vld [vmem:[%s682 + $0x78] sm:$0xff]
      %s699 = scalar_lea.vmem %s245, 128
      %v700 = vld [vmem:[%s699] sm:$0xf]
      %v701 = vld [vmem:[%s699 + $0x4] sm:$0xf]
      %v702 = vld [vmem:[%s699 + $0x8] sm:$0xf]
      %v703 = vld [vmem:[%s699 + $0xc] sm:$0xf]
      %v704 = vld [vmem:[%s699 + $0x10] sm:$0xf]
      %v705 = vld [vmem:[%s699 + $0x14] sm:$0xf]
      %v706 = vld [vmem:[%s699 + $0x18] sm:$0xf]
      %v707 = vld [vmem:[%s699 + $0x1c] sm:$0xf]
      %v708 = vld [vmem:[%s699 + $0x20] sm:$0xf]
      %v709 = vld [vmem:[%s699 + $0x24] sm:$0xf]
      %v710 = vld [vmem:[%s699 + $0x28] sm:$0xf]
      %v711 = vld [vmem:[%s699 + $0x2c] sm:$0xf]
      %v712 = vld [vmem:[%s699 + $0x30] sm:$0xf]
      %v713 = vld [vmem:[%s699 + $0x34] sm:$0xf]
      %v714 = vld [vmem:[%s699 + $0x38] sm:$0xf]
      %v715 = vld [vmem:[%s699 + $0x3c] sm:$0xf]
      %v716 = vld [vmem:[%s699 + $0x40] sm:$0xf]
      %v717 = vld [vmem:[%s699 + $0x44] sm:$0xf]
      %v718 = vld [vmem:[%s699 + $0x48] sm:$0xf]
      %v719 = vld [vmem:[%s699 + $0x4c] sm:$0xf]
      %v720 = vld [vmem:[%s699 + $0x50] sm:$0xf]
      %v721 = vld [vmem:[%s699 + $0x54] sm:$0xf]
      %v722 = vld [vmem:[%s699 + $0x58] sm:$0xf]
      %v723 = vld [vmem:[%s699 + $0x5c] sm:$0xf]
      %v724 = vld [vmem:[%s699 + $0x60] sm:$0xf]
      %v725 = vld [vmem:[%s699 + $0x64] sm:$0xf]
      %v726 = vld [vmem:[%s699 + $0x68] sm:$0xf]
      %v727 = vld [vmem:[%s699 + $0x6c] sm:$0xf]
      %v728 = vld [vmem:[%s699 + $0x70] sm:$0xf]
      %v729 = vld [vmem:[%s699 + $0x74] sm:$0xf]
      %v730 = vld [vmem:[%s699 + $0x78] sm:$0xf]
      %v731 = vld [vmem:[%s699 + $0x7c] sm:$0xf]
      %v748 = vunpack.c.l.b16 %v683
      %v749 = vunpack.c.h.b16 %v683
      %v750 = vunpack.c.l.b16 %v684
      %v751 = vunpack.c.h.b16 %v684
      %v752 = vunpack.c.l.b16 %v685
      %v753 = vunpack.c.h.b16 %v685
      %v754 = vunpack.c.l.b16 %v686
      %v755 = vunpack.c.h.b16 %v686
      %v756 = vunpack.c.l.b16 %v687
      %v757 = vunpack.c.h.b16 %v687
      %v758 = vunpack.c.l.b16 %v688
      %v759 = vunpack.c.h.b16 %v688
      %v760 = vunpack.c.l.b16 %v689
      %v761 = vunpack.c.h.b16 %v689
      %v762 = vunpack.c.l.b16 %v690
      %v763 = vunpack.c.h.b16 %v690
      %v764 = vunpack.c.l.b16 %v691
      %v765 = vunpack.c.h.b16 %v691
      %v766 = vunpack.c.l.b16 %v692
      %v767 = vunpack.c.h.b16 %v692
      %v768 = vunpack.c.l.b16 %v693
      %v769 = vunpack.c.h.b16 %v693
      %v770 = vunpack.c.l.b16 %v694
      %v771 = vunpack.c.h.b16 %v694
      %v772 = vunpack.c.l.b16 %v695
      %v773 = vunpack.c.h.b16 %v695
      %v774 = vunpack.c.l.b16 %v696
      %v775 = vunpack.c.h.b16 %v696
      %v776 = vunpack.c.l.b16 %v697
      %v777 = vunpack.c.h.b16 %v697
      %v778 = vunpack.c.l.b16 %v698
      %v779 = vunpack.c.h.b16 %v698
      %v780 = vpack.c.b16 %v750, %v748
      %v781 = vpack.c.b16 %v751, %v749
      %v782 = vpack.c.b16 %v754, %v752
      %v783 = vpack.c.b16 %v755, %v753
      %v784 = vpack.c.b16 %v758, %v756
      %v785 = vpack.c.b16 %v759, %v757
      %v786 = vpack.c.b16 %v762, %v760
      %v787 = vpack.c.b16 %v763, %v761
      %v788 = vpack.c.b16 %v766, %v764
      %v789 = vpack.c.b16 %v767, %v765
      %v790 = vpack.c.b16 %v770, %v768
      %v791 = vpack.c.b16 %v771, %v769
      %v792 = vpack.c.b16 %v774, %v772
      %v793 = vpack.c.b16 %v775, %v773
      %v794 = vpack.c.b16 %v778, %v776
      %v795 = vpack.c.b16 %v779, %v777
      %v844 = vunpack.c.l.b16 %v700
      %v845 = vunpack.c.l.b16 %v701
      %v846 = vunpack.c.l.b16 %v702
      %v847 = vunpack.c.l.b16 %v703
      %v848 = vunpack.c.l.b16 %v704
      %v849 = vunpack.c.l.b16 %v705
      %v850 = vunpack.c.l.b16 %v706
      %v851 = vunpack.c.l.b16 %v707
      %v852 = vunpack.c.l.b16 %v708
      %v853 = vunpack.c.l.b16 %v709
      %v854 = vunpack.c.l.b16 %v710
      %v855 = vunpack.c.l.b16 %v711
      %v856 = vunpack.c.l.b16 %v712
      %v857 = vunpack.c.l.b16 %v713
      %v858 = vunpack.c.l.b16 %v714
      %v859 = vunpack.c.l.b16 %v715
      %v860 = vunpack.c.l.b16 %v716
      %v861 = vunpack.c.l.b16 %v717
      %v862 = vunpack.c.l.b16 %v718
      %v863 = vunpack.c.l.b16 %v719
      %v864 = vunpack.c.l.b16 %v720
      %v865 = vunpack.c.l.b16 %v721
      %v866 = vunpack.c.l.b16 %v722
      %v867 = vunpack.c.l.b16 %v723
      %v868 = vunpack.c.l.b16 %v724
      %v869 = vunpack.c.l.b16 %v725
      %v870 = vunpack.c.l.b16 %v726
      %v871 = vunpack.c.l.b16 %v727
      %v872 = vunpack.c.l.b16 %v728
      %v873 = vunpack.c.l.b16 %v729
      %v874 = vunpack.c.l.b16 %v730
      %v875 = vunpack.c.l.b16 %v731
      %v876 = vpack.c.b16 %v845, %v844
      %v877 = vpack.c.b16 %v847, %v846
      %v878 = vpack.c.b16 %v849, %v848
      %v879 = vpack.c.b16 %v851, %v850
      %v880 = vpack.c.b16 %v853, %v852
      %v881 = vpack.c.b16 %v855, %v854
      %v882 = vpack.c.b16 %v857, %v856
      %v883 = vpack.c.b16 %v859, %v858
      %v884 = vpack.c.b16 %v861, %v860
      %v885 = vpack.c.b16 %v863, %v862
      %v886 = vpack.c.b16 %v865, %v864
      %v887 = vpack.c.b16 %v867, %v866
      %v888 = vpack.c.b16 %v869, %v868
      %v889 = vpack.c.b16 %v871, %v870
      %v890 = vpack.c.b16 %v873, %v872
      %v891 = vpack.c.b16 %v875, %v874
      %908 = vmatpush.bf16.msra.mxu0 %v883
      %909 = vmatpush.bf16.msra.mxu0 %v882
      %910 = vmatpush.bf16.msra.mxu0 %v881
      %911 = vmatpush.bf16.msra.mxu0 %v880
      %912 = vmatpush.bf16.msra.mxu0 %v879
      %913 = vmatpush.bf16.msra.mxu0 %v878
      %914 = vmatpush.bf16.msra.mxu0 %v877
      %915 = vmatpush.bf16.msra.mxu0 %v876
      %916 = vmatmul.bf16.gmra.mxu0 %v780
      %v917 = vpop.f32.mrf.mxu0
      %v918 = vadd.f32 0.0, %v917
      %v919 = vpop.f32.mrf.mxu0
      %v920 = vadd.f32 0.0, %v919
      %921 = vmatmul.bf16.gmra.mxu0 %v782
      %v922 = vpop.f32.mrf.mxu0
      %v923 = vadd.f32 0.0, %v922
      %v924 = vpop.f32.mrf.mxu0
      %v925 = vadd.f32 0.0, %v924
      %926 = vmatmul.bf16.gmra.mxu0 %v784
      %v927 = vpop.f32.mrf.mxu0
      %v928 = vadd.f32 0.0, %v927
      %v929 = vpop.f32.mrf.mxu0
      %v930 = vadd.f32 0.0, %v929
      %931 = vmatmul.bf16.gmra.mxu0 %v786
      %v932 = vpop.f32.mrf.mxu0
      %v933 = vadd.f32 0.0, %v932
      %v934 = vpop.f32.mrf.mxu0
      %v935 = vadd.f32 0.0, %v934
      %936 = vmatmul.bf16.gmra.mxu0 %v788
      %v937 = vpop.f32.mrf.mxu0
      %v938 = vadd.f32 0.0, %v937
      %v939 = vpop.f32.mrf.mxu0
      %v940 = vadd.f32 0.0, %v939
      %941 = vmatmul.bf16.gmra.mxu0 %v790
      %v942 = vpop.f32.mrf.mxu0
      %v943 = vadd.f32 0.0, %v942
      %v944 = vpop.f32.mrf.mxu0
      %v945 = vadd.f32 0.0, %v944
      %946 = vmatmul.bf16.gmra.mxu0 %v792
      %v947 = vpop.f32.mrf.mxu0
      %v948 = vadd.f32 0.0, %v947
      %v949 = vpop.f32.mrf.mxu0
      %v950 = vadd.f32 0.0, %v949
      %951 = vmatmul.bf16.gmra.mxu0 %v794
      %v952 = vpop.f32.mrf.mxu0
      %v953 = vadd.f32 0.0, %v952
      %v954 = vpop.f32.mrf.mxu0
      %v955 = vadd.f32 0.0, %v954
      %956 = vdwg.mxu0
      %957 = vmatpush.bf16.msra.mxu0 %v891
      %958 = vmatpush.bf16.msra.mxu0 %v890
      %959 = vmatpush.bf16.msra.mxu0 %v889
      %960 = vmatpush.bf16.msra.mxu0 %v888
      %961 = vmatpush.bf16.msra.mxu0 %v887
      %962 = vmatpush.bf16.msra.mxu0 %v886
      %963 = vmatpush.bf16.msra.mxu0 %v885
      %964 = vmatpush.bf16.msra.mxu0 %v884
      %965 = vmatmul.bf16.gmra.mxu0 %v781
      %v966 = vpop.f32.mrf.mxu0
      %v967 = vadd.f32 %v918, %v966
      %v968 = vpop.f32.mrf.mxu0
      %v969 = vadd.f32 %v920, %v968
      %970 = vmatmul.bf16.gmra.mxu0 %v783
      %v971 = vpop.f32.mrf.mxu0
      %v972 = vadd.f32 %v923, %v971
      %v973 = vpop.f32.mrf.mxu0
      %v974 = vadd.f32 %v925, %v973
      %975 = vmatmul.bf16.gmra.mxu0 %v785
      %v976 = vpop.f32.mrf.mxu0
      %v977 = vadd.f32 %v928, %v976
      %v978 = vpop.f32.mrf.mxu0
      %v979 = vadd.f32 %v930, %v978
      %980 = vmatmul.bf16.gmra.mxu0 %v787
      %v981 = vpop.f32.mrf.mxu0
      %v982 = vadd.f32 %v933, %v981
      %v983 = vpop.f32.mrf.mxu0
      %v984 = vadd.f32 %v935, %v983
      %985 = vmatmul.bf16.gmra.mxu0 %v789
      %v986 = vpop.f32.mrf.mxu0
      %v987 = vadd.f32 %v938, %v986
      %v988 = vpop.f32.mrf.mxu0
      %v989 = vadd.f32 %v940, %v988
      %990 = vmatmul.bf16.gmra.mxu0 %v791
      %v991 = vpop.f32.mrf.mxu0
      %v992 = vadd.f32 %v943, %v991
      %v993 = vpop.f32.mrf.mxu0
      %v994 = vadd.f32 %v945, %v993
      %995 = vmatmul.bf16.gmra.mxu0 %v793
      %v996 = vpop.f32.mrf.mxu0
      %v997 = vadd.f32 %v948, %v996
      %v998 = vpop.f32.mrf.mxu0
      %v999 = vadd.f32 %v950, %v998
      %1000 = vmatmul.bf16.gmra.mxu0 %v795
      %v1001 = vpop.f32.mrf.mxu0
      %v1002 = vadd.f32 %v953, %v1001
      %v1003 = vpop.f32.mrf.mxu0
      %v1004 = vadd.f32 %v955, %v1003
      %1005 = vdwg.mxu0
      %v1006 = vadd.f32 %v967, %v969
      %v1007 = vadd.f32 %v1006, %v972
      %v1008 = vadd.f32 %v1007, %v974
      %v1009 = vadd.f32 %v1008, %v977
      %v1010 = vadd.f32 %v1009, %v979
      %v1011 = vadd.f32 %v1010, %v982
      %v1012 = vadd.f32 %v1011, %v984
      %v1013 = vadd.f32 %v1012, %v987
      %v1014 = vadd.f32 %v1013, %v989
      %v1015 = vadd.f32 %v1014, %v992
      %v1016 = vadd.f32 %v1015, %v994
      %v1017 = vadd.f32 %v1016, %v997
      %v1018 = vadd.f32 %v1017, %v999
      %v1019 = vadd.f32 %v1018, %v1002
      %v1020 = vadd.f32 %v1019, %v1004
      %v1021 = vrot.slane %v1020, 4
      %v1022 = vadd.f32 %v1020, %v1021
      %v1023 = vrot.slane %v1022, 2
      %v1024 = vadd.f32 %v1022, %v1023
      %v1025 = vrot.slane %v1024, 1
      %v1026 = vadd.f32 %v1024, %v1025
      %v1027 = vmul.f32 %v967, %v967
      %v1028 = vmul.f32 %v969, %v969
      %v1029 = vmul.f32 %v972, %v972
      %v1030 = vmul.f32 %v974, %v974
      %v1031 = vmul.f32 %v977, %v977
      %v1032 = vmul.f32 %v979, %v979
      %v1033 = vmul.f32 %v982, %v982
      %v1034 = vmul.f32 %v984, %v984
      %v1035 = vmul.f32 %v987, %v987
      %v1036 = vmul.f32 %v989, %v989
      %v1037 = vmul.f32 %v992, %v992
      %v1038 = vmul.f32 %v994, %v994
      %v1039 = vmul.f32 %v997, %v997
      %v1040 = vmul.f32 %v999, %v999
      %v1041 = vmul.f32 %v1002, %v1002
      %v1042 = vmul.f32 %v1004, %v1004
      %v1043 = vadd.f32 %v1027, %v1028
      %v1044 = vadd.f32 %v1043, %v1029
      %v1045 = vadd.f32 %v1044, %v1030
      %v1046 = vadd.f32 %v1045, %v1031
      %v1047 = vadd.f32 %v1046, %v1032
      %v1048 = vadd.f32 %v1047, %v1033
      %v1049 = vadd.f32 %v1048, %v1034
      %v1050 = vadd.f32 %v1049, %v1035
      %v1051 = vadd.f32 %v1050, %v1036
      %v1052 = vadd.f32 %v1051, %v1037
      %v1053 = vadd.f32 %v1052, %v1038
      %v1054 = vadd.f32 %v1053, %v1039
      %v1055 = vadd.f32 %v1054, %v1040
      %v1056 = vadd.f32 %v1055, %v1041
      %v1057 = vadd.f32 %v1056, %v1042
      %v1058 = vrot.slane %v1057, 4
      %v1059 = vadd.f32 %v1057, %v1058
      %v1060 = vrot.slane %v1059, 2
      %v1061 = vadd.f32 %v1059, %v1060
      %v1062 = vrot.slane %v1061, 1
      %v1063 = vadd.f32 %v1061, %v1062
      %v1064 = vsel %vm648, %v1026, %v1063
      %v1065 = vpack.c.bf16 %v967, %v967
      %v1066 = vpack.c.bf16 %v969, %v969
      %v1067 = vpack.c.bf16 %v972, %v972
      %v1068 = vpack.c.bf16 %v974, %v974
      %v1069 = vpack.c.bf16 %v977, %v977
      %v1070 = vpack.c.bf16 %v979, %v979
      %v1071 = vpack.c.bf16 %v982, %v982
      %v1072 = vpack.c.bf16 %v984, %v984
      %v1073 = vpack.c.bf16 %v987, %v987
      %v1074 = vpack.c.bf16 %v989, %v989
      %v1075 = vpack.c.bf16 %v992, %v992
      %v1076 = vpack.c.bf16 %v994, %v994
      %v1077 = vpack.c.bf16 %v997, %v997
      %v1078 = vpack.c.bf16 %v999, %v999
      %v1079 = vpack.c.bf16 %v1002, %v1002
      %v1080 = vpack.c.bf16 %v1004, %v1004
      %s1081 = scalar_lea.vmem %s256, 64
      %1082 = vst [vmem:[%s1081] sm:$0xf] %v1065
      %1083 = vst [vmem:[%s1081 + $0x4] sm:$0xf] %v1066
      %1084 = vst [vmem:[%s1081 + $0x8] sm:$0xf] %v1067
      %1085 = vst [vmem:[%s1081 + $0xc] sm:$0xf] %v1068
      %1086 = vst [vmem:[%s1081 + $0x10] sm:$0xf] %v1069
      %1087 = vst [vmem:[%s1081 + $0x14] sm:$0xf] %v1070
      %1088 = vst [vmem:[%s1081 + $0x18] sm:$0xf] %v1071
      %1089 = vst [vmem:[%s1081 + $0x1c] sm:$0xf] %v1072
      %1090 = vst [vmem:[%s1081 + $0x20] sm:$0xf] %v1073
      %1091 = vst [vmem:[%s1081 + $0x24] sm:$0xf] %v1074
      %1092 = vst [vmem:[%s1081 + $0x28] sm:$0xf] %v1075
      %1093 = vst [vmem:[%s1081 + $0x2c] sm:$0xf] %v1076
      %1094 = vst [vmem:[%s1081 + $0x30] sm:$0xf] %v1077
      %1095 = vst [vmem:[%s1081 + $0x34] sm:$0xf] %v1078
      %1096 = vst [vmem:[%s1081 + $0x38] sm:$0xf] %v1079
      %1097 = vst [vmem:[%s1081 + $0x3c] sm:$0xf] %v1080
      %1098 = vst [vmem:[%s266] sm:$0x3] %v649
      %1099 = vst [vmem:[%s266 + $0x2] sm:$0x3] %v1064
      %s1100 = smul.u32 2, %s19
      %s1101 = smul.u32 16, %s20
      %p1102 = scmp.lt.s32.totalorder %s1100, 3
      %s1103 = scalar_select %p1102, %s1100, 3
      %p1104 = scmp.lt.s32.totalorder %s1101, 15
      %s1105 = scalar_select %p1104, %s1101, 15
      %s1106 = smul.addr %s1103, 16
      %s1107 = sadd.s32 %s1105, %s1106
      %s1108 = smul.addr %s1107, 4
      %s1109 = scalar_lea.vmem %s2, %s1108
      %s1110 = smul.u32 2, %s19
      %p1111 = scmp.lt.s32.totalorder %s1110, 3
      %s1112 = scalar_select %p1111, %s1110, 3
      %p1113 = scmp.lt.s32.totalorder %s20, 0
      %s1114 = scalar_select %p1113, %s20, 0
      %s1115 = sadd.s32 %s1114, %s1112
      %s1116 = smul.addr %s1115, 2
      %s1117 = scalar_lea.vmem %s3, %s1116
      // Predicated region
      $region29: #{generator_forward.7} parent=27 // pred_check
        %p1118 = pneg %p101
      $region30: #{generator_forward.7} parent=27 // pred_check_branch
        %1120 = sbr.rel (%p1118) target = $region32
      $region31: #{generator_forward.7} parent=27 // pred_region
        %s1121 = smul.u32 2, %s19
        %s1122 = smul.u32 16, %s20
      $region32: #{generator_forward.7} parent=27 // pred_fallthru
        _
      // Predicated region
      $region33: #{generator_forward.7} parent=27 // pred_check
        %p1123 = pneg %p129
      $region34: #{generator_forward.7} parent=27 // pred_check_branch
        %1125 = sbr.rel (%p1123) target = $region36
      $region35: #{generator_forward.7} parent=27 // pred_region
        %s1126 = smul.u32 2, %s19
      $region36: #{generator_forward.7} parent=27 // pred_fallthru
        _
    $region28: #{generator_forward.7} parent=5 // pred_fallthru
      _
    %p1127 = scmp.le.s32.totalorder 2, %s10
    // Predicated region
    $region37: #{generator_forward.7} parent=5 // pred_check
      %p1128 = pneg %p1127
    $region38: #{generator_forward.7} parent=5 // pred_check_branch
      %1130 = sbr.rel (%p1128) target = $region40
    $region39: #{generator_forward.7} parent=5 // pred_region
      %s1131 = ssub.s32 %s10, 2
      // Predicated region
      $region41: #{generator_forward.7} parent=39 // pred_check
        %p1132 = pneg %p107
      $region42: #{generator_forward.7} parent=39 // pred_check_branch
        %1134 = sbr.rel (%p1132) target = $region44
      $region43: #{generator_forward.7} parent=39 // pred_region
        %s1135 = smul.u32 2, %s21
        %s1136 = smul.u32 16, %s22
        %p1137 = scmp.lt.s32.totalorder %s1135, 3
        %s1138 = scalar_select %p1137, %s1135, 3
        %p1139 = scmp.lt.s32.totalorder %s1136, 15
        %s1140 = scalar_select %p1139, %s1136, 15
        %s1141 = smul.addr %s1138, 16
        %s1142 = sadd.s32 %s1140, %s1141
        %s1143 = smul.addr %s1142, 4
        %s1144 = scalar_lea.vmem %s2, %s1143
      $region44: #{generator_forward.7} parent=39 // pred_fallthru
        _
      // Predicated region
      $region45: #{generator_forward.7} parent=39 // pred_check
        %p1145 = pneg %p135
      $region46: #{generator_forward.7} parent=39 // pred_check_branch
        %1147 = sbr.rel (%p1145) target = $region48
      $region47: #{generator_forward.7} parent=39 // pred_region
        %s1148 = smul.u32 2, %s21
        %p1149 = scmp.lt.s32.totalorder %s1148, 3
        %s1150 = scalar_select %p1149, %s1148, 3
        %p1151 = scmp.lt.s32.totalorder %s22, 0
        %s1152 = scalar_select %p1151, %s22, 0
        %s1153 = sadd.s32 %s1152, %s1150
        %s1154 = smul.addr %s1153, 2
        %s1155 = scalar_lea.vmem %s3, %s1154
      $region48: #{generator_forward.7} parent=39 // pred_fallthru
        _
    $region40: #{generator_forward.7} parent=5 // pred_fallthru
      _
  $region6: #{generator_forward.7} parent=0 // loop_footer
    %s14 = sadd.s32 1, %s10
  $region7: #{generator_forward.7} parent=0 // loop_footer_branch
    %9 = sbr.rel target = $region3
  $region8: #{generator_forward.7} parent=0 // loop_exit
    _

// kernel: generator_forward.8
$region0: #{generator_forward.8}
  #allocation0 [shape = 'u32[]', space=smem, size = 0x4, offset = 0x4, fixed_abs, tag = 'smem constant byte address 0x4 - core index']
  #allocation1 [shape = 'u32[72,128]{1,0:T(1,128)}', space=vmem, size = 0x9000, scoped, tag = 'internal scratch']
  %s0 = inlined_call_operand.vmem [shape: bf16[4,512,128], index: 0, kind: input, shape index: {}]
  %s1 = inlined_call_operand.vmem [shape: bf16[4,128,128], index: 1, kind: input, shape index: {}]
  %s2 = inlined_call_operand.vmem [shape: bf16[4,512,128], index: 2, kind: output, shape index: {0}]
  %s3 = inlined_call_operand.vmem [shape: f32[4,1,2,128], index: 3, kind: output, shape index: {1}]
  %4 = xla_tuple %s2, %s3
  %s5 = sld [smem:[#allocation0]]
  $region49: #{generator_forward.8} parent=0
    _
  %s7 = ssub.s32 1, %s5
  %s8 = scalar_select 0, %s7, %s5
  loop: start=0, step=1, limit=4
  $region2: #{generator_forward.8} parent=0 // loop_pre_header
    _
  $region3: #{generator_forward.8} parent=0 // loop_header
    %s10 = sphi 0, %s14
    %p11 = scmp.ge.s32.totalorder %s10, 4
    %s17 = sphi 0, %s29
    %s18 = sphi 0, %s25
    %s19 = sphi 0, %s17
    %s20 = sphi 0, %s18
    %s21 = sphi 0, %s19
    %s22 = sphi 0, %s20
    %s34 = sphi 0, %s36
    %s37 = sphi 0, %s34
    %s38 = sphi 0, %s37
    %s54 = sphi 0, %s38
    %s60 = sphi 0, %s62
    %s63 = sphi 0, %s60
    %s64 = sphi 0, %s63
    %s80 = sphi 0, %s64
    %s88 = sphi 0, %s90
    %s91 = sphi 0, %s88
    %s92 = sphi 0, %s91
    %s108 = sphi 0, %s92
    %s116 = sphi 0, %s118
    %s119 = sphi 0, %s116
    %s120 = sphi 0, %s119
    %s136 = sphi 0, %s120
  $region4: #{generator_forward.8} parent=0 // loop_header_branch
    %13 = sbr.rel (%p11) target = $region8
  $region5: #{generator_forward.8} parent=0 // loop_body
    %s15 = ssub.s32 %s10, 1
    %s16 = ssub.s32 %s10, 2
    %s23 = sadd.s32 1, %s18
    %p24 = scmp.ge.s32.totalorder %s23, 1
    %s25 = scalar_select %p24, 0, %s23
    %s26 = sadd.s32 1, %s17
    %s27 = scalar_select %p24, %s26, %s17
    %p28 = scmp.ge.s32.totalorder %s27, 2
    %s29 = scalar_select %p28, 0, %s27
    %s30 = ssub.s32 %s17, %s29
    %s31 = ssub.s32 %s18, %s25
    %s32 = sor.u32 %s30, %s31
    %p33 = scmp.eq.s32.totalorder %s32, 0
    %s35 = sadd.s32 %s34, 1
    %s36 = scalar_select %p33, %s34, %s35
    %p39 = pneg %p33
    %p40 = scmp.eq.s32.totalorder %s10, 1
    %p41 = por %p39, %p40
    %p42 = scmp.ne.s32.totalorder %s34, %s37
    %p43 = scmp.eq.s32.totalorder %s10, 0
    %p44 = por %p42, %p43
    %p45 = scmp.ne.s32.totalorder %s34, %s37
    %p46 = scmp.eq.s32.totalorder %s15, 1
    %p47 = por %p45, %p46
    %p48 = scmp.ne.s32.totalorder %s37, %s38
    %p49 = scmp.eq.s32.totalorder %s15, 0
    %p50 = por %p48, %p49
    %p51 = scmp.ne.s32.totalorder %s37, %s38
    %p52 = scmp.eq.s32.totalorder %s16, 1
    %p53 = por %p51, %p52
    %p55 = scmp.ne.s32.totalorder %s38, %s54
    %p56 = scmp.eq.s32.totalorder %s16, 0
    %p57 = por %p55, %p56
    %s58 = ssub.s32 %s17, %s29
    %p59 = scmp.eq.s32.totalorder %s58, 0
    %s61 = sadd.s32 %s60, 1
    %s62 = scalar_select %p59, %s60, %s61
    %p65 = pneg %p59
    %p66 = scmp.eq.s32.totalorder %s10, 1
    %p67 = por %p65, %p66
    %p68 = scmp.ne.s32.totalorder %s60, %s63
    %p69 = scmp.eq.s32.totalorder %s10, 0
    %p70 = por %p68, %p69
    %p71 = scmp.ne.s32.totalorder %s60, %s63
    %p72 = scmp.eq.s32.totalorder %s15, 1
    %p73 = por %p71, %p72
    %p74 = scmp.ne.s32.totalorder %s63, %s64
    %p75 = scmp.eq.s32.totalorder %s15, 0
    %p76 = por %p74, %p75
    %p77 = scmp.ne.s32.totalorder %s63, %s64
    %p78 = scmp.eq.s32.totalorder %s16, 1
    %p79 = por %p77, %p78
    %p81 = scmp.ne.s32.totalorder %s64, %s80
    %p82 = scmp.eq.s32.totalorder %s16, 0
    %p83 = por %p81, %p82
    %s84 = ssub.s32 %s17, %s29
    %s85 = ssub.s32 %s18, %s25
    %s86 = sor.u32 %s84, %s85
    %p87 = scmp.eq.s32.totalorder %s86, 0
    %s89 = sadd.s32 %s88, 1
    %s90 = scalar_select %p87, %s88, %s89
    %p93 = pneg %p87
    %p94 = scmp.eq.s32.totalorder %s10, 1
    %p95 = por %p93, %p94
    %p96 = scmp.ne.s32.totalorder %s88, %s91
    %p97 = scmp.eq.s32.totalorder %s10, 0
    %p98 = por %p96, %p97
    %p99 = scmp.ne.s32.totalorder %s88, %s91
    %p100 = scmp.eq.s32.totalorder %s15, 1
    %p101 = por %p99, %p100
    %p102 = scmp.ne.s32.totalorder %s91, %s92
    %p103 = scmp.eq.s32.totalorder %s15, 0
    %p104 = por %p102, %p103
    %p105 = scmp.ne.s32.totalorder %s91, %s92
    %p106 = scmp.eq.s32.totalorder %s16, 1
    %p107 = por %p105, %p106
    %p109 = scmp.ne.s32.totalorder %s92, %s108
    %p110 = scmp.eq.s32.totalorder %s16, 0
    %p111 = por %p109, %p110
    %s112 = ssub.s32 %s17, %s29
    %s113 = ssub.s32 %s18, %s25
    %s114 = sor.u32 %s112, %s113
    %p115 = scmp.eq.s32.totalorder %s114, 0
    %s117 = sadd.s32 %s116, 1
    %s118 = scalar_select %p115, %s116, %s117
    %p121 = pneg %p115
    %p122 = scmp.eq.s32.totalorder %s10, 1
    %p123 = por %p121, %p122
    %p124 = scmp.ne.s32.totalorder %s116, %s119
    %p125 = scmp.eq.s32.totalorder %s10, 0
    %p126 = por %p124, %p125
    %p127 = scmp.ne.s32.totalorder %s116, %s119
    %p128 = scmp.eq.s32.totalorder %s15, 1
    %p129 = por %p127, %p128
    %p130 = scmp.ne.s32.totalorder %s119, %s120
    %p131 = scmp.eq.s32.totalorder %s15, 0
    %p132 = por %p130, %p131
    %p133 = scmp.ne.s32.totalorder %s119, %s120
    %p134 = scmp.eq.s32.totalorder %s16, 1
    %p135 = por %p133, %p134
    %p137 = scmp.ne.s32.totalorder %s120, %s136
    %p138 = scmp.eq.s32.totalorder %s16, 0
    %p139 = por %p137, %p138
    %p140 = scmp.le.s32.totalorder 1, %s10
    %p141 = scmp.lt.s32.totalorder %s10, 3
    %p142 = pnand %p140, %p141
    %p143 = pneg %p142
    // Predicated region
    $region9: #{generator_forward.8} parent=5 // pred_check
      _
    $region10: #{generator_forward.8} parent=5 // pred_check_branch
      %145 = sbr.rel (%p142) target = $region12
    $region11: #{generator_forward.8} parent=5 // pred_region
      %s146 = ssub.s32 %s10, 1
    $region12: #{generator_forward.8} parent=5 // pred_fallthru
      _
    %p147 = scmp.lt.s32.totalorder %s10, 2
    // Predicated region
    $region13: #{generator_forward.8} parent=5 // pred_check
      %p148 = pneg %p147
    $region14: #{generator_forward.8} parent=5 // pred_check_branch
      %150 = sbr.rel (%p148) target = $region16
    $region15: #{generator_forward.8} parent=5 // pred_region
      // Predicated region
      $region17: #{generator_forward.8} parent=15 // pred_check
        %p151 = pneg %p44
      $region18: #{generator_forward.8} parent=15 // pred_check_branch
        %153 = sbr.rel (%p151) target = $region20
      $region19: #{generator_forward.8} parent=15 // pred_region
        %s154 = smul.u32 2, %s17
        %s155 = smul.u32 64, %s18
        %p156 = scmp.lt.s32.totalorder %s154, 3
        %s157 = scalar_select %p156, %s154, 3
        %p158 = scmp.lt.s32.totalorder %s155, 63
        %s159 = scalar_select %p158, %s155, 63
        %s160 = smul.addr %s157, 64
        %s161 = sadd.s32 %s159, %s160
        %s162 = smul.addr %s161, 4
        %s163 = scalar_lea.vmem %s0, %s162
        %s164 = smul.u32 2, %s17
        %s165 = smul.u32 64, %s18
      $region20: #{generator_forward.8} parent=15 // pred_fallthru
        _
      // Predicated region
      $region21: #{generator_forward.8} parent=15 // pred_check
        %p166 = pneg %p70
      $region22: #{generator_forward.8} parent=15 // pred_check_branch
        %168 = sbr.rel (%p166) target = $region24
      $region23: #{generator_forward.8} parent=15 // pred_region
        %s169 = smul.u32 2, %s17
        %p170 = scmp.lt.s32.totalorder %s169, 3
        %s171 = scalar_select %p170, %s169, 3
        %s172 = smul.addr %s171, 16
        %s173 = smul.addr %s172, 4
        %s174 = scalar_lea.vmem %s1, %s173
        %s175 = smul.u32 2, %s17
      $region24: #{generator_forward.8} parent=15 // pred_fallthru
        _
    $region16: #{generator_forward.8} parent=5 // pred_fallthru
      _
    %p176 = scmp.le.s32.totalorder 1, %s10
    %p177 = scmp.lt.s32.totalorder %s10, 3
    %p178 = pnand %p176, %p177
    %p179 = pneg %p178
    // Predicated region
    $region25: #{generator_forward.8} parent=5 // pred_check
      _
    $region26: #{generator_forward.8} parent=5 // pred_check_branch
      %181 = sbr.rel (%p178) target = $region28
    $region27: #{generator_forward.8} parent=5 // pred_region
      %s182 = ssub.s32 %s10, 1
      %s183 = smul.u32 2, %s19
      %s184 = smul.u32 64, %s20
      %p185 = scmp.lt.s32.totalorder %s183, 3
      %s186 = scalar_select %p185, %s183, 3
      %p187 = scmp.lt.s32.totalorder %s184, 63
      %s188 = scalar_select %p187, %s184, 63
      %s189 = smul.addr %s186, 64
      %s190 = sadd.s32 %s188, %s189
      %s191 = smul.addr %s190, 4
      %s192 = scalar_lea.vmem %s0, %s191
      %p193 = pneg %p50
      %p194 = pneg %p47
      %s195 = smul.u32 2, %s19
      %p196 = scmp.lt.s32.totalorder %s195, 3
      %s197 = scalar_select %p196, %s195, 3
      %s198 = smul.addr %s197, 16
      %s199 = smul.addr %s198, 4
      %s200 = scalar_lea.vmem %s1, %s199
      %p201 = pneg %p76
      %p202 = pneg %p73
      %p203 = pneg %p104
      %p204 = pneg %p101
      %s205 = smul.u32 2, %s19
      %s206 = smul.u32 64, %s20
      %p207 = scmp.lt.s32.totalorder %s205, 3
      %s208 = scalar_select %p207, %s205, 3
      %p209 = scmp.lt.s32.totalorder %s206, 63
      %s210 = scalar_select %p209, %s206, 63
      %s211 = smul.addr %s208, 64
      %s212 = sadd.s32 %s210, %s211
      %s213 = smul.addr %s212, 4
      %s214 = scalar_lea.vmem %s2, %s213
      %p215 = pneg %p132
      %p216 = pneg %p129
      %s217 = smul.u32 2, %s19
      %p218 = scmp.lt.s32.totalorder %s217, 3
      %s219 = scalar_select %p218, %s217, 3
      %p220 = scmp.lt.s32.totalorder %s20, 0
      %s221 = scalar_select %p220, %s20, 0
      %s222 = sadd.s32 %s221, %s219
      %s223 = smul.addr %s222, 2
      %s224 = scalar_lea.vmem %s3, %s223
      %s225 = smul.u32 2, %s19
      %s226 = smul.u32 64, %s20
      %p227 = scmp.lt.s32.totalorder %s225, 3
      %s228 = scalar_select %p227, %s225, 3
      %p229 = scmp.lt.s32.totalorder %s226, 63
      %s230 = scalar_select %p229, %s226, 63
      %s231 = smul.addr %s228, 64
      %s232 = sadd.s32 %s230, %s231
      %s233 = smul.addr %s232, 4
      %s234 = scalar_lea.vmem %s0, %s233
      %s235 = smul.u32 2, %s19
      %s236 = smul.u32 64, %s20
      %s237 = smul.u32 2, %s19
      %p238 = scmp.lt.s32.totalorder %s237, 3
      %s239 = scalar_select %p238, %s237, 3
      %s240 = smul.addr %s239, 16
      %s241 = smul.addr %s240, 4
      %s242 = scalar_lea.vmem %s1, %s241
      %s243 = smul.u32 2, %s19
      %s244 = smul.u32 2, %s19
      %s245 = smul.u32 64, %s20
      %p246 = scmp.lt.s32.totalorder %s244, 3
      %s247 = scalar_select %p246, %s244, 3
      %p248 = scmp.lt.s32.totalorder %s245, 63
      %s249 = scalar_select %p248, %s245, 63
      %s250 = smul.addr %s247, 64
      %s251 = sadd.s32 %s249, %s250
      %s252 = smul.addr %s251, 4
      %s253 = scalar_lea.vmem %s2, %s252
      %s254 = smul.u32 2, %s19
      %s255 = smul.u32 64, %s20
      %s256 = smul.u32 2, %s19
      %p257 = scmp.lt.s32.totalorder %s256, 3
      %s258 = scalar_select %p257, %s256, 3
      %p259 = scmp.lt.s32.totalorder %s20, 0
      %s260 = scalar_select %p259, %s20, 0
      %s261 = sadd.s32 %s260, %s258
      %s262 = smul.addr %s261, 2
      %s263 = scalar_lea.vmem %s3, %s262
      %s264 = smul.u32 2, %s19
      %v265 = vld [vmem:[%s234] sm:$0xf]
      %v266 = vld [vmem:[%s234 + $0x4] sm:$0xf]
      %v267 = vld [vmem:[%s234 + $0x8] sm:$0xf]
      %v268 = vld [vmem:[%s234 + $0xc] sm:$0xf]
      %v269 = vld [vmem:[%s234 + $0x10] sm:$0xf]
      %v270 = vld [vmem:[%s234 + $0x14] sm:$0xf]
      %v271 = vld [vmem:[%s234 + $0x18] sm:$0xf]
      %v272 = vld [vmem:[%s234 + $0x1c] sm:$0xf]
      %v273 = vld [vmem:[%s234 + $0x20] sm:$0xf]
      %v274 = vld [vmem:[%s234 + $0x24] sm:$0xf]
      %v275 = vld [vmem:[%s234 + $0x28] sm:$0xf]
      %v276 = vld [vmem:[%s234 + $0x2c] sm:$0xf]
      %v277 = vld [vmem:[%s234 + $0x30] sm:$0xf]
      %v278 = vld [vmem:[%s234 + $0x34] sm:$0xf]
      %v279 = vld [vmem:[%s234 + $0x38] sm:$0xf]
      %v280 = vld [vmem:[%s234 + $0x3c] sm:$0xf]
      %v281 = vld [vmem:[%s234 + $0x40] sm:$0xf]
      %v282 = vld [vmem:[%s234 + $0x44] sm:$0xf]
      %v283 = vld [vmem:[%s234 + $0x48] sm:$0xf]
      %v284 = vld [vmem:[%s234 + $0x4c] sm:$0xf]
      %v285 = vld [vmem:[%s234 + $0x50] sm:$0xf]
      %v286 = vld [vmem:[%s234 + $0x54] sm:$0xf]
      %v287 = vld [vmem:[%s234 + $0x58] sm:$0xf]
      %v288 = vld [vmem:[%s234 + $0x5c] sm:$0xf]
      %v289 = vld [vmem:[%s234 + $0x60] sm:$0xf]
      %v290 = vld [vmem:[%s234 + $0x64] sm:$0xf]
      %v291 = vld [vmem:[%s234 + $0x68] sm:$0xf]
      %v292 = vld [vmem:[%s234 + $0x6c] sm:$0xf]
      %v293 = vld [vmem:[%s234 + $0x70] sm:$0xf]
      %v294 = vld [vmem:[%s234 + $0x74] sm:$0xf]
      %v295 = vld [vmem:[%s234 + $0x78] sm:$0xf]
      %v296 = vld [vmem:[%s234 + $0x7c] sm:$0xf]
      %v297 = vld [vmem:[%s234 + $0x80] sm:$0xf]
      %v298 = vld [vmem:[%s234 + $0x84] sm:$0xf]
      %v299 = vld [vmem:[%s234 + $0x88] sm:$0xf]
      %v300 = vld [vmem:[%s234 + $0x8c] sm:$0xf]
      %v301 = vld [vmem:[%s234 + $0x90] sm:$0xf]
      %v302 = vld [vmem:[%s234 + $0x94] sm:$0xf]
      %v303 = vld [vmem:[%s234 + $0x98] sm:$0xf]
      %v304 = vld [vmem:[%s234 + $0x9c] sm:$0xf]
      %v305 = vld [vmem:[%s234 + $0xa0] sm:$0xf]
      %v306 = vld [vmem:[%s234 + $0xa4] sm:$0xf]
      %v307 = vld [vmem:[%s234 + $0xa8] sm:$0xf]
      %v308 = vld [vmem:[%s234 + $0xac] sm:$0xf]
      %v309 = vld [vmem:[%s234 + $0xb0] sm:$0xf]
      %v310 = vld [vmem:[%s234 + $0xb4] sm:$0xf]
      %v311 = vld [vmem:[%s234 + $0xb8] sm:$0xf]
      %v312 = vld [vmem:[%s234 + $0xbc] sm:$0xf]
      %v313 = vld [vmem:[%s234 + $0xc0] sm:$0xf]
      %v314 = vld [vmem:[%s234 + $0xc4] sm:$0xf]
      %v315 = vld [vmem:[%s234 + $0xc8] sm:$0xf]
      %v316 = vld [vmem:[%s234 + $0xcc] sm:$0xf]
      %v317 = vld [vmem:[%s234 + $0xd0] sm:$0xf]
      %v318 = vld [vmem:[%s234 + $0xd4] sm:$0xf]
      %v319 = vld [vmem:[%s234 + $0xd8] sm:$0xf]
      %v320 = vld [vmem:[%s234 + $0xdc] sm:$0xf]
      %v321 = vld [vmem:[%s234 + $0xe0] sm:$0xf]
      %v322 = vld [vmem:[%s234 + $0xe4] sm:$0xf]
      %v323 = vld [vmem:[%s234 + $0xe8] sm:$0xf]
      %v324 = vld [vmem:[%s234 + $0xec] sm:$0xf]
      %v325 = vld [vmem:[%s234 + $0xf0] sm:$0xf]
      %v326 = vld [vmem:[%s234 + $0xf4] sm:$0xf]
      %v327 = vld [vmem:[%s234 + $0xf8] sm:$0xf]
      %v328 = vld [vmem:[%s234 + $0xfc] sm:$0xf]
      %v329 = vld [vmem:[%s242] sm:$0xf]
      %v330 = vld [vmem:[%s242 + $0x4] sm:$0xf]
      %v331 = vld [vmem:[%s242 + $0x8] sm:$0xf]
      %v332 = vld [vmem:[%s242 + $0xc] sm:$0xf]
      %v333 = vld [vmem:[%s242 + $0x10] sm:$0xf]
      %v334 = vld [vmem:[%s242 + $0x14] sm:$0xf]
      %v335 = vld [vmem:[%s242 + $0x18] sm:$0xf]
      %v336 = vld [vmem:[%s242 + $0x1c] sm:$0xf]
      %v337 = vld [vmem:[%s242 + $0x20] sm:$0xf]
      %v338 = vld [vmem:[%s242 + $0x24] sm:$0xf]
      %v339 = vld [vmem:[%s242 + $0x28] sm:$0xf]
      %v340 = vld [vmem:[%s242 + $0x2c] sm:$0xf]
      %v341 = vld [vmem:[%s242 + $0x30] sm:$0xf]
      %v342 = vld [vmem:[%s242 + $0x34] sm:$0xf]
      %v343 = vld [vmem:[%s242 + $0x38] sm:$0xf]
      %v344 = vld [vmem:[%s242 + $0x3c] sm:$0xf]
      %v409 = vunpack.c.l.b16 %v265
      %v410 = vunpack.c.l.b16 %v266
      %v411 = vunpack.c.l.b16 %v267
      %v412 = vunpack.c.l.b16 %v268
      %v413 = vunpack.c.l.b16 %v269
      %v414 = vunpack.c.l.b16 %v270
      %v415 = vunpack.c.l.b16 %v271
      %v416 = vunpack.c.l.b16 %v272
      %v417 = vunpack.c.l.b16 %v273
      %v418 = vunpack.c.l.b16 %v274
      %v419 = vunpack.c.l.b16 %v275
      %v420 = vunpack.c.l.b16 %v276
      %v421 = vunpack.c.l.b16 %v277
      %v422 = vunpack.c.l.b16 %v278
      %v423 = vunpack.c.l.b16 %v279
      %v424 = vunpack.c.l.b16 %v280
      %v425 = vunpack.c.l.b16 %v281
      %v426 = vunpack.c.l.b16 %v282
      %v427 = vunpack.c.l.b16 %v283
      %v428 = vunpack.c.l.b16 %v284
      %v429 = vunpack.c.l.b16 %v285
      %v430 = vunpack.c.l.b16 %v286
      %v431 = vunpack.c.l.b16 %v287
      %v432 = vunpack.c.l.b16 %v288
      %v433 = vunpack.c.l.b16 %v289
      %v434 = vunpack.c.l.b16 %v290
      %v435 = vunpack.c.l.b16 %v291
      %v436 = vunpack.c.l.b16 %v292
      %v437 = vunpack.c.l.b16 %v293
      %v438 = vunpack.c.l.b16 %v294
      %v439 = vunpack.c.l.b16 %v295
      %v440 = vunpack.c.l.b16 %v296
      %v441 = vunpack.c.l.b16 %v297
      %v442 = vunpack.c.l.b16 %v298
      %v443 = vunpack.c.l.b16 %v299
      %v444 = vunpack.c.l.b16 %v300
      %v445 = vunpack.c.l.b16 %v301
      %v446 = vunpack.c.l.b16 %v302
      %v447 = vunpack.c.l.b16 %v303
      %v448 = vunpack.c.l.b16 %v304
      %v449 = vunpack.c.l.b16 %v305
      %v450 = vunpack.c.l.b16 %v306
      %v451 = vunpack.c.l.b16 %v307
      %v452 = vunpack.c.l.b16 %v308
      %v453 = vunpack.c.l.b16 %v309
      %v454 = vunpack.c.l.b16 %v310
      %v455 = vunpack.c.l.b16 %v311
      %v456 = vunpack.c.l.b16 %v312
      %v457 = vunpack.c.l.b16 %v313
      %v458 = vunpack.c.l.b16 %v314
      %v459 = vunpack.c.l.b16 %v315
      %v460 = vunpack.c.l.b16 %v316
      %v461 = vunpack.c.l.b16 %v317
      %v462 = vunpack.c.l.b16 %v318
      %v463 = vunpack.c.l.b16 %v319
      %v464 = vunpack.c.l.b16 %v320
      %v465 = vunpack.c.l.b16 %v321
      %v466 = vunpack.c.l.b16 %v322
      %v467 = vunpack.c.l.b16 %v323
      %v468 = vunpack.c.l.b16 %v324
      %v469 = vunpack.c.l.b16 %v325
      %v470 = vunpack.c.l.b16 %v326
      %v471 = vunpack.c.l.b16 %v327
      %v472 = vunpack.c.l.b16 %v328
      %v473 = vpack.c.b16 %v410, %v409
      %v474 = vpack.c.b16 %v412, %v411
      %v475 = vpack.c.b16 %v414, %v413
      %v476 = vpack.c.b16 %v416, %v415
      %v477 = vpack.c.b16 %v418, %v417
      %v478 = vpack.c.b16 %v420, %v419
      %v479 = vpack.c.b16 %v422, %v421
      %v480 = vpack.c.b16 %v424, %v423
      %v481 = vpack.c.b16 %v426, %v425
      %v482 = vpack.c.b16 %v428, %v427
      %v483 = vpack.c.b16 %v430, %v429
      %v484 = vpack.c.b16 %v432, %v431
      %v485 = vpack.c.b16 %v434, %v433
      %v486 = vpack.c.b16 %v436, %v435
      %v487 = vpack.c.b16 %v438, %v437
      %v488 = vpack.c.b16 %v440, %v439
      %v489 = vpack.c.b16 %v442, %v441
      %v490 = vpack.c.b16 %v444, %v443
      %v491 = vpack.c.b16 %v446, %v445
      %v492 = vpack.c.b16 %v448, %v447
      %v493 = vpack.c.b16 %v450, %v449
      %v494 = vpack.c.b16 %v452, %v451
      %v495 = vpack.c.b16 %v454, %v453
      %v496 = vpack.c.b16 %v456, %v455
      %v497 = vpack.c.b16 %v458, %v457
      %v498 = vpack.c.b16 %v460, %v459
      %v499 = vpack.c.b16 %v462, %v461
      %v500 = vpack.c.b16 %v464, %v463
      %v501 = vpack.c.b16 %v466, %v465
      %v502 = vpack.c.b16 %v468, %v467
      %v503 = vpack.c.b16 %v470, %v469
      %v504 = vpack.c.b16 %v472, %v471
      %v553 = vunpack.c.l.b16 %v329
      %v554 = vunpack.c.l.b16 %v330
      %v555 = vunpack.c.l.b16 %v331
      %v556 = vunpack.c.l.b16 %v332
      %v557 = vunpack.c.l.b16 %v333
      %v558 = vunpack.c.l.b16 %v334
      %v559 = vunpack.c.l.b16 %v335
      %v560 = vunpack.c.l.b16 %v336
      %v561 = vunpack.c.l.b16 %v337
      %v562 = vunpack.c.l.b16 %v338
      %v563 = vunpack.c.l.b16 %v339
      %v564 = vunpack.c.l.b16 %v340
      %v565 = vunpack.c.l.b16 %v341
      %v566 = vunpack.c.l.b16 %v342
      %v567 = vunpack.c.l.b16 %v343
      %v568 = vunpack.c.l.b16 %v344
      %v569 = vpack.c.b16 %v554, %v553
      %v570 = vpack.c.b16 %v556, %v555
      %v571 = vpack.c.b16 %v558, %v557
      %v572 = vpack.c.b16 %v560, %v559
      %v573 = vpack.c.b16 %v562, %v561
      %v574 = vpack.c.b16 %v564, %v563
      %v575 = vpack.c.b16 %v566, %v565
      %v576 = vpack.c.b16 %v568, %v567
      %585 = vmatpush.bf16.msra.mxu0 %v576
      %586 = vmatpush.bf16.msra.mxu0 %v575
      %587 = vmatpush.bf16.msra.mxu0 %v574
      %588 = vmatpush.bf16.msra.mxu0 %v573
      %589 = vmatpush.bf16.msra.mxu0 %v572
      %590 = vmatpush.bf16.msra.mxu0 %v571
      %591 = vmatpush.bf16.msra.mxu0 %v570
      %592 = vmatpush.bf16.msra.mxu0 %v569
      %593 = vmatmul.bf16.gmra.mxu0 %v473
      %v594 = vpop.f32.mrf.mxu0
      %v595 = vadd.f32 0.0, %v594
      %v596 = vpop.f32.mrf.mxu0
      %v597 = vadd.f32 0.0, %v596
      %598 = vmatmul.bf16.gmra.mxu0 %v474
      %v599 = vpop.f32.mrf.mxu0
      %v600 = vadd.f32 0.0, %v599
      %v601 = vpop.f32.mrf.mxu0
      %v602 = vadd.f32 0.0, %v601
      %603 = vmatmul.bf16.gmra.mxu0 %v475
      %v604 = vpop.f32.mrf.mxu0
      %v605 = vadd.f32 0.0, %v604
      %v606 = vpop.f32.mrf.mxu0
      %v607 = vadd.f32 0.0, %v606
      %608 = vmatmul.bf16.gmra.mxu0 %v476
      %v609 = vpop.f32.mrf.mxu0
      %v610 = vadd.f32 0.0, %v609
      %v611 = vpop.f32.mrf.mxu0
      %v612 = vadd.f32 0.0, %v611
      %613 = vmatmul.bf16.gmra.mxu0 %v477
      %v614 = vpop.f32.mrf.mxu0
      %v615 = vadd.f32 0.0, %v614
      %v616 = vpop.f32.mrf.mxu0
      %v617 = vadd.f32 0.0, %v616
      %618 = vmatmul.bf16.gmra.mxu0 %v478
      %v619 = vpop.f32.mrf.mxu0
      %v620 = vadd.f32 0.0, %v619
      %v621 = vpop.f32.mrf.mxu0
      %v622 = vadd.f32 0.0, %v621
      %623 = vmatmul.bf16.gmra.mxu0 %v479
      %v624 = vpop.f32.mrf.mxu0
      %v625 = vadd.f32 0.0, %v624
      %v626 = vpop.f32.mrf.mxu0
      %v627 = vadd.f32 0.0, %v626
      %628 = vmatmul.bf16.gmra.mxu0 %v480
      %v629 = vpop.f32.mrf.mxu0
      %v630 = vadd.f32 0.0, %v629
      %v631 = vpop.f32.mrf.mxu0
      %v632 = vadd.f32 0.0, %v631
      %633 = vmatmul.bf16.gmra.mxu0 %v481
      %v634 = vpop.f32.mrf.mxu0
      %v635 = vadd.f32 0.0, %v634
      %v636 = vpop.f32.mrf.mxu0
      %v637 = vadd.f32 0.0, %v636
      %638 = vmatmul.bf16.gmra.mxu0 %v482
      %v639 = vpop.f32.mrf.mxu0
      %v640 = vadd.f32 0.0, %v639
      %v641 = vpop.f32.mrf.mxu0
      %v642 = vadd.f32 0.0, %v641
      %643 = vmatmul.bf16.gmra.mxu0 %v483
      %v644 = vpop.f32.mrf.mxu0
      %v645 = vadd.f32 0.0, %v644
      %v646 = vpop.f32.mrf.mxu0
      %v647 = vadd.f32 0.0, %v646
      %648 = vmatmul.bf16.gmra.mxu0 %v484
      %v649 = vpop.f32.mrf.mxu0
      %v650 = vadd.f32 0.0, %v649
      %v651 = vpop.f32.mrf.mxu0
      %v652 = vadd.f32 0.0, %v651
      %653 = vmatmul.bf16.gmra.mxu0 %v485
      %v654 = vpop.f32.mrf.mxu0
      %v655 = vadd.f32 0.0, %v654
      %v656 = vpop.f32.mrf.mxu0
      %v657 = vadd.f32 0.0, %v656
      %658 = vmatmul.bf16.gmra.mxu0 %v486
      %v659 = vpop.f32.mrf.mxu0
      %v660 = vadd.f32 0.0, %v659
      %v661 = vpop.f32.mrf.mxu0
      %v662 = vadd.f32 0.0, %v661
      %663 = vmatmul.bf16.gmra.mxu0 %v487
      %v664 = vpop.f32.mrf.mxu0
      %v665 = vadd.f32 0.0, %v664
      %v666 = vpop.f32.mrf.mxu0
      %v667 = vadd.f32 0.0, %v666
      %668 = vmatmul.bf16.gmra.mxu0 %v488
      %v669 = vpop.f32.mrf.mxu0
      %v670 = vadd.f32 0.0, %v669
      %v671 = vpop.f32.mrf.mxu0
      %v672 = vadd.f32 0.0, %v671
      %673 = vmatmul.bf16.gmra.mxu0 %v489
      %v674 = vpop.f32.mrf.mxu0
      %v675 = vadd.f32 0.0, %v674
      %v676 = vpop.f32.mrf.mxu0
      %v677 = vadd.f32 0.0, %v676
      %678 = vmatmul.bf16.gmra.mxu0 %v490
      %v679 = vpop.f32.mrf.mxu0
      %v680 = vadd.f32 0.0, %v679
      %v681 = vpop.f32.mrf.mxu0
      %v682 = vadd.f32 0.0, %v681
      %683 = vmatmul.bf16.gmra.mxu0 %v491
      %v684 = vpop.f32.mrf.mxu0
      %v685 = vadd.f32 0.0, %v684
      %v686 = vpop.f32.mrf.mxu0
      %v687 = vadd.f32 0.0, %v686
      %688 = vmatmul.bf16.gmra.mxu0 %v492
      %v689 = vpop.f32.mrf.mxu0
      %v690 = vadd.f32 0.0, %v689
      %v691 = vpop.f32.mrf.mxu0
      %v692 = vadd.f32 0.0, %v691
      %693 = vmatmul.bf16.gmra.mxu0 %v493
      %v694 = vpop.f32.mrf.mxu0
      %v695 = vadd.f32 0.0, %v694
      %v696 = vpop.f32.mrf.mxu0
      %v697 = vadd.f32 0.0, %v696
      %698 = vmatmul.bf16.gmra.mxu0 %v494
      %v699 = vpop.f32.mrf.mxu0
      %v700 = vadd.f32 0.0, %v699
      %v701 = vpop.f32.mrf.mxu0
      %v702 = vadd.f32 0.0, %v701
      %703 = vmatmul.bf16.gmra.mxu0 %v495
      %v704 = vpop.f32.mrf.mxu0
      %v705 = vadd.f32 0.0, %v704
      %v706 = vpop.f32.mrf.mxu0
      %v707 = vadd.f32 0.0, %v706
      %708 = vmatmul.bf16.gmra.mxu0 %v496
      %v709 = vpop.f32.mrf.mxu0
      %v710 = vadd.f32 0.0, %v709
      %v711 = vpop.f32.mrf.mxu0
      %v712 = vadd.f32 0.0, %v711
      %713 = vmatmul.bf16.gmra.mxu0 %v497
      %v714 = vpop.f32.mrf.mxu0
      %v715 = vadd.f32 0.0, %v714
      %v716 = vpop.f32.mrf.mxu0
      %v717 = vadd.f32 0.0, %v716
      %718 = vmatmul.bf16.gmra.mxu0 %v498
      %v719 = vpop.f32.mrf.mxu0
      %v720 = vadd.f32 0.0, %v719
      %v721 = vpop.f32.mrf.mxu0
      %v722 = vadd.f32 0.0, %v721
      %723 = vmatmul.bf16.gmra.mxu0 %v499
      %v724 = vpop.f32.mrf.mxu0
      %v725 = vadd.f32 0.0, %v724
      %v726 = vpop.f32.mrf.mxu0
      %v727 = vadd.f32 0.0, %v726
      %728 = vmatmul.bf16.gmra.mxu0 %v500
      %v729 = vpop.f32.mrf.mxu0
      %v730 = vadd.f32 0.0, %v729
      %v731 = vpop.f32.mrf.mxu0
      %v732 = vadd.f32 0.0, %v731
      %733 = vmatmul.bf16.gmra.mxu0 %v501
      %v734 = vpop.f32.mrf.mxu0
      %v735 = vadd.f32 0.0, %v734
      %v736 = vpop.f32.mrf.mxu0
      %v737 = vadd.f32 0.0, %v736
      %738 = vmatmul.bf16.gmra.mxu0 %v502
      %v739 = vpop.f32.mrf.mxu0
      %v740 = vadd.f32 0.0, %v739
      %v741 = vpop.f32.mrf.mxu0
      %v742 = vadd.f32 0.0, %v741
      %743 = vmatmul.bf16.gmra.mxu0 %v503
      %v744 = vpop.f32.mrf.mxu0
      %v745 = vadd.f32 0.0, %v744
      %v746 = vpop.f32.mrf.mxu0
      %v747 = vadd.f32 0.0, %v746
      %748 = vmatmul.bf16.gmra.mxu0 %v504
      %v749 = vpop.f32.mrf.mxu0
      %v750 = vadd.f32 0.0, %v749
      %v751 = vpop.f32.mrf.mxu0
      %v752 = vadd.f32 0.0, %v751
      %753 = vdwg.mxu0
      %v754 = vadd.f32 %v595, %v597
      %v755 = vadd.f32 %v754, %v600
      %v756 = vadd.f32 %v755, %v602
      %v757 = vadd.f32 %v756, %v605
      %v758 = vadd.f32 %v757, %v607
      %v759 = vadd.f32 %v758, %v610
      %v760 = vadd.f32 %v759, %v612
      %v761 = vadd.f32 %v760, %v615
      %v762 = vadd.f32 %v761, %v617
      %v763 = vadd.f32 %v762, %v620
      %v764 = vadd.f32 %v763, %v622
      %v765 = vadd.f32 %v764, %v625
      %v766 = vadd.f32 %v765, %v627
      %v767 = vadd.f32 %v766, %v630
      %v768 = vadd.f32 %v767, %v632
      %v769 = vadd.f32 %v768, %v635
      %v770 = vadd.f32 %v769, %v637
      %v771 = vadd.f32 %v770, %v640
      %v772 = vadd.f32 %v771, %v642
      %v773 = vadd.f32 %v772, %v645
      %v774 = vadd.f32 %v773, %v647
      %v775 = vadd.f32 %v774, %v650
      %v776 = vadd.f32 %v775, %v652
      %v777 = vadd.f32 %v776, %v655
      %v778 = vadd.f32 %v777, %v657
      %v779 = vadd.f32 %v778, %v660
      %v780 = vadd.f32 %v779, %v662
      %v781 = vadd.f32 %v780, %v665
      %v782 = vadd.f32 %v781, %v667
      %v783 = vadd.f32 %v782, %v670
      %v784 = vadd.f32 %v783, %v672
      %v785 = vadd.f32 %v784, %v675
      %v786 = vadd.f32 %v785, %v677
      %v787 = vadd.f32 %v786, %v680
      %v788 = vadd.f32 %v787, %v682
      %v789 = vadd.f32 %v788, %v685
      %v790 = vadd.f32 %v789, %v687
      %v791 = vadd.f32 %v790, %v690
      %v792 = vadd.f32 %v791, %v692
      %v793 = vadd.f32 %v792, %v695
      %v794 = vadd.f32 %v793, %v697
      %v795 = vadd.f32 %v794, %v700
      %v796 = vadd.f32 %v795, %v702
      %v797 = vadd.f32 %v796, %v705
      %v798 = vadd.f32 %v797, %v707
      %v799 = vadd.f32 %v798, %v710
      %v800 = vadd.f32 %v799, %v712
      %v801 = vadd.f32 %v800, %v715
      %v802 = vadd.f32 %v801, %v717
      %v803 = vadd.f32 %v802, %v720
      %v804 = vadd.f32 %v803, %v722
      %v805 = vadd.f32 %v804, %v725
      %v806 = vadd.f32 %v805, %v727
      %v807 = vadd.f32 %v806, %v730
      %v808 = vadd.f32 %v807, %v732
      %v809 = vadd.f32 %v808, %v735
      %v810 = vadd.f32 %v809, %v737
      %v811 = vadd.f32 %v810, %v740
      %v812 = vadd.f32 %v811, %v742
      %v813 = vadd.f32 %v812, %v745
      %v814 = vadd.f32 %v813, %v747
      %v815 = vadd.f32 %v814, %v750
      %v816 = vadd.f32 %v815, %v752
      %v817 = vrot.slane %v816, 4
      %v818 = vadd.f32 %v816, %v817
      %v819 = vrot.slane %v818, 2
      %v820 = vadd.f32 %v818, %v819
      %v821 = vrot.slane %v820, 1
      %v822 = vadd.f32 %v820, %v821
      %v823 = vmul.f32 %v595, %v595
      %v824 = vmul.f32 %v597, %v597
      %v825 = vmul.f32 %v600, %v600
      %v826 = vmul.f32 %v602, %v602
      %v827 = vmul.f32 %v605, %v605
      %v828 = vmul.f32 %v607, %v607
      %v829 = vmul.f32 %v610, %v610
      %v830 = vmul.f32 %v612, %v612
      %v831 = vmul.f32 %v615, %v615
      %v832 = vmul.f32 %v617, %v617
      %v833 = vmul.f32 %v620, %v620
      %v834 = vmul.f32 %v622, %v622
      %v835 = vmul.f32 %v625, %v625
      %v836 = vmul.f32 %v627, %v627
      %v837 = vmul.f32 %v630, %v630
      %v838 = vmul.f32 %v632, %v632
      %v839 = vmul.f32 %v635, %v635
      %v840 = vmul.f32 %v637, %v637
      %v841 = vmul.f32 %v640, %v640
      %v842 = vmul.f32 %v642, %v642
      %v843 = vmul.f32 %v645, %v645
      %v844 = vmul.f32 %v647, %v647
      %v845 = vmul.f32 %v650, %v650
      %v846 = vmul.f32 %v652, %v652
      %v847 = vmul.f32 %v655, %v655
      %v848 = vmul.f32 %v657, %v657
      %v849 = vmul.f32 %v660, %v660
      %v850 = vmul.f32 %v662, %v662
      %v851 = vmul.f32 %v665, %v665
      %v852 = vmul.f32 %v667, %v667
      %v853 = vmul.f32 %v670, %v670
      %v854 = vmul.f32 %v672, %v672
      %v855 = vmul.f32 %v675, %v675
      %v856 = vmul.f32 %v677, %v677
      %v857 = vmul.f32 %v680, %v680
      %v858 = vmul.f32 %v682, %v682
      %v859 = vmul.f32 %v685, %v685
      %v860 = vmul.f32 %v687, %v687
      %v861 = vmul.f32 %v690, %v690
      %v862 = vmul.f32 %v692, %v692
      %v863 = vmul.f32 %v695, %v695
      %v864 = vmul.f32 %v697, %v697
      %v865 = vmul.f32 %v700, %v700
      %v866 = vmul.f32 %v702, %v702
      %v867 = vmul.f32 %v705, %v705
      %v868 = vmul.f32 %v707, %v707
      %v869 = vmul.f32 %v710, %v710
      %v870 = vmul.f32 %v712, %v712
      %v871 = vmul.f32 %v715, %v715
      %v872 = vmul.f32 %v717, %v717
      %v873 = vmul.f32 %v720, %v720
      %v874 = vmul.f32 %v722, %v722
      %v875 = vmul.f32 %v725, %v725
      %v876 = vmul.f32 %v727, %v727
      %v877 = vmul.f32 %v730, %v730
      %v878 = vmul.f32 %v732, %v732
      %v879 = vmul.f32 %v735, %v735
      %v880 = vmul.f32 %v737, %v737
      %v881 = vmul.f32 %v740, %v740
      %v882 = vmul.f32 %v742, %v742
      %v883 = vmul.f32 %v745, %v745
      %v884 = vmul.f32 %v747, %v747
      %v885 = vmul.f32 %v750, %v750
      %v886 = vmul.f32 %v752, %v752
      %v887 = vadd.f32 %v823, %v824
      %v888 = vadd.f32 %v887, %v825
      %v889 = vadd.f32 %v888, %v826
      %v890 = vadd.f32 %v889, %v827
      %v891 = vadd.f32 %v890, %v828
      %v892 = vadd.f32 %v891, %v829
      %v893 = vadd.f32 %v892, %v830
      %v894 = vadd.f32 %v893, %v831
      %v895 = vadd.f32 %v894, %v832
      %v896 = vadd.f32 %v895, %v833
      %v897 = vadd.f32 %v896, %v834
      %v898 = vadd.f32 %v897, %v835
      %v899 = vadd.f32 %v898, %v836
      %v900 = vadd.f32 %v899, %v837
      %v901 = vadd.f32 %v900, %v838
      %v902 = vadd.f32 %v901, %v839
      %v903 = vadd.f32 %v902, %v840
      %v904 = vadd.f32 %v903, %v841
      %v905 = vadd.f32 %v904, %v842
      %v906 = vadd.f32 %v905, %v843
      %v907 = vadd.f32 %v906, %v844
      %v908 = vadd.f32 %v907, %v845
      %v909 = vadd.f32 %v908, %v846
      %v910 = vadd.f32 %v909, %v847
      %v911 = vadd.f32 %v910, %v848
      %v912 = vadd.f32 %v911, %v849
      %v913 = vadd.f32 %v912, %v850
      %v914 = vadd.f32 %v913, %v851
      %v915 = vadd.f32 %v914, %v852
      %v916 = vadd.f32 %v915, %v853
      %v917 = vadd.f32 %v916, %v854
      %v918 = vadd.f32 %v917, %v855
      %v919 = vadd.f32 %v918, %v856
      %v920 = vadd.f32 %v919, %v857
      %v921 = vadd.f32 %v920, %v858
      %v922 = vadd.f32 %v921, %v859
      %v923 = vadd.f32 %v922, %v860
      %v924 = vadd.f32 %v923, %v861
      %v925 = vadd.f32 %v924, %v862
      %v926 = vadd.f32 %v925, %v863
      %v927 = vadd.f32 %v926, %v864
      %v928 = vadd.f32 %v927, %v865
      %v929 = vadd.f32 %v928, %v866
      %v930 = vadd.f32 %v929, %v867
      %v931 = vadd.f32 %v930, %v868
      %v932 = vadd.f32 %v931, %v869
      %v933 = vadd.f32 %v932, %v870
      %v934 = vadd.f32 %v933, %v871
      %v935 = vadd.f32 %v934, %v872
      %v936 = vadd.f32 %v935, %v873
      %v937 = vadd.f32 %v936, %v874
      %v938 = vadd.f32 %v937, %v875
      %v939 = vadd.f32 %v938, %v876
      %v940 = vadd.f32 %v939, %v877
      %v941 = vadd.f32 %v940, %v878
      %v942 = vadd.f32 %v941, %v879
      %v943 = vadd.f32 %v942, %v880
      %v944 = vadd.f32 %v943, %v881
      %v945 = vadd.f32 %v944, %v882
      %v946 = vadd.f32 %v945, %v883
      %v947 = vadd.f32 %v946, %v884
      %v948 = vadd.f32 %v947, %v885
      %v949 = vadd.f32 %v948, %v886
      %v950 = vrot.slane %v949, 4
      %v951 = vadd.f32 %v949, %v950
      %v952 = vrot.slane %v951, 2
      %v953 = vadd.f32 %v951, %v952
      %v954 = vrot.slane %v953, 1
      %v955 = vadd.f32 %v953, %v954
      %vm956 = vcmask 1040384
      %v957 = vsel %vm956, %v822, %v955
      %v958 = vpack.c.bf16 %v595, %v595
      %v959 = vpack.c.bf16 %v597, %v597
      %v960 = vpack.c.bf16 %v600, %v600
      %v961 = vpack.c.bf16 %v602, %v602
      %v962 = vpack.c.bf16 %v605, %v605
      %v963 = vpack.c.bf16 %v607, %v607
      %v964 = vpack.c.bf16 %v610, %v610
      %v965 = vpack.c.bf16 %v612, %v612
      %v966 = vpack.c.bf16 %v615, %v615
      %v967 = vpack.c.bf16 %v617, %v617
      %v968 = vpack.c.bf16 %v620, %v620
      %v969 = vpack.c.bf16 %v622, %v622
      %v970 = vpack.c.bf16 %v625, %v625
      %v971 = vpack.c.bf16 %v627, %v627
      %v972 = vpack.c.bf16 %v630, %v630
      %v973 = vpack.c.bf16 %v632, %v632
      %v974 = vpack.c.bf16 %v635, %v635
      %v975 = vpack.c.bf16 %v637, %v637
      %v976 = vpack.c.bf16 %v640, %v640
      %v977 = vpack.c.bf16 %v642, %v642
      %v978 = vpack.c.bf16 %v645, %v645
      %v979 = vpack.c.bf16 %v647, %v647
      %v980 = vpack.c.bf16 %v650, %v650
      %v981 = vpack.c.bf16 %v652, %v652
      %v982 = vpack.c.bf16 %v655, %v655
      %v983 = vpack.c.bf16 %v657, %v657
      %v984 = vpack.c.bf16 %v660, %v660
      %v985 = vpack.c.bf16 %v662, %v662
      %v986 = vpack.c.bf16 %v665, %v665
      %v987 = vpack.c.bf16 %v667, %v667
      %v988 = vpack.c.bf16 %v670, %v670
      %v989 = vpack.c.bf16 %v672, %v672
      %v990 = vpack.c.bf16 %v675, %v675
      %v991 = vpack.c.bf16 %v677, %v677
      %v992 = vpack.c.bf16 %v680, %v680
      %v993 = vpack.c.bf16 %v682, %v682
      %v994 = vpack.c.bf16 %v685, %v685
      %v995 = vpack.c.bf16 %v687, %v687
      %v996 = vpack.c.bf16 %v690, %v690
      %v997 = vpack.c.bf16 %v692, %v692
      %v998 = vpack.c.bf16 %v695, %v695
      %v999 = vpack.c.bf16 %v697, %v697
      %v1000 = vpack.c.bf16 %v700, %v700
      %v1001 = vpack.c.bf16 %v702, %v702
      %v1002 = vpack.c.bf16 %v705, %v705
      %v1003 = vpack.c.bf16 %v707, %v707
      %v1004 = vpack.c.bf16 %v710, %v710
      %v1005 = vpack.c.bf16 %v712, %v712
      %v1006 = vpack.c.bf16 %v715, %v715
      %v1007 = vpack.c.bf16 %v717, %v717
      %v1008 = vpack.c.bf16 %v720, %v720
      %v1009 = vpack.c.bf16 %v722, %v722
      %v1010 = vpack.c.bf16 %v725, %v725
      %v1011 = vpack.c.bf16 %v727, %v727
      %v1012 = vpack.c.bf16 %v730, %v730
      %v1013 = vpack.c.bf16 %v732, %v732
      %v1014 = vpack.c.bf16 %v735, %v735
      %v1015 = vpack.c.bf16 %v737, %v737
      %v1016 = vpack.c.bf16 %v740, %v740
      %v1017 = vpack.c.bf16 %v742, %v742
      %v1018 = vpack.c.bf16 %v745, %v745
      %v1019 = vpack.c.bf16 %v747, %v747
      %v1020 = vpack.c.bf16 %v750, %v750
      %v1021 = vpack.c.bf16 %v752, %v752
      %1022 = vst [vmem:[%s253] sm:$0xf] %v958
      %1023 = vst [vmem:[%s253 + $0x4] sm:$0xf] %v959
      %1024 = vst [vmem:[%s253 + $0x8] sm:$0xf] %v960
      %1025 = vst [vmem:[%s253 + $0xc] sm:$0xf] %v961
      %1026 = vst [vmem:[%s253 + $0x10] sm:$0xf] %v962
      %1027 = vst [vmem:[%s253 + $0x14] sm:$0xf] %v963
      %1028 = vst [vmem:[%s253 + $0x18] sm:$0xf] %v964
      %1029 = vst [vmem:[%s253 + $0x1c] sm:$0xf] %v965
      %1030 = vst [vmem:[%s253 + $0x20] sm:$0xf] %v966
      %1031 = vst [vmem:[%s253 + $0x24] sm:$0xf] %v967
      %1032 = vst [vmem:[%s253 + $0x28] sm:$0xf] %v968
      %1033 = vst [vmem:[%s253 + $0x2c] sm:$0xf] %v969
      %1034 = vst [vmem:[%s253 + $0x30] sm:$0xf] %v970
      %1035 = vst [vmem:[%s253 + $0x34] sm:$0xf] %v971
      %1036 = vst [vmem:[%s253 + $0x38] sm:$0xf] %v972
      %1037 = vst [vmem:[%s253 + $0x3c] sm:$0xf] %v973
      %1038 = vst [vmem:[%s253 + $0x40] sm:$0xf] %v974
      %1039 = vst [vmem:[%s253 + $0x44] sm:$0xf] %v975
      %1040 = vst [vmem:[%s253 + $0x48] sm:$0xf] %v976
      %1041 = vst [vmem:[%s253 + $0x4c] sm:$0xf] %v977
      %1042 = vst [vmem:[%s253 + $0x50] sm:$0xf] %v978
      %1043 = vst [vmem:[%s253 + $0x54] sm:$0xf] %v979
      %1044 = vst [vmem:[%s253 + $0x58] sm:$0xf] %v980
      %1045 = vst [vmem:[%s253 + $0x5c] sm:$0xf] %v981
      %1046 = vst [vmem:[%s253 + $0x60] sm:$0xf] %v982
      %1047 = vst [vmem:[%s253 + $0x64] sm:$0xf] %v983
      %1048 = vst [vmem:[%s253 + $0x68] sm:$0xf] %v984
      %1049 = vst [vmem:[%s253 + $0x6c] sm:$0xf] %v985
      %1050 = vst [vmem:[%s253 + $0x70] sm:$0xf] %v986
      %1051 = vst [vmem:[%s253 + $0x74] sm:$0xf] %v987
      %1052 = vst [vmem:[%s253 + $0x78] sm:$0xf] %v988
      %1053 = vst [vmem:[%s253 + $0x7c] sm:$0xf] %v989
      %1054 = vst [vmem:[%s253 + $0x80] sm:$0xf] %v990
      %1055 = vst [vmem:[%s253 + $0x84] sm:$0xf] %v991
      %1056 = vst [vmem:[%s253 + $0x88] sm:$0xf] %v992
      %1057 = vst [vmem:[%s253 + $0x8c] sm:$0xf] %v993
      %1058 = vst [vmem:[%s253 + $0x90] sm:$0xf] %v994
      %1059 = vst [vmem:[%s253 + $0x94] sm:$0xf] %v995
      %1060 = vst [vmem:[%s253 + $0x98] sm:$0xf] %v996
      %1061 = vst [vmem:[%s253 + $0x9c] sm:$0xf] %v997
      %1062 = vst [vmem:[%s253 + $0xa0] sm:$0xf] %v998
      %1063 = vst [vmem:[%s253 + $0xa4] sm:$0xf] %v999
      %1064 = vst [vmem:[%s253 + $0xa8] sm:$0xf] %v1000
      %1065 = vst [vmem:[%s253 + $0xac] sm:$0xf] %v1001
      %1066 = vst [vmem:[%s253 + $0xb0] sm:$0xf] %v1002
      %1067 = vst [vmem:[%s253 + $0xb4] sm:$0xf] %v1003
      %1068 = vst [vmem:[%s253 + $0xb8] sm:$0xf] %v1004
      %1069 = vst [vmem:[%s253 + $0xbc] sm:$0xf] %v1005
      %1070 = vst [vmem:[%s253 + $0xc0] sm:$0xf] %v1006
      %1071 = vst [vmem:[%s253 + $0xc4] sm:$0xf] %v1007
      %1072 = vst [vmem:[%s253 + $0xc8] sm:$0xf] %v1008
      %1073 = vst [vmem:[%s253 + $0xcc] sm:$0xf] %v1009
      %1074 = vst [vmem:[%s253 + $0xd0] sm:$0xf] %v1010
      %1075 = vst [vmem:[%s253 + $0xd4] sm:$0xf] %v1011
      %1076 = vst [vmem:[%s253 + $0xd8] sm:$0xf] %v1012
      %1077 = vst [vmem:[%s253 + $0xdc] sm:$0xf] %v1013
      %1078 = vst [vmem:[%s253 + $0xe0] sm:$0xf] %v1014
      %1079 = vst [vmem:[%s253 + $0xe4] sm:$0xf] %v1015
      %1080 = vst [vmem:[%s253 + $0xe8] sm:$0xf] %v1016
      %1081 = vst [vmem:[%s253 + $0xec] sm:$0xf] %v1017
      %1082 = vst [vmem:[%s253 + $0xf0] sm:$0xf] %v1018
      %1083 = vst [vmem:[%s253 + $0xf4] sm:$0xf] %v1019
      %1084 = vst [vmem:[%s253 + $0xf8] sm:$0xf] %v1020
      %1085 = vst [vmem:[%s253 + $0xfc] sm:$0xf] %v1021
      %s1086 = scalar_lea.vmem %s234, 256
      %v1087 = vld [vmem:[%s1086] sm:$0xf]
      %v1088 = vld [vmem:[%s1086 + $0x4] sm:$0xf]
      %v1089 = vld [vmem:[%s1086 + $0x8] sm:$0xf]
      %v1090 = vld [vmem:[%s1086 + $0xc] sm:$0xf]
      %v1091 = vld [vmem:[%s1086 + $0x10] sm:$0xf]
      %v1092 = vld [vmem:[%s1086 + $0x14] sm:$0xf]
      %v1093 = vld [vmem:[%s1086 + $0x18] sm:$0xf]
      %v1094 = vld [vmem:[%s1086 + $0x1c] sm:$0xf]
      %v1095 = vld [vmem:[%s1086 + $0x20] sm:$0xf]
      %v1096 = vld [vmem:[%s1086 + $0x24] sm:$0xf]
      %v1097 = vld [vmem:[%s1086 + $0x28] sm:$0xf]
      %v1098 = vld [vmem:[%s1086 + $0x2c] sm:$0xf]
      %v1099 = vld [vmem:[%s1086 + $0x30] sm:$0xf]
      %v1100 = vld [vmem:[%s1086 + $0x34] sm:$0xf]
      %v1101 = vld [vmem:[%s1086 + $0x38] sm:$0xf]
      %v1102 = vld [vmem:[%s1086 + $0x3c] sm:$0xf]
      %v1103 = vld [vmem:[%s1086 + $0x40] sm:$0xf]
      %v1104 = vld [vmem:[%s1086 + $0x44] sm:$0xf]
      %v1105 = vld [vmem:[%s1086 + $0x48] sm:$0xf]
      %v1106 = vld [vmem:[%s1086 + $0x4c] sm:$0xf]
      %v1107 = vld [vmem:[%s1086 + $0x50] sm:$0xf]
      %v1108 = vld [vmem:[%s1086 + $0x54] sm:$0xf]
      %v1109 = vld [vmem:[%s1086 + $0x58] sm:$0xf]
      %v1110 = vld [vmem:[%s1086 + $0x5c] sm:$0xf]
      %v1111 = vld [vmem:[%s1086 + $0x60] sm:$0xf]
      %v1112 = vld [vmem:[%s1086 + $0x64] sm:$0xf]
      %v1113 = vld [vmem:[%s1086 + $0x68] sm:$0xf]
      %v1114 = vld [vmem:[%s1086 + $0x6c] sm:$0xf]
      %v1115 = vld [vmem:[%s1086 + $0x70] sm:$0xf]
      %v1116 = vld [vmem:[%s1086 + $0x74] sm:$0xf]
      %v1117 = vld [vmem:[%s1086 + $0x78] sm:$0xf]
      %v1118 = vld [vmem:[%s1086 + $0x7c] sm:$0xf]
      %v1119 = vld [vmem:[%s1086 + $0x80] sm:$0xf]
      %v1120 = vld [vmem:[%s1086 + $0x84] sm:$0xf]
      %v1121 = vld [vmem:[%s1086 + $0x88] sm:$0xf]
      %v1122 = vld [vmem:[%s1086 + $0x8c] sm:$0xf]
      %v1123 = vld [vmem:[%s1086 + $0x90] sm:$0xf]
      %v1124 = vld [vmem:[%s1086 + $0x94] sm:$0xf]
      %v1125 = vld [vmem:[%s1086 + $0x98] sm:$0xf]
      %v1126 = vld [vmem:[%s1086 + $0x9c] sm:$0xf]
      %v1127 = vld [vmem:[%s1086 + $0xa0] sm:$0xf]
      %v1128 = vld [vmem:[%s1086 + $0xa4] sm:$0xf]
      %v1129 = vld [vmem:[%s1086 + $0xa8] sm:$0xf]
      %v1130 = vld [vmem:[%s1086 + $0xac] sm:$0xf]
      %v1131 = vld [vmem:[%s1086 + $0xb0] sm:$0xf]
      %v1132 = vld [vmem:[%s1086 + $0xb4] sm:$0xf]
      %v1133 = vld [vmem:[%s1086 + $0xb8] sm:$0xf]
      %v1134 = vld [vmem:[%s1086 + $0xbc] sm:$0xf]
      %v1135 = vld [vmem:[%s1086 + $0xc0] sm:$0xf]
      %v1136 = vld [vmem:[%s1086 + $0xc4] sm:$0xf]
      %v1137 = vld [vmem:[%s1086 + $0xc8] sm:$0xf]
      %v1138 = vld [vmem:[%s1086 + $0xcc] sm:$0xf]
      %v1139 = vld [vmem:[%s1086 + $0xd0] sm:$0xf]
      %v1140 = vld [vmem:[%s1086 + $0xd4] sm:$0xf]
      %v1141 = vld [vmem:[%s1086 + $0xd8] sm:$0xf]
      %v1142 = vld [vmem:[%s1086 + $0xdc] sm:$0xf]
      %v1143 = vld [vmem:[%s1086 + $0xe0] sm:$0xf]
      %v1144 = vld [vmem:[%s1086 + $0xe4] sm:$0xf]
      %v1145 = vld [vmem:[%s1086 + $0xe8] sm:$0xf]
      %v1146 = vld [vmem:[%s1086 + $0xec] sm:$0xf]
      %v1147 = vld [vmem:[%s1086 + $0xf0] sm:$0xf]
      %v1148 = vld [vmem:[%s1086 + $0xf4] sm:$0xf]
      %v1149 = vld [vmem:[%s1086 + $0xf8] sm:$0xf]
      %v1150 = vld [vmem:[%s1086 + $0xfc] sm:$0xf]
      %s1151 = scalar_lea.vmem %s242, 64
      %v1152 = vld [vmem:[%s1151] sm:$0xf]
      %v1153 = vld [vmem:[%s1151 + $0x4] sm:$0xf]
      %v1154 = vld [vmem:[%s1151 + $0x8] sm:$0xf]
      %v1155 = vld [vmem:[%s1151 + $0xc] sm:$0xf]
      %v1156 = vld [vmem:[%s1151 + $0x10] sm:$0xf]
      %v1157 = vld [vmem:[%s1151 + $0x14] sm:$0xf]
      %v1158 = vld [vmem:[%s1151 + $0x18] sm:$0xf]
      %v1159 = vld [vmem:[%s1151 + $0x1c] sm:$0xf]
      %v1160 = vld [vmem:[%s1151 + $0x20] sm:$0xf]
      %v1161 = vld [vmem:[%s1151 + $0x24] sm:$0xf]
      %v1162 = vld [vmem:[%s1151 + $0x28] sm:$0xf]
      %v1163 = vld [vmem:[%s1151 + $0x2c] sm:$0xf]
      %v1164 = vld [vmem:[%s1151 + $0x30] sm:$0xf]
      %v1165 = vld [vmem:[%s1151 + $0x34] sm:$0xf]
      %v1166 = vld [vmem:[%s1151 + $0x38] sm:$0xf]
      %v1167 = vld [vmem:[%s1151 + $0x3c] sm:$0xf]
      %v1232 = vunpack.c.l.b16 %v1087
      %v1233 = vunpack.c.l.b16 %v1088
      %v1234 = vunpack.c.l.b16 %v1089
      %v1235 = vunpack.c.l.b16 %v1090
      %v1236 = vunpack.c.l.b16 %v1091
      %v1237 = vunpack.c.l.b16 %v1092
      %v1238 = vunpack.c.l.b16 %v1093
      %v1239 = vunpack.c.l.b16 %v1094
      %v1240 = vunpack.c.l.b16 %v1095
      %v1241 = vunpack.c.l.b16 %v1096
      %v1242 = vunpack.c.l.b16 %v1097
      %v1243 = vunpack.c.l.b16 %v1098
      %v1244 = vunpack.c.l.b16 %v1099
      %v1245 = vunpack.c.l.b16 %v1100
      %v1246 = vunpack.c.l.b16 %v1101
      %v1247 = vunpack.c.l.b16 %v1102
      %v1248 = vunpack.c.l.b16 %v1103
      %v1249 = vunpack.c.l.b16 %v1104
      %v1250 = vunpack.c.l.b16 %v1105
      %v1251 = vunpack.c.l.b16 %v1106
      %v1252 = vunpack.c.l.b16 %v1107
      %v1253 = vunpack.c.l.b16 %v1108
      %v1254 = vunpack.c.l.b16 %v1109
      %v1255 = vunpack.c.l.b16 %v1110
      %v1256 = vunpack.c.l.b16 %v1111
      %v1257 = vunpack.c.l.b16 %v1112
      %v1258 = vunpack.c.l.b16 %v1113
      %v1259 = vunpack.c.l.b16 %v1114
      %v1260 = vunpack.c.l.b16 %v1115
      %v1261 = vunpack.c.l.b16 %v1116
      %v1262 = vunpack.c.l.b16 %v1117
      %v1263 = vunpack.c.l.b16 %v1118
      %v1264 = vunpack.c.l.b16 %v1119
      %v1265 = vunpack.c.l.b16 %v1120
      %v1266 = vunpack.c.l.b16 %v1121
      %v1267 = vunpack.c.l.b16 %v1122
      %v1268 = vunpack.c.l.b16 %v1123
      %v1269 = vunpack.c.l.b16 %v1124
      %v1270 = vunpack.c.l.b16 %v1125
      %v1271 = vunpack.c.l.b16 %v1126
      %v1272 = vunpack.c.l.b16 %v1127
      %v1273 = vunpack.c.l.b16 %v1128
      %v1274 = vunpack.c.l.b16 %v1129
      %v1275 = vunpack.c.l.b16 %v1130
      %v1276 = vunpack.c.l.b16 %v1131
      %v1277 = vunpack.c.l.b16 %v1132
      %v1278 = vunpack.c.l.b16 %v1133
      %v1279 = vunpack.c.l.b16 %v1134
      %v1280 = vunpack.c.l.b16 %v1135
      %v1281 = vunpack.c.l.b16 %v1136
      %v1282 = vunpack.c.l.b16 %v1137
      %v1283 = vunpack.c.l.b16 %v1138
      %v1284 = vunpack.c.l.b16 %v1139
      %v1285 = vunpack.c.l.b16 %v1140
      %v1286 = vunpack.c.l.b16 %v1141
      %v1287 = vunpack.c.l.b16 %v1142
      %v1288 = vunpack.c.l.b16 %v1143
      %v1289 = vunpack.c.l.b16 %v1144
      %v1290 = vunpack.c.l.b16 %v1145
      %v1291 = vunpack.c.l.b16 %v1146
      %v1292 = vunpack.c.l.b16 %v1147
      %v1293 = vunpack.c.l.b16 %v1148
      %v1294 = vunpack.c.l.b16 %v1149
      %v1295 = vunpack.c.l.b16 %v1150
      %v1296 = vpack.c.b16 %v1233, %v1232
      %v1297 = vpack.c.b16 %v1235, %v1234
      %v1298 = vpack.c.b16 %v1237, %v1236
      %v1299 = vpack.c.b16 %v1239, %v1238
      %v1300 = vpack.c.b16 %v1241, %v1240
      %v1301 = vpack.c.b16 %v1243, %v1242
      %v1302 = vpack.c.b16 %v1245, %v1244
      %v1303 = vpack.c.b16 %v1247, %v1246
      %v1304 = vpack.c.b16 %v1249, %v1248
      %v1305 = vpack.c.b16 %v1251, %v1250
      %v1306 = vpack.c.b16 %v1253, %v1252
      %v1307 = vpack.c.b16 %v1255, %v1254
      %v1308 = vpack.c.b16 %v1257, %v1256
      %v1309 = vpack.c.b16 %v1259, %v1258
      %v1310 = vpack.c.b16 %v1261, %v1260
      %v1311 = vpack.c.b16 %v1263, %v1262
      %v1312 = vpack.c.b16 %v1265, %v1264
      %v1313 = vpack.c.b16 %v1267, %v1266
      %v1314 = vpack.c.b16 %v1269, %v1268
      %v1315 = vpack.c.b16 %v1271, %v1270
      %v1316 = vpack.c.b16 %v1273, %v1272
      %v1317 = vpack.c.b16 %v1275, %v1274
      %v1318 = vpack.c.b16 %v1277, %v1276
      %v1319 = vpack.c.b16 %v1279, %v1278
      %v1320 = vpack.c.b16 %v1281, %v1280
      %v1321 = vpack.c.b16 %v1283, %v1282
      %v1322 = vpack.c.b16 %v1285, %v1284
      %v1323 = vpack.c.b16 %v1287, %v1286
      %v1324 = vpack.c.b16 %v1289, %v1288
      %v1325 = vpack.c.b16 %v1291, %v1290
      %v1326 = vpack.c.b16 %v1293, %v1292
      %v1327 = vpack.c.b16 %v1295, %v1294
      %v1376 = vunpack.c.l.b16 %v1152
      %v1377 = vunpack.c.l.b16 %v1153
      %v1378 = vunpack.c.l.b16 %v1154
      %v1379 = vunpack.c.l.b16 %v1155
      %v1380 = vunpack.c.l.b16 %v1156
      %v1381 = vunpack.c.l.b16 %v1157
      %v1382 = vunpack.c.l.b16 %v1158
      %v1383 = vunpack.c.l.b16 %v1159
      %v1384 = vunpack.c.l.b16 %v1160
      %v1385 = vunpack.c.l.b16 %v1161
      %v1386 = vunpack.c.l.b16 %v1162
      %v1387 = vunpack.c.l.b16 %v1163
      %v1388 = vunpack.c.l.b16 %v1164
      %v1389 = vunpack.c.l.b16 %v1165
      %v1390 = vunpack.c.l.b16 %v1166
      %v1391 = vunpack.c.l.b16 %v1167
      %v1392 = vpack.c.b16 %v1377, %v1376
      %v1393 = vpack.c.b16 %v1379, %v1378
      %v1394 = vpack.c.b16 %v1381, %v1380
      %v1395 = vpack.c.b16 %v1383, %v1382
      %v1396 = vpack.c.b16 %v1385, %v1384
      %v1397 = vpack.c.b16 %v1387, %v1386
      %v1398 = vpack.c.b16 %v1389, %v1388
      %v1399 = vpack.c.b16 %v1391, %v1390
      %1408 = vmatpush.bf16.msra.mxu0 %v1399
      %1409 = vmatpush.bf16.msra.mxu0 %v1398
      %1410 = vmatpush.bf16.msra.mxu0 %v1397
      %1411 = vmatpush.bf16.msra.mxu0 %v1396
      %1412 = vmatpush.bf16.msra.mxu0 %v1395
      %1413 = vmatpush.bf16.msra.mxu0 %v1394
      %1414 = vmatpush.bf16.msra.mxu0 %v1393
      %1415 = vmatpush.bf16.msra.mxu0 %v1392
      %1416 = vmatmul.bf16.gmra.mxu0 %v1296
      %v1417 = vpop.f32.mrf.mxu0
      %v1418 = vadd.f32 0.0, %v1417
      %v1419 = vpop.f32.mrf.mxu0
      %v1420 = vadd.f32 0.0, %v1419
      %1421 = vmatmul.bf16.gmra.mxu0 %v1297
      %v1422 = vpop.f32.mrf.mxu0
      %v1423 = vadd.f32 0.0, %v1422
      %v1424 = vpop.f32.mrf.mxu0
      %v1425 = vadd.f32 0.0, %v1424
      %1426 = vmatmul.bf16.gmra.mxu0 %v1298
      %v1427 = vpop.f32.mrf.mxu0
      %v1428 = vadd.f32 0.0, %v1427
      %v1429 = vpop.f32.mrf.mxu0
      %v1430 = vadd.f32 0.0, %v1429
      %1431 = vmatmul.bf16.gmra.mxu0 %v1299
      %v1432 = vpop.f32.mrf.mxu0
      %v1433 = vadd.f32 0.0, %v1432
      %v1434 = vpop.f32.mrf.mxu0
      %v1435 = vadd.f32 0.0, %v1434
      %1436 = vmatmul.bf16.gmra.mxu0 %v1300
      %v1437 = vpop.f32.mrf.mxu0
      %v1438 = vadd.f32 0.0, %v1437
      %v1439 = vpop.f32.mrf.mxu0
      %v1440 = vadd.f32 0.0, %v1439
      %1441 = vmatmul.bf16.gmra.mxu0 %v1301
      %v1442 = vpop.f32.mrf.mxu0
      %v1443 = vadd.f32 0.0, %v1442
      %v1444 = vpop.f32.mrf.mxu0
      %v1445 = vadd.f32 0.0, %v1444
      %1446 = vmatmul.bf16.gmra.mxu0 %v1302
      %v1447 = vpop.f32.mrf.mxu0
      %v1448 = vadd.f32 0.0, %v1447
      %v1449 = vpop.f32.mrf.mxu0
      %v1450 = vadd.f32 0.0, %v1449
      %1451 = vmatmul.bf16.gmra.mxu0 %v1303
      %v1452 = vpop.f32.mrf.mxu0
      %v1453 = vadd.f32 0.0, %v1452
      %v1454 = vpop.f32.mrf.mxu0
      %v1455 = vadd.f32 0.0, %v1454
      %1456 = vmatmul.bf16.gmra.mxu0 %v1304
      %v1457 = vpop.f32.mrf.mxu0
      %v1458 = vadd.f32 0.0, %v1457
      %v1459 = vpop.f32.mrf.mxu0
      %v1460 = vadd.f32 0.0, %v1459
      %1461 = vmatmul.bf16.gmra.mxu0 %v1305
      %v1462 = vpop.f32.mrf.mxu0
      %v1463 = vadd.f32 0.0, %v1462
      %v1464 = vpop.f32.mrf.mxu0
      %v1465 = vadd.f32 0.0, %v1464
      %1466 = vmatmul.bf16.gmra.mxu0 %v1306
      %v1467 = vpop.f32.mrf.mxu0
      %v1468 = vadd.f32 0.0, %v1467
      %v1469 = vpop.f32.mrf.mxu0
      %v1470 = vadd.f32 0.0, %v1469
      %1471 = vmatmul.bf16.gmra.mxu0 %v1307
      %v1472 = vpop.f32.mrf.mxu0
      %v1473 = vadd.f32 0.0, %v1472
      %v1474 = vpop.f32.mrf.mxu0
      %v1475 = vadd.f32 0.0, %v1474
      %1476 = vmatmul.bf16.gmra.mxu0 %v1308
      %v1477 = vpop.f32.mrf.mxu0
      %v1478 = vadd.f32 0.0, %v1477
      %v1479 = vpop.f32.mrf.mxu0
      %v1480 = vadd.f32 0.0, %v1479
      %1481 = vmatmul.bf16.gmra.mxu0 %v1309
      %v1482 = vpop.f32.mrf.mxu0
      %v1483 = vadd.f32 0.0, %v1482
      %v1484 = vpop.f32.mrf.mxu0
      %v1485 = vadd.f32 0.0, %v1484
      %1486 = vmatmul.bf16.gmra.mxu0 %v1310
      %v1487 = vpop.f32.mrf.mxu0
      %v1488 = vadd.f32 0.0, %v1487
      %v1489 = vpop.f32.mrf.mxu0
      %v1490 = vadd.f32 0.0, %v1489
      %1491 = vmatmul.bf16.gmra.mxu0 %v1311
      %v1492 = vpop.f32.mrf.mxu0
      %v1493 = vadd.f32 0.0, %v1492
      %v1494 = vpop.f32.mrf.mxu0
      %v1495 = vadd.f32 0.0, %v1494
      %1496 = vmatmul.bf16.gmra.mxu0 %v1312
      %v1497 = vpop.f32.mrf.mxu0
      %v1498 = vadd.f32 0.0, %v1497
      %v1499 = vpop.f32.mrf.mxu0
      %v1500 = vadd.f32 0.0, %v1499
      %1501 = vmatmul.bf16.gmra.mxu0 %v1313
      %v1502 = vpop.f32.mrf.mxu0
      %v1503 = vadd.f32 0.0, %v1502
      %v1504 = vpop.f32.mrf.mxu0
      %v1505 = vadd.f32 0.0, %v1504
      %1506 = vmatmul.bf16.gmra.mxu0 %v1314
      %v1507 = vpop.f32.mrf.mxu0
      %v1508 = vadd.f32 0.0, %v1507
      %v1509 = vpop.f32.mrf.mxu0
      %v1510 = vadd.f32 0.0, %v1509
      %1511 = vmatmul.bf16.gmra.mxu0 %v1315
      %v1512 = vpop.f32.mrf.mxu0
      %v1513 = vadd.f32 0.0, %v1512
      %v1514 = vpop.f32.mrf.mxu0
      %v1515 = vadd.f32 0.0, %v1514
      %1516 = vmatmul.bf16.gmra.mxu0 %v1316
      %v1517 = vpop.f32.mrf.mxu0
      %v1518 = vadd.f32 0.0, %v1517
      %v1519 = vpop.f32.mrf.mxu0
      %v1520 = vadd.f32 0.0, %v1519
      %1521 = vmatmul.bf16.gmra.mxu0 %v1317
      %v1522 = vpop.f32.mrf.mxu0
      %v1523 = vadd.f32 0.0, %v1522
      %v1524 = vpop.f32.mrf.mxu0
      %v1525 = vadd.f32 0.0, %v1524
      %1526 = vmatmul.bf16.gmra.mxu0 %v1318
      %v1527 = vpop.f32.mrf.mxu0
      %v1528 = vadd.f32 0.0, %v1527
      %v1529 = vpop.f32.mrf.mxu0
      %v1530 = vadd.f32 0.0, %v1529
      %1531 = vmatmul.bf16.gmra.mxu0 %v1319
      %v1532 = vpop.f32.mrf.mxu0
      %v1533 = vadd.f32 0.0, %v1532
      %v1534 = vpop.f32.mrf.mxu0
      %v1535 = vadd.f32 0.0, %v1534
      %1536 = vmatmul.bf16.gmra.mxu0 %v1320
      %v1537 = vpop.f32.mrf.mxu0
      %v1538 = vadd.f32 0.0, %v1537
      %v1539 = vpop.f32.mrf.mxu0
      %v1540 = vadd.f32 0.0, %v1539
      %1541 = vmatmul.bf16.gmra.mxu0 %v1321
      %v1542 = vpop.f32.mrf.mxu0
      %v1543 = vadd.f32 0.0, %v1542
      %v1544 = vpop.f32.mrf.mxu0
      %v1545 = vadd.f32 0.0, %v1544
      %1546 = vmatmul.bf16.gmra.mxu0 %v1322
      %v1547 = vpop.f32.mrf.mxu0
      %v1548 = vadd.f32 0.0, %v1547
      %v1549 = vpop.f32.mrf.mxu0
      %v1550 = vadd.f32 0.0, %v1549
      %1551 = vmatmul.bf16.gmra.mxu0 %v1323
      %v1552 = vpop.f32.mrf.mxu0
      %v1553 = vadd.f32 0.0, %v1552
      %v1554 = vpop.f32.mrf.mxu0
      %v1555 = vadd.f32 0.0, %v1554
      %1556 = vmatmul.bf16.gmra.mxu0 %v1324
      %v1557 = vpop.f32.mrf.mxu0
      %v1558 = vadd.f32 0.0, %v1557
      %v1559 = vpop.f32.mrf.mxu0
      %v1560 = vadd.f32 0.0, %v1559
      %1561 = vmatmul.bf16.gmra.mxu0 %v1325
      %v1562 = vpop.f32.mrf.mxu0
      %v1563 = vadd.f32 0.0, %v1562
      %v1564 = vpop.f32.mrf.mxu0
      %v1565 = vadd.f32 0.0, %v1564
      %1566 = vmatmul.bf16.gmra.mxu0 %v1326
      %v1567 = vpop.f32.mrf.mxu0
      %v1568 = vadd.f32 0.0, %v1567
      %v1569 = vpop.f32.mrf.mxu0
      %v1570 = vadd.f32 0.0, %v1569
      %1571 = vmatmul.bf16.gmra.mxu0 %v1327
      %v1572 = vpop.f32.mrf.mxu0
      %v1573 = vadd.f32 0.0, %v1572
      %v1574 = vpop.f32.mrf.mxu0
      %v1575 = vadd.f32 0.0, %v1574
      %1576 = vdwg.mxu0
      %v1577 = vadd.f32 %v1418, %v1420
      %v1578 = vadd.f32 %v1577, %v1423
      %v1579 = vadd.f32 %v1578, %v1425
      %v1580 = vadd.f32 %v1579, %v1428
      %v1581 = vadd.f32 %v1580, %v1430
      %v1582 = vadd.f32 %v1581, %v1433
      %v1583 = vadd.f32 %v1582, %v1435
      %v1584 = vadd.f32 %v1583, %v1438
      %v1585 = vadd.f32 %v1584, %v1440
      %v1586 = vadd.f32 %v1585, %v1443
      %v1587 = vadd.f32 %v1586, %v1445
      %v1588 = vadd.f32 %v1587, %v1448
      %v1589 = vadd.f32 %v1588, %v1450
      %v1590 = vadd.f32 %v1589, %v1453
      %v1591 = vadd.f32 %v1590, %v1455
      %v1592 = vadd.f32 %v1591, %v1458
      %v1593 = vadd.f32 %v1592, %v1460
      %v1594 = vadd.f32 %v1593, %v1463
      %v1595 = vadd.f32 %v1594, %v1465
      %v1596 = vadd.f32 %v1595, %v1468
      %v1597 = vadd.f32 %v1596, %v1470
      %v1598 = vadd.f32 %v1597, %v1473
      %v1599 = vadd.f32 %v1598, %v1475
      %v1600 = vadd.f32 %v1599, %v1478
      %v1601 = vadd.f32 %v1600, %v1480
      %v1602 = vadd.f32 %v1601, %v1483
      %v1603 = vadd.f32 %v1602, %v1485
      %v1604 = vadd.f32 %v1603, %v1488
      %v1605 = vadd.f32 %v1604, %v1490
      %v1606 = vadd.f32 %v1605, %v1493
      %v1607 = vadd.f32 %v1606, %v1495
      %v1608 = vadd.f32 %v1607, %v1498
      %v1609 = vadd.f32 %v1608, %v1500
      %v1610 = vadd.f32 %v1609, %v1503
      %v1611 = vadd.f32 %v1610, %v1505
      %v1612 = vadd.f32 %v1611, %v1508
      %v1613 = vadd.f32 %v1612, %v1510
      %v1614 = vadd.f32 %v1613, %v1513
      %v1615 = vadd.f32 %v1614, %v1515
      %v1616 = vadd.f32 %v1615, %v1518
      %v1617 = vadd.f32 %v1616, %v1520
      %v1618 = vadd.f32 %v1617, %v1523
      %v1619 = vadd.f32 %v1618, %v1525
      %v1620 = vadd.f32 %v1619, %v1528
      %v1621 = vadd.f32 %v1620, %v1530
      %v1622 = vadd.f32 %v1621, %v1533
      %v1623 = vadd.f32 %v1622, %v1535
      %v1624 = vadd.f32 %v1623, %v1538
      %v1625 = vadd.f32 %v1624, %v1540
      %v1626 = vadd.f32 %v1625, %v1543
      %v1627 = vadd.f32 %v1626, %v1545
      %v1628 = vadd.f32 %v1627, %v1548
      %v1629 = vadd.f32 %v1628, %v1550
      %v1630 = vadd.f32 %v1629, %v1553
      %v1631 = vadd.f32 %v1630, %v1555
      %v1632 = vadd.f32 %v1631, %v1558
      %v1633 = vadd.f32 %v1632, %v1560
      %v1634 = vadd.f32 %v1633, %v1563
      %v1635 = vadd.f32 %v1634, %v1565
      %v1636 = vadd.f32 %v1635, %v1568
      %v1637 = vadd.f32 %v1636, %v1570
      %v1638 = vadd.f32 %v1637, %v1573
      %v1639 = vadd.f32 %v1638, %v1575
      %v1640 = vrot.slane %v1639, 4
      %v1641 = vadd.f32 %v1639, %v1640
      %v1642 = vrot.slane %v1641, 2
      %v1643 = vadd.f32 %v1641, %v1642
      %v1644 = vrot.slane %v1643, 1
      %v1645 = vadd.f32 %v1643, %v1644
      %v1646 = vmul.f32 %v1418, %v1418
      %v1647 = vmul.f32 %v1420, %v1420
      %v1648 = vmul.f32 %v1423, %v1423
      %v1649 = vmul.f32 %v1425, %v1425
      %v1650 = vmul.f32 %v1428, %v1428
      %v1651 = vmul.f32 %v1430, %v1430
      %v1652 = vmul.f32 %v1433, %v1433
      %v1653 = vmul.f32 %v1435, %v1435
      %v1654 = vmul.f32 %v1438, %v1438
      %v1655 = vmul.f32 %v1440, %v1440
      %v1656 = vmul.f32 %v1443, %v1443
      %v1657 = vmul.f32 %v1445, %v1445
      %v1658 = vmul.f32 %v1448, %v1448
      %v1659 = vmul.f32 %v1450, %v1450
      %v1660 = vmul.f32 %v1453, %v1453
      %v1661 = vmul.f32 %v1455, %v1455
      %v1662 = vmul.f32 %v1458, %v1458
      %v1663 = vmul.f32 %v1460, %v1460
      %v1664 = vmul.f32 %v1463, %v1463
      %v1665 = vmul.f32 %v1465, %v1465
      %v1666 = vmul.f32 %v1468, %v1468
      %v1667 = vmul.f32 %v1470, %v1470
      %v1668 = vmul.f32 %v1473, %v1473
      %v1669 = vmul.f32 %v1475, %v1475
      %v1670 = vmul.f32 %v1478, %v1478
      %v1671 = vmul.f32 %v1480, %v1480
      %v1672 = vmul.f32 %v1483, %v1483
      %v1673 = vmul.f32 %v1485, %v1485
      %v1674 = vmul.f32 %v1488, %v1488
      %v1675 = vmul.f32 %v1490, %v1490
      %v1676 = vmul.f32 %v1493, %v1493
      %v1677 = vmul.f32 %v1495, %v1495
      %v1678 = vmul.f32 %v1498, %v1498
      %v1679 = vmul.f32 %v1500, %v1500
      %v1680 = vmul.f32 %v1503, %v1503
      %v1681 = vmul.f32 %v1505, %v1505
      %v1682 = vmul.f32 %v1508, %v1508
      %v1683 = vmul.f32 %v1510, %v1510
      %v1684 = vmul.f32 %v1513, %v1513
      %v1685 = vmul.f32 %v1515, %v1515
      %v1686 = vmul.f32 %v1518, %v1518
      %v1687 = vmul.f32 %v1520, %v1520
      %v1688 = vmul.f32 %v1523, %v1523
      %v1689 = vmul.f32 %v1525, %v1525
      %v1690 = vmul.f32 %v1528, %v1528
      %v1691 = vmul.f32 %v1530, %v1530
      %v1692 = vmul.f32 %v1533, %v1533
      %v1693 = vmul.f32 %v1535, %v1535
      %v1694 = vmul.f32 %v1538, %v1538
      %v1695 = vmul.f32 %v1540, %v1540
      %v1696 = vmul.f32 %v1543, %v1543
      %v1697 = vmul.f32 %v1545, %v1545
      %v1698 = vmul.f32 %v1548, %v1548
      %v1699 = vmul.f32 %v1550, %v1550
      %v1700 = vmul.f32 %v1553, %v1553
      %v1701 = vmul.f32 %v1555, %v1555
      %v1702 = vmul.f32 %v1558, %v1558
      %v1703 = vmul.f32 %v1560, %v1560
      %v1704 = vmul.f32 %v1563, %v1563
      %v1705 = vmul.f32 %v1565, %v1565
      %v1706 = vmul.f32 %v1568, %v1568
      %v1707 = vmul.f32 %v1570, %v1570
      %v1708 = vmul.f32 %v1573, %v1573
      %v1709 = vmul.f32 %v1575, %v1575
      %v1710 = vadd.f32 %v1646, %v1647
      %v1711 = vadd.f32 %v1710, %v1648
      %v1712 = vadd.f32 %v1711, %v1649
      %v1713 = vadd.f32 %v1712, %v1650
      %v1714 = vadd.f32 %v1713, %v1651
      %v1715 = vadd.f32 %v1714, %v1652
      %v1716 = vadd.f32 %v1715, %v1653
      %v1717 = vadd.f32 %v1716, %v1654
      %v1718 = vadd.f32 %v1717, %v1655
      %v1719 = vadd.f32 %v1718, %v1656
      %v1720 = vadd.f32 %v1719, %v1657
      %v1721 = vadd.f32 %v1720, %v1658
      %v1722 = vadd.f32 %v1721, %v1659
      %v1723 = vadd.f32 %v1722, %v1660
      %v1724 = vadd.f32 %v1723, %v1661
      %v1725 = vadd.f32 %v1724, %v1662
      %v1726 = vadd.f32 %v1725, %v1663
      %v1727 = vadd.f32 %v1726, %v1664
      %v1728 = vadd.f32 %v1727, %v1665
      %v1729 = vadd.f32 %v1728, %v1666
      %v1730 = vadd.f32 %v1729, %v1667
      %v1731 = vadd.f32 %v1730, %v1668
      %v1732 = vadd.f32 %v1731, %v1669
      %v1733 = vadd.f32 %v1732, %v1670
      %v1734 = vadd.f32 %v1733, %v1671
      %v1735 = vadd.f32 %v1734, %v1672
      %v1736 = vadd.f32 %v1735, %v1673
      %v1737 = vadd.f32 %v1736, %v1674
      %v1738 = vadd.f32 %v1737, %v1675
      %v1739 = vadd.f32 %v1738, %v1676
      %v1740 = vadd.f32 %v1739, %v1677
      %v1741 = vadd.f32 %v1740, %v1678
      %v1742 = vadd.f32 %v1741, %v1679
      %v1743 = vadd.f32 %v1742, %v1680
      %v1744 = vadd.f32 %v1743, %v1681
      %v1745 = vadd.f32 %v1744, %v1682
      %v1746 = vadd.f32 %v1745, %v1683
      %v1747 = vadd.f32 %v1746, %v1684
      %v1748 = vadd.f32 %v1747, %v1685
      %v1749 = vadd.f32 %v1748, %v1686
      %v1750 = vadd.f32 %v1749, %v1687
      %v1751 = vadd.f32 %v1750, %v1688
      %v1752 = vadd.f32 %v1751, %v1689
      %v1753 = vadd.f32 %v1752, %v1690
      %v1754 = vadd.f32 %v1753, %v1691
      %v1755 = vadd.f32 %v1754, %v1692
      %v1756 = vadd.f32 %v1755, %v1693
      %v1757 = vadd.f32 %v1756, %v1694
      %v1758 = vadd.f32 %v1757, %v1695
      %v1759 = vadd.f32 %v1758, %v1696
      %v1760 = vadd.f32 %v1759, %v1697
      %v1761 = vadd.f32 %v1760, %v1698
      %v1762 = vadd.f32 %v1761, %v1699
      %v1763 = vadd.f32 %v1762, %v1700
      %v1764 = vadd.f32 %v1763, %v1701
      %v1765 = vadd.f32 %v1764, %v1702
      %v1766 = vadd.f32 %v1765, %v1703
      %v1767 = vadd.f32 %v1766, %v1704
      %v1768 = vadd.f32 %v1767, %v1705
      %v1769 = vadd.f32 %v1768, %v1706
      %v1770 = vadd.f32 %v1769, %v1707
      %v1771 = vadd.f32 %v1770, %v1708
      %v1772 = vadd.f32 %v1771, %v1709
      %v1773 = vrot.slane %v1772, 4
      %v1774 = vadd.f32 %v1772, %v1773
      %v1775 = vrot.slane %v1774, 2
      %v1776 = vadd.f32 %v1774, %v1775
      %v1777 = vrot.slane %v1776, 1
      %v1778 = vadd.f32 %v1776, %v1777
      %v1779 = vsel %vm956, %v1645, %v1778
      %v1780 = vpack.c.bf16 %v1418, %v1418
      %v1781 = vpack.c.bf16 %v1420, %v1420
      %v1782 = vpack.c.bf16 %v1423, %v1423
      %v1783 = vpack.c.bf16 %v1425, %v1425
      %v1784 = vpack.c.bf16 %v1428, %v1428
      %v1785 = vpack.c.bf16 %v1430, %v1430
      %v1786 = vpack.c.bf16 %v1433, %v1433
      %v1787 = vpack.c.bf16 %v1435, %v1435
      %v1788 = vpack.c.bf16 %v1438, %v1438
      %v1789 = vpack.c.bf16 %v1440, %v1440
      %v1790 = vpack.c.bf16 %v1443, %v1443
      %v1791 = vpack.c.bf16 %v1445, %v1445
      %v1792 = vpack.c.bf16 %v1448, %v1448
      %v1793 = vpack.c.bf16 %v1450, %v1450
      %v1794 = vpack.c.bf16 %v1453, %v1453
      %v1795 = vpack.c.bf16 %v1455, %v1455
      %v1796 = vpack.c.bf16 %v1458, %v1458
      %v1797 = vpack.c.bf16 %v1460, %v1460
      %v1798 = vpack.c.bf16 %v1463, %v1463
      %v1799 = vpack.c.bf16 %v1465, %v1465
      %v1800 = vpack.c.bf16 %v1468, %v1468
      %v1801 = vpack.c.bf16 %v1470, %v1470
      %v1802 = vpack.c.bf16 %v1473, %v1473
      %v1803 = vpack.c.bf16 %v1475, %v1475
      %v1804 = vpack.c.bf16 %v1478, %v1478
      %v1805 = vpack.c.bf16 %v1480, %v1480
      %v1806 = vpack.c.bf16 %v1483, %v1483
      %v1807 = vpack.c.bf16 %v1485, %v1485
      %v1808 = vpack.c.bf16 %v1488, %v1488
      %v1809 = vpack.c.bf16 %v1490, %v1490
      %v1810 = vpack.c.bf16 %v1493, %v1493
      %v1811 = vpack.c.bf16 %v1495, %v1495
      %v1812 = vpack.c.bf16 %v1498, %v1498
      %v1813 = vpack.c.bf16 %v1500, %v1500
      %v1814 = vpack.c.bf16 %v1503, %v1503
      %v1815 = vpack.c.bf16 %v1505, %v1505
      %v1816 = vpack.c.bf16 %v1508, %v1508
      %v1817 = vpack.c.bf16 %v1510, %v1510
      %v1818 = vpack.c.bf16 %v1513, %v1513
      %v1819 = vpack.c.bf16 %v1515, %v1515
      %v1820 = vpack.c.bf16 %v1518, %v1518
      %v1821 = vpack.c.bf16 %v1520, %v1520
      %v1822 = vpack.c.bf16 %v1523, %v1523
      %v1823 = vpack.c.bf16 %v1525, %v1525
      %v1824 = vpack.c.bf16 %v1528, %v1528
      %v1825 = vpack.c.bf16 %v1530, %v1530
      %v1826 = vpack.c.bf16 %v1533, %v1533
      %v1827 = vpack.c.bf16 %v1535, %v1535
      %v1828 = vpack.c.bf16 %v1538, %v1538
      %v1829 = vpack.c.bf16 %v1540, %v1540
      %v1830 = vpack.c.bf16 %v1543, %v1543
      %v1831 = vpack.c.bf16 %v1545, %v1545
      %v1832 = vpack.c.bf16 %v1548, %v1548
      %v1833 = vpack.c.bf16 %v1550, %v1550
      %v1834 = vpack.c.bf16 %v1553, %v1553
      %v1835 = vpack.c.bf16 %v1555, %v1555
      %v1836 = vpack.c.bf16 %v1558, %v1558
      %v1837 = vpack.c.bf16 %v1560, %v1560
      %v1838 = vpack.c.bf16 %v1563, %v1563
      %v1839 = vpack.c.bf16 %v1565, %v1565
      %v1840 = vpack.c.bf16 %v1568, %v1568
      %v1841 = vpack.c.bf16 %v1570, %v1570
      %v1842 = vpack.c.bf16 %v1573, %v1573
      %v1843 = vpack.c.bf16 %v1575, %v1575
      %s1844 = scalar_lea.vmem %s253, 256
      %1845 = vst [vmem:[%s1844] sm:$0xf] %v1780
      %1846 = vst [vmem:[%s1844 + $0x4] sm:$0xf] %v1781
      %1847 = vst [vmem:[%s1844 + $0x8] sm:$0xf] %v1782
      %1848 = vst [vmem:[%s1844 + $0xc] sm:$0xf] %v1783
      %1849 = vst [vmem:[%s1844 + $0x10] sm:$0xf] %v1784
      %1850 = vst [vmem:[%s1844 + $0x14] sm:$0xf] %v1785
      %1851 = vst [vmem:[%s1844 + $0x18] sm:$0xf] %v1786
      %1852 = vst [vmem:[%s1844 + $0x1c] sm:$0xf] %v1787
      %1853 = vst [vmem:[%s1844 + $0x20] sm:$0xf] %v1788
      %1854 = vst [vmem:[%s1844 + $0x24] sm:$0xf] %v1789
      %1855 = vst [vmem:[%s1844 + $0x28] sm:$0xf] %v1790
      %1856 = vst [vmem:[%s1844 + $0x2c] sm:$0xf] %v1791
      %1857 = vst [vmem:[%s1844 + $0x30] sm:$0xf] %v1792
      %1858 = vst [vmem:[%s1844 + $0x34] sm:$0xf] %v1793
      %1859 = vst [vmem:[%s1844 + $0x38] sm:$0xf] %v1794
      %1860 = vst [vmem:[%s1844 + $0x3c] sm:$0xf] %v1795
      %1861 = vst [vmem:[%s1844 + $0x40] sm:$0xf] %v1796
      %1862 = vst [vmem:[%s1844 + $0x44] sm:$0xf] %v1797
      %1863 = vst [vmem:[%s1844 + $0x48] sm:$0xf] %v1798
      %1864 = vst [vmem:[%s1844 + $0x4c] sm:$0xf] %v1799
      %1865 = vst [vmem:[%s1844 + $0x50] sm:$0xf] %v1800
      %1866 = vst [vmem:[%s1844 + $0x54] sm:$0xf] %v1801
      %1867 = vst [vmem:[%s1844 + $0x58] sm:$0xf] %v1802
      %1868 = vst [vmem:[%s1844 + $0x5c] sm:$0xf] %v1803
      %1869 = vst [vmem:[%s1844 + $0x60] sm:$0xf] %v1804
      %1870 = vst [vmem:[%s1844 + $0x64] sm:$0xf] %v1805
      %1871 = vst [vmem:[%s1844 + $0x68] sm:$0xf] %v1806
      %1872 = vst [vmem:[%s1844 + $0x6c] sm:$0xf] %v1807
      %1873 = vst [vmem:[%s1844 + $0x70] sm:$0xf] %v1808
      %1874 = vst [vmem:[%s1844 + $0x74] sm:$0xf] %v1809
      %1875 = vst [vmem:[%s1844 + $0x78] sm:$0xf] %v1810
      %1876 = vst [vmem:[%s1844 + $0x7c] sm:$0xf] %v1811
      %1877 = vst [vmem:[%s1844 + $0x80] sm:$0xf] %v1812
      %1878 = vst [vmem:[%s1844 + $0x84] sm:$0xf] %v1813
      %1879 = vst [vmem:[%s1844 + $0x88] sm:$0xf] %v1814
      %1880 = vst [vmem:[%s1844 + $0x8c] sm:$0xf] %v1815
      %1881 = vst [vmem:[%s1844 + $0x90] sm:$0xf] %v1816
      %1882 = vst [vmem:[%s1844 + $0x94] sm:$0xf] %v1817
      %1883 = vst [vmem:[%s1844 + $0x98] sm:$0xf] %v1818
      %1884 = vst [vmem:[%s1844 + $0x9c] sm:$0xf] %v1819
      %1885 = vst [vmem:[%s1844 + $0xa0] sm:$0xf] %v1820
      %1886 = vst [vmem:[%s1844 + $0xa4] sm:$0xf] %v1821
      %1887 = vst [vmem:[%s1844 + $0xa8] sm:$0xf] %v1822
      %1888 = vst [vmem:[%s1844 + $0xac] sm:$0xf] %v1823
      %1889 = vst [vmem:[%s1844 + $0xb0] sm:$0xf] %v1824
      %1890 = vst [vmem:[%s1844 + $0xb4] sm:$0xf] %v1825
      %1891 = vst [vmem:[%s1844 + $0xb8] sm:$0xf] %v1826
      %1892 = vst [vmem:[%s1844 + $0xbc] sm:$0xf] %v1827
      %1893 = vst [vmem:[%s1844 + $0xc0] sm:$0xf] %v1828
      %1894 = vst [vmem:[%s1844 + $0xc4] sm:$0xf] %v1829
      %1895 = vst [vmem:[%s1844 + $0xc8] sm:$0xf] %v1830
      %1896 = vst [vmem:[%s1844 + $0xcc] sm:$0xf] %v1831
      %1897 = vst [vmem:[%s1844 + $0xd0] sm:$0xf] %v1832
      %1898 = vst [vmem:[%s1844 + $0xd4] sm:$0xf] %v1833
      %1899 = vst [vmem:[%s1844 + $0xd8] sm:$0xf] %v1834
      %1900 = vst [vmem:[%s1844 + $0xdc] sm:$0xf] %v1835
      %1901 = vst [vmem:[%s1844 + $0xe0] sm:$0xf] %v1836
      %1902 = vst [vmem:[%s1844 + $0xe4] sm:$0xf] %v1837
      %1903 = vst [vmem:[%s1844 + $0xe8] sm:$0xf] %v1838
      %1904 = vst [vmem:[%s1844 + $0xec] sm:$0xf] %v1839
      %1905 = vst [vmem:[%s1844 + $0xf0] sm:$0xf] %v1840
      %1906 = vst [vmem:[%s1844 + $0xf4] sm:$0xf] %v1841
      %1907 = vst [vmem:[%s1844 + $0xf8] sm:$0xf] %v1842
      %1908 = vst [vmem:[%s1844 + $0xfc] sm:$0xf] %v1843
      %1909 = vst [vmem:[%s263] sm:$0x3] %v957
      %1910 = vst [vmem:[%s263 + $0x2] sm:$0x3] %v1779
      %s1911 = smul.u32 2, %s19
      %s1912 = smul.u32 64, %s20
      %p1913 = scmp.lt.s32.totalorder %s1911, 3
      %s1914 = scalar_select %p1913, %s1911, 3
      %p1915 = scmp.lt.s32.totalorder %s1912, 63
      %s1916 = scalar_select %p1915, %s1912, 63
      %s1917 = smul.addr %s1914, 64
      %s1918 = sadd.s32 %s1916, %s1917
      %s1919 = smul.addr %s1918, 4
      %s1920 = scalar_lea.vmem %s2, %s1919
      %s1921 = smul.u32 2, %s19
      %p1922 = scmp.lt.s32.totalorder %s1921, 3
      %s1923 = scalar_select %p1922, %s1921, 3
      %p1924 = scmp.lt.s32.totalorder %s20, 0
      %s1925 = scalar_select %p1924, %s20, 0
      %s1926 = sadd.s32 %s1925, %s1923
      %s1927 = smul.addr %s1926, 2
      %s1928 = scalar_lea.vmem %s3, %s1927
      // Predicated region
      $region29: #{generator_forward.8} parent=27 // pred_check
        %p1929 = pneg %p101
      $region30: #{generator_forward.8} parent=27 // pred_check_branch
        %1931 = sbr.rel (%p1929) target = $region32
      $region31: #{generator_forward.8} parent=27 // pred_region
        %s1932 = smul.u32 2, %s19
        %s1933 = smul.u32 64, %s20
      $region32: #{generator_forward.8} parent=27 // pred_fallthru
        _
      // Predicated region
      $region33: #{generator_forward.8} parent=27 // pred_check
        %p1934 = pneg %p129
      $region34: #{generator_forward.8} parent=27 // pred_check_branch
        %1936 = sbr.rel (%p1934) target = $region36
      $region35: #{generator_forward.8} parent=27 // pred_region
        %s1937 = smul.u32 2, %s19
      $region36: #{generator_forward.8} parent=27 // pred_fallthru
        _
    $region28: #{generator_forward.8} parent=5 // pred_fallthru
      _
    %p1938 = scmp.le.s32.totalorder 2, %s10
    // Predicated region
    $region37: #{generator_forward.8} parent=5 // pred_check
      %p1939 = pneg %p1938
    $region38: #{generator_forward.8} parent=5 // pred_check_branch
      %1941 = sbr.rel (%p1939) target = $region40
    $region39: #{generator_forward.8} parent=5 // pred_region
      %s1942 = ssub.s32 %s10, 2
      // Predicated region
      $region41: #{generator_forward.8} parent=39 // pred_check
        %p1943 = pneg %p107
      $region42: #{generator_forward.8} parent=39 // pred_check_branch
        %1945 = sbr.rel (%p1943) target = $region44
      $region43: #{generator_forward.8} parent=39 // pred_region
        %s1946 = smul.u32 2, %s21
        %s1947 = smul.u32 64, %s22
        %p1948 = scmp.lt.s32.totalorder %s1946, 3
        %s1949 = scalar_select %p1948, %s1946, 3
        %p1950 = scmp.lt.s32.totalorder %s1947, 63
        %s1951 = scalar_select %p1950, %s1947, 63
        %s1952 = smul.addr %s1949, 64
        %s1953 = sadd.s32 %s1951, %s1952
        %s1954 = smul.addr %s1953, 4
        %s1955 = scalar_lea.vmem %s2, %s1954
      $region44: #{generator_forward.8} parent=39 // pred_fallthru
        _
      // Predicated region
      $region45: #{generator_forward.8} parent=39 // pred_check
        %p1956 = pneg %p135
      $region46: #{generator_forward.8} parent=39 // pred_check_branch
        %1958 = sbr.rel (%p1956) target = $region48
      $region47: #{generator_forward.8} parent=39 // pred_region
        %s1959 = smul.u32 2, %s21
        %p1960 = scmp.lt.s32.totalorder %s1959, 3
        %s1961 = scalar_select %p1960, %s1959, 3
        %p1962 = scmp.lt.s32.totalorder %s22, 0
        %s1963 = scalar_select %p1962, %s22, 0
        %s1964 = sadd.s32 %s1963, %s1961
        %s1965 = smul.addr %s1964, 2
        %s1966 = scalar_lea.vmem %s3, %s1965
      $region48: #{generator_forward.8} parent=39 // pred_fallthru
        _
    $region40: #{generator_forward.8} parent=5 // pred_fallthru
      _
  $region6: #{generator_forward.8} parent=0 // loop_footer
    %s14 = sadd.s32 1, %s10
  $region7: #{generator_forward.8} parent=0 // loop_footer_branch
    %9 = sbr.rel target = $region3
  $region8: #{generator_forward.8} parent=0 // loop_exit
    _

// kernel: generator_forward.9
$region0: #{generator_forward.9}
  #allocation0 [shape = 'u32[]', space=smem, size = 0x4, offset = 0x4, fixed_abs, tag = 'smem constant byte address 0x4 - core index']
  #allocation1 [shape = 'u32[72,128]{1,0:T(1,128)}', space=vmem, size = 0x9000, scoped, tag = 'internal scratch']
  %s0 = inlined_call_operand.vmem [shape: bf16[4,2048,128], index: 0, kind: input, shape index: {}]
  %s1 = inlined_call_operand.vmem [shape: bf16[4,128,128], index: 1, kind: input, shape index: {}]
  %s2 = inlined_call_operand.vmem [shape: bf16[4,2048,128], index: 2, kind: output, shape index: {}]
  %s3 = sld [smem:[#allocation0]]
  $region41: #{generator_forward.9} parent=0
    _
  %s5 = ssub.s32 1, %s3
  %s6 = scalar_select 0, %s5, %s3
  loop: start=0, step=1, limit=4
  $region2: #{generator_forward.9} parent=0 // loop_pre_header
    _
  $region3: #{generator_forward.9} parent=0 // loop_header
    %s8 = sphi 0, %s12
    %p9 = scmp.ge.s32.totalorder %s8, 4
    %s15 = sphi 0, %s27
    %s16 = sphi 0, %s23
    %s17 = sphi 0, %s15
    %s18 = sphi 0, %s16
    %s19 = sphi 0, %s17
    %s20 = sphi 0, %s18
    %s32 = sphi 0, %s34
    %s35 = sphi 0, %s32
    %s36 = sphi 0, %s35
    %s52 = sphi 0, %s36
    %s58 = sphi 0, %s60
    %s61 = sphi 0, %s58
    %s62 = sphi 0, %s61
    %s78 = sphi 0, %s62
    %s86 = sphi 0, %s88
    %s89 = sphi 0, %s86
    %s90 = sphi 0, %s89
    %s106 = sphi 0, %s90
  $region4: #{generator_forward.9} parent=0 // loop_header_branch
    %11 = sbr.rel (%p9) target = $region8
  $region5: #{generator_forward.9} parent=0 // loop_body
    %s13 = ssub.s32 %s8, 1
    %s14 = ssub.s32 %s8, 2
    %s21 = sadd.s32 1, %s16
    %p22 = scmp.ge.s32.totalorder %s21, 1
    %s23 = scalar_select %p22, 0, %s21
    %s24 = sadd.s32 1, %s15
    %s25 = scalar_select %p22, %s24, %s15
    %p26 = scmp.ge.s32.totalorder %s25, 2
    %s27 = scalar_select %p26, 0, %s25
    %s28 = ssub.s32 %s15, %s27
    %s29 = ssub.s32 %s16, %s23
    %s30 = sor.u32 %s28, %s29
    %p31 = scmp.eq.s32.totalorder %s30, 0
    %s33 = sadd.s32 %s32, 1
    %s34 = scalar_select %p31, %s32, %s33
    %p37 = pneg %p31
    %p38 = scmp.eq.s32.totalorder %s8, 1
    %p39 = por %p37, %p38
    %p40 = scmp.ne.s32.totalorder %s32, %s35
    %p41 = scmp.eq.s32.totalorder %s8, 0
    %p42 = por %p40, %p41
    %p43 = scmp.ne.s32.totalorder %s32, %s35
    %p44 = scmp.eq.s32.totalorder %s13, 1
    %p45 = por %p43, %p44
    %p46 = scmp.ne.s32.totalorder %s35, %s36
    %p47 = scmp.eq.s32.totalorder %s13, 0
    %p48 = por %p46, %p47
    %p49 = scmp.ne.s32.totalorder %s35, %s36
    %p50 = scmp.eq.s32.totalorder %s14, 1
    %p51 = por %p49, %p50
    %p53 = scmp.ne.s32.totalorder %s36, %s52
    %p54 = scmp.eq.s32.totalorder %s14, 0
    %p55 = por %p53, %p54
    %s56 = ssub.s32 %s15, %s27
    %p57 = scmp.eq.s32.totalorder %s56, 0
    %s59 = sadd.s32 %s58, 1
    %s60 = scalar_select %p57, %s58, %s59
    %p63 = pneg %p57
    %p64 = scmp.eq.s32.totalorder %s8, 1
    %p65 = por %p63, %p64
    %p66 = scmp.ne.s32.totalorder %s58, %s61
    %p67 = scmp.eq.s32.totalorder %s8, 0
    %p68 = por %p66, %p67
    %p69 = scmp.ne.s32.totalorder %s58, %s61
    %p70 = scmp.eq.s32.totalorder %s13, 1
    %p71 = por %p69, %p70
    %p72 = scmp.ne.s32.totalorder %s61, %s62
    %p73 = scmp.eq.s32.totalorder %s13, 0
    %p74 = por %p72, %p73
    %p75 = scmp.ne.s32.totalorder %s61, %s62
    %p76 = scmp.eq.s32.totalorder %s14, 1
    %p77 = por %p75, %p76
    %p79 = scmp.ne.s32.totalorder %s62, %s78
    %p80 = scmp.eq.s32.totalorder %s14, 0
    %p81 = por %p79, %p80
    %s82 = ssub.s32 %s15, %s27
    %s83 = ssub.s32 %s16, %s23
    %s84 = sor.u32 %s82, %s83
    %p85 = scmp.eq.s32.totalorder %s84, 0
    %s87 = sadd.s32 %s86, 1
    %s88 = scalar_select %p85, %s86, %s87
    %p91 = pneg %p85
    %p92 = scmp.eq.s32.totalorder %s8, 1
    %p93 = por %p91, %p92
    %p94 = scmp.ne.s32.totalorder %s86, %s89
    %p95 = scmp.eq.s32.totalorder %s8, 0
    %p96 = por %p94, %p95
    %p97 = scmp.ne.s32.totalorder %s86, %s89
    %p98 = scmp.eq.s32.totalorder %s13, 1
    %p99 = por %p97, %p98
    %p100 = scmp.ne.s32.totalorder %s89, %s90
    %p101 = scmp.eq.s32.totalorder %s13, 0
    %p102 = por %p100, %p101
    %p103 = scmp.ne.s32.totalorder %s89, %s90
    %p104 = scmp.eq.s32.totalorder %s14, 1
    %p105 = por %p103, %p104
    %p107 = scmp.ne.s32.totalorder %s90, %s106
    %p108 = scmp.eq.s32.totalorder %s14, 0
    %p109 = por %p107, %p108
    %p110 = scmp.le.s32.totalorder 1, %s8
    %p111 = scmp.lt.s32.totalorder %s8, 3
    %p112 = pnand %p110, %p111
    %p113 = pneg %p112
    // Predicated region
    $region9: #{generator_forward.9} parent=5 // pred_check
      _
    $region10: #{generator_forward.9} parent=5 // pred_check_branch
      %115 = sbr.rel (%p112) target = $region12
    $region11: #{generator_forward.9} parent=5 // pred_region
      %s116 = ssub.s32 %s8, 1
    $region12: #{generator_forward.9} parent=5 // pred_fallthru
      _
    %p117 = scmp.lt.s32.totalorder %s8, 2
    // Predicated region
    $region13: #{generator_forward.9} parent=5 // pred_check
      %p118 = pneg %p117
    $region14: #{generator_forward.9} parent=5 // pred_check_branch
      %120 = sbr.rel (%p118) target = $region16
    $region15: #{generator_forward.9} parent=5 // pred_region
      // Predicated region
      $region17: #{generator_forward.9} parent=15 // pred_check
        %p121 = pneg %p42
      $region18: #{generator_forward.9} parent=15 // pred_check_branch
        %123 = sbr.rel (%p121) target = $region20
      $region19: #{generator_forward.9} parent=15 // pred_region
        %s124 = smul.u32 2, %s15
        %s125 = smul.u32 256, %s16
        %p126 = scmp.lt.s32.totalorder %s124, 3
        %s127 = scalar_select %p126, %s124, 3
        %p128 = scmp.lt.s32.totalorder %s125, 255
        %s129 = scalar_select %p128, %s125, 255
        %s130 = smul.addr %s127, 256
        %s131 = sadd.s32 %s129, %s130
        %s132 = smul.addr %s131, 4
        %s133 = scalar_lea.vmem %s0, %s132
        %s134 = smul.u32 2, %s15
        %s135 = smul.u32 256, %s16
      $region20: #{generator_forward.9} parent=15 // pred_fallthru
        _
      // Predicated region
      $region21: #{generator_forward.9} parent=15 // pred_check
        %p136 = pneg %p68
      $region22: #{generator_forward.9} parent=15 // pred_check_branch
        %138 = sbr.rel (%p136) target = $region24
      $region23: #{generator_forward.9} parent=15 // pred_region
        %s139 = smul.u32 2, %s15
        %p140 = scmp.lt.s32.totalorder %s139, 3
        %s141 = scalar_select %p140, %s139, 3
        %s142 = smul.addr %s141, 16
        %s143 = smul.addr %s142, 4
        %s144 = scalar_lea.vmem %s1, %s143
        %s145 = smul.u32 2, %s15
      $region24: #{generator_forward.9} parent=15 // pred_fallthru
        _
    $region16: #{generator_forward.9} parent=5 // pred_fallthru
      _
    %p146 = scmp.le.s32.totalorder 1, %s8
    %p147 = scmp.lt.s32.totalorder %s8, 3
    %p148 = pnand %p146, %p147
    %p149 = pneg %p148
    // Predicated region
    $region25: #{generator_forward.9} parent=5 // pred_check
      _
    $region26: #{generator_forward.9} parent=5 // pred_check_branch
      %151 = sbr.rel (%p148) target = $region28
    $region27: #{generator_forward.9} parent=5 // pred_region
      %s152 = ssub.s32 %s8, 1
      %s153 = smul.u32 2, %s17
      %s154 = smul.u32 256, %s18
      %p155 = scmp.lt.s32.totalorder %s153, 3
      %s156 = scalar_select %p155, %s153, 3
      %p157 = scmp.lt.s32.totalorder %s154, 255
      %s158 = scalar_select %p157, %s154, 255
      %s159 = smul.addr %s156, 256
      %s160 = sadd.s32 %s158, %s159
      %s161 = smul.addr %s160, 4
      %s162 = scalar_lea.vmem %s0, %s161
      %p163 = pneg %p48
      %p164 = pneg %p45
      %s165 = smul.u32 2, %s17
      %p166 = scmp.lt.s32.totalorder %s165, 3
      %s167 = scalar_select %p166, %s165, 3
      %s168 = smul.addr %s167, 16
      %s169 = smul.addr %s168, 4
      %s170 = scalar_lea.vmem %s1, %s169
      %p171 = pneg %p74
      %p172 = pneg %p71
      %p173 = pneg %p102
      %p174 = pneg %p99
      %s175 = smul.u32 2, %s17
      %s176 = smul.u32 256, %s18
      %p177 = scmp.lt.s32.totalorder %s175, 3
      %s178 = scalar_select %p177, %s175, 3
      %p179 = scmp.lt.s32.totalorder %s176, 255
      %s180 = scalar_select %p179, %s176, 255
      %s181 = smul.addr %s178, 256
      %s182 = sadd.s32 %s180, %s181
      %s183 = smul.addr %s182, 4
      %s184 = scalar_lea.vmem %s2, %s183
      %s185 = smul.u32 2, %s17
      %s186 = smul.u32 256, %s18
      %p187 = scmp.lt.s32.totalorder %s185, 3
      %s188 = scalar_select %p187, %s185, 3
      %p189 = scmp.lt.s32.totalorder %s186, 255
      %s190 = scalar_select %p189, %s186, 255
      %s191 = smul.addr %s188, 256
      %s192 = sadd.s32 %s190, %s191
      %s193 = smul.addr %s192, 4
      %s194 = scalar_lea.vmem %s0, %s193
      %s195 = smul.u32 2, %s17
      %s196 = smul.u32 256, %s18
      %s197 = smul.u32 2, %s17
      %p198 = scmp.lt.s32.totalorder %s197, 3
      %s199 = scalar_select %p198, %s197, 3
      %s200 = smul.addr %s199, 16
      %s201 = smul.addr %s200, 4
      %s202 = scalar_lea.vmem %s1, %s201
      %s203 = smul.u32 2, %s17
      %s204 = smul.u32 2, %s17
      %s205 = smul.u32 256, %s18
      %p206 = scmp.lt.s32.totalorder %s204, 3
      %s207 = scalar_select %p206, %s204, 3
      %p208 = scmp.lt.s32.totalorder %s205, 255
      %s209 = scalar_select %p208, %s205, 255
      %s210 = smul.addr %s207, 256
      %s211 = sadd.s32 %s209, %s210
      %s212 = smul.addr %s211, 4
      %s213 = scalar_lea.vmem %s2, %s212
      %s214 = smul.u32 2, %s17
      %s215 = smul.u32 256, %s18
      %v216 = vld [vmem:[%s194] sm:$0xf]
      %v217 = vld [vmem:[%s194 + $0x4] sm:$0xf]
      %v218 = vld [vmem:[%s194 + $0x8] sm:$0xf]
      %v219 = vld [vmem:[%s194 + $0xc] sm:$0xf]
      %v220 = vld [vmem:[%s194 + $0x10] sm:$0xf]
      %v221 = vld [vmem:[%s194 + $0x14] sm:$0xf]
      %v222 = vld [vmem:[%s194 + $0x18] sm:$0xf]
      %v223 = vld [vmem:[%s194 + $0x1c] sm:$0xf]
      %v224 = vld [vmem:[%s194 + $0x20] sm:$0xf]
      %v225 = vld [vmem:[%s194 + $0x24] sm:$0xf]
      %v226 = vld [vmem:[%s194 + $0x28] sm:$0xf]
      %v227 = vld [vmem:[%s194 + $0x2c] sm:$0xf]
      %v228 = vld [vmem:[%s194 + $0x30] sm:$0xf]
      %v229 = vld [vmem:[%s194 + $0x34] sm:$0xf]
      %v230 = vld [vmem:[%s194 + $0x38] sm:$0xf]
      %v231 = vld [vmem:[%s194 + $0x3c] sm:$0xf]
      %v232 = vld [vmem:[%s194 + $0x40] sm:$0xf]
      %v233 = vld [vmem:[%s194 + $0x44] sm:$0xf]
      %v234 = vld [vmem:[%s194 + $0x48] sm:$0xf]
      %v235 = vld [vmem:[%s194 + $0x4c] sm:$0xf]
      %v236 = vld [vmem:[%s194 + $0x50] sm:$0xf]
      %v237 = vld [vmem:[%s194 + $0x54] sm:$0xf]
      %v238 = vld [vmem:[%s194 + $0x58] sm:$0xf]
      %v239 = vld [vmem:[%s194 + $0x5c] sm:$0xf]
      %v240 = vld [vmem:[%s194 + $0x60] sm:$0xf]
      %v241 = vld [vmem:[%s194 + $0x64] sm:$0xf]
      %v242 = vld [vmem:[%s194 + $0x68] sm:$0xf]
      %v243 = vld [vmem:[%s194 + $0x6c] sm:$0xf]
      %v244 = vld [vmem:[%s194 + $0x70] sm:$0xf]
      %v245 = vld [vmem:[%s194 + $0x74] sm:$0xf]
      %v246 = vld [vmem:[%s194 + $0x78] sm:$0xf]
      %v247 = vld [vmem:[%s194 + $0x7c] sm:$0xf]
      %v248 = vld [vmem:[%s194 + $0x80] sm:$0xf]
      %v249 = vld [vmem:[%s194 + $0x84] sm:$0xf]
      %v250 = vld [vmem:[%s194 + $0x88] sm:$0xf]
      %v251 = vld [vmem:[%s194 + $0x8c] sm:$0xf]
      %v252 = vld [vmem:[%s194 + $0x90] sm:$0xf]
      %v253 = vld [vmem:[%s194 + $0x94] sm:$0xf]
      %v254 = vld [vmem:[%s194 + $0x98] sm:$0xf]
      %v255 = vld [vmem:[%s194 + $0x9c] sm:$0xf]
      %v256 = vld [vmem:[%s194 + $0xa0] sm:$0xf]
      %v257 = vld [vmem:[%s194 + $0xa4] sm:$0xf]
      %v258 = vld [vmem:[%s194 + $0xa8] sm:$0xf]
      %v259 = vld [vmem:[%s194 + $0xac] sm:$0xf]
      %v260 = vld [vmem:[%s194 + $0xb0] sm:$0xf]
      %v261 = vld [vmem:[%s194 + $0xb4] sm:$0xf]
      %v262 = vld [vmem:[%s194 + $0xb8] sm:$0xf]
      %v263 = vld [vmem:[%s194 + $0xbc] sm:$0xf]
      %v264 = vld [vmem:[%s194 + $0xc0] sm:$0xf]
      %v265 = vld [vmem:[%s194 + $0xc4] sm:$0xf]
      %v266 = vld [vmem:[%s194 + $0xc8] sm:$0xf]
      %v267 = vld [vmem:[%s194 + $0xcc] sm:$0xf]
      %v268 = vld [vmem:[%s194 + $0xd0] sm:$0xf]
      %v269 = vld [vmem:[%s194 + $0xd4] sm:$0xf]
      %v270 = vld [vmem:[%s194 + $0xd8] sm:$0xf]
      %v271 = vld [vmem:[%s194 + $0xdc] sm:$0xf]
      %v272 = vld [vmem:[%s194 + $0xe0] sm:$0xf]
      %v273 = vld [vmem:[%s194 + $0xe4] sm:$0xf]
      %v274 = vld [vmem:[%s194 + $0xe8] sm:$0xf]
      %v275 = vld [vmem:[%s194 + $0xec] sm:$0xf]
      %v276 = vld [vmem:[%s194 + $0xf0] sm:$0xf]
      %v277 = vld [vmem:[%s194 + $0xf4] sm:$0xf]
      %v278 = vld [vmem:[%s194 + $0xf8] sm:$0xf]
      %v279 = vld [vmem:[%s194 + $0xfc] sm:$0xf]
      %v280 = vld [vmem:[%s194 + $0x100] sm:$0xf]
      %v281 = vld [vmem:[%s194 + $0x104] sm:$0xf]
      %v282 = vld [vmem:[%s194 + $0x108] sm:$0xf]
      %v283 = vld [vmem:[%s194 + $0x10c] sm:$0xf]
      %v284 = vld [vmem:[%s194 + $0x110] sm:$0xf]
      %v285 = vld [vmem:[%s194 + $0x114] sm:$0xf]
      %v286 = vld [vmem:[%s194 + $0x118] sm:$0xf]
      %v287 = vld [vmem:[%s194 + $0x11c] sm:$0xf]
      %v288 = vld [vmem:[%s194 + $0x120] sm:$0xf]
      %v289 = vld [vmem:[%s194 + $0x124] sm:$0xf]
      %v290 = vld [vmem:[%s194 + $0x128] sm:$0xf]
      %v291 = vld [vmem:[%s194 + $0x12c] sm:$0xf]
      %v292 = vld [vmem:[%s194 + $0x130] sm:$0xf]
      %v293 = vld [vmem:[%s194 + $0x134] sm:$0xf]
      %v294 = vld [vmem:[%s194 + $0x138] sm:$0xf]
      %v295 = vld [vmem:[%s194 + $0x13c] sm:$0xf]
      %v296 = vld [vmem:[%s194 + $0x140] sm:$0xf]
      %v297 = vld [vmem:[%s194 + $0x144] sm:$0xf]
      %v298 = vld [vmem:[%s194 + $0x148] sm:$0xf]
      %v299 = vld [vmem:[%s194 + $0x14c] sm:$0xf]
      %v300 = vld [vmem:[%s194 + $0x150] sm:$0xf]
      %v301 = vld [vmem:[%s194 + $0x154] sm:$0xf]
      %v302 = vld [vmem:[%s194 + $0x158] sm:$0xf]
      %v303 = vld [vmem:[%s194 + $0x15c] sm:$0xf]
      %v304 = vld [vmem:[%s194 + $0x160] sm:$0xf]
      %v305 = vld [vmem:[%s194 + $0x164] sm:$0xf]
      %v306 = vld [vmem:[%s194 + $0x168] sm:$0xf]
      %v307 = vld [vmem:[%s194 + $0x16c] sm:$0xf]
      %v308 = vld [vmem:[%s194 + $0x170] sm:$0xf]
      %v309 = vld [vmem:[%s194 + $0x174] sm:$0xf]
      %v310 = vld [vmem:[%s194 + $0x178] sm:$0xf]
      %v311 = vld [vmem:[%s194 + $0x17c] sm:$0xf]
      %v312 = vld [vmem:[%s194 + $0x180] sm:$0xf]
      %v313 = vld [vmem:[%s194 + $0x184] sm:$0xf]
      %v314 = vld [vmem:[%s194 + $0x188] sm:$0xf]
      %v315 = vld [vmem:[%s194 + $0x18c] sm:$0xf]
      %v316 = vld [vmem:[%s194 + $0x190] sm:$0xf]
      %v317 = vld [vmem:[%s194 + $0x194] sm:$0xf]
      %v318 = vld [vmem:[%s194 + $0x198] sm:$0xf]
      %v319 = vld [vmem:[%s194 + $0x19c] sm:$0xf]
      %v320 = vld [vmem:[%s194 + $0x1a0] sm:$0xf]
      %v321 = vld [vmem:[%s194 + $0x1a4] sm:$0xf]
      %v322 = vld [vmem:[%s194 + $0x1a8] sm:$0xf]
      %v323 = vld [vmem:[%s194 + $0x1ac] sm:$0xf]
      %v324 = vld [vmem:[%s194 + $0x1b0] sm:$0xf]
      %v325 = vld [vmem:[%s194 + $0x1b4] sm:$0xf]
      %v326 = vld [vmem:[%s194 + $0x1b8] sm:$0xf]
      %v327 = vld [vmem:[%s194 + $0x1bc] sm:$0xf]
      %v328 = vld [vmem:[%s194 + $0x1c0] sm:$0xf]
      %v329 = vld [vmem:[%s194 + $0x1c4] sm:$0xf]
      %v330 = vld [vmem:[%s194 + $0x1c8] sm:$0xf]
      %v331 = vld [vmem:[%s194 + $0x1cc] sm:$0xf]
      %v332 = vld [vmem:[%s194 + $0x1d0] sm:$0xf]
      %v333 = vld [vmem:[%s194 + $0x1d4] sm:$0xf]
      %v334 = vld [vmem:[%s194 + $0x1d8] sm:$0xf]
      %v335 = vld [vmem:[%s194 + $0x1dc] sm:$0xf]
      %v336 = vld [vmem:[%s194 + $0x1e0] sm:$0xf]
      %v337 = vld [vmem:[%s194 + $0x1e4] sm:$0xf]
      %v338 = vld [vmem:[%s194 + $0x1e8] sm:$0xf]
      %v339 = vld [vmem:[%s194 + $0x1ec] sm:$0xf]
      %v340 = vld [vmem:[%s194 + $0x1f0] sm:$0xf]
      %v341 = vld [vmem:[%s194 + $0x1f4] sm:$0xf]
      %v342 = vld [vmem:[%s194 + $0x1f8] sm:$0xf]
      %v343 = vld [vmem:[%s194 + $0x1fc] sm:$0xf]
      %v344 = vld [vmem:[%s194 + $0x200] sm:$0xf]
      %v345 = vld [vmem:[%s194 + $0x204] sm:$0xf]
      %v346 = vld [vmem:[%s194 + $0x208] sm:$0xf]
      %v347 = vld [vmem:[%s194 + $0x20c] sm:$0xf]
      %v348 = vld [vmem:[%s194 + $0x210] sm:$0xf]
      %v349 = vld [vmem:[%s194 + $0x214] sm:$0xf]
      %v350 = vld [vmem:[%s194 + $0x218] sm:$0xf]
      %v351 = vld [vmem:[%s194 + $0x21c] sm:$0xf]
      %v352 = vld [vmem:[%s194 + $0x220] sm:$0xf]
      %v353 = vld [vmem:[%s194 + $0x224] sm:$0xf]
      %v354 = vld [vmem:[%s194 + $0x228] sm:$0xf]
      %v355 = vld [vmem:[%s194 + $0x22c] sm:$0xf]
      %v356 = vld [vmem:[%s194 + $0x230] sm:$0xf]
      %v357 = vld [vmem:[%s194 + $0x234] sm:$0xf]
      %v358 = vld [vmem:[%s194 + $0x238] sm:$0xf]
      %v359 = vld [vmem:[%s194 + $0x23c] sm:$0xf]
      %v360 = vld [vmem:[%s194 + $0x240] sm:$0xf]
      %v361 = vld [vmem:[%s194 + $0x244] sm:$0xf]
      %v362 = vld [vmem:[%s194 + $0x248] sm:$0xf]
      %v363 = vld [vmem:[%s194 + $0x24c] sm:$0xf]
      %v364 = vld [vmem:[%s194 + $0x250] sm:$0xf]
      %v365 = vld [vmem:[%s194 + $0x254] sm:$0xf]
      %v366 = vld [vmem:[%s194 + $0x258] sm:$0xf]
      %v367 = vld [vmem:[%s194 + $0x25c] sm:$0xf]
      %v368 = vld [vmem:[%s194 + $0x260] sm:$0xf]
      %v369 = vld [vmem:[%s194 + $0x264] sm:$0xf]
      %v370 = vld [vmem:[%s194 + $0x268] sm:$0xf]
      %v371 = vld [vmem:[%s194 + $0x26c] sm:$0xf]
      %v372 = vld [vmem:[%s194 + $0x270] sm:$0xf]
      %v373 = vld [vmem:[%s194 + $0x274] sm:$0xf]
      %v374 = vld [vmem:[%s194 + $0x278] sm:$0xf]
      %v375 = vld [vmem:[%s194 + $0x27c] sm:$0xf]
      %v376 = vld [vmem:[%s194 + $0x280] sm:$0xf]
      %v377 = vld [vmem:[%s194 + $0x284] sm:$0xf]
      %v378 = vld [vmem:[%s194 + $0x288] sm:$0xf]
      %v379 = vld [vmem:[%s194 + $0x28c] sm:$0xf]
      %v380 = vld [vmem:[%s194 + $0x290] sm:$0xf]
      %v381 = vld [vmem:[%s194 + $0x294] sm:$0xf]
      %v382 = vld [vmem:[%s194 + $0x298] sm:$0xf]
      %v383 = vld [vmem:[%s194 + $0x29c] sm:$0xf]
      %v384 = vld [vmem:[%s194 + $0x2a0] sm:$0xf]
      %v385 = vld [vmem:[%s194 + $0x2a4] sm:$0xf]
      %v386 = vld [vmem:[%s194 + $0x2a8] sm:$0xf]
      %v387 = vld [vmem:[%s194 + $0x2ac] sm:$0xf]
      %v388 = vld [vmem:[%s194 + $0x2b0] sm:$0xf]
      %v389 = vld [vmem:[%s194 + $0x2b4] sm:$0xf]
      %v390 = vld [vmem:[%s194 + $0x2b8] sm:$0xf]
      %v391 = vld [vmem:[%s194 + $0x2bc] sm:$0xf]
      %v392 = vld [vmem:[%s194 + $0x2c0] sm:$0xf]
      %v393 = vld [vmem:[%s194 + $0x2c4] sm:$0xf]
      %v394 = vld [vmem:[%s194 + $0x2c8] sm:$0xf]
      %v395 = vld [vmem:[%s194 + $0x2cc] sm:$0xf]
      %v396 = vld [vmem:[%s194 + $0x2d0] sm:$0xf]
      %v397 = vld [vmem:[%s194 + $0x2d4] sm:$0xf]
      %v398 = vld [vmem:[%s194 + $0x2d8] sm:$0xf]
      %v399 = vld [vmem:[%s194 + $0x2dc] sm:$0xf]
      %v400 = vld [vmem:[%s194 + $0x2e0] sm:$0xf]
      %v401 = vld [vmem:[%s194 + $0x2e4] sm:$0xf]
      %v402 = vld [vmem:[%s194 + $0x2e8] sm:$0xf]
      %v403 = vld [vmem:[%s194 + $0x2ec] sm:$0xf]
      %v404 = vld [vmem:[%s194 + $0x2f0] sm:$0xf]
      %v405 = vld [vmem:[%s194 + $0x2f4] sm:$0xf]
      %v406 = vld [vmem:[%s194 + $0x2f8] sm:$0xf]
      %v407 = vld [vmem:[%s194 + $0x2fc] sm:$0xf]
      %v408 = vld [vmem:[%s194 + $0x300] sm:$0xf]
      %v409 = vld [vmem:[%s194 + $0x304] sm:$0xf]
      %v410 = vld [vmem:[%s194 + $0x308] sm:$0xf]
      %v411 = vld [vmem:[%s194 + $0x30c] sm:$0xf]
      %v412 = vld [vmem:[%s194 + $0x310] sm:$0xf]
      %v413 = vld [vmem:[%s194 + $0x314] sm:$0xf]
      %v414 = vld [vmem:[%s194 + $0x318] sm:$0xf]
      %v415 = vld [vmem:[%s194 + $0x31c] sm:$0xf]
      %v416 = vld [vmem:[%s194 + $0x320] sm:$0xf]
      %v417 = vld [vmem:[%s194 + $0x324] sm:$0xf]
      %v418 = vld [vmem:[%s194 + $0x328] sm:$0xf]
      %v419 = vld [vmem:[%s194 + $0x32c] sm:$0xf]
      %v420 = vld [vmem:[%s194 + $0x330] sm:$0xf]
      %v421 = vld [vmem:[%s194 + $0x334] sm:$0xf]
      %v422 = vld [vmem:[%s194 + $0x338] sm:$0xf]
      %v423 = vld [vmem:[%s194 + $0x33c] sm:$0xf]
      %v424 = vld [vmem:[%s194 + $0x340] sm:$0xf]
      %v425 = vld [vmem:[%s194 + $0x344] sm:$0xf]
      %v426 = vld [vmem:[%s194 + $0x348] sm:$0xf]
      %v427 = vld [vmem:[%s194 + $0x34c] sm:$0xf]
      %v428 = vld [vmem:[%s194 + $0x350] sm:$0xf]
      %v429 = vld [vmem:[%s194 + $0x354] sm:$0xf]
      %v430 = vld [vmem:[%s194 + $0x358] sm:$0xf]
      %v431 = vld [vmem:[%s194 + $0x35c] sm:$0xf]
      %v432 = vld [vmem:[%s194 + $0x360] sm:$0xf]
      %v433 = vld [vmem:[%s194 + $0x364] sm:$0xf]
      %v434 = vld [vmem:[%s194 + $0x368] sm:$0xf]
      %v435 = vld [vmem:[%s194 + $0x36c] sm:$0xf]
      %v436 = vld [vmem:[%s194 + $0x370] sm:$0xf]
      %v437 = vld [vmem:[%s194 + $0x374] sm:$0xf]
      %v438 = vld [vmem:[%s194 + $0x378] sm:$0xf]
      %v439 = vld [vmem:[%s194 + $0x37c] sm:$0xf]
      %v440 = vld [vmem:[%s194 + $0x380] sm:$0xf]
      %v441 = vld [vmem:[%s194 + $0x384] sm:$0xf]
      %v442 = vld [vmem:[%s194 + $0x388] sm:$0xf]
      %v443 = vld [vmem:[%s194 + $0x38c] sm:$0xf]
      %v444 = vld [vmem:[%s194 + $0x390] sm:$0xf]
      %v445 = vld [vmem:[%s194 + $0x394] sm:$0xf]
      %v446 = vld [vmem:[%s194 + $0x398] sm:$0xf]
      %v447 = vld [vmem:[%s194 + $0x39c] sm:$0xf]
      %v448 = vld [vmem:[%s194 + $0x3a0] sm:$0xf]
      %v449 = vld [vmem:[%s194 + $0x3a4] sm:$0xf]
      %v450 = vld [vmem:[%s194 + $0x3a8] sm:$0xf]
      %v451 = vld [vmem:[%s194 + $0x3ac] sm:$0xf]
      %v452 = vld [vmem:[%s194 + $0x3b0] sm:$0xf]
      %v453 = vld [vmem:[%s194 + $0x3b4] sm:$0xf]
      %v454 = vld [vmem:[%s194 + $0x3b8] sm:$0xf]
      %v455 = vld [vmem:[%s194 + $0x3bc] sm:$0xf]
      %v456 = vld [vmem:[%s194 + $0x3c0] sm:$0xf]
      %v457 = vld [vmem:[%s194 + $0x3c4] sm:$0xf]
      %v458 = vld [vmem:[%s194 + $0x3c8] sm:$0xf]
      %v459 = vld [vmem:[%s194 + $0x3cc] sm:$0xf]
      %v460 = vld [vmem:[%s194 + $0x3d0] sm:$0xf]
      %v461 = vld [vmem:[%s194 + $0x3d4] sm:$0xf]
      %v462 = vld [vmem:[%s194 + $0x3d8] sm:$0xf]
      %v463 = vld [vmem:[%s194 + $0x3dc] sm:$0xf]
      %v464 = vld [vmem:[%s194 + $0x3e0] sm:$0xf]
      %v465 = vld [vmem:[%s194 + $0x3e4] sm:$0xf]
      %v466 = vld [vmem:[%s194 + $0x3e8] sm:$0xf]
      %v467 = vld [vmem:[%s194 + $0x3ec] sm:$0xf]
      %v468 = vld [vmem:[%s194 + $0x3f0] sm:$0xf]
      %v469 = vld [vmem:[%s194 + $0x3f4] sm:$0xf]
      %v470 = vld [vmem:[%s194 + $0x3f8] sm:$0xf]
      %v471 = vld [vmem:[%s194 + $0x3fc] sm:$0xf]
      %v472 = vld [vmem:[%s202] sm:$0xf]
      %v473 = vld [vmem:[%s202 + $0x4] sm:$0xf]
      %v474 = vld [vmem:[%s202 + $0x8] sm:$0xf]
      %v475 = vld [vmem:[%s202 + $0xc] sm:$0xf]
      %v476 = vld [vmem:[%s202 + $0x10] sm:$0xf]
      %v477 = vld [vmem:[%s202 + $0x14] sm:$0xf]
      %v478 = vld [vmem:[%s202 + $0x18] sm:$0xf]
      %v479 = vld [vmem:[%s202 + $0x1c] sm:$0xf]
      %v480 = vld [vmem:[%s202 + $0x20] sm:$0xf]
      %v481 = vld [vmem:[%s202 + $0x24] sm:$0xf]
      %v482 = vld [vmem:[%s202 + $0x28] sm:$0xf]
      %v483 = vld [vmem:[%s202 + $0x2c] sm:$0xf]
      %v484 = vld [vmem:[%s202 + $0x30] sm:$0xf]
      %v485 = vld [vmem:[%s202 + $0x34] sm:$0xf]
      %v486 = vld [vmem:[%s202 + $0x38] sm:$0xf]
      %v487 = vld [vmem:[%s202 + $0x3c] sm:$0xf]
      %v744 = vunpack.c.l.b16 %v216
      %v745 = vunpack.c.l.b16 %v217
      %v746 = vunpack.c.l.b16 %v218
      %v747 = vunpack.c.l.b16 %v219
      %v748 = vunpack.c.l.b16 %v220
      %v749 = vunpack.c.l.b16 %v221
      %v750 = vunpack.c.l.b16 %v222
      %v751 = vunpack.c.l.b16 %v223
      %v752 = vunpack.c.l.b16 %v224
      %v753 = vunpack.c.l.b16 %v225
      %v754 = vunpack.c.l.b16 %v226
      %v755 = vunpack.c.l.b16 %v227
      %v756 = vunpack.c.l.b16 %v228
      %v757 = vunpack.c.l.b16 %v229
      %v758 = vunpack.c.l.b16 %v230
      %v759 = vunpack.c.l.b16 %v231
      %v760 = vunpack.c.l.b16 %v232
      %v761 = vunpack.c.l.b16 %v233
      %v762 = vunpack.c.l.b16 %v234
      %v763 = vunpack.c.l.b16 %v235
      %v764 = vunpack.c.l.b16 %v236
      %v765 = vunpack.c.l.b16 %v237
      %v766 = vunpack.c.l.b16 %v238
      %v767 = vunpack.c.l.b16 %v239
      %v768 = vunpack.c.l.b16 %v240
      %v769 = vunpack.c.l.b16 %v241
      %v770 = vunpack.c.l.b16 %v242
      %v771 = vunpack.c.l.b16 %v243
      %v772 = vunpack.c.l.b16 %v244
      %v773 = vunpack.c.l.b16 %v245
      %v774 = vunpack.c.l.b16 %v246
      %v775 = vunpack.c.l.b16 %v247
      %v776 = vunpack.c.l.b16 %v248
      %v777 = vunpack.c.l.b16 %v249
      %v778 = vunpack.c.l.b16 %v250
      %v779 = vunpack.c.l.b16 %v251
      %v780 = vunpack.c.l.b16 %v252
      %v781 = vunpack.c.l.b16 %v253
      %v782 = vunpack.c.l.b16 %v254
      %v783 = vunpack.c.l.b16 %v255
      %v784 = vunpack.c.l.b16 %v256
      %v785 = vunpack.c.l.b16 %v257
      %v786 = vunpack.c.l.b16 %v258
      %v787 = vunpack.c.l.b16 %v259
      %v788 = vunpack.c.l.b16 %v260
      %v789 = vunpack.c.l.b16 %v261
      %v790 = vunpack.c.l.b16 %v262
      %v791 = vunpack.c.l.b16 %v263
      %v792 = vunpack.c.l.b16 %v264
      %v793 = vunpack.c.l.b16 %v265
      %v794 = vunpack.c.l.b16 %v266
      %v795 = vunpack.c.l.b16 %v267
      %v796 = vunpack.c.l.b16 %v268
      %v797 = vunpack.c.l.b16 %v269
      %v798 = vunpack.c.l.b16 %v270
      %v799 = vunpack.c.l.b16 %v271
      %v800 = vunpack.c.l.b16 %v272
      %v801 = vunpack.c.l.b16 %v273
      %v802 = vunpack.c.l.b16 %v274
      %v803 = vunpack.c.l.b16 %v275
      %v804 = vunpack.c.l.b16 %v276
      %v805 = vunpack.c.l.b16 %v277
      %v806 = vunpack.c.l.b16 %v278
      %v807 = vunpack.c.l.b16 %v279
      %v808 = vunpack.c.l.b16 %v280
      %v809 = vunpack.c.l.b16 %v281
      %v810 = vunpack.c.l.b16 %v282
      %v811 = vunpack.c.l.b16 %v283
      %v812 = vunpack.c.l.b16 %v284
      %v813 = vunpack.c.l.b16 %v285
      %v814 = vunpack.c.l.b16 %v286
      %v815 = vunpack.c.l.b16 %v287
      %v816 = vunpack.c.l.b16 %v288
      %v817 = vunpack.c.l.b16 %v289
      %v818 = vunpack.c.l.b16 %v290
      %v819 = vunpack.c.l.b16 %v291
      %v820 = vunpack.c.l.b16 %v292
      %v821 = vunpack.c.l.b16 %v293
      %v822 = vunpack.c.l.b16 %v294
      %v823 = vunpack.c.l.b16 %v295
      %v824 = vunpack.c.l.b16 %v296
      %v825 = vunpack.c.l.b16 %v297
      %v826 = vunpack.c.l.b16 %v298
      %v827 = vunpack.c.l.b16 %v299
      %v828 = vunpack.c.l.b16 %v300
      %v829 = vunpack.c.l.b16 %v301
      %v830 = vunpack.c.l.b16 %v302
      %v831 = vunpack.c.l.b16 %v303
      %v832 = vunpack.c.l.b16 %v304
      %v833 = vunpack.c.l.b16 %v305
      %v834 = vunpack.c.l.b16 %v306
      %v835 = vunpack.c.l.b16 %v307
      %v836 = vunpack.c.l.b16 %v308
      %v837 = vunpack.c.l.b16 %v309
      %v838 = vunpack.c.l.b16 %v310
      %v839 = vunpack.c.l.b16 %v311
      %v840 = vunpack.c.l.b16 %v312
      %v841 = vunpack.c.l.b16 %v313
      %v842 = vunpack.c.l.b16 %v314
      %v843 = vunpack.c.l.b16 %v315
      %v844 = vunpack.c.l.b16 %v316
      %v845 = vunpack.c.l.b16 %v317
      %v846 = vunpack.c.l.b16 %v318
      %v847 = vunpack.c.l.b16 %v319
      %v848 = vunpack.c.l.b16 %v320
      %v849 = vunpack.c.l.b16 %v321
      %v850 = vunpack.c.l.b16 %v322
      %v851 = vunpack.c.l.b16 %v323
      %v852 = vunpack.c.l.b16 %v324
      %v853 = vunpack.c.l.b16 %v325
      %v854 = vunpack.c.l.b16 %v326
      %v855 = vunpack.c.l.b16 %v327
      %v856 = vunpack.c.l.b16 %v328
      %v857 = vunpack.c.l.b16 %v329
      %v858 = vunpack.c.l.b16 %v330
      %v859 = vunpack.c.l.b16 %v331
      %v860 = vunpack.c.l.b16 %v332
      %v861 = vunpack.c.l.b16 %v333
      %v862 = vunpack.c.l.b16 %v334
      %v863 = vunpack.c.l.b16 %v335
      %v864 = vunpack.c.l.b16 %v336
      %v865 = vunpack.c.l.b16 %v337
      %v866 = vunpack.c.l.b16 %v338
      %v867 = vunpack.c.l.b16 %v339
      %v868 = vunpack.c.l.b16 %v340
      %v869 = vunpack.c.l.b16 %v341
      %v870 = vunpack.c.l.b16 %v342
      %v871 = vunpack.c.l.b16 %v343
      %v872 = vunpack.c.l.b16 %v344
      %v873 = vunpack.c.l.b16 %v345
      %v874 = vunpack.c.l.b16 %v346
      %v875 = vunpack.c.l.b16 %v347
      %v876 = vunpack.c.l.b16 %v348
      %v877 = vunpack.c.l.b16 %v349
      %v878 = vunpack.c.l.b16 %v350
      %v879 = vunpack.c.l.b16 %v351
      %v880 = vunpack.c.l.b16 %v352
      %v881 = vunpack.c.l.b16 %v353
      %v882 = vunpack.c.l.b16 %v354
      %v883 = vunpack.c.l.b16 %v355
      %v884 = vunpack.c.l.b16 %v356
      %v885 = vunpack.c.l.b16 %v357
      %v886 = vunpack.c.l.b16 %v358
      %v887 = vunpack.c.l.b16 %v359
      %v888 = vunpack.c.l.b16 %v360
      %v889 = vunpack.c.l.b16 %v361
      %v890 = vunpack.c.l.b16 %v362
      %v891 = vunpack.c.l.b16 %v363
      %v892 = vunpack.c.l.b16 %v364
      %v893 = vunpack.c.l.b16 %v365
      %v894 = vunpack.c.l.b16 %v366
      %v895 = vunpack.c.l.b16 %v367
      %v896 = vunpack.c.l.b16 %v368
      %v897 = vunpack.c.l.b16 %v369
      %v898 = vunpack.c.l.b16 %v370
      %v899 = vunpack.c.l.b16 %v371
      %v900 = vunpack.c.l.b16 %v372
      %v901 = vunpack.c.l.b16 %v373
      %v902 = vunpack.c.l.b16 %v374
      %v903 = vunpack.c.l.b16 %v375
      %v904 = vunpack.c.l.b16 %v376
      %v905 = vunpack.c.l.b16 %v377
      %v906 = vunpack.c.l.b16 %v378
      %v907 = vunpack.c.l.b16 %v379
      %v908 = vunpack.c.l.b16 %v380
      %v909 = vunpack.c.l.b16 %v381
      %v910 = vunpack.c.l.b16 %v382
      %v911 = vunpack.c.l.b16 %v383
      %v912 = vunpack.c.l.b16 %v384
      %v913 = vunpack.c.l.b16 %v385
      %v914 = vunpack.c.l.b16 %v386
      %v915 = vunpack.c.l.b16 %v387
      %v916 = vunpack.c.l.b16 %v388
      %v917 = vunpack.c.l.b16 %v389
      %v918 = vunpack.c.l.b16 %v390
      %v919 = vunpack.c.l.b16 %v391
      %v920 = vunpack.c.l.b16 %v392
      %v921 = vunpack.c.l.b16 %v393
      %v922 = vunpack.c.l.b16 %v394
      %v923 = vunpack.c.l.b16 %v395
      %v924 = vunpack.c.l.b16 %v396
      %v925 = vunpack.c.l.b16 %v397
      %v926 = vunpack.c.l.b16 %v398
      %v927 = vunpack.c.l.b16 %v399
      %v928 = vunpack.c.l.b16 %v400
      %v929 = vunpack.c.l.b16 %v401
      %v930 = vunpack.c.l.b16 %v402
      %v931 = vunpack.c.l.b16 %v403
      %v932 = vunpack.c.l.b16 %v404
      %v933 = vunpack.c.l.b16 %v405
      %v934 = vunpack.c.l.b16 %v406
      %v935 = vunpack.c.l.b16 %v407
      %v936 = vunpack.c.l.b16 %v408
      %v937 = vunpack.c.l.b16 %v409
      %v938 = vunpack.c.l.b16 %v410
      %v939 = vunpack.c.l.b16 %v411
      %v940 = vunpack.c.l.b16 %v412
      %v941 = vunpack.c.l.b16 %v413
      %v942 = vunpack.c.l.b16 %v414
      %v943 = vunpack.c.l.b16 %v415
      %v944 = vunpack.c.l.b16 %v416
      %v945 = vunpack.c.l.b16 %v417
      %v946 = vunpack.c.l.b16 %v418
      %v947 = vunpack.c.l.b16 %v419
      %v948 = vunpack.c.l.b16 %v420
      %v949 = vunpack.c.l.b16 %v421
      %v950 = vunpack.c.l.b16 %v422
      %v951 = vunpack.c.l.b16 %v423
      %v952 = vunpack.c.l.b16 %v424
      %v953 = vunpack.c.l.b16 %v425
      %v954 = vunpack.c.l.b16 %v426
      %v955 = vunpack.c.l.b16 %v427
      %v956 = vunpack.c.l.b16 %v428
      %v957 = vunpack.c.l.b16 %v429
      %v958 = vunpack.c.l.b16 %v430
      %v959 = vunpack.c.l.b16 %v431
      %v960 = vunpack.c.l.b16 %v432
      %v961 = vunpack.c.l.b16 %v433
      %v962 = vunpack.c.l.b16 %v434
      %v963 = vunpack.c.l.b16 %v435
      %v964 = vunpack.c.l.b16 %v436
      %v965 = vunpack.c.l.b16 %v437
      %v966 = vunpack.c.l.b16 %v438
      %v967 = vunpack.c.l.b16 %v439
      %v968 = vunpack.c.l.b16 %v440
      %v969 = vunpack.c.l.b16 %v441
      %v970 = vunpack.c.l.b16 %v442
      %v971 = vunpack.c.l.b16 %v443
      %v972 = vunpack.c.l.b16 %v444
      %v973 = vunpack.c.l.b16 %v445
      %v974 = vunpack.c.l.b16 %v446
      %v975 = vunpack.c.l.b16 %v447
      %v976 = vunpack.c.l.b16 %v448
      %v977 = vunpack.c.l.b16 %v449
      %v978 = vunpack.c.l.b16 %v450
      %v979 = vunpack.c.l.b16 %v451
      %v980 = vunpack.c.l.b16 %v452
      %v981 = vunpack.c.l.b16 %v453
      %v982 = vunpack.c.l.b16 %v454
      %v983 = vunpack.c.l.b16 %v455
      %v984 = vunpack.c.l.b16 %v456
      %v985 = vunpack.c.l.b16 %v457
      %v986 = vunpack.c.l.b16 %v458
      %v987 = vunpack.c.l.b16 %v459
      %v988 = vunpack.c.l.b16 %v460
      %v989 = vunpack.c.l.b16 %v461
      %v990 = vunpack.c.l.b16 %v462
      %v991 = vunpack.c.l.b16 %v463
      %v992 = vunpack.c.l.b16 %v464
      %v993 = vunpack.c.l.b16 %v465
      %v994 = vunpack.c.l.b16 %v466
      %v995 = vunpack.c.l.b16 %v467
      %v996 = vunpack.c.l.b16 %v468
      %v997 = vunpack.c.l.b16 %v469
      %v998 = vunpack.c.l.b16 %v470
      %v999 = vunpack.c.l.b16 %v471
      %v1000 = vpack.c.b16 %v745, %v744
      %v1001 = vpack.c.b16 %v747, %v746
      %v1002 = vpack.c.b16 %v749, %v748
      %v1003 = vpack.c.b16 %v751, %v750
      %v1004 = vpack.c.b16 %v753, %v752
      %v1005 = vpack.c.b16 %v755, %v754
      %v1006 = vpack.c.b16 %v757, %v756
      %v1007 = vpack.c.b16 %v759, %v758
      %v1008 = vpack.c.b16 %v761, %v760
      %v1009 = vpack.c.b16 %v763, %v762
      %v1010 = vpack.c.b16 %v765, %v764
      %v1011 = vpack.c.b16 %v767, %v766
      %v1012 = vpack.c.b16 %v769, %v768
      %v1013 = vpack.c.b16 %v771, %v770
      %v1014 = vpack.c.b16 %v773, %v772
      %v1015 = vpack.c.b16 %v775, %v774
      %v1016 = vpack.c.b16 %v777, %v776
      %v1017 = vpack.c.b16 %v779, %v778
      %v1018 = vpack.c.b16 %v781, %v780
      %v1019 = vpack.c.b16 %v783, %v782
      %v1020 = vpack.c.b16 %v785, %v784
      %v1021 = vpack.c.b16 %v787, %v786
      %v1022 = vpack.c.b16 %v789, %v788
      %v1023 = vpack.c.b16 %v791, %v790
      %v1024 = vpack.c.b16 %v793, %v792
      %v1025 = vpack.c.b16 %v795, %v794
      %v1026 = vpack.c.b16 %v797, %v796
      %v1027 = vpack.c.b16 %v799, %v798
      %v1028 = vpack.c.b16 %v801, %v800
      %v1029 = vpack.c.b16 %v803, %v802
      %v1030 = vpack.c.b16 %v805, %v804
      %v1031 = vpack.c.b16 %v807, %v806
      %v1032 = vpack.c.b16 %v809, %v808
      %v1033 = vpack.c.b16 %v811, %v810
      %v1034 = vpack.c.b16 %v813, %v812
      %v1035 = vpack.c.b16 %v815, %v814
      %v1036 = vpack.c.b16 %v817, %v816
      %v1037 = vpack.c.b16 %v819, %v818
      %v1038 = vpack.c.b16 %v821, %v820
      %v1039 = vpack.c.b16 %v823, %v822
      %v1040 = vpack.c.b16 %v825, %v824
      %v1041 = vpack.c.b16 %v827, %v826
      %v1042 = vpack.c.b16 %v829, %v828
      %v1043 = vpack.c.b16 %v831, %v830
      %v1044 = vpack.c.b16 %v833, %v832
      %v1045 = vpack.c.b16 %v835, %v834
      %v1046 = vpack.c.b16 %v837, %v836
      %v1047 = vpack.c.b16 %v839, %v838
      %v1048 = vpack.c.b16 %v841, %v840
      %v1049 = vpack.c.b16 %v843, %v842
      %v1050 = vpack.c.b16 %v845, %v844
      %v1051 = vpack.c.b16 %v847, %v846
      %v1052 = vpack.c.b16 %v849, %v848
      %v1053 = vpack.c.b16 %v851, %v850
      %v1054 = vpack.c.b16 %v853, %v852
      %v1055 = vpack.c.b16 %v855, %v854
      %v1056 = vpack.c.b16 %v857, %v856
      %v1057 = vpack.c.b16 %v859, %v858
      %v1058 = vpack.c.b16 %v861, %v860
      %v1059 = vpack.c.b16 %v863, %v862
      %v1060 = vpack.c.b16 %v865, %v864
      %v1061 = vpack.c.b16 %v867, %v866
      %v1062 = vpack.c.b16 %v869, %v868
      %v1063 = vpack.c.b16 %v871, %v870
      %v1064 = vpack.c.b16 %v873, %v872
      %v1065 = vpack.c.b16 %v875, %v874
      %v1066 = vpack.c.b16 %v877, %v876
      %v1067 = vpack.c.b16 %v879, %v878
      %v1068 = vpack.c.b16 %v881, %v880
      %v1069 = vpack.c.b16 %v883, %v882
      %v1070 = vpack.c.b16 %v885, %v884
      %v1071 = vpack.c.b16 %v887, %v886
      %v1072 = vpack.c.b16 %v889, %v888
      %v1073 = vpack.c.b16 %v891, %v890
      %v1074 = vpack.c.b16 %v893, %v892
      %v1075 = vpack.c.b16 %v895, %v894
      %v1076 = vpack.c.b16 %v897, %v896
      %v1077 = vpack.c.b16 %v899, %v898
      %v1078 = vpack.c.b16 %v901, %v900
      %v1079 = vpack.c.b16 %v903, %v902
      %v1080 = vpack.c.b16 %v905, %v904
      %v1081 = vpack.c.b16 %v907, %v906
      %v1082 = vpack.c.b16 %v909, %v908
      %v1083 = vpack.c.b16 %v911, %v910
      %v1084 = vpack.c.b16 %v913, %v912
      %v1085 = vpack.c.b16 %v915, %v914
      %v1086 = vpack.c.b16 %v917, %v916
      %v1087 = vpack.c.b16 %v919, %v918
      %v1088 = vpack.c.b16 %v921, %v920
      %v1089 = vpack.c.b16 %v923, %v922
      %v1090 = vpack.c.b16 %v925, %v924
      %v1091 = vpack.c.b16 %v927, %v926
      %v1092 = vpack.c.b16 %v929, %v928
      %v1093 = vpack.c.b16 %v931, %v930
      %v1094 = vpack.c.b16 %v933, %v932
      %v1095 = vpack.c.b16 %v935, %v934
      %v1096 = vpack.c.b16 %v937, %v936
      %v1097 = vpack.c.b16 %v939, %v938
      %v1098 = vpack.c.b16 %v941, %v940
      %v1099 = vpack.c.b16 %v943, %v942
      %v1100 = vpack.c.b16 %v945, %v944
      %v1101 = vpack.c.b16 %v947, %v946
      %v1102 = vpack.c.b16 %v949, %v948
      %v1103 = vpack.c.b16 %v951, %v950
      %v1104 = vpack.c.b16 %v953, %v952
      %v1105 = vpack.c.b16 %v955, %v954
      %v1106 = vpack.c.b16 %v957, %v956
      %v1107 = vpack.c.b16 %v959, %v958
      %v1108 = vpack.c.b16 %v961, %v960
      %v1109 = vpack.c.b16 %v963, %v962
      %v1110 = vpack.c.b16 %v965, %v964
      %v1111 = vpack.c.b16 %v967, %v966
      %v1112 = vpack.c.b16 %v969, %v968
      %v1113 = vpack.c.b16 %v971, %v970
      %v1114 = vpack.c.b16 %v973, %v972
      %v1115 = vpack.c.b16 %v975, %v974
      %v1116 = vpack.c.b16 %v977, %v976
      %v1117 = vpack.c.b16 %v979, %v978
      %v1118 = vpack.c.b16 %v981, %v980
      %v1119 = vpack.c.b16 %v983, %v982
      %v1120 = vpack.c.b16 %v985, %v984
      %v1121 = vpack.c.b16 %v987, %v986
      %v1122 = vpack.c.b16 %v989, %v988
      %v1123 = vpack.c.b16 %v991, %v990
      %v1124 = vpack.c.b16 %v993, %v992
      %v1125 = vpack.c.b16 %v995, %v994
      %v1126 = vpack.c.b16 %v997, %v996
      %v1127 = vpack.c.b16 %v999, %v998
      %v1272 = vunpack.c.l.b16 %v472
      %v1273 = vunpack.c.l.b16 %v473
      %v1274 = vunpack.c.l.b16 %v474
      %v1275 = vunpack.c.l.b16 %v475
      %v1276 = vunpack.c.l.b16 %v476
      %v1277 = vunpack.c.l.b16 %v477
      %v1278 = vunpack.c.l.b16 %v478
      %v1279 = vunpack.c.l.b16 %v479
      %v1280 = vunpack.c.l.b16 %v480
      %v1281 = vunpack.c.l.b16 %v481
      %v1282 = vunpack.c.l.b16 %v482
      %v1283 = vunpack.c.l.b16 %v483
      %v1284 = vunpack.c.l.b16 %v484
      %v1285 = vunpack.c.l.b16 %v485
      %v1286 = vunpack.c.l.b16 %v486
      %v1287 = vunpack.c.l.b16 %v487
      %v1288 = vpack.c.b16 %v1273, %v1272
      %v1289 = vpack.c.b16 %v1275, %v1274
      %v1290 = vpack.c.b16 %v1277, %v1276
      %v1291 = vpack.c.b16 %v1279, %v1278
      %v1292 = vpack.c.b16 %v1281, %v1280
      %v1293 = vpack.c.b16 %v1283, %v1282
      %v1294 = vpack.c.b16 %v1285, %v1284
      %v1295 = vpack.c.b16 %v1287, %v1286
      %1304 = vmatpush.bf16.msra.mxu0 %v1295
      %1305 = vmatpush.bf16.msra.mxu0 %v1294
      %1306 = vmatpush.bf16.msra.mxu0 %v1293
      %1307 = vmatpush.bf16.msra.mxu0 %v1292
      %1308 = vmatpush.bf16.msra.mxu0 %v1291
      %1309 = vmatpush.bf16.msra.mxu0 %v1290
      %1310 = vmatpush.bf16.msra.mxu0 %v1289
      %1311 = vmatpush.bf16.msra.mxu0 %v1288
      %1312 = vmatmul.bf16.gmra.mxu0 %v1000
      %v1313 = vpop.f32.mrf.mxu0
      %v1314 = vadd.f32 0.0, %v1313
      %v1315 = vpop.f32.mrf.mxu0
      %v1316 = vadd.f32 0.0, %v1315
      %1317 = vmatmul.bf16.gmra.mxu0 %v1001
      %v1318 = vpop.f32.mrf.mxu0
      %v1319 = vadd.f32 0.0, %v1318
      %v1320 = vpop.f32.mrf.mxu0
      %v1321 = vadd.f32 0.0, %v1320
      %1322 = vmatmul.bf16.gmra.mxu0 %v1002
      %v1323 = vpop.f32.mrf.mxu0
      %v1324 = vadd.f32 0.0, %v1323
      %v1325 = vpop.f32.mrf.mxu0
      %v1326 = vadd.f32 0.0, %v1325
      %1327 = vmatmul.bf16.gmra.mxu0 %v1003
      %v1328 = vpop.f32.mrf.mxu0
      %v1329 = vadd.f32 0.0, %v1328
      %v1330 = vpop.f32.mrf.mxu0
      %v1331 = vadd.f32 0.0, %v1330
      %1332 = vmatmul.bf16.gmra.mxu0 %v1004
      %v1333 = vpop.f32.mrf.mxu0
      %v1334 = vadd.f32 0.0, %v1333
      %v1335 = vpop.f32.mrf.mxu0
      %v1336 = vadd.f32 0.0, %v1335
      %1337 = vmatmul.bf16.gmra.mxu0 %v1005
      %v1338 = vpop.f32.mrf.mxu0
      %v1339 = vadd.f32 0.0, %v1338
      %v1340 = vpop.f32.mrf.mxu0
      %v1341 = vadd.f32 0.0, %v1340
      %1342 = vmatmul.bf16.gmra.mxu0 %v1006
      %v1343 = vpop.f32.mrf.mxu0
      %v1344 = vadd.f32 0.0, %v1343
      %v1345 = vpop.f32.mrf.mxu0
      %v1346 = vadd.f32 0.0, %v1345
      %1347 = vmatmul.bf16.gmra.mxu0 %v1007
      %v1348 = vpop.f32.mrf.mxu0
      %v1349 = vadd.f32 0.0, %v1348
      %v1350 = vpop.f32.mrf.mxu0
      %v1351 = vadd.f32 0.0, %v1350
      %1352 = vmatmul.bf16.gmra.mxu0 %v1008
      %v1353 = vpop.f32.mrf.mxu0
      %v1354 = vadd.f32 0.0, %v1353
      %v1355 = vpop.f32.mrf.mxu0
      %v1356 = vadd.f32 0.0, %v1355
      %1357 = vmatmul.bf16.gmra.mxu0 %v1009
      %v1358 = vpop.f32.mrf.mxu0
      %v1359 = vadd.f32 0.0, %v1358
      %v1360 = vpop.f32.mrf.mxu0
      %v1361 = vadd.f32 0.0, %v1360
      %1362 = vmatmul.bf16.gmra.mxu0 %v1010
      %v1363 = vpop.f32.mrf.mxu0
      %v1364 = vadd.f32 0.0, %v1363
      %v1365 = vpop.f32.mrf.mxu0
      %v1366 = vadd.f32 0.0, %v1365
      %1367 = vmatmul.bf16.gmra.mxu0 %v1011
      %v1368 = vpop.f32.mrf.mxu0
      %v1369 = vadd.f32 0.0, %v1368
      %v1370 = vpop.f32.mrf.mxu0
      %v1371 = vadd.f32 0.0, %v1370
      %1372 = vmatmul.bf16.gmra.mxu0 %v1012
      %v1373 = vpop.f32.mrf.mxu0
      %v1374 = vadd.f32 0.0, %v1373
      %v1375 = vpop.f32.mrf.mxu0
      %v1376 = vadd.f32 0.0, %v1375
      %1377 = vmatmul.bf16.gmra.mxu0 %v1013
      %v1378 = vpop.f32.mrf.mxu0
      %v1379 = vadd.f32 0.0, %v1378
      %v1380 = vpop.f32.mrf.mxu0
      %v1381 = vadd.f32 0.0, %v1380
      %1382 = vmatmul.bf16.gmra.mxu0 %v1014
      %v1383 = vpop.f32.mrf.mxu0
      %v1384 = vadd.f32 0.0, %v1383
      %v1385 = vpop.f32.mrf.mxu0
      %v1386 = vadd.f32 0.0, %v1385
      %1387 = vmatmul.bf16.gmra.mxu0 %v1015
      %v1388 = vpop.f32.mrf.mxu0
      %v1389 = vadd.f32 0.0, %v1388
      %v1390 = vpop.f32.mrf.mxu0
      %v1391 = vadd.f32 0.0, %v1390
      %1392 = vmatmul.bf16.gmra.mxu0 %v1016
      %v1393 = vpop.f32.mrf.mxu0
      %v1394 = vadd.f32 0.0, %v1393
      %v1395 = vpop.f32.mrf.mxu0
      %v1396 = vadd.f32 0.0, %v1395
      %1397 = vmatmul.bf16.gmra.mxu0 %v1017
      %v1398 = vpop.f32.mrf.mxu0
      %v1399 = vadd.f32 0.0, %v1398
      %v1400 = vpop.f32.mrf.mxu0
      %v1401 = vadd.f32 0.0, %v1400
      %1402 = vmatmul.bf16.gmra.mxu0 %v1018
      %v1403 = vpop.f32.mrf.mxu0
      %v1404 = vadd.f32 0.0, %v1403
      %v1405 = vpop.f32.mrf.mxu0
      %v1406 = vadd.f32 0.0, %v1405
      %1407 = vmatmul.bf16.gmra.mxu0 %v1019
      %v1408 = vpop.f32.mrf.mxu0
      %v1409 = vadd.f32 0.0, %v1408
      %v1410 = vpop.f32.mrf.mxu0
      %v1411 = vadd.f32 0.0, %v1410
      %1412 = vmatmul.bf16.gmra.mxu0 %v1020
      %v1413 = vpop.f32.mrf.mxu0
      %v1414 = vadd.f32 0.0, %v1413
      %v1415 = vpop.f32.mrf.mxu0
      %v1416 = vadd.f32 0.0, %v1415
      %1417 = vmatmul.bf16.gmra.mxu0 %v1021
      %v1418 = vpop.f32.mrf.mxu0
      %v1419 = vadd.f32 0.0, %v1418
      %v1420 = vpop.f32.mrf.mxu0
      %v1421 = vadd.f32 0.0, %v1420
      %1422 = vmatmul.bf16.gmra.mxu0 %v1022
      %v1423 = vpop.f32.mrf.mxu0
      %v1424 = vadd.f32 0.0, %v1423
      %v1425 = vpop.f32.mrf.mxu0
      %v1426 = vadd.f32 0.0, %v1425
      %1427 = vmatmul.bf16.gmra.mxu0 %v1023
      %v1428 = vpop.f32.mrf.mxu0
      %v1429 = vadd.f32 0.0, %v1428
      %v1430 = vpop.f32.mrf.mxu0
      %v1431 = vadd.f32 0.0, %v1430
      %1432 = vmatmul.bf16.gmra.mxu0 %v1024
      %v1433 = vpop.f32.mrf.mxu0
      %v1434 = vadd.f32 0.0, %v1433
      %v1435 = vpop.f32.mrf.mxu0
      %v1436 = vadd.f32 0.0, %v1435
      %1437 = vmatmul.bf16.gmra.mxu0 %v1025
      %v1438 = vpop.f32.mrf.mxu0
      %v1439 = vadd.f32 0.0, %v1438
      %v1440 = vpop.f32.mrf.mxu0
      %v1441 = vadd.f32 0.0, %v1440
      %1442 = vmatmul.bf16.gmra.mxu0 %v1026
      %v1443 = vpop.f32.mrf.mxu0
      %v1444 = vadd.f32 0.0, %v1443
      %v1445 = vpop.f32.mrf.mxu0
      %v1446 = vadd.f32 0.0, %v1445
      %1447 = vmatmul.bf16.gmra.mxu0 %v1027
      %v1448 = vpop.f32.mrf.mxu0
      %v1449 = vadd.f32 0.0, %v1448
      %v1450 = vpop.f32.mrf.mxu0
      %v1451 = vadd.f32 0.0, %v1450
      %1452 = vmatmul.bf16.gmra.mxu0 %v1028
      %v1453 = vpop.f32.mrf.mxu0
      %v1454 = vadd.f32 0.0, %v1453
      %v1455 = vpop.f32.mrf.mxu0
      %v1456 = vadd.f32 0.0, %v1455
      %1457 = vmatmul.bf16.gmra.mxu0 %v1029
      %v1458 = vpop.f32.mrf.mxu0
      %v1459 = vadd.f32 0.0, %v1458
      %v1460 = vpop.f32.mrf.mxu0
      %v1461 = vadd.f32 0.0, %v1460
      %1462 = vmatmul.bf16.gmra.mxu0 %v1030
      %v1463 = vpop.f32.mrf.mxu0
      %v1464 = vadd.f32 0.0, %v1463
      %v1465 = vpop.f32.mrf.mxu0
      %v1466 = vadd.f32 0.0, %v1465
      %1467 = vmatmul.bf16.gmra.mxu0 %v1031
      %v1468 = vpop.f32.mrf.mxu0
      %v1469 = vadd.f32 0.0, %v1468
      %v1470 = vpop.f32.mrf.mxu0
      %v1471 = vadd.f32 0.0, %v1470
      %1472 = vmatmul.bf16.gmra.mxu0 %v1032
      %v1473 = vpop.f32.mrf.mxu0
      %v1474 = vadd.f32 0.0, %v1473
      %v1475 = vpop.f32.mrf.mxu0
      %v1476 = vadd.f32 0.0, %v1475
      %1477 = vmatmul.bf16.gmra.mxu0 %v1033
      %v1478 = vpop.f32.mrf.mxu0
      %v1479 = vadd.f32 0.0, %v1478
      %v1480 = vpop.f32.mrf.mxu0
      %v1481 = vadd.f32 0.0, %v1480
      %1482 = vmatmul.bf16.gmra.mxu0 %v1034
      %v1483 = vpop.f32.mrf.mxu0
      %v1484 = vadd.f32 0.0, %v1483
      %v1485 = vpop.f32.mrf.mxu0
      %v1486 = vadd.f32 0.0, %v1485
      %1487 = vmatmul.bf16.gmra.mxu0 %v1035
      %v1488 = vpop.f32.mrf.mxu0
      %v1489 = vadd.f32 0.0, %v1488
      %v1490 = vpop.f32.mrf.mxu0
      %v1491 = vadd.f32 0.0, %v1490
      %1492 = vmatmul.bf16.gmra.mxu0 %v1036
      %v1493 = vpop.f32.mrf.mxu0
      %v1494 = vadd.f32 0.0, %v1493
      %v1495 = vpop.f32.mrf.mxu0
      %v1496 = vadd.f32 0.0, %v1495
      %1497 = vmatmul.bf16.gmra.mxu0 %v1037
      %v1498 = vpop.f32.mrf.mxu0
      %v1499 = vadd.f32 0.0, %v1498
      %v1500 = vpop.f32.mrf.mxu0
      %v1501 = vadd.f32 0.0, %v1500
      %1502 = vmatmul.bf16.gmra.mxu0 %v1038
      %v1503 = vpop.f32.mrf.mxu0
      %v1504 = vadd.f32 0.0, %v1503
      %v1505 = vpop.f32.mrf.mxu0
      %v1506 = vadd.f32 0.0, %v1505
      %1507 = vmatmul.bf16.gmra.mxu0 %v1039
      %v1508 = vpop.f32.mrf.mxu0
      %v1509 = vadd.f32 0.0, %v1508
      %v1510 = vpop.f32.mrf.mxu0
      %v1511 = vadd.f32 0.0, %v1510
      %1512 = vmatmul.bf16.gmra.mxu0 %v1040
      %v1513 = vpop.f32.mrf.mxu0
      %v1514 = vadd.f32 0.0, %v1513
      %v1515 = vpop.f32.mrf.mxu0
      %v1516 = vadd.f32 0.0, %v1515
      %1517 = vmatmul.bf16.gmra.mxu0 %v1041
      %v1518 = vpop.f32.mrf.mxu0
      %v1519 = vadd.f32 0.0, %v1518
      %v1520 = vpop.f32.mrf.mxu0
      %v1521 = vadd.f32 0.0, %v1520
      %1522 = vmatmul.bf16.gmra.mxu0 %v1042
      %v1523 = vpop.f32.mrf.mxu0
      %v1524 = vadd.f32 0.0, %v1523
      %v1525 = vpop.f32.mrf.mxu0
      %v1526 = vadd.f32 0.0, %v1525
      %1527 = vmatmul.bf16.gmra.mxu0 %v1043
      %v1528 = vpop.f32.mrf.mxu0
      %v1529 = vadd.f32 0.0, %v1528
      %v1530 = vpop.f32.mrf.mxu0
      %v1531 = vadd.f32 0.0, %v1530
      %1532 = vmatmul.bf16.gmra.mxu0 %v1044
      %v1533 = vpop.f32.mrf.mxu0
      %v1534 = vadd.f32 0.0, %v1533
      %v1535 = vpop.f32.mrf.mxu0
      %v1536 = vadd.f32 0.0, %v1535
      %1537 = vmatmul.bf16.gmra.mxu0 %v1045
      %v1538 = vpop.f32.mrf.mxu0
      %v1539 = vadd.f32 0.0, %v1538
      %v1540 = vpop.f32.mrf.mxu0
      %v1541 = vadd.f32 0.0, %v1540
      %1542 = vmatmul.bf16.gmra.mxu0 %v1046
      %v1543 = vpop.f32.mrf.mxu0
      %v1544 = vadd.f32 0.0, %v1543
      %v1545 = vpop.f32.mrf.mxu0
      %v1546 = vadd.f32 0.0, %v1545
      %1547 = vmatmul.bf16.gmra.mxu0 %v1047
      %v1548 = vpop.f32.mrf.mxu0
      %v1549 = vadd.f32 0.0, %v1548
      %v1550 = vpop.f32.mrf.mxu0
      %v1551 = vadd.f32 0.0, %v1550
      %1552 = vmatmul.bf16.gmra.mxu0 %v1048
      %v1553 = vpop.f32.mrf.mxu0
      %v1554 = vadd.f32 0.0, %v1553
      %v1555 = vpop.f32.mrf.mxu0
      %v1556 = vadd.f32 0.0, %v1555
      %1557 = vmatmul.bf16.gmra.mxu0 %v1049
      %v1558 = vpop.f32.mrf.mxu0
      %v1559 = vadd.f32 0.0, %v1558
      %v1560 = vpop.f32.mrf.mxu0
      %v1561 = vadd.f32 0.0, %v1560
      %1562 = vmatmul.bf16.gmra.mxu0 %v1050
      %v1563 = vpop.f32.mrf.mxu0
      %v1564 = vadd.f32 0.0, %v1563
      %v1565 = vpop.f32.mrf.mxu0
      %v1566 = vadd.f32 0.0, %v1565
      %1567 = vmatmul.bf16.gmra.mxu0 %v1051
      %v1568 = vpop.f32.mrf.mxu0
      %v1569 = vadd.f32 0.0, %v1568
      %v1570 = vpop.f32.mrf.mxu0
      %v1571 = vadd.f32 0.0, %v1570
      %1572 = vmatmul.bf16.gmra.mxu0 %v1052
      %v1573 = vpop.f32.mrf.mxu0
      %v1574 = vadd.f32 0.0, %v1573
      %v1575 = vpop.f32.mrf.mxu0
      %v1576 = vadd.f32 0.0, %v1575
      %1577 = vmatmul.bf16.gmra.mxu0 %v1053
      %v1578 = vpop.f32.mrf.mxu0
      %v1579 = vadd.f32 0.0, %v1578
      %v1580 = vpop.f32.mrf.mxu0
      %v1581 = vadd.f32 0.0, %v1580
      %1582 = vmatmul.bf16.gmra.mxu0 %v1054
      %v1583 = vpop.f32.mrf.mxu0
      %v1584 = vadd.f32 0.0, %v1583
      %v1585 = vpop.f32.mrf.mxu0
      %v1586 = vadd.f32 0.0, %v1585
      %1587 = vmatmul.bf16.gmra.mxu0 %v1055
      %v1588 = vpop.f32.mrf.mxu0
      %v1589 = vadd.f32 0.0, %v1588
      %v1590 = vpop.f32.mrf.mxu0
      %v1591 = vadd.f32 0.0, %v1590
      %1592 = vmatmul.bf16.gmra.mxu0 %v1056
      %v1593 = vpop.f32.mrf.mxu0
      %v1594 = vadd.f32 0.0, %v1593
      %v1595 = vpop.f32.mrf.mxu0
      %v1596 = vadd.f32 0.0, %v1595
      %1597 = vmatmul.bf16.gmra.mxu0 %v1057
      %v1598 = vpop.f32.mrf.mxu0
      %v1599 = vadd.f32 0.0, %v1598
      %v1600 = vpop.f32.mrf.mxu0
      %v1601 = vadd.f32 0.0, %v1600
      %1602 = vmatmul.bf16.gmra.mxu0 %v1058
      %v1603 = vpop.f32.mrf.mxu0
      %v1604 = vadd.f32 0.0, %v1603
      %v1605 = vpop.f32.mrf.mxu0
      %v1606 = vadd.f32 0.0, %v1605
      %1607 = vmatmul.bf16.gmra.mxu0 %v1059
      %v1608 = vpop.f32.mrf.mxu0
      %v1609 = vadd.f32 0.0, %v1608
      %v1610 = vpop.f32.mrf.mxu0
      %v1611 = vadd.f32 0.0, %v1610
      %1612 = vmatmul.bf16.gmra.mxu0 %v1060
      %v1613 = vpop.f32.mrf.mxu0
      %v1614 = vadd.f32 0.0, %v1613
      %v1615 = vpop.f32.mrf.mxu0
      %v1616 = vadd.f32 0.0, %v1615
      %1617 = vmatmul.bf16.gmra.mxu0 %v1061
      %v1618 = vpop.f32.mrf.mxu0
      %v1619 = vadd.f32 0.0, %v1618
      %v1620 = vpop.f32.mrf.mxu0
      %v1621 = vadd.f32 0.0, %v1620
      %1622 = vmatmul.bf16.gmra.mxu0 %v1062
      %v1623 = vpop.f32.mrf.mxu0
      %v1624 = vadd.f32 0.0, %v1623
      %v1625 = vpop.f32.mrf.mxu0
      %v1626 = vadd.f32 0.0, %v1625
      %1627 = vmatmul.bf16.gmra.mxu0 %v1063
      %v1628 = vpop.f32.mrf.mxu0
      %v1629 = vadd.f32 0.0, %v1628
      %v1630 = vpop.f32.mrf.mxu0
      %v1631 = vadd.f32 0.0, %v1630
      %1632 = vmatmul.bf16.gmra.mxu0 %v1064
      %v1633 = vpop.f32.mrf.mxu0
      %v1634 = vadd.f32 0.0, %v1633
      %v1635 = vpop.f32.mrf.mxu0
      %v1636 = vadd.f32 0.0, %v1635
      %1637 = vmatmul.bf16.gmra.mxu0 %v1065
      %v1638 = vpop.f32.mrf.mxu0
      %v1639 = vadd.f32 0.0, %v1638
      %v1640 = vpop.f32.mrf.mxu0
      %v1641 = vadd.f32 0.0, %v1640
      %1642 = vmatmul.bf16.gmra.mxu0 %v1066
      %v1643 = vpop.f32.mrf.mxu0
      %v1644 = vadd.f32 0.0, %v1643
      %v1645 = vpop.f32.mrf.mxu0
      %v1646 = vadd.f32 0.0, %v1645
      %1647 = vmatmul.bf16.gmra.mxu0 %v1067
      %v1648 = vpop.f32.mrf.mxu0
      %v1649 = vadd.f32 0.0, %v1648
      %v1650 = vpop.f32.mrf.mxu0
      %v1651 = vadd.f32 0.0, %v1650
      %1652 = vmatmul.bf16.gmra.mxu0 %v1068
      %v1653 = vpop.f32.mrf.mxu0
      %v1654 = vadd.f32 0.0, %v1653
      %v1655 = vpop.f32.mrf.mxu0
      %v1656 = vadd.f32 0.0, %v1655
      %1657 = vmatmul.bf16.gmra.mxu0 %v1069
      %v1658 = vpop.f32.mrf.mxu0
      %v1659 = vadd.f32 0.0, %v1658
      %v1660 = vpop.f32.mrf.mxu0
      %v1661 = vadd.f32 0.0, %v1660
      %1662 = vmatmul.bf16.gmra.mxu0 %v1070
      %v1663 = vpop.f32.mrf.mxu0
      %v1664 = vadd.f32 0.0, %v1663
      %v1665 = vpop.f32.mrf.mxu0
      %v1666 = vadd.f32 0.0, %v1665
      %1667 = vmatmul.bf16.gmra.mxu0 %v1071
      %v1668 = vpop.f32.mrf.mxu0
      %v1669 = vadd.f32 0.0, %v1668
      %v1670 = vpop.f32.mrf.mxu0
      %v1671 = vadd.f32 0.0, %v1670
      %1672 = vmatmul.bf16.gmra.mxu0 %v1072
      %v1673 = vpop.f32.mrf.mxu0
      %v1674 = vadd.f32 0.0, %v1673
      %v1675 = vpop.f32.mrf.mxu0
      %v1676 = vadd.f32 0.0, %v1675
      %1677 = vmatmul.bf16.gmra.mxu0 %v1073
      %v1678 = vpop.f32.mrf.mxu0
      %v1679 = vadd.f32 0.0, %v1678
      %v1680 = vpop.f32.mrf.mxu0
      %v1681 = vadd.f32 0.0, %v1680
      %1682 = vmatmul.bf16.gmra.mxu0 %v1074
      %v1683 = vpop.f32.mrf.mxu0
      %v1684 = vadd.f32 0.0, %v1683
      %v1685 = vpop.f32.mrf.mxu0
      %v1686 = vadd.f32 0.0, %v1685
      %1687 = vmatmul.bf16.gmra.mxu0 %v1075
      %v1688 = vpop.f32.mrf.mxu0
      %v1689 = vadd.f32 0.0, %v1688
      %v1690 = vpop.f32.mrf.mxu0
      %v1691 = vadd.f32 0.0, %v1690
      %1692 = vmatmul.bf16.gmra.mxu0 %v1076
      %v1693 = vpop.f32.mrf.mxu0
      %v1694 = vadd.f32 0.0, %v1693
      %v1695 = vpop.f32.mrf.mxu0
      %v1696 = vadd.f32 0.0, %v1695
      %1697 = vmatmul.bf16.gmra.mxu0 %v1077
      %v1698 = vpop.f32.mrf.mxu0
      %v1699 = vadd.f32 0.0, %v1698
      %v1700 = vpop.f32.mrf.mxu0
      %v1701 = vadd.f32 0.0, %v1700
      %1702 = vmatmul.bf16.gmra.mxu0 %v1078
      %v1703 = vpop.f32.mrf.mxu0
      %v1704 = vadd.f32 0.0, %v1703
      %v1705 = vpop.f32.mrf.mxu0
      %v1706 = vadd.f32 0.0, %v1705
      %1707 = vmatmul.bf16.gmra.mxu0 %v1079
      %v1708 = vpop.f32.mrf.mxu0
      %v1709 = vadd.f32 0.0, %v1708
      %v1710 = vpop.f32.mrf.mxu0
      %v1711 = vadd.f32 0.0, %v1710
      %1712 = vmatmul.bf16.gmra.mxu0 %v1080
      %v1713 = vpop.f32.mrf.mxu0
      %v1714 = vadd.f32 0.0, %v1713
      %v1715 = vpop.f32.mrf.mxu0
      %v1716 = vadd.f32 0.0, %v1715
      %1717 = vmatmul.bf16.gmra.mxu0 %v1081
      %v1718 = vpop.f32.mrf.mxu0
      %v1719 = vadd.f32 0.0, %v1718
      %v1720 = vpop.f32.mrf.mxu0
      %v1721 = vadd.f32 0.0, %v1720
      %1722 = vmatmul.bf16.gmra.mxu0 %v1082
      %v1723 = vpop.f32.mrf.mxu0
      %v1724 = vadd.f32 0.0, %v1723
      %v1725 = vpop.f32.mrf.mxu0
      %v1726 = vadd.f32 0.0, %v1725
      %1727 = vmatmul.bf16.gmra.mxu0 %v1083
      %v1728 = vpop.f32.mrf.mxu0
      %v1729 = vadd.f32 0.0, %v1728
      %v1730 = vpop.f32.mrf.mxu0
      %v1731 = vadd.f32 0.0, %v1730
      %1732 = vmatmul.bf16.gmra.mxu0 %v1084
      %v1733 = vpop.f32.mrf.mxu0
      %v1734 = vadd.f32 0.0, %v1733
      %v1735 = vpop.f32.mrf.mxu0
      %v1736 = vadd.f32 0.0, %v1735
      %1737 = vmatmul.bf16.gmra.mxu0 %v1085
      %v1738 = vpop.f32.mrf.mxu0
      %v1739 = vadd.f32 0.0, %v1738
      %v1740 = vpop.f32.mrf.mxu0
      %v1741 = vadd.f32 0.0, %v1740
      %1742 = vmatmul.bf16.gmra.mxu0 %v1086
      %v1743 = vpop.f32.mrf.mxu0
      %v1744 = vadd.f32 0.0, %v1743
      %v1745 = vpop.f32.mrf.mxu0
      %v1746 = vadd.f32 0.0, %v1745
      %1747 = vmatmul.bf16.gmra.mxu0 %v1087
      %v1748 = vpop.f32.mrf.mxu0
      %v1749 = vadd.f32 0.0, %v1748
      %v1750 = vpop.f32.mrf.mxu0
      %v1751 = vadd.f32 0.0, %v1750
      %1752 = vmatmul.bf16.gmra.mxu0 %v1088
      %v1753 = vpop.f32.mrf.mxu0
      %v1754 = vadd.f32 0.0, %v1753
      %v1755 = vpop.f32.mrf.mxu0
      %v1756 = vadd.f32 0.0, %v1755
      %1757 = vmatmul.bf16.gmra.mxu0 %v1089
      %v1758 = vpop.f32.mrf.mxu0
      %v1759 = vadd.f32 0.0, %v1758
      %v1760 = vpop.f32.mrf.mxu0
      %v1761 = vadd.f32 0.0, %v1760
      %1762 = vmatmul.bf16.gmra.mxu0 %v1090
      %v1763 = vpop.f32.mrf.mxu0
      %v1764 = vadd.f32 0.0, %v1763
      %v1765 = vpop.f32.mrf.mxu0
      %v1766 = vadd.f32 0.0, %v1765
      %1767 = vmatmul.bf16.gmra.mxu0 %v1091
      %v1768 = vpop.f32.mrf.mxu0
      %v1769 = vadd.f32 0.0, %v1768
      %v1770 = vpop.f32.mrf.mxu0
      %v1771 = vadd.f32 0.0, %v1770
      %1772 = vmatmul.bf16.gmra.mxu0 %v1092
      %v1773 = vpop.f32.mrf.mxu0
      %v1774 = vadd.f32 0.0, %v1773
      %v1775 = vpop.f32.mrf.mxu0
      %v1776 = vadd.f32 0.0, %v1775
      %1777 = vmatmul.bf16.gmra.mxu0 %v1093
      %v1778 = vpop.f32.mrf.mxu0
      %v1779 = vadd.f32 0.0, %v1778
      %v1780 = vpop.f32.mrf.mxu0
      %v1781 = vadd.f32 0.0, %v1780
      %1782 = vmatmul.bf16.gmra.mxu0 %v1094
      %v1783 = vpop.f32.mrf.mxu0
      %v1784 = vadd.f32 0.0, %v1783
      %v1785 = vpop.f32.mrf.mxu0
      %v1786 = vadd.f32 0.0, %v1785
      %1787 = vmatmul.bf16.gmra.mxu0 %v1095
      %v1788 = vpop.f32.mrf.mxu0
      %v1789 = vadd.f32 0.0, %v1788
      %v1790 = vpop.f32.mrf.mxu0
      %v1791 = vadd.f32 0.0, %v1790
      %1792 = vmatmul.bf16.gmra.mxu0 %v1096
      %v1793 = vpop.f32.mrf.mxu0
      %v1794 = vadd.f32 0.0, %v1793
      %v1795 = vpop.f32.mrf.mxu0
      %v1796 = vadd.f32 0.0, %v1795
      %1797 = vmatmul.bf16.gmra.mxu0 %v1097
      %v1798 = vpop.f32.mrf.mxu0
      %v1799 = vadd.f32 0.0, %v1798
      %v1800 = vpop.f32.mrf.mxu0
      %v1801 = vadd.f32 0.0, %v1800
      %1802 = vmatmul.bf16.gmra.mxu0 %v1098
      %v1803 = vpop.f32.mrf.mxu0
      %v1804 = vadd.f32 0.0, %v1803
      %v1805 = vpop.f32.mrf.mxu0
      %v1806 = vadd.f32 0.0, %v1805
      %1807 = vmatmul.bf16.gmra.mxu0 %v1099
      %v1808 = vpop.f32.mrf.mxu0
      %v1809 = vadd.f32 0.0, %v1808
      %v1810 = vpop.f32.mrf.mxu0
      %v1811 = vadd.f32 0.0, %v1810
      %1812 = vmatmul.bf16.gmra.mxu0 %v1100
      %v1813 = vpop.f32.mrf.mxu0
      %v1814 = vadd.f32 0.0, %v1813
      %v1815 = vpop.f32.mrf.mxu0
      %v1816 = vadd.f32 0.0, %v1815
      %1817 = vmatmul.bf16.gmra.mxu0 %v1101
      %v1818 = vpop.f32.mrf.mxu0
      %v1819 = vadd.f32 0.0, %v1818
      %v1820 = vpop.f32.mrf.mxu0
      %v1821 = vadd.f32 0.0, %v1820
      %1822 = vmatmul.bf16.gmra.mxu0 %v1102
      %v1823 = vpop.f32.mrf.mxu0
      %v1824 = vadd.f32 0.0, %v1823
      %v1825 = vpop.f32.mrf.mxu0
      %v1826 = vadd.f32 0.0, %v1825
      %1827 = vmatmul.bf16.gmra.mxu0 %v1103
      %v1828 = vpop.f32.mrf.mxu0
      %v1829 = vadd.f32 0.0, %v1828
      %v1830 = vpop.f32.mrf.mxu0
      %v1831 = vadd.f32 0.0, %v1830
      %1832 = vmatmul.bf16.gmra.mxu0 %v1104
      %v1833 = vpop.f32.mrf.mxu0
      %v1834 = vadd.f32 0.0, %v1833
      %v1835 = vpop.f32.mrf.mxu0
      %v1836 = vadd.f32 0.0, %v1835
      %1837 = vmatmul.bf16.gmra.mxu0 %v1105
      %v1838 = vpop.f32.mrf.mxu0
      %v1839 = vadd.f32 0.0, %v1838
      %v1840 = vpop.f32.mrf.mxu0
      %v1841 = vadd.f32 0.0, %v1840
      %1842 = vmatmul.bf16.gmra.mxu0 %v1106
      %v1843 = vpop.f32.mrf.mxu0
      %v1844 = vadd.f32 0.0, %v1843
      %v1845 = vpop.f32.mrf.mxu0
      %v1846 = vadd.f32 0.0, %v1845
      %1847 = vmatmul.bf16.gmra.mxu0 %v1107
      %v1848 = vpop.f32.mrf.mxu0
      %v1849 = vadd.f32 0.0, %v1848
      %v1850 = vpop.f32.mrf.mxu0
      %v1851 = vadd.f32 0.0, %v1850
      %1852 = vmatmul.bf16.gmra.mxu0 %v1108
      %v1853 = vpop.f32.mrf.mxu0
      %v1854 = vadd.f32 0.0, %v1853
      %v1855 = vpop.f32.mrf.mxu0
      %v1856 = vadd.f32 0.0, %v1855
      %1857 = vmatmul.bf16.gmra.mxu0 %v1109
      %v1858 = vpop.f32.mrf.mxu0
      %v1859 = vadd.f32 0.0, %v1858
      %v1860 = vpop.f32.mrf.mxu0
      %v1861 = vadd.f32 0.0, %v1860
      %1862 = vmatmul.bf16.gmra.mxu0 %v1110
      %v1863 = vpop.f32.mrf.mxu0
      %v1864 = vadd.f32 0.0, %v1863
      %v1865 = vpop.f32.mrf.mxu0
      %v1866 = vadd.f32 0.0, %v1865
      %1867 = vmatmul.bf16.gmra.mxu0 %v1111
      %v1868 = vpop.f32.mrf.mxu0
      %v1869 = vadd.f32 0.0, %v1868
      %v1870 = vpop.f32.mrf.mxu0
      %v1871 = vadd.f32 0.0, %v1870
      %1872 = vmatmul.bf16.gmra.mxu0 %v1112
      %v1873 = vpop.f32.mrf.mxu0
      %v1874 = vadd.f32 0.0, %v1873
      %v1875 = vpop.f32.mrf.mxu0
      %v1876 = vadd.f32 0.0, %v1875
      %1877 = vmatmul.bf16.gmra.mxu0 %v1113
      %v1878 = vpop.f32.mrf.mxu0
      %v1879 = vadd.f32 0.0, %v1878
      %v1880 = vpop.f32.mrf.mxu0
      %v1881 = vadd.f32 0.0, %v1880
      %1882 = vmatmul.bf16.gmra.mxu0 %v1114
      %v1883 = vpop.f32.mrf.mxu0
      %v1884 = vadd.f32 0.0, %v1883
      %v1885 = vpop.f32.mrf.mxu0
      %v1886 = vadd.f32 0.0, %v1885
      %1887 = vmatmul.bf16.gmra.mxu0 %v1115
      %v1888 = vpop.f32.mrf.mxu0
      %v1889 = vadd.f32 0.0, %v1888
      %v1890 = vpop.f32.mrf.mxu0
      %v1891 = vadd.f32 0.0, %v1890
      %1892 = vmatmul.bf16.gmra.mxu0 %v1116
      %v1893 = vpop.f32.mrf.mxu0
      %v1894 = vadd.f32 0.0, %v1893
      %v1895 = vpop.f32.mrf.mxu0
      %v1896 = vadd.f32 0.0, %v1895
      %1897 = vmatmul.bf16.gmra.mxu0 %v1117
      %v1898 = vpop.f32.mrf.mxu0
      %v1899 = vadd.f32 0.0, %v1898
      %v1900 = vpop.f32.mrf.mxu0
      %v1901 = vadd.f32 0.0, %v1900
      %1902 = vmatmul.bf16.gmra.mxu0 %v1118
      %v1903 = vpop.f32.mrf.mxu0
      %v1904 = vadd.f32 0.0, %v1903
      %v1905 = vpop.f32.mrf.mxu0
      %v1906 = vadd.f32 0.0, %v1905
      %1907 = vmatmul.bf16.gmra.mxu0 %v1119
      %v1908 = vpop.f32.mrf.mxu0
      %v1909 = vadd.f32 0.0, %v1908
      %v1910 = vpop.f32.mrf.mxu0
      %v1911 = vadd.f32 0.0, %v1910
      %1912 = vmatmul.bf16.gmra.mxu0 %v1120
      %v1913 = vpop.f32.mrf.mxu0
      %v1914 = vadd.f32 0.0, %v1913
      %v1915 = vpop.f32.mrf.mxu0
      %v1916 = vadd.f32 0.0, %v1915
      %1917 = vmatmul.bf16.gmra.mxu0 %v1121
      %v1918 = vpop.f32.mrf.mxu0
      %v1919 = vadd.f32 0.0, %v1918
      %v1920 = vpop.f32.mrf.mxu0
      %v1921 = vadd.f32 0.0, %v1920
      %1922 = vmatmul.bf16.gmra.mxu0 %v1122
      %v1923 = vpop.f32.mrf.mxu0
      %v1924 = vadd.f32 0.0, %v1923
      %v1925 = vpop.f32.mrf.mxu0
      %v1926 = vadd.f32 0.0, %v1925
      %1927 = vmatmul.bf16.gmra.mxu0 %v1123
      %v1928 = vpop.f32.mrf.mxu0
      %v1929 = vadd.f32 0.0, %v1928
      %v1930 = vpop.f32.mrf.mxu0
      %v1931 = vadd.f32 0.0, %v1930
      %1932 = vmatmul.bf16.gmra.mxu0 %v1124
      %v1933 = vpop.f32.mrf.mxu0
      %v1934 = vadd.f32 0.0, %v1933
      %v1935 = vpop.f32.mrf.mxu0
      %v1936 = vadd.f32 0.0, %v1935
      %1937 = vmatmul.bf16.gmra.mxu0 %v1125
      %v1938 = vpop.f32.mrf.mxu0
      %v1939 = vadd.f32 0.0, %v1938
      %v1940 = vpop.f32.mrf.mxu0
      %v1941 = vadd.f32 0.0, %v1940
      %1942 = vmatmul.bf16.gmra.mxu0 %v1126
      %v1943 = vpop.f32.mrf.mxu0
      %v1944 = vadd.f32 0.0, %v1943
      %v1945 = vpop.f32.mrf.mxu0
      %v1946 = vadd.f32 0.0, %v1945
      %1947 = vmatmul.bf16.gmra.mxu0 %v1127
      %v1948 = vpop.f32.mrf.mxu0
      %v1949 = vadd.f32 0.0, %v1948
      %v1950 = vpop.f32.mrf.mxu0
      %v1951 = vadd.f32 0.0, %v1950
      %1952 = vdwg.mxu0
      %v1953 = vpack.c.bf16 %v1314, %v1314
      %v1954 = vpack.c.bf16 %v1316, %v1316
      %v1955 = vpack.c.bf16 %v1319, %v1319
      %v1956 = vpack.c.bf16 %v1321, %v1321
      %v1957 = vpack.c.bf16 %v1324, %v1324
      %v1958 = vpack.c.bf16 %v1326, %v1326
      %v1959 = vpack.c.bf16 %v1329, %v1329
      %v1960 = vpack.c.bf16 %v1331, %v1331
      %v1961 = vpack.c.bf16 %v1334, %v1334
      %v1962 = vpack.c.bf16 %v1336, %v1336
      %v1963 = vpack.c.bf16 %v1339, %v1339
      %v1964 = vpack.c.bf16 %v1341, %v1341
      %v1965 = vpack.c.bf16 %v1344, %v1344
      %v1966 = vpack.c.bf16 %v1346, %v1346
      %v1967 = vpack.c.bf16 %v1349, %v1349
      %v1968 = vpack.c.bf16 %v1351, %v1351
      %v1969 = vpack.c.bf16 %v1354, %v1354
      %v1970 = vpack.c.bf16 %v1356, %v1356
      %v1971 = vpack.c.bf16 %v1359, %v1359
      %v1972 = vpack.c.bf16 %v1361, %v1361
      %v1973 = vpack.c.bf16 %v1364, %v1364
      %v1974 = vpack.c.bf16 %v1366, %v1366
      %v1975 = vpack.c.bf16 %v1369, %v1369
      %v1976 = vpack.c.bf16 %v1371, %v1371
      %v1977 = vpack.c.bf16 %v1374, %v1374
      %v1978 = vpack.c.bf16 %v1376, %v1376
      %v1979 = vpack.c.bf16 %v1379, %v1379
      %v1980 = vpack.c.bf16 %v1381, %v1381
      %v1981 = vpack.c.bf16 %v1384, %v1384
      %v1982 = vpack.c.bf16 %v1386, %v1386
      %v1983 = vpack.c.bf16 %v1389, %v1389
      %v1984 = vpack.c.bf16 %v1391, %v1391
      %v1985 = vpack.c.bf16 %v1394, %v1394
      %v1986 = vpack.c.bf16 %v1396, %v1396
      %v1987 = vpack.c.bf16 %v1399, %v1399
      %v1988 = vpack.c.bf16 %v1401, %v1401
      %v1989 = vpack.c.bf16 %v1404, %v1404
      %v1990 = vpack.c.bf16 %v1406, %v1406
      %v1991 = vpack.c.bf16 %v1409, %v1409
      %v1992 = vpack.c.bf16 %v1411, %v1411
      %v1993 = vpack.c.bf16 %v1414, %v1414
      %v1994 = vpack.c.bf16 %v1416, %v1416
      %v1995 = vpack.c.bf16 %v1419, %v1419
      %v1996 = vpack.c.bf16 %v1421, %v1421
      %v1997 = vpack.c.bf16 %v1424, %v1424
      %v1998 = vpack.c.bf16 %v1426, %v1426
      %v1999 = vpack.c.bf16 %v1429, %v1429
      %v2000 = vpack.c.bf16 %v1431, %v1431
      %v2001 = vpack.c.bf16 %v1434, %v1434
      %v2002 = vpack.c.bf16 %v1436, %v1436
      %v2003 = vpack.c.bf16 %v1439, %v1439
      %v2004 = vpack.c.bf16 %v1441, %v1441
      %v2005 = vpack.c.bf16 %v1444, %v1444
      %v2006 = vpack.c.bf16 %v1446, %v1446
      %v2007 = vpack.c.bf16 %v1449, %v1449
      %v2008 = vpack.c.bf16 %v1451, %v1451
      %v2009 = vpack.c.bf16 %v1454, %v1454
      %v2010 = vpack.c.bf16 %v1456, %v1456
      %v2011 = vpack.c.bf16 %v1459, %v1459
      %v2012 = vpack.c.bf16 %v1461, %v1461
      %v2013 = vpack.c.bf16 %v1464, %v1464
      %v2014 = vpack.c.bf16 %v1466, %v1466
      %v2015 = vpack.c.bf16 %v1469, %v1469
      %v2016 = vpack.c.bf16 %v1471, %v1471
      %v2017 = vpack.c.bf16 %v1474, %v1474
      %v2018 = vpack.c.bf16 %v1476, %v1476
      %v2019 = vpack.c.bf16 %v1479, %v1479
      %v2020 = vpack.c.bf16 %v1481, %v1481
      %v2021 = vpack.c.bf16 %v1484, %v1484
      %v2022 = vpack.c.bf16 %v1486, %v1486
      %v2023 = vpack.c.bf16 %v1489, %v1489
      %v2024 = vpack.c.bf16 %v1491, %v1491
      %v2025 = vpack.c.bf16 %v1494, %v1494
      %v2026 = vpack.c.bf16 %v1496, %v1496
      %v2027 = vpack.c.bf16 %v1499, %v1499
      %v2028 = vpack.c.bf16 %v1501, %v1501
      %v2029 = vpack.c.bf16 %v1504, %v1504
      %v2030 = vpack.c.bf16 %v1506, %v1506
      %v2031 = vpack.c.bf16 %v1509, %v1509
      %v2032 = vpack.c.bf16 %v1511, %v1511
      %v2033 = vpack.c.bf16 %v1514, %v1514
      %v2034 = vpack.c.bf16 %v1516, %v1516
      %v2035 = vpack.c.bf16 %v1519, %v1519
      %v2036 = vpack.c.bf16 %v1521, %v1521
      %v2037 = vpack.c.bf16 %v1524, %v1524
      %v2038 = vpack.c.bf16 %v1526, %v1526
      %v2039 = vpack.c.bf16 %v1529, %v1529
      %v2040 = vpack.c.bf16 %v1531, %v1531
      %v2041 = vpack.c.bf16 %v1534, %v1534
      %v2042 = vpack.c.bf16 %v1536, %v1536
      %v2043 = vpack.c.bf16 %v1539, %v1539
      %v2044 = vpack.c.bf16 %v1541, %v1541
      %v2045 = vpack.c.bf16 %v1544, %v1544
      %v2046 = vpack.c.bf16 %v1546, %v1546
      %v2047 = vpack.c.bf16 %v1549, %v1549
      %v2048 = vpack.c.bf16 %v1551, %v1551
      %v2049 = vpack.c.bf16 %v1554, %v1554
      %v2050 = vpack.c.bf16 %v1556, %v1556
      %v2051 = vpack.c.bf16 %v1559, %v1559
      %v2052 = vpack.c.bf16 %v1561, %v1561
      %v2053 = vpack.c.bf16 %v1564, %v1564
      %v2054 = vpack.c.bf16 %v1566, %v1566
      %v2055 = vpack.c.bf16 %v1569, %v1569
      %v2056 = vpack.c.bf16 %v1571, %v1571
      %v2057 = vpack.c.bf16 %v1574, %v1574
      %v2058 = vpack.c.bf16 %v1576, %v1576
      %v2059 = vpack.c.bf16 %v1579, %v1579
      %v2060 = vpack.c.bf16 %v1581, %v1581
      %v2061 = vpack.c.bf16 %v1584, %v1584
      %v2062 = vpack.c.bf16 %v1586, %v1586
      %v2063 = vpack.c.bf16 %v1589, %v1589
      %v2064 = vpack.c.bf16 %v1591, %v1591
      %v2065 = vpack.c.bf16 %v1594, %v1594
      %v2066 = vpack.c.bf16 %v1596, %v1596
      %v2067 = vpack.c.bf16 %v1599, %v1599
      %v2068 = vpack.c.bf16 %v1601, %v1601
      %v2069 = vpack.c.bf16 %v1604, %v1604
      %v2070 = vpack.c.bf16 %v1606, %v1606
      %v2071 = vpack.c.bf16 %v1609, %v1609
      %v2072 = vpack.c.bf16 %v1611, %v1611
      %v2073 = vpack.c.bf16 %v1614, %v1614
      %v2074 = vpack.c.bf16 %v1616, %v1616
      %v2075 = vpack.c.bf16 %v1619, %v1619
      %v2076 = vpack.c.bf16 %v1621, %v1621
      %v2077 = vpack.c.bf16 %v1624, %v1624
      %v2078 = vpack.c.bf16 %v1626, %v1626
      %v2079 = vpack.c.bf16 %v1629, %v1629
      %v2080 = vpack.c.bf16 %v1631, %v1631
      %v2081 = vpack.c.bf16 %v1634, %v1634
      %v2082 = vpack.c.bf16 %v1636, %v1636
      %v2083 = vpack.c.bf16 %v1639, %v1639
      %v2084 = vpack.c.bf16 %v1641, %v1641
      %v2085 = vpack.c.bf16 %v1644, %v1644
      %v2086 = vpack.c.bf16 %v1646, %v1646
      %v2087 = vpack.c.bf16 %v1649, %v1649
      %v2088 = vpack.c.bf16 %v1651, %v1651
      %v2089 = vpack.c.bf16 %v1654, %v1654
      %v2090 = vpack.c.bf16 %v1656, %v1656
      %v2091 = vpack.c.bf16 %v1659, %v1659
      %v2092 = vpack.c.bf16 %v1661, %v1661
      %v2093 = vpack.c.bf16 %v1664, %v1664
      %v2094 = vpack.c.bf16 %v1666, %v1666
      %v2095 = vpack.c.bf16 %v1669, %v1669
      %v2096 = vpack.c.bf16 %v1671, %v1671
      %v2097 = vpack.c.bf16 %v1674, %v1674
      %v2098 = vpack.c.bf16 %v1676, %v1676
      %v2099 = vpack.c.bf16 %v1679, %v1679
      %v2100 = vpack.c.bf16 %v1681, %v1681
      %v2101 = vpack.c.bf16 %v1684, %v1684
      %v2102 = vpack.c.bf16 %v1686, %v1686
      %v2103 = vpack.c.bf16 %v1689, %v1689
      %v2104 = vpack.c.bf16 %v1691, %v1691
      %v2105 = vpack.c.bf16 %v1694, %v1694
      %v2106 = vpack.c.bf16 %v1696, %v1696
      %v2107 = vpack.c.bf16 %v1699, %v1699
      %v2108 = vpack.c.bf16 %v1701, %v1701
      %v2109 = vpack.c.bf16 %v1704, %v1704
      %v2110 = vpack.c.bf16 %v1706, %v1706
      %v2111 = vpack.c.bf16 %v1709, %v1709
      %v2112 = vpack.c.bf16 %v1711, %v1711
      %v2113 = vpack.c.bf16 %v1714, %v1714
      %v2114 = vpack.c.bf16 %v1716, %v1716
      %v2115 = vpack.c.bf16 %v1719, %v1719
      %v2116 = vpack.c.bf16 %v1721, %v1721
      %v2117 = vpack.c.bf16 %v1724, %v1724
      %v2118 = vpack.c.bf16 %v1726, %v1726
      %v2119 = vpack.c.bf16 %v1729, %v1729
      %v2120 = vpack.c.bf16 %v1731, %v1731
      %v2121 = vpack.c.bf16 %v1734, %v1734
      %v2122 = vpack.c.bf16 %v1736, %v1736
      %v2123 = vpack.c.bf16 %v1739, %v1739
      %v2124 = vpack.c.bf16 %v1741, %v1741
      %v2125 = vpack.c.bf16 %v1744, %v1744
      %v2126 = vpack.c.bf16 %v1746, %v1746
      %v2127 = vpack.c.bf16 %v1749, %v1749
      %v2128 = vpack.c.bf16 %v1751, %v1751
      %v2129 = vpack.c.bf16 %v1754, %v1754
      %v2130 = vpack.c.bf16 %v1756, %v1756
      %v2131 = vpack.c.bf16 %v1759, %v1759
      %v2132 = vpack.c.bf16 %v1761, %v1761
      %v2133 = vpack.c.bf16 %v1764, %v1764
      %v2134 = vpack.c.bf16 %v1766, %v1766
      %v2135 = vpack.c.bf16 %v1769, %v1769
      %v2136 = vpack.c.bf16 %v1771, %v1771
      %v2137 = vpack.c.bf16 %v1774, %v1774
      %v2138 = vpack.c.bf16 %v1776, %v1776
      %v2139 = vpack.c.bf16 %v1779, %v1779
      %v2140 = vpack.c.bf16 %v1781, %v1781
      %v2141 = vpack.c.bf16 %v1784, %v1784
      %v2142 = vpack.c.bf16 %v1786, %v1786
      %v2143 = vpack.c.bf16 %v1789, %v1789
      %v2144 = vpack.c.bf16 %v1791, %v1791
      %v2145 = vpack.c.bf16 %v1794, %v1794
      %v2146 = vpack.c.bf16 %v1796, %v1796
      %v2147 = vpack.c.bf16 %v1799, %v1799
      %v2148 = vpack.c.bf16 %v1801, %v1801
      %v2149 = vpack.c.bf16 %v1804, %v1804
      %v2150 = vpack.c.bf16 %v1806, %v1806
      %v2151 = vpack.c.bf16 %v1809, %v1809
      %v2152 = vpack.c.bf16 %v1811, %v1811
      %v2153 = vpack.c.bf16 %v1814, %v1814
      %v2154 = vpack.c.bf16 %v1816, %v1816
      %v2155 = vpack.c.bf16 %v1819, %v1819
      %v2156 = vpack.c.bf16 %v1821, %v1821
      %v2157 = vpack.c.bf16 %v1824, %v1824
      %v2158 = vpack.c.bf16 %v1826, %v1826
      %v2159 = vpack.c.bf16 %v1829, %v1829
      %v2160 = vpack.c.bf16 %v1831, %v1831
      %v2161 = vpack.c.bf16 %v1834, %v1834
      %v2162 = vpack.c.bf16 %v1836, %v1836
      %v2163 = vpack.c.bf16 %v1839, %v1839
      %v2164 = vpack.c.bf16 %v1841, %v1841
      %v2165 = vpack.c.bf16 %v1844, %v1844
      %v2166 = vpack.c.bf16 %v1846, %v1846
      %v2167 = vpack.c.bf16 %v1849, %v1849
      %v2168 = vpack.c.bf16 %v1851, %v1851
      %v2169 = vpack.c.bf16 %v1854, %v1854
      %v2170 = vpack.c.bf16 %v1856, %v1856
      %v2171 = vpack.c.bf16 %v1859, %v1859
      %v2172 = vpack.c.bf16 %v1861, %v1861
      %v2173 = vpack.c.bf16 %v1864, %v1864
      %v2174 = vpack.c.bf16 %v1866, %v1866
      %v2175 = vpack.c.bf16 %v1869, %v1869
      %v2176 = vpack.c.bf16 %v1871, %v1871
      %v2177 = vpack.c.bf16 %v1874, %v1874
      %v2178 = vpack.c.bf16 %v1876, %v1876
      %v2179 = vpack.c.bf16 %v1879, %v1879
      %v2180 = vpack.c.bf16 %v1881, %v1881
      %v2181 = vpack.c.bf16 %v1884, %v1884
      %v2182 = vpack.c.bf16 %v1886, %v1886
      %v2183 = vpack.c.bf16 %v1889, %v1889
      %v2184 = vpack.c.bf16 %v1891, %v1891
      %v2185 = vpack.c.bf16 %v1894, %v1894
      %v2186 = vpack.c.bf16 %v1896, %v1896
      %v2187 = vpack.c.bf16 %v1899, %v1899
      %v2188 = vpack.c.bf16 %v1901, %v1901
      %v2189 = vpack.c.bf16 %v1904, %v1904
      %v2190 = vpack.c.bf16 %v1906, %v1906
      %v2191 = vpack.c.bf16 %v1909, %v1909
      %v2192 = vpack.c.bf16 %v1911, %v1911
      %v2193 = vpack.c.bf16 %v1914, %v1914
      %v2194 = vpack.c.bf16 %v1916, %v1916
      %v2195 = vpack.c.bf16 %v1919, %v1919
      %v2196 = vpack.c.bf16 %v1921, %v1921
      %v2197 = vpack.c.bf16 %v1924, %v1924
      %v2198 = vpack.c.bf16 %v1926, %v1926
      %v2199 = vpack.c.bf16 %v1929, %v1929
      %v2200 = vpack.c.bf16 %v1931, %v1931
      %v2201 = vpack.c.bf16 %v1934, %v1934
      %v2202 = vpack.c.bf16 %v1936, %v1936
      %v2203 = vpack.c.bf16 %v1939, %v1939
      %v2204 = vpack.c.bf16 %v1941, %v1941
      %v2205 = vpack.c.bf16 %v1944, %v1944
      %v2206 = vpack.c.bf16 %v1946, %v1946
      %v2207 = vpack.c.bf16 %v1949, %v1949
      %v2208 = vpack.c.bf16 %v1951, %v1951
      %2209 = vst [vmem:[%s213] sm:$0xf] %v1953
      %2210 = vst [vmem:[%s213 + $0x4] sm:$0xf] %v1954
      %2211 = vst [vmem:[%s213 + $0x8] sm:$0xf] %v1955
      %2212 = vst [vmem:[%s213 + $0xc] sm:$0xf] %v1956
      %2213 = vst [vmem:[%s213 + $0x10] sm:$0xf] %v1957
      %2214 = vst [vmem:[%s213 + $0x14] sm:$0xf] %v1958
      %2215 = vst [vmem:[%s213 + $0x18] sm:$0xf] %v1959
      %2216 = vst [vmem:[%s213 + $0x1c] sm:$0xf] %v1960
      %2217 = vst [vmem:[%s213 + $0x20] sm:$0xf] %v1961
      %2218 = vst [vmem:[%s213 + $0x24] sm:$0xf] %v1962
      %2219 = vst [vmem:[%s213 + $0x28] sm:$0xf] %v1963
      %2220 = vst [vmem:[%s213 + $0x2c] sm:$0xf] %v1964
      %2221 = vst [vmem:[%s213 + $0x30] sm:$0xf] %v1965
      %2222 = vst [vmem:[%s213 + $0x34] sm:$0xf] %v1966
      %2223 = vst [vmem:[%s213 + $0x38] sm:$0xf] %v1967
      %2224 = vst [vmem:[%s213 + $0x3c] sm:$0xf] %v1968
      %2225 = vst [vmem:[%s213 + $0x40] sm:$0xf] %v1969
      %2226 = vst [vmem:[%s213 + $0x44] sm:$0xf] %v1970
      %2227 = vst [vmem:[%s213 + $0x48] sm:$0xf] %v1971
      %2228 = vst [vmem:[%s213 + $0x4c] sm:$0xf] %v1972
      %2229 = vst [vmem:[%s213 + $0x50] sm:$0xf] %v1973
      %2230 = vst [vmem:[%s213 + $0x54] sm:$0xf] %v1974
      %2231 = vst [vmem:[%s213 + $0x58] sm:$0xf] %v1975
      %2232 = vst [vmem:[%s213 + $0x5c] sm:$0xf] %v1976
      %2233 = vst [vmem:[%s213 + $0x60] sm:$0xf] %v1977
      %2234 = vst [vmem:[%s213 + $0x64] sm:$0xf] %v1978
      %2235 = vst [vmem:[%s213 + $0x68] sm:$0xf] %v1979
      %2236 = vst [vmem:[%s213 + $0x6c] sm:$0xf] %v1980
      %2237 = vst [vmem:[%s213 + $0x70] sm:$0xf] %v1981
      %2238 = vst [vmem:[%s213 + $0x74] sm:$0xf] %v1982
      %2239 = vst [vmem:[%s213 + $0x78] sm:$0xf] %v1983
      %2240 = vst [vmem:[%s213 + $0x7c] sm:$0xf] %v1984
      %2241 = vst [vmem:[%s213 + $0x80] sm:$0xf] %v1985
      %2242 = vst [vmem:[%s213 + $0x84] sm:$0xf] %v1986
      %2243 = vst [vmem:[%s213 + $0x88] sm:$0xf] %v1987
      %2244 = vst [vmem:[%s213 + $0x8c] sm:$0xf] %v1988
      %2245 = vst [vmem:[%s213 + $0x90] sm:$0xf] %v1989
      %2246 = vst [vmem:[%s213 + $0x94] sm:$0xf] %v1990
      %2247 = vst [vmem:[%s213 + $0x98] sm:$0xf] %v1991
      %2248 = vst [vmem:[%s213 + $0x9c] sm:$0xf] %v1992
      %2249 = vst [vmem:[%s213 + $0xa0] sm:$0xf] %v1993
      %2250 = vst [vmem:[%s213 + $0xa4] sm:$0xf] %v1994
      %2251 = vst [vmem:[%s213 + $0xa8] sm:$0xf] %v1995
      %2252 = vst [vmem:[%s213 + $0xac] sm:$0xf] %v1996
      %2253 = vst [vmem:[%s213 + $0xb0] sm:$0xf] %v1997
      %2254 = vst [vmem:[%s213 + $0xb4] sm:$0xf] %v1998
      %2255 = vst [vmem:[%s213 + $0xb8] sm:$0xf] %v1999
      %2256 = vst [vmem:[%s213 + $0xbc] sm:$0xf] %v2000
      %2257 = vst [vmem:[%s213 + $0xc0] sm:$0xf] %v2001
      %2258 = vst [vmem:[%s213 + $0xc4] sm:$0xf] %v2002
      %2259 = vst [vmem:[%s213 + $0xc8] sm:$0xf] %v2003
      %2260 = vst [vmem:[%s213 + $0xcc] sm:$0xf] %v2004
      %2261 = vst [vmem:[%s213 + $0xd0] sm:$0xf] %v2005
      %2262 = vst [vmem:[%s213 + $0xd4] sm:$0xf] %v2006
      %2263 = vst [vmem:[%s213 + $0xd8] sm:$0xf] %v2007
      %2264 = vst [vmem:[%s213 + $0xdc] sm:$0xf] %v2008
      %2265 = vst [vmem:[%s213 + $0xe0] sm:$0xf] %v2009
      %2266 = vst [vmem:[%s213 + $0xe4] sm:$0xf] %v2010
      %2267 = vst [vmem:[%s213 + $0xe8] sm:$0xf] %v2011
      %2268 = vst [vmem:[%s213 + $0xec] sm:$0xf] %v2012
      %2269 = vst [vmem:[%s213 + $0xf0] sm:$0xf] %v2013
      %2270 = vst [vmem:[%s213 + $0xf4] sm:$0xf] %v2014
      %2271 = vst [vmem:[%s213 + $0xf8] sm:$0xf] %v2015
      %2272 = vst [vmem:[%s213 + $0xfc] sm:$0xf] %v2016
      %2273 = vst [vmem:[%s213 + $0x100] sm:$0xf] %v2017
      %2274 = vst [vmem:[%s213 + $0x104] sm:$0xf] %v2018
      %2275 = vst [vmem:[%s213 + $0x108] sm:$0xf] %v2019
      %2276 = vst [vmem:[%s213 + $0x10c] sm:$0xf] %v2020
      %2277 = vst [vmem:[%s213 + $0x110] sm:$0xf] %v2021
      %2278 = vst [vmem:[%s213 + $0x114] sm:$0xf] %v2022
      %2279 = vst [vmem:[%s213 + $0x118] sm:$0xf] %v2023
      %2280 = vst [vmem:[%s213 + $0x11c] sm:$0xf] %v2024
      %2281 = vst [vmem:[%s213 + $0x120] sm:$0xf] %v2025
      %2282 = vst [vmem:[%s213 + $0x124] sm:$0xf] %v2026
      %2283 = vst [vmem:[%s213 + $0x128] sm:$0xf] %v2027
      %2284 = vst [vmem:[%s213 + $0x12c] sm:$0xf] %v2028
      %2285 = vst [vmem:[%s213 + $0x130] sm:$0xf] %v2029
      %2286 = vst [vmem:[%s213 + $0x134] sm:$0xf] %v2030
      %2287 = vst [vmem:[%s213 + $0x138] sm:$0xf] %v2031
      %2288 = vst [vmem:[%s213 + $0x13c] sm:$0xf] %v2032
      %2289 = vst [vmem:[%s213 + $0x140] sm:$0xf] %v2033
      %2290 = vst [vmem:[%s213 + $0x144] sm:$0xf] %v2034
      %2291 = vst [vmem:[%s213 + $0x148] sm:$0xf] %v2035
      %2292 = vst [vmem:[%s213 + $0x14c] sm:$0xf] %v2036
      %2293 = vst [vmem:[%s213 + $0x150] sm:$0xf] %v2037
      %2294 = vst [vmem:[%s213 + $0x154] sm:$0xf] %v2038
      %2295 = vst [vmem:[%s213 + $0x158] sm:$0xf] %v2039
      %2296 = vst [vmem:[%s213 + $0x15c] sm:$0xf] %v2040
      %2297 = vst [vmem:[%s213 + $0x160] sm:$0xf] %v2041
      %2298 = vst [vmem:[%s213 + $0x164] sm:$0xf] %v2042
      %2299 = vst [vmem:[%s213 + $0x168] sm:$0xf] %v2043
      %2300 = vst [vmem:[%s213 + $0x16c] sm:$0xf] %v2044
      %2301 = vst [vmem:[%s213 + $0x170] sm:$0xf] %v2045
      %2302 = vst [vmem:[%s213 + $0x174] sm:$0xf] %v2046
      %2303 = vst [vmem:[%s213 + $0x178] sm:$0xf] %v2047
      %2304 = vst [vmem:[%s213 + $0x17c] sm:$0xf] %v2048
      %2305 = vst [vmem:[%s213 + $0x180] sm:$0xf] %v2049
      %2306 = vst [vmem:[%s213 + $0x184] sm:$0xf] %v2050
      %2307 = vst [vmem:[%s213 + $0x188] sm:$0xf] %v2051
      %2308 = vst [vmem:[%s213 + $0x18c] sm:$0xf] %v2052
      %2309 = vst [vmem:[%s213 + $0x190] sm:$0xf] %v2053
      %2310 = vst [vmem:[%s213 + $0x194] sm:$0xf] %v2054
      %2311 = vst [vmem:[%s213 + $0x198] sm:$0xf] %v2055
      %2312 = vst [vmem:[%s213 + $0x19c] sm:$0xf] %v2056
      %2313 = vst [vmem:[%s213 + $0x1a0] sm:$0xf] %v2057
      %2314 = vst [vmem:[%s213 + $0x1a4] sm:$0xf] %v2058
      %2315 = vst [vmem:[%s213 + $0x1a8] sm:$0xf] %v2059
      %2316 = vst [vmem:[%s213 + $0x1ac] sm:$0xf] %v2060
      %2317 = vst [vmem:[%s213 + $0x1b0] sm:$0xf] %v2061
      %2318 = vst [vmem:[%s213 + $0x1b4] sm:$0xf] %v2062
      %2319 = vst [vmem:[%s213 + $0x1b8] sm:$0xf] %v2063
      %2320 = vst [vmem:[%s213 + $0x1bc] sm:$0xf] %v2064
      %2321 = vst [vmem:[%s213 + $0x1c0] sm:$0xf] %v2065
      %2322 = vst [vmem:[%s213 + $0x1c4] sm:$0xf] %v2066
      %2323 = vst [vmem:[%s213 + $0x1c8] sm:$0xf] %v2067
      %2324 = vst [vmem:[%s213 + $0x1cc] sm:$0xf] %v2068
      %2325 = vst [vmem:[%s213 + $0x1d0] sm:$0xf] %v2069
      %2326 = vst [vmem:[%s213 + $0x1d4] sm:$0xf] %v2070
      %2327 = vst [vmem:[%s213 + $0x1d8] sm:$0xf] %v2071
      %2328 = vst [vmem:[%s213 + $0x1dc] sm:$0xf] %v2072
      %2329 = vst [vmem:[%s213 + $0x1e0] sm:$0xf] %v2073
      %2330 = vst [vmem:[%s213 + $0x1e4] sm:$0xf] %v2074
      %2331 = vst [vmem:[%s213 + $0x1e8] sm:$0xf] %v2075
      %2332 = vst [vmem:[%s213 + $0x1ec] sm:$0xf] %v2076
      %2333 = vst [vmem:[%s213 + $0x1f0] sm:$0xf] %v2077
      %2334 = vst [vmem:[%s213 + $0x1f4] sm:$0xf] %v2078
      %2335 = vst [vmem:[%s213 + $0x1f8] sm:$0xf] %v2079
      %2336 = vst [vmem:[%s213 + $0x1fc] sm:$0xf] %v2080
      %2337 = vst [vmem:[%s213 + $0x200] sm:$0xf] %v2081
      %2338 = vst [vmem:[%s213 + $0x204] sm:$0xf] %v2082
      %2339 = vst [vmem:[%s213 + $0x208] sm:$0xf] %v2083
      %2340 = vst [vmem:[%s213 + $0x20c] sm:$0xf] %v2084
      %2341 = vst [vmem:[%s213 + $0x210] sm:$0xf] %v2085
      %2342 = vst [vmem:[%s213 + $0x214] sm:$0xf] %v2086
      %2343 = vst [vmem:[%s213 + $0x218] sm:$0xf] %v2087
      %2344 = vst [vmem:[%s213 + $0x21c] sm:$0xf] %v2088
      %2345 = vst [vmem:[%s213 + $0x220] sm:$0xf] %v2089
      %2346 = vst [vmem:[%s213 + $0x224] sm:$0xf] %v2090
      %2347 = vst [vmem:[%s213 + $0x228] sm:$0xf] %v2091
      %2348 = vst [vmem:[%s213 + $0x22c] sm:$0xf] %v2092
      %2349 = vst [vmem:[%s213 + $0x230] sm:$0xf] %v2093
      %2350 = vst [vmem:[%s213 + $0x234] sm:$0xf] %v2094
      %2351 = vst [vmem:[%s213 + $0x238] sm:$0xf] %v2095
      %2352 = vst [vmem:[%s213 + $0x23c] sm:$0xf] %v2096
      %2353 = vst [vmem:[%s213 + $0x240] sm:$0xf] %v2097
      %2354 = vst [vmem:[%s213 + $0x244] sm:$0xf] %v2098
      %2355 = vst [vmem:[%s213 + $0x248] sm:$0xf] %v2099
      %2356 = vst [vmem:[%s213 + $0x24c] sm:$0xf] %v2100
      %2357 = vst [vmem:[%s213 + $0x250] sm:$0xf] %v2101
      %2358 = vst [vmem:[%s213 + $0x254] sm:$0xf] %v2102
      %2359 = vst [vmem:[%s213 + $0x258] sm:$0xf] %v2103
      %2360 = vst [vmem:[%s213 + $0x25c] sm:$0xf] %v2104
      %2361 = vst [vmem:[%s213 + $0x260] sm:$0xf] %v2105
      %2362 = vst [vmem:[%s213 + $0x264] sm:$0xf] %v2106
      %2363 = vst [vmem:[%s213 + $0x268] sm:$0xf] %v2107
      %2364 = vst [vmem:[%s213 + $0x26c] sm:$0xf] %v2108
      %2365 = vst [vmem:[%s213 + $0x270] sm:$0xf] %v2109
      %2366 = vst [vmem:[%s213 + $0x274] sm:$0xf] %v2110
      %2367 = vst [vmem:[%s213 + $0x278] sm:$0xf] %v2111
      %2368 = vst [vmem:[%s213 + $0x27c] sm:$0xf] %v2112
      %2369 = vst [vmem:[%s213 + $0x280] sm:$0xf] %v2113
      %2370 = vst [vmem:[%s213 + $0x284] sm:$0xf] %v2114
      %2371 = vst [vmem:[%s213 + $0x288] sm:$0xf] %v2115
      %2372 = vst [vmem:[%s213 + $0x28c] sm:$0xf] %v2116
      %2373 = vst [vmem:[%s213 + $0x290] sm:$0xf] %v2117
      %2374 = vst [vmem:[%s213 + $0x294] sm:$0xf] %v2118
      %2375 = vst [vmem:[%s213 + $0x298] sm:$0xf] %v2119
      %2376 = vst [vmem:[%s213 + $0x29c] sm:$0xf] %v2120
      %2377 = vst [vmem:[%s213 + $0x2a0] sm:$0xf] %v2121
      %2378 = vst [vmem:[%s213 + $0x2a4] sm:$0xf] %v2122
      %2379 = vst [vmem:[%s213 + $0x2a8] sm:$0xf] %v2123
      %2380 = vst [vmem:[%s213 + $0x2ac] sm:$0xf] %v2124
      %2381 = vst [vmem:[%s213 + $0x2b0] sm:$0xf] %v2125
      %2382 = vst [vmem:[%s213 + $0x2b4] sm:$0xf] %v2126
      %2383 = vst [vmem:[%s213 + $0x2b8] sm:$0xf] %v2127
      %2384 = vst [vmem:[%s213 + $0x2bc] sm:$0xf] %v2128
      %2385 = vst [vmem:[%s213 + $0x2c0] sm:$0xf] %v2129
      %2386 = vst [vmem:[%s213 + $0x2c4] sm:$0xf] %v2130
      %2387 = vst [vmem:[%s213 + $0x2c8] sm:$0xf] %v2131
      %2388 = vst [vmem:[%s213 + $0x2cc] sm:$0xf] %v2132
      %2389 = vst [vmem:[%s213 + $0x2d0] sm:$0xf] %v2133
      %2390 = vst [vmem:[%s213 + $0x2d4] sm:$0xf] %v2134
      %2391 = vst [vmem:[%s213 + $0x2d8] sm:$0xf] %v2135
      %2392 = vst [vmem:[%s213 + $0x2dc] sm:$0xf] %v2136
      %2393 = vst [vmem:[%s213 + $0x2e0] sm:$0xf] %v2137
      %2394 = vst [vmem:[%s213 + $0x2e4] sm:$0xf] %v2138
      %2395 = vst [vmem:[%s213 + $0x2e8] sm:$0xf] %v2139
      %2396 = vst [vmem:[%s213 + $0x2ec] sm:$0xf] %v2140
      %2397 = vst [vmem:[%s213 + $0x2f0] sm:$0xf] %v2141
      %2398 = vst [vmem:[%s213 + $0x2f4] sm:$0xf] %v2142
      %2399 = vst [vmem:[%s213 + $0x2f8] sm:$0xf] %v2143
      %2400 = vst [vmem:[%s213 + $0x2fc] sm:$0xf] %v2144
      %2401 = vst [vmem:[%s213 + $0x300] sm:$0xf] %v2145
      %2402 = vst [vmem:[%s213 + $0x304] sm:$0xf] %v2146
      %2403 = vst [vmem:[%s213 + $0x308] sm:$0xf] %v2147
      %2404 = vst [vmem:[%s213 + $0x30c] sm:$0xf] %v2148
      %2405 = vst [vmem:[%s213 + $0x310] sm:$0xf] %v2149
      %2406 = vst [vmem:[%s213 + $0x314] sm:$0xf] %v2150
      %2407 = vst [vmem:[%s213 + $0x318] sm:$0xf] %v2151
      %2408 = vst [vmem:[%s213 + $0x31c] sm:$0xf] %v2152
      %2409 = vst [vmem:[%s213 + $0x320] sm:$0xf] %v2153
      %2410 = vst [vmem:[%s213 + $0x324] sm:$0xf] %v2154
      %2411 = vst [vmem:[%s213 + $0x328] sm:$0xf] %v2155
      %2412 = vst [vmem:[%s213 + $0x32c] sm:$0xf] %v2156
      %2413 = vst [vmem:[%s213 + $0x330] sm:$0xf] %v2157
      %2414 = vst [vmem:[%s213 + $0x334] sm:$0xf] %v2158
      %2415 = vst [vmem:[%s213 + $0x338] sm:$0xf] %v2159
      %2416 = vst [vmem:[%s213 + $0x33c] sm:$0xf] %v2160
      %2417 = vst [vmem:[%s213 + $0x340] sm:$0xf] %v2161
      %2418 = vst [vmem:[%s213 + $0x344] sm:$0xf] %v2162
      %2419 = vst [vmem:[%s213 + $0x348] sm:$0xf] %v2163
      %2420 = vst [vmem:[%s213 + $0x34c] sm:$0xf] %v2164
      %2421 = vst [vmem:[%s213 + $0x350] sm:$0xf] %v2165
      %2422 = vst [vmem:[%s213 + $0x354] sm:$0xf] %v2166
      %2423 = vst [vmem:[%s213 + $0x358] sm:$0xf] %v2167
      %2424 = vst [vmem:[%s213 + $0x35c] sm:$0xf] %v2168
      %2425 = vst [vmem:[%s213 + $0x360] sm:$0xf] %v2169
      %2426 = vst [vmem:[%s213 + $0x364] sm:$0xf] %v2170
      %2427 = vst [vmem:[%s213 + $0x368] sm:$0xf] %v2171
      %2428 = vst [vmem:[%s213 + $0x36c] sm:$0xf] %v2172
      %2429 = vst [vmem:[%s213 + $0x370] sm:$0xf] %v2173
      %2430 = vst [vmem:[%s213 + $0x374] sm:$0xf] %v2174
      %2431 = vst [vmem:[%s213 + $0x378] sm:$0xf] %v2175
      %2432 = vst [vmem:[%s213 + $0x37c] sm:$0xf] %v2176
      %2433 = vst [vmem:[%s213 + $0x380] sm:$0xf] %v2177
      %2434 = vst [vmem:[%s213 + $0x384] sm:$0xf] %v2178
      %2435 = vst [vmem:[%s213 + $0x388] sm:$0xf] %v2179
      %2436 = vst [vmem:[%s213 + $0x38c] sm:$0xf] %v2180
      %2437 = vst [vmem:[%s213 + $0x390] sm:$0xf] %v2181
      %2438 = vst [vmem:[%s213 + $0x394] sm:$0xf] %v2182
      %2439 = vst [vmem:[%s213 + $0x398] sm:$0xf] %v2183
      %2440 = vst [vmem:[%s213 + $0x39c] sm:$0xf] %v2184
      %2441 = vst [vmem:[%s213 + $0x3a0] sm:$0xf] %v2185
      %2442 = vst [vmem:[%s213 + $0x3a4] sm:$0xf] %v2186
      %2443 = vst [vmem:[%s213 + $0x3a8] sm:$0xf] %v2187
      %2444 = vst [vmem:[%s213 + $0x3ac] sm:$0xf] %v2188
      %2445 = vst [vmem:[%s213 + $0x3b0] sm:$0xf] %v2189
      %2446 = vst [vmem:[%s213 + $0x3b4] sm:$0xf] %v2190
      %2447 = vst [vmem:[%s213 + $0x3b8] sm:$0xf] %v2191
      %2448 = vst [vmem:[%s213 + $0x3bc] sm:$0xf] %v2192
      %2449 = vst [vmem:[%s213 + $0x3c0] sm:$0xf] %v2193
      %2450 = vst [vmem:[%s213 + $0x3c4] sm:$0xf] %v2194
      %2451 = vst [vmem:[%s213 + $0x3c8] sm:$0xf] %v2195
      %2452 = vst [vmem:[%s213 + $0x3cc] sm:$0xf] %v2196
      %2453 = vst [vmem:[%s213 + $0x3d0] sm:$0xf] %v2197
      %2454 = vst [vmem:[%s213 + $0x3d4] sm:$0xf] %v2198
      %2455 = vst [vmem:[%s213 + $0x3d8] sm:$0xf] %v2199
      %2456 = vst [vmem:[%s213 + $0x3dc] sm:$0xf] %v2200
      %2457 = vst [vmem:[%s213 + $0x3e0] sm:$0xf] %v2201
      %2458 = vst [vmem:[%s213 + $0x3e4] sm:$0xf] %v2202
      %2459 = vst [vmem:[%s213 + $0x3e8] sm:$0xf] %v2203
      %2460 = vst [vmem:[%s213 + $0x3ec] sm:$0xf] %v2204
      %2461 = vst [vmem:[%s213 + $0x3f0] sm:$0xf] %v2205
      %2462 = vst [vmem:[%s213 + $0x3f4] sm:$0xf] %v2206
      %2463 = vst [vmem:[%s213 + $0x3f8] sm:$0xf] %v2207
      %2464 = vst [vmem:[%s213 + $0x3fc] sm:$0xf] %v2208
      %s2465 = scalar_lea.vmem %s194, 1024
      %v2466 = vld [vmem:[%s2465] sm:$0xf]
      %v2467 = vld [vmem:[%s2465 + $0x4] sm:$0xf]
      %v2468 = vld [vmem:[%s2465 + $0x8] sm:$0xf]
      %v2469 = vld [vmem:[%s2465 + $0xc] sm:$0xf]
      %v2470 = vld [vmem:[%s2465 + $0x10] sm:$0xf]
      %v2471 = vld [vmem:[%s2465 + $0x14] sm:$0xf]
      %v2472 = vld [vmem:[%s2465 + $0x18] sm:$0xf]
      %v2473 = vld [vmem:[%s2465 + $0x1c] sm:$0xf]
      %v2474 = vld [vmem:[%s2465 + $0x20] sm:$0xf]
      %v2475 = vld [vmem:[%s2465 + $0x24] sm:$0xf]
      %v2476 = vld [vmem:[%s2465 + $0x28] sm:$0xf]
      %v2477 = vld [vmem:[%s2465 + $0x2c] sm:$0xf]
      %v2478 = vld [vmem:[%s2465 + $0x30] sm:$0xf]
      %v2479 = vld [vmem:[%s2465 + $0x34] sm:$0xf]
      %v2480 = vld [vmem:[%s2465 + $0x38] sm:$0xf]
      %v2481 = vld [vmem:[%s2465 + $0x3c] sm:$0xf]
      %v2482 = vld [vmem:[%s2465 + $0x40] sm:$0xf]
      %v2483 = vld [vmem:[%s2465 + $0x44] sm:$0xf]
      %v2484 = vld [vmem:[%s2465 + $0x48] sm:$0xf]
      %v2485 = vld [vmem:[%s2465 + $0x4c] sm:$0xf]
      %v2486 = vld [vmem:[%s2465 + $0x50] sm:$0xf]
      %v2487 = vld [vmem:[%s2465 + $0x54] sm:$0xf]
      %v2488 = vld [vmem:[%s2465 + $0x58] sm:$0xf]
      %v2489 = vld [vmem:[%s2465 + $0x5c] sm:$0xf]
      %v2490 = vld [vmem:[%s2465 + $0x60] sm:$0xf]
      %v2491 = vld [vmem:[%s2465 + $0x64] sm:$0xf]
      %v2492 = vld [vmem:[%s2465 + $0x68] sm:$0xf]
      %v2493 = vld [vmem:[%s2465 + $0x6c] sm:$0xf]
      %v2494 = vld [vmem:[%s2465 + $0x70] sm:$0xf]
      %v2495 = vld [vmem:[%s2465 + $0x74] sm:$0xf]
      %v2496 = vld [vmem:[%s2465 + $0x78] sm:$0xf]
      %v2497 = vld [vmem:[%s2465 + $0x7c] sm:$0xf]
      %v2498 = vld [vmem:[%s2465 + $0x80] sm:$0xf]
      %v2499 = vld [vmem:[%s2465 + $0x84] sm:$0xf]
      %v2500 = vld [vmem:[%s2465 + $0x88] sm:$0xf]
      %v2501 = vld [vmem:[%s2465 + $0x8c] sm:$0xf]
      %v2502 = vld [vmem:[%s2465 + $0x90] sm:$0xf]
      %v2503 = vld [vmem:[%s2465 + $0x94] sm:$0xf]
      %v2504 = vld [vmem:[%s2465 + $0x98] sm:$0xf]
      %v2505 = vld [vmem:[%s2465 + $0x9c] sm:$0xf]
      %v2506 = vld [vmem:[%s2465 + $0xa0] sm:$0xf]
      %v2507 = vld [vmem:[%s2465 + $0xa4] sm:$0xf]
      %v2508 = vld [vmem:[%s2465 + $0xa8] sm:$0xf]
      %v2509 = vld [vmem:[%s2465 + $0xac] sm:$0xf]
      %v2510 = vld [vmem:[%s2465 + $0xb0] sm:$0xf]
      %v2511 = vld [vmem:[%s2465 + $0xb4] sm:$0xf]
      %v2512 = vld [vmem:[%s2465 + $0xb8] sm:$0xf]
      %v2513 = vld [vmem:[%s2465 + $0xbc] sm:$0xf]
      %v2514 = vld [vmem:[%s2465 + $0xc0] sm:$0xf]
      %v2515 = vld [vmem:[%s2465 + $0xc4] sm:$0xf]
      %v2516 = vld [vmem:[%s2465 + $0xc8] sm:$0xf]
      %v2517 = vld [vmem:[%s2465 + $0xcc] sm:$0xf]
      %v2518 = vld [vmem:[%s2465 + $0xd0] sm:$0xf]
      %v2519 = vld [vmem:[%s2465 + $0xd4] sm:$0xf]
      %v2520 = vld [vmem:[%s2465 + $0xd8] sm:$0xf]
      %v2521 = vld [vmem:[%s2465 + $0xdc] sm:$0xf]
      %v2522 = vld [vmem:[%s2465 + $0xe0] sm:$0xf]
      %v2523 = vld [vmem:[%s2465 + $0xe4] sm:$0xf]
      %v2524 = vld [vmem:[%s2465 + $0xe8] sm:$0xf]
      %v2525 = vld [vmem:[%s2465 + $0xec] sm:$0xf]
      %v2526 = vld [vmem:[%s2465 + $0xf0] sm:$0xf]
      %v2527 = vld [vmem:[%s2465 + $0xf4] sm:$0xf]
      %v2528 = vld [vmem:[%s2465 + $0xf8] sm:$0xf]
      %v2529 = vld [vmem:[%s2465 + $0xfc] sm:$0xf]
      %v2530 = vld [vmem:[%s2465 + $0x100] sm:$0xf]
      %v2531 = vld [vmem:[%s2465 + $0x104] sm:$0xf]
      %v2532 = vld [vmem:[%s2465 + $0x108] sm:$0xf]
      %v2533 = vld [vmem:[%s2465 + $0x10c] sm:$0xf]
      %v2534 = vld [vmem:[%s2465 + $0x110] sm:$0xf]
      %v2535 = vld [vmem:[%s2465 + $0x114] sm:$0xf]
      %v2536 = vld [vmem:[%s2465 + $0x118] sm:$0xf]
      %v2537 = vld [vmem:[%s2465 + $0x11c] sm:$0xf]
      %v2538 = vld [vmem:[%s2465 + $0x120] sm:$0xf]
      %v2539 = vld [vmem:[%s2465 + $0x124] sm:$0xf]
      %v2540 = vld [vmem:[%s2465 + $0x128] sm:$0xf]
      %v2541 = vld [vmem:[%s2465 + $0x12c] sm:$0xf]
      %v2542 = vld [vmem:[%s2465 + $0x130] sm:$0xf]
      %v2543 = vld [vmem:[%s2465 + $0x134] sm:$0xf]
      %v2544 = vld [vmem:[%s2465 + $0x138] sm:$0xf]
      %v2545 = vld [vmem:[%s2465 + $0x13c] sm:$0xf]
      %v2546 = vld [vmem:[%s2465 + $0x140] sm:$0xf]
      %v2547 = vld [vmem:[%s2465 + $0x144] sm:$0xf]
      %v2548 = vld [vmem:[%s2465 + $0x148] sm:$0xf]
      %v2549 = vld [vmem:[%s2465 + $0x14c] sm:$0xf]
      %v2550 = vld [vmem:[%s2465 + $0x150] sm:$0xf]
      %v2551 = vld [vmem:[%s2465 + $0x154] sm:$0xf]
      %v2552 = vld [vmem:[%s2465 + $0x158] sm:$0xf]
      %v2553 = vld [vmem:[%s2465 + $0x15c] sm:$0xf]
      %v2554 = vld [vmem:[%s2465 + $0x160] sm:$0xf]
      %v2555 = vld [vmem:[%s2465 + $0x164] sm:$0xf]
      %v2556 = vld [vmem:[%s2465 + $0x168] sm:$0xf]
      %v2557 = vld [vmem:[%s2465 + $0x16c] sm:$0xf]
      %v2558 = vld [vmem:[%s2465 + $0x170] sm:$0xf]
      %v2559 = vld [vmem:[%s2465 + $0x174] sm:$0xf]
      %v2560 = vld [vmem:[%s2465 + $0x178] sm:$0xf]
      %v2561 = vld [vmem:[%s2465 + $0x17c] sm:$0xf]
      %v2562 = vld [vmem:[%s2465 + $0x180] sm:$0xf]
      %v2563 = vld [vmem:[%s2465 + $0x184] sm:$0xf]
      %v2564 = vld [vmem:[%s2465 + $0x188] sm:$0xf]
      %v2565 = vld [vmem:[%s2465 + $0x18c] sm:$0xf]
      %v2566 = vld [vmem:[%s2465 + $0x190] sm:$0xf]
      %v2567 = vld [vmem:[%s2465 + $0x194] sm:$0xf]
      %v2568 = vld [vmem:[%s2465 + $0x198] sm:$0xf]
      %v2569 = vld [vmem:[%s2465 + $0x19c] sm:$0xf]
      %v2570 = vld [vmem:[%s2465 + $0x1a0] sm:$0xf]
      %v2571 = vld [vmem:[%s2465 + $0x1a4] sm:$0xf]
      %v2572 = vld [vmem:[%s2465 + $0x1a8] sm:$0xf]
      %v2573 = vld [vmem:[%s2465 + $0x1ac] sm:$0xf]
      %v2574 = vld [vmem:[%s2465 + $0x1b0] sm:$0xf]
      %v2575 = vld [vmem:[%s2465 + $0x1b4] sm:$0xf]
      %v2576 = vld [vmem:[%s2465 + $0x1b8] sm:$0xf]
      %v2577 = vld [vmem:[%s2465 + $0x1bc] sm:$0xf]
      %v2578 = vld [vmem:[%s2465 + $0x1c0] sm:$0xf]
      %v2579 = vld [vmem:[%s2465 + $0x1c4] sm:$0xf]
      %v2580 = vld [vmem:[%s2465 + $0x1c8] sm:$0xf]
      %v2581 = vld [vmem:[%s2465 + $0x1cc] sm:$0xf]
      %v2582 = vld [vmem:[%s2465 + $0x1d0] sm:$0xf]
      %v2583 = vld [vmem:[%s2465 + $0x1d4] sm:$0xf]
      %v2584 = vld [vmem:[%s2465 + $0x1d8] sm:$0xf]
      %v2585 = vld [vmem:[%s2465 + $0x1dc] sm:$0xf]
      %v2586 = vld [vmem:[%s2465 + $0x1e0] sm:$0xf]
      %v2587 = vld [vmem:[%s2465 + $0x1e4] sm:$0xf]
      %v2588 = vld [vmem:[%s2465 + $0x1e8] sm:$0xf]
      %v2589 = vld [vmem:[%s2465 + $0x1ec] sm:$0xf]
      %v2590 = vld [vmem:[%s2465 + $0x1f0] sm:$0xf]
      %v2591 = vld [vmem:[%s2465 + $0x1f4] sm:$0xf]
      %v2592 = vld [vmem:[%s2465 + $0x1f8] sm:$0xf]
      %v2593 = vld [vmem:[%s2465 + $0x1fc] sm:$0xf]
      %v2594 = vld [vmem:[%s2465 + $0x200] sm:$0xf]
      %v2595 = vld [vmem:[%s2465 + $0x204] sm:$0xf]
      %v2596 = vld [vmem:[%s2465 + $0x208] sm:$0xf]
      %v2597 = vld [vmem:[%s2465 + $0x20c] sm:$0xf]
      %v2598 = vld [vmem:[%s2465 + $0x210] sm:$0xf]
      %v2599 = vld [vmem:[%s2465 + $0x214] sm:$0xf]
      %v2600 = vld [vmem:[%s2465 + $0x218] sm:$0xf]
      %v2601 = vld [vmem:[%s2465 + $0x21c] sm:$0xf]
      %v2602 = vld [vmem:[%s2465 + $0x220] sm:$0xf]
      %v2603 = vld [vmem:[%s2465 + $0x224] sm:$0xf]
      %v2604 = vld [vmem:[%s2465 + $0x228] sm:$0xf]
      %v2605 = vld [vmem:[%s2465 + $0x22c] sm:$0xf]
      %v2606 = vld [vmem:[%s2465 + $0x230] sm:$0xf]
      %v2607 = vld [vmem:[%s2465 + $0x234] sm:$0xf]
      %v2608 = vld [vmem:[%s2465 + $0x238] sm:$0xf]
      %v2609 = vld [vmem:[%s2465 + $0x23c] sm:$0xf]
      %v2610 = vld [vmem:[%s2465 + $0x240] sm:$0xf]
      %v2611 = vld [vmem:[%s2465 + $0x244] sm:$0xf]
      %v2612 = vld [vmem:[%s2465 + $0x248] sm:$0xf]
      %v2613 = vld [vmem:[%s2465 + $0x24c] sm:$0xf]
      %v2614 = vld [vmem:[%s2465 + $0x250] sm:$0xf]
      %v2615 = vld [vmem:[%s2465 + $0x254] sm:$0xf]
      %v2616 = vld [vmem:[%s2465 + $0x258] sm:$0xf]
      %v2617 = vld [vmem:[%s2465 + $0x25c] sm:$0xf]
      %v2618 = vld [vmem:[%s2465 + $0x260] sm:$0xf]
      %v2619 = vld [vmem:[%s2465 + $0x264] sm:$0xf]
      %v2620 = vld [vmem:[%s2465 + $0x268] sm:$0xf]
      %v2621 = vld [vmem:[%s2465 + $0x26c] sm:$0xf]
      %v2622 = vld [vmem:[%s2465 + $0x270] sm:$0xf]
      %v2623 = vld [vmem:[%s2465 + $0x274] sm:$0xf]
      %v2624 = vld [vmem:[%s2465 + $0x278] sm:$0xf]
      %v2625 = vld [vmem:[%s2465 + $0x27c] sm:$0xf]
      %v2626 = vld [vmem:[%s2465 + $0x280] sm:$0xf]
      %v2627 = vld [vmem:[%s2465 + $0x284] sm:$0xf]
      %v2628 = vld [vmem:[%s2465 + $0x288] sm:$0xf]
      %v2629 = vld [vmem:[%s2465 + $0x28c] sm:$0xf]
      %v2630 = vld [vmem:[%s2465 + $0x290] sm:$0xf]
      %v2631 = vld [vmem:[%s2465 + $0x294] sm:$0xf]
      %v2632 = vld [vmem:[%s2465 + $0x298] sm:$0xf]
      %v2633 = vld [vmem:[%s2465 + $0x29c] sm:$0xf]
      %v2634 = vld [vmem:[%s2465 + $0x2a0] sm:$0xf]
      %v2635 = vld [vmem:[%s2465 + $0x2a4] sm:$0xf]
      %v2636 = vld [vmem:[%s2465 + $0x2a8] sm:$0xf]
      %v2637 = vld [vmem:[%s2465 + $0x2ac] sm:$0xf]
      %v2638 = vld [vmem:[%s2465 + $0x2b0] sm:$0xf]
      %v2639 = vld [vmem:[%s2465 + $0x2b4] sm:$0xf]
      %v2640 = vld [vmem:[%s2465 + $0x2b8] sm:$0xf]
      %v2641 = vld [vmem:[%s2465 + $0x2bc] sm:$0xf]
      %v2642 = vld [vmem:[%s2465 + $0x2c0] sm:$0xf]
      %v2643 = vld [vmem:[%s2465 + $0x2c4] sm:$0xf]
      %v2644 = vld [vmem:[%s2465 + $0x2c8] sm:$0xf]
      %v2645 = vld [vmem:[%s2465 + $0x2cc] sm:$0xf]
      %v2646 = vld [vmem:[%s2465 + $0x2d0] sm:$0xf]
      %v2647 = vld [vmem:[%s2465 + $0x2d4] sm:$0xf]
      %v2648 = vld [vmem:[%s2465 + $0x2d8] sm:$0xf]
      %v2649 = vld [vmem:[%s2465 + $0x2dc] sm:$0xf]
      %v2650 = vld [vmem:[%s2465 + $0x2e0] sm:$0xf]
      %v2651 = vld [vmem:[%s2465 + $0x2e4] sm:$0xf]
      %v2652 = vld [vmem:[%s2465 + $0x2e8] sm:$0xf]
      %v2653 = vld [vmem:[%s2465 + $0x2ec] sm:$0xf]
      %v2654 = vld [vmem:[%s2465 + $0x2f0] sm:$0xf]
      %v2655 = vld [vmem:[%s2465 + $0x2f4] sm:$0xf]
      %v2656 = vld [vmem:[%s2465 + $0x2f8] sm:$0xf]
      %v2657 = vld [vmem:[%s2465 + $0x2fc] sm:$0xf]
      %v2658 = vld [vmem:[%s2465 + $0x300] sm:$0xf]
      %v2659 = vld [vmem:[%s2465 + $0x304] sm:$0xf]
      %v2660 = vld [vmem:[%s2465 + $0x308] sm:$0xf]
      %v2661 = vld [vmem:[%s2465 + $0x30c] sm:$0xf]
      %v2662 = vld [vmem:[%s2465 + $0x310] sm:$0xf]
      %v2663 = vld [vmem:[%s2465 + $0x314] sm:$0xf]
      %v2664 = vld [vmem:[%s2465 + $0x318] sm:$0xf]
      %v2665 = vld [vmem:[%s2465 + $0x31c] sm:$0xf]
      %v2666 = vld [vmem:[%s2465 + $0x320] sm:$0xf]
      %v2667 = vld [vmem:[%s2465 + $0x324] sm:$0xf]
      %v2668 = vld [vmem:[%s2465 + $0x328] sm:$0xf]
      %v2669 = vld [vmem:[%s2465 + $0x32c] sm:$0xf]
      %v2670 = vld [vmem:[%s2465 + $0x330] sm:$0xf]
      %v2671 = vld [vmem:[%s2465 + $0x334] sm:$0xf]
      %v2672 = vld [vmem:[%s2465 + $0x338] sm:$0xf]
      %v2673 = vld [vmem:[%s2465 + $0x33c] sm:$0xf]
      %v2674 = vld [vmem:[%s2465 + $0x340] sm:$0xf]
      %v2675 = vld [vmem:[%s2465 + $0x344] sm:$0xf]
      %v2676 = vld [vmem:[%s2465 + $0x348] sm:$0xf]
      %v2677 = vld [vmem:[%s2465 + $0x34c] sm:$0xf]
      %v2678 = vld [vmem:[%s2465 + $0x350] sm:$0xf]
      %v2679 = vld [vmem:[%s2465 + $0x354] sm:$0xf]
      %v2680 = vld [vmem:[%s2465 + $0x358] sm:$0xf]
      %v2681 = vld [vmem:[%s2465 + $0x35c] sm:$0xf]
      %v2682 = vld [vmem:[%s2465 + $0x360] sm:$0xf]
      %v2683 = vld [vmem:[%s2465 + $0x364] sm:$0xf]
      %v2684 = vld [vmem:[%s2465 + $0x368] sm:$0xf]
      %v2685 = vld [vmem:[%s2465 + $0x36c] sm:$0xf]
      %v2686 = vld [vmem:[%s2465 + $0x370] sm:$0xf]
      %v2687 = vld [vmem:[%s2465 + $0x374] sm:$0xf]
      %v2688 = vld [vmem:[%s2465 + $0x378] sm:$0xf]
      %v2689 = vld [vmem:[%s2465 + $0x37c] sm:$0xf]
      %v2690 = vld [vmem:[%s2465 + $0x380] sm:$0xf]
      %v2691 = vld [vmem:[%s2465 + $0x384] sm:$0xf]
      %v2692 = vld [vmem:[%s2465 + $0x388] sm:$0xf]
      %v2693 = vld [vmem:[%s2465 + $0x38c] sm:$0xf]
      %v2694 = vld [vmem:[%s2465 + $0x390] sm:$0xf]
      %v2695 = vld [vmem:[%s2465 + $0x394] sm:$0xf]
      %v2696 = vld [vmem:[%s2465 + $0x398] sm:$0xf]
      %v2697 = vld [vmem:[%s2465 + $0x39c] sm:$0xf]
      %v2698 = vld [vmem:[%s2465 + $0x3a0] sm:$0xf]
      %v2699 = vld [vmem:[%s2465 + $0x3a4] sm:$0xf]
      %v2700 = vld [vmem:[%s2465 + $0x3a8] sm:$0xf]
      %v2701 = vld [vmem:[%s2465 + $0x3ac] sm:$0xf]
      %v2702 = vld [vmem:[%s2465 + $0x3b0] sm:$0xf]
      %v2703 = vld [vmem:[%s2465 + $0x3b4] sm:$0xf]
      %v2704 = vld [vmem:[%s2465 + $0x3b8] sm:$0xf]
      %v2705 = vld [vmem:[%s2465 + $0x3bc] sm:$0xf]
      %v2706 = vld [vmem:[%s2465 + $0x3c0] sm:$0xf]
      %v2707 = vld [vmem:[%s2465 + $0x3c4] sm:$0xf]
      %v2708 = vld [vmem:[%s2465 + $0x3c8] sm:$0xf]
      %v2709 = vld [vmem:[%s2465 + $0x3cc] sm:$0xf]
      %v2710 = vld [vmem:[%s2465 + $0x3d0] sm:$0xf]
      %v2711 = vld [vmem:[%s2465 + $0x3d4] sm:$0xf]
      %v2712 = vld [vmem:[%s2465 + $0x3d8] sm:$0xf]
      %v2713 = vld [vmem:[%s2465 + $0x3dc] sm:$0xf]
      %v2714 = vld [vmem:[%s2465 + $0x3e0] sm:$0xf]
      %v2715 = vld [vmem:[%s2465 + $0x3e4] sm:$0xf]
      %v2716 = vld [vmem:[%s2465 + $0x3e8] sm:$0xf]
      %v2717 = vld [vmem:[%s2465 + $0x3ec] sm:$0xf]
      %v2718 = vld [vmem:[%s2465 + $0x3f0] sm:$0xf]
      %v2719 = vld [vmem:[%s2465 + $0x3f4] sm:$0xf]
      %v2720 = vld [vmem:[%s2465 + $0x3f8] sm:$0xf]
      %v2721 = vld [vmem:[%s2465 + $0x3fc] sm:$0xf]
      %s2722 = scalar_lea.vmem %s202, 64
      %v2723 = vld [vmem:[%s2722] sm:$0xf]
      %v2724 = vld [vmem:[%s2722 + $0x4] sm:$0xf]
      %v2725 = vld [vmem:[%s2722 + $0x8] sm:$0xf]
      %v2726 = vld [vmem:[%s2722 + $0xc] sm:$0xf]
      %v2727 = vld [vmem:[%s2722 + $0x10] sm:$0xf]
      %v2728 = vld [vmem:[%s2722 + $0x14] sm:$0xf]
      %v2729 = vld [vmem:[%s2722 + $0x18] sm:$0xf]
      %v2730 = vld [vmem:[%s2722 + $0x1c] sm:$0xf]
      %v2731 = vld [vmem:[%s2722 + $0x20] sm:$0xf]
      %v2732 = vld [vmem:[%s2722 + $0x24] sm:$0xf]
      %v2733 = vld [vmem:[%s2722 + $0x28] sm:$0xf]
      %v2734 = vld [vmem:[%s2722 + $0x2c] sm:$0xf]
      %v2735 = vld [vmem:[%s2722 + $0x30] sm:$0xf]
      %v2736 = vld [vmem:[%s2722 + $0x34] sm:$0xf]
      %v2737 = vld [vmem:[%s2722 + $0x38] sm:$0xf]
      %v2738 = vld [vmem:[%s2722 + $0x3c] sm:$0xf]
      %v2995 = vunpack.c.l.b16 %v2466
      %v2996 = vunpack.c.l.b16 %v2467
      %v2997 = vunpack.c.l.b16 %v2468
      %v2998 = vunpack.c.l.b16 %v2469
      %v2999 = vunpack.c.l.b16 %v2470
      %v3000 = vunpack.c.l.b16 %v2471
      %v3001 = vunpack.c.l.b16 %v2472
      %v3002 = vunpack.c.l.b16 %v2473
      %v3003 = vunpack.c.l.b16 %v2474
      %v3004 = vunpack.c.l.b16 %v2475
      %v3005 = vunpack.c.l.b16 %v2476
      %v3006 = vunpack.c.l.b16 %v2477
      %v3007 = vunpack.c.l.b16 %v2478
      %v3008 = vunpack.c.l.b16 %v2479
      %v3009 = vunpack.c.l.b16 %v2480
      %v3010 = vunpack.c.l.b16 %v2481
      %v3011 = vunpack.c.l.b16 %v2482
      %v3012 = vunpack.c.l.b16 %v2483
      %v3013 = vunpack.c.l.b16 %v2484
      %v3014 = vunpack.c.l.b16 %v2485
      %v3015 = vunpack.c.l.b16 %v2486
      %v3016 = vunpack.c.l.b16 %v2487
      %v3017 = vunpack.c.l.b16 %v2488
      %v3018 = vunpack.c.l.b16 %v2489
      %v3019 = vunpack.c.l.b16 %v2490
      %v3020 = vunpack.c.l.b16 %v2491
      %v3021 = vunpack.c.l.b16 %v2492
      %v3022 = vunpack.c.l.b16 %v2493
      %v3023 = vunpack.c.l.b16 %v2494
      %v3024 = vunpack.c.l.b16 %v2495
      %v3025 = vunpack.c.l.b16 %v2496
      %v3026 = vunpack.c.l.b16 %v2497
      %v3027 = vunpack.c.l.b16 %v2498
      %v3028 = vunpack.c.l.b16 %v2499
      %v3029 = vunpack.c.l.b16 %v2500
      %v3030 = vunpack.c.l.b16 %v2501
      %v3031 = vunpack.c.l.b16 %v2502
      %v3032 = vunpack.c.l.b16 %v2503
      %v3033 = vunpack.c.l.b16 %v2504
      %v3034 = vunpack.c.l.b16 %v2505
      %v3035 = vunpack.c.l.b16 %v2506
      %v3036 = vunpack.c.l.b16 %v2507
      %v3037 = vunpack.c.l.b16 %v2508
      %v3038 = vunpack.c.l.b16 %v2509
      %v3039 = vunpack.c.l.b16 %v2510
      %v3040 = vunpack.c.l.b16 %v2511
      %v3041 = vunpack.c.l.b16 %v2512
      %v3042 = vunpack.c.l.b16 %v2513
      %v3043 = vunpack.c.l.b16 %v2514
      %v3044 = vunpack.c.l.b16 %v2515
      %v3045 = vunpack.c.l.b16 %v2516
      %v3046 = vunpack.c.l.b16 %v2517
      %v3047 = vunpack.c.l.b16 %v2518
      %v3048 = vunpack.c.l.b16 %v2519
      %v3049 = vunpack.c.l.b16 %v2520
      %v3050 = vunpack.c.l.b16 %v2521
      %v3051 = vunpack.c.l.b16 %v2522
      %v3052 = vunpack.c.l.b16 %v2523
      %v3053 = vunpack.c.l.b16 %v2524
      %v3054 = vunpack.c.l.b16 %v2525
      %v3055 = vunpack.c.l.b16 %v2526
      %v3056 = vunpack.c.l.b16 %v2527
      %v3057 = vunpack.c.l.b16 %v2528
      %v3058 = vunpack.c.l.b16 %v2529
      %v3059 = vunpack.c.l.b16 %v2530
      %v3060 = vunpack.c.l.b16 %v2531
      %v3061 = vunpack.c.l.b16 %v2532
      %v3062 = vunpack.c.l.b16 %v2533
      %v3063 = vunpack.c.l.b16 %v2534
      %v3064 = vunpack.c.l.b16 %v2535
      %v3065 = vunpack.c.l.b16 %v2536
      %v3066 = vunpack.c.l.b16 %v2537
      %v3067 = vunpack.c.l.b16 %v2538
      %v3068 = vunpack.c.l.b16 %v2539
      %v3069 = vunpack.c.l.b16 %v2540
      %v3070 = vunpack.c.l.b16 %v2541
      %v3071 = vunpack.c.l.b16 %v2542
      %v3072 = vunpack.c.l.b16 %v2543
      %v3073 = vunpack.c.l.b16 %v2544
      %v3074 = vunpack.c.l.b16 %v2545
      %v3075 = vunpack.c.l.b16 %v2546
      %v3076 = vunpack.c.l.b16 %v2547
      %v3077 = vunpack.c.l.b16 %v2548
      %v3078 = vunpack.c.l.b16 %v2549
      %v3079 = vunpack.c.l.b16 %v2550
      %v3080 = vunpack.c.l.b16 %v2551
      %v3081 = vunpack.c.l.b16 %v2552
      %v3082 = vunpack.c.l.b16 %v2553
      %v3083 = vunpack.c.l.b16 %v2554
      %v3084 = vunpack.c.l.b16 %v2555
      %v3085 = vunpack.c.l.b16 %v2556
      %v3086 = vunpack.c.l.b16 %v2557
      %v3087 = vunpack.c.l.b16 %v2558
      %v3088 = vunpack.c.l.b16 %v2559
      %v3089 = vunpack.c.l.b16 %v2560
      %v3090 = vunpack.c.l.b16 %v2561
      %v3091 = vunpack.c.l.b16 %v2562
      %v3092 = vunpack.c.l.b16 %v2563
      %v3093 = vunpack.c.l.b16 %v2564
      %v3094 = vunpack.c.l.b16 %v2565
      %v3095 = vunpack.c.l.b16 %v2566
      %v3096 = vunpack.c.l.b16 %v2567
      %v3097 = vunpack.c.l.b16 %v2568
      %v3098 = vunpack.c.l.b16 %v2569
      %v3099 = vunpack.c.l.b16 %v2570
      %v3100 = vunpack.c.l.b16 %v2571
      %v3101 = vunpack.c.l.b16 %v2572
      %v3102 = vunpack.c.l.b16 %v2573
      %v3103 = vunpack.c.l.b16 %v2574
      %v3104 = vunpack.c.l.b16 %v2575
      %v3105 = vunpack.c.l.b16 %v2576
      %v3106 = vunpack.c.l.b16 %v2577
      %v3107 = vunpack.c.l.b16 %v2578
      %v3108 = vunpack.c.l.b16 %v2579
      %v3109 = vunpack.c.l.b16 %v2580
      %v3110 = vunpack.c.l.b16 %v2581
      %v3111 = vunpack.c.l.b16 %v2582
      %v3112 = vunpack.c.l.b16 %v2583
      %v3113 = vunpack.c.l.b16 %v2584
      %v3114 = vunpack.c.l.b16 %v2585
      %v3115 = vunpack.c.l.b16 %v2586
      %v3116 = vunpack.c.l.b16 %v2587
      %v3117 = vunpack.c.l.b16 %v2588
      %v3118 = vunpack.c.l.b16 %v2589
      %v3119 = vunpack.c.l.b16 %v2590
      %v3120 = vunpack.c.l.b16 %v2591
      %v3121 = vunpack.c.l.b16 %v2592
      %v3122 = vunpack.c.l.b16 %v2593
      %v3123 = vunpack.c.l.b16 %v2594
      %v3124 = vunpack.c.l.b16 %v2595
      %v3125 = vunpack.c.l.b16 %v2596
      %v3126 = vunpack.c.l.b16 %v2597
      %v3127 = vunpack.c.l.b16 %v2598
      %v3128 = vunpack.c.l.b16 %v2599
      %v3129 = vunpack.c.l.b16 %v2600
      %v3130 = vunpack.c.l.b16 %v2601
      %v3131 = vunpack.c.l.b16 %v2602
      %v3132 = vunpack.c.l.b16 %v2603
      %v3133 = vunpack.c.l.b16 %v2604
      %v3134 = vunpack.c.l.b16 %v2605
      %v3135 = vunpack.c.l.b16 %v2606
      %v3136 = vunpack.c.l.b16 %v2607
      %v3137 = vunpack.c.l.b16 %v2608
      %v3138 = vunpack.c.l.b16 %v2609
      %v3139 = vunpack.c.l.b16 %v2610
      %v3140 = vunpack.c.l.b16 %v2611
      %v3141 = vunpack.c.l.b16 %v2612
      %v3142 = vunpack.c.l.b16 %v2613
      %v3143 = vunpack.c.l.b16 %v2614
      %v3144 = vunpack.c.l.b16 %v2615
      %v3145 = vunpack.c.l.b16 %v2616
      %v3146 = vunpack.c.l.b16 %v2617
      %v3147 = vunpack.c.l.b16 %v2618
      %v3148 = vunpack.c.l.b16 %v2619
      %v3149 = vunpack.c.l.b16 %v2620
      %v3150 = vunpack.c.l.b16 %v2621
      %v3151 = vunpack.c.l.b16 %v2622
      %v3152 = vunpack.c.l.b16 %v2623
      %v3153 = vunpack.c.l.b16 %v2624
      %v3154 = vunpack.c.l.b16 %v2625
      %v3155 = vunpack.c.l.b16 %v2626
      %v3156 = vunpack.c.l.b16 %v2627
      %v3157 = vunpack.c.l.b16 %v2628
      %v3158 = vunpack.c.l.b16 %v2629
      %v3159 = vunpack.c.l.b16 %v2630
      %v3160 = vunpack.c.l.b16 %v2631
      %v3161 = vunpack.c.l.b16 %v2632
      %v3162 = vunpack.c.l.b16 %v2633
      %v3163 = vunpack.c.l.b16 %v2634
      %v3164 = vunpack.c.l.b16 %v2635
      %v3165 = vunpack.c.l.b16 %v2636
      %v3166 = vunpack.c.l.b16 %v2637
      %v3167 = vunpack.c.l.b16 %v2638
      %v3168 = vunpack.c.l.b16 %v2639
      %v3169 = vunpack.c.l.b16 %v2640
      %v3170 = vunpack.c.l.b16 %v2641
      %v3171 = vunpack.c.l.b16 %v2642
      %v3172 = vunpack.c.l.b16 %v2643
      %v3173 = vunpack.c.l.b16 %v2644
      %v3174 = vunpack.c.l.b16 %v2645
      %v3175 = vunpack.c.l.b16 %v2646
      %v3176 = vunpack.c.l.b16 %v2647
      %v3177 = vunpack.c.l.b16 %v2648
      %v3178 = vunpack.c.l.b16 %v2649
      %v3179 = vunpack.c.l.b16 %v2650
      %v3180 = vunpack.c.l.b16 %v2651
      %v3181 = vunpack.c.l.b16 %v2652
      %v3182 = vunpack.c.l.b16 %v2653
      %v3183 = vunpack.c.l.b16 %v2654
      %v3184 = vunpack.c.l.b16 %v2655
      %v3185 = vunpack.c.l.b16 %v2656
      %v3186 = vunpack.c.l.b16 %v2657
      %v3187 = vunpack.c.l.b16 %v2658
      %v3188 = vunpack.c.l.b16 %v2659
      %v3189 = vunpack.c.l.b16 %v2660
      %v3190 = vunpack.c.l.b16 %v2661
      %v3191 = vunpack.c.l.b16 %v2662
      %v3192 = vunpack.c.l.b16 %v2663
      %v3193 = vunpack.c.l.b16 %v2664
      %v3194 = vunpack.c.l.b16 %v2665
      %v3195 = vunpack.c.l.b16 %v2666
      %v3196 = vunpack.c.l.b16 %v2667
      %v3197 = vunpack.c.l.b16 %v2668
      %v3198 = vunpack.c.l.b16 %v2669
      %v3199 = vunpack.c.l.b16 %v2670
      %v3200 = vunpack.c.l.b16 %v2671
      %v3201 = vunpack.c.l.b16 %v2672
      %v3202 = vunpack.c.l.b16 %v2673
      %v3203 = vunpack.c.l.b16 %v2674
      %v3204 = vunpack.c.l.b16 %v2675
      %v3205 = vunpack.c.l.b16 %v2676
      %v3206 = vunpack.c.l.b16 %v2677
      %v3207 = vunpack.c.l.b16 %v2678
      %v3208 = vunpack.c.l.b16 %v2679
      %v3209 = vunpack.c.l.b16 %v2680
      %v3210 = vunpack.c.l.b16 %v2681
      %v3211 = vunpack.c.l.b16 %v2682
      %v3212 = vunpack.c.l.b16 %v2683
      %v3213 = vunpack.c.l.b16 %v2684
      %v3214 = vunpack.c.l.b16 %v2685
      %v3215 = vunpack.c.l.b16 %v2686
      %v3216 = vunpack.c.l.b16 %v2687
      %v3217 = vunpack.c.l.b16 %v2688
      %v3218 = vunpack.c.l.b16 %v2689
      %v3219 = vunpack.c.l.b16 %v2690
      %v3220 = vunpack.c.l.b16 %v2691
      %v3221 = vunpack.c.l.b16 %v2692
      %v3222 = vunpack.c.l.b16 %v2693
      %v3223 = vunpack.c.l.b16 %v2694
      %v3224 = vunpack.c.l.b16 %v2695
      %v3225 = vunpack.c.l.b16 %v2696
      %v3226 = vunpack.c.l.b16 %v2697
      %v3227 = vunpack.c.l.b16 %v2698
      %v3228 = vunpack.c.l.b16 %v2699
      %v3229 = vunpack.c.l.b16 %v2700
      %v3230 = vunpack.c.l.b16 %v2701
      %v3231 = vunpack.c.l.b16 %v2702
      %v3232 = vunpack.c.l.b16 %v2703
      %v3233 = vunpack.c.l.b16 %v2704
      %v3234 = vunpack.c.l.b16 %v2705
      %v3235 = vunpack.c.l.b16 %v2706
      %v3236 = vunpack.c.l.b16 %v2707
      %v3237 = vunpack.c.l.b16 %v2708
      %v3238 = vunpack.c.l.b16 %v2709
      %v3239 = vunpack.c.l.b16 %v2710
      %v3240 = vunpack.c.l.b16 %v2711
      %v3241 = vunpack.c.l.b16 %v2712
      %v3242 = vunpack.c.l.b16 %v2713
      %v3243 = vunpack.c.l.b16 %v2714
      %v3244 = vunpack.c.l.b16 %v2715
      %v3245 = vunpack.c.l.b16 %v2716
      %v3246 = vunpack.c.l.b16 %v2717
      %v3247 = vunpack.c.l.b16 %v2718
      %v3248 = vunpack.c.l.b16 %v2719
      %v3249 = vunpack.c.l.b16 %v2720
      %v3250 = vunpack.c.l.b16 %v2721
      %v3251 = vpack.c.b16 %v2996, %v2995
      %v3252 = vpack.c.b16 %v2998, %v2997
      %v3253 = vpack.c.b16 %v3000, %v2999
      %v3254 = vpack.c.b16 %v3002, %v3001
      %v3255 = vpack.c.b16 %v3004, %v3003
      %v3256 = vpack.c.b16 %v3006, %v3005
      %v3257 = vpack.c.b16 %v3008, %v3007
      %v3258 = vpack.c.b16 %v3010, %v3009
      %v3259 = vpack.c.b16 %v3012, %v3011
      %v3260 = vpack.c.b16 %v3014, %v3013
      %v3261 = vpack.c.b16 %v3016, %v3015
      %v3262 = vpack.c.b16 %v3018, %v3017
      %v3263 = vpack.c.b16 %v3020, %v3019
      %v3264 = vpack.c.b16 %v3022, %v3021
      %v3265 = vpack.c.b16 %v3024, %v3023
      %v3266 = vpack.c.b16 %v3026, %v3025
      %v3267 = vpack.c.b16 %v3028, %v3027
      %v3268 = vpack.c.b16 %v3030, %v3029
      %v3269 = vpack.c.b16 %v3032, %v3031
      %v3270 = vpack.c.b16 %v3034, %v3033
      %v3271 = vpack.c.b16 %v3036, %v3035
      %v3272 = vpack.c.b16 %v3038, %v3037
      %v3273 = vpack.c.b16 %v3040, %v3039
      %v3274 = vpack.c.b16 %v3042, %v3041
      %v3275 = vpack.c.b16 %v3044, %v3043
      %v3276 = vpack.c.b16 %v3046, %v3045
      %v3277 = vpack.c.b16 %v3048, %v3047
      %v3278 = vpack.c.b16 %v3050, %v3049
      %v3279 = vpack.c.b16 %v3052, %v3051
      %v3280 = vpack.c.b16 %v3054, %v3053
      %v3281 = vpack.c.b16 %v3056, %v3055
      %v3282 = vpack.c.b16 %v3058, %v3057
      %v3283 = vpack.c.b16 %v3060, %v3059
      %v3284 = vpack.c.b16 %v3062, %v3061
      %v3285 = vpack.c.b16 %v3064, %v3063
      %v3286 = vpack.c.b16 %v3066, %v3065
      %v3287 = vpack.c.b16 %v3068, %v3067
      %v3288 = vpack.c.b16 %v3070, %v3069
      %v3289 = vpack.c.b16 %v3072, %v3071
      %v3290 = vpack.c.b16 %v3074, %v3073
      %v3291 = vpack.c.b16 %v3076, %v3075
      %v3292 = vpack.c.b16 %v3078, %v3077
      %v3293 = vpack.c.b16 %v3080, %v3079
      %v3294 = vpack.c.b16 %v3082, %v3081
      %v3295 = vpack.c.b16 %v3084, %v3083
      %v3296 = vpack.c.b16 %v3086, %v3085
      %v3297 = vpack.c.b16 %v3088, %v3087
      %v3298 = vpack.c.b16 %v3090, %v3089
      %v3299 = vpack.c.b16 %v3092, %v3091
      %v3300 = vpack.c.b16 %v3094, %v3093
      %v3301 = vpack.c.b16 %v3096, %v3095
      %v3302 = vpack.c.b16 %v3098, %v3097
      %v3303 = vpack.c.b16 %v3100, %v3099
      %v3304 = vpack.c.b16 %v3102, %v3101
      %v3305 = vpack.c.b16 %v3104, %v3103
      %v3306 = vpack.c.b16 %v3106, %v3105
      %v3307 = vpack.c.b16 %v3108, %v3107
      %v3308 = vpack.c.b16 %v3110, %v3109
      %v3309 = vpack.c.b16 %v3112, %v3111
      %v3310 = vpack.c.b16 %v3114, %v3113
      %v3311 = vpack.c.b16 %v3116, %v3115
      %v3312 = vpack.c.b16 %v3118, %v3117
      %v3313 = vpack.c.b16 %v3120, %v3119
      %v3314 = vpack.c.b16 %v3122, %v3121
      %v3315 = vpack.c.b16 %v3124, %v3123
      %v3316 = vpack.c.b16 %v3126, %v3125
      %v3317 = vpack.c.b16 %v3128, %v3127
      %v3318 = vpack.c.b16 %v3130, %v3129
      %v3319 = vpack.c.b16 %v3132, %v3131
      %v3320 = vpack.c.b16 %v3134, %v3133
      %v3321 = vpack.c.b16 %v3136, %v3135
      %v3322 = vpack.c.b16 %v3138, %v3137
      %v3323 = vpack.c.b16 %v3140, %v3139
      %v3324 = vpack.c.b16 %v3142, %v3141
      %v3325 = vpack.c.b16 %v3144, %v3143
      %v3326 = vpack.c.b16 %v3146, %v3145
      %v3327 = vpack.c.b16 %v3148, %v3147
      %v3328 = vpack.c.b16 %v3150, %v3149
      %v3329 = vpack.c.b16 %v3152, %v3151
      %v3330 = vpack.c.b16 %v3154, %v3153
      %v3331 = vpack.c.b16 %v3156, %v3155
      %v3332 = vpack.c.b16 %v3158, %v3157
      %v3333 = vpack.c.b16 %v3160, %v3159
      %v3334 = vpack.c.b16 %v3162, %v3161
      %v3335 = vpack.c.b16 %v3164, %v3163
      %v3336 = vpack.c.b16 %v3166, %v3165
      %v3337 = vpack.c.b16 %v3168, %v3167
      %v3338 = vpack.c.b16 %v3170, %v3169
      %v3339 = vpack.c.b16 %v3172, %v3171
      %v3340 = vpack.c.b16 %v3174, %v3173
      %v3341 = vpack.c.b16 %v3176, %v3175
      %v3342 = vpack.c.b16 %v3178, %v3177
      %v3343 = vpack.c.b16 %v3180, %v3179
      %v3344 = vpack.c.b16 %v3182, %v3181
      %v3345 = vpack.c.b16 %v3184, %v3183
      %v3346 = vpack.c.b16 %v3186, %v3185
      %v3347 = vpack.c.b16 %v3188, %v3187
      %v3348 = vpack.c.b16 %v3190, %v3189
      %v3349 = vpack.c.b16 %v3192, %v3191
      %v3350 = vpack.c.b16 %v3194, %v3193
      %v3351 = vpack.c.b16 %v3196, %v3195
      %v3352 = vpack.c.b16 %v3198, %v3197
      %v3353 = vpack.c.b16 %v3200, %v3199
      %v3354 = vpack.c.b16 %v3202, %v3201
      %v3355 = vpack.c.b16 %v3204, %v3203
      %v3356 = vpack.c.b16 %v3206, %v3205
      %v3357 = vpack.c.b16 %v3208, %v3207
      %v3358 = vpack.c.b16 %v3210, %v3209
      %v3359 = vpack.c.b16 %v3212, %v3211
      %v3360 = vpack.c.b16 %v3214, %v3213
      %v3361 = vpack.c.b16 %v3216, %v3215
      %v3362 = vpack.c.b16 %v3218, %v3217
      %v3363 = vpack.c.b16 %v3220, %v3219
      %v3364 = vpack.c.b16 %v3222, %v3221
      %v3365 = vpack.c.b16 %v3224, %v3223
      %v3366 = vpack.c.b16 %v3226, %v3225
      %v3367 = vpack.c.b16 %v3228, %v3227
      %v3368 = vpack.c.b16 %v3230, %v3229
      %v3369 = vpack.c.b16 %v3232, %v3231
      %v3370 = vpack.c.b16 %v3234, %v3233
      %v3371 = vpack.c.b16 %v3236, %v3235
      %v3372 = vpack.c.b16 %v3238, %v3237
      %v3373 = vpack.c.b16 %v3240, %v3239
      %v3374 = vpack.c.b16 %v3242, %v3241
      %v3375 = vpack.c.b16 %v3244, %v3243
      %v3376 = vpack.c.b16 %v3246, %v3245
      %v3377 = vpack.c.b16 %v3248, %v3247
      %v3378 = vpack.c.b16 %v3250, %v3249
      %v3523 = vunpack.c.l.b16 %v2723
      %v3524 = vunpack.c.l.b16 %v2724
      %v3525 = vunpack.c.l.b16 %v2725
      %v3526 = vunpack.c.l.b16 %v2726
      %v3527 = vunpack.c.l.b16 %v2727
      %v3528 = vunpack.c.l.b16 %v2728
      %v3529 = vunpack.c.l.b16 %v2729
      %v3530 = vunpack.c.l.b16 %v2730
      %v3531 = vunpack.c.l.b16 %v2731
      %v3532 = vunpack.c.l.b16 %v2732
      %v3533 = vunpack.c.l.b16 %v2733
      %v3534 = vunpack.c.l.b16 %v2734
      %v3535 = vunpack.c.l.b16 %v2735
      %v3536 = vunpack.c.l.b16 %v2736
      %v3537 = vunpack.c.l.b16 %v2737
      %v3538 = vunpack.c.l.b16 %v2738
      %v3539 = vpack.c.b16 %v3524, %v3523
      %v3540 = vpack.c.b16 %v3526, %v3525
      %v3541 = vpack.c.b16 %v3528, %v3527
      %v3542 = vpack.c.b16 %v3530, %v3529
      %v3543 = vpack.c.b16 %v3532, %v3531
      %v3544 = vpack.c.b16 %v3534, %v3533
      %v3545 = vpack.c.b16 %v3536, %v3535
      %v3546 = vpack.c.b16 %v3538, %v3537
      %3555 = vmatpush.bf16.msra.mxu0 %v3546
      %3556 = vmatpush.bf16.msra.mxu0 %v3545
      %3557 = vmatpush.bf16.msra.mxu0 %v3544
      %3558 = vmatpush.bf16.msra.mxu0 %v3543
      %3559 = vmatpush.bf16.msra.mxu0 %v3542
      %3560 = vmatpush.bf16.msra.mxu0 %v3541
      %3561 = vmatpush.bf16.msra.mxu0 %v3540
      %3562 = vmatpush.bf16.msra.mxu0 %v3539
      %3563 = vmatmul.bf16.gmra.mxu0 %v3251
      %v3564 = vpop.f32.mrf.mxu0
      %v3565 = vadd.f32 0.0, %v3564
      %v3566 = vpop.f32.mrf.mxu0
      %v3567 = vadd.f32 0.0, %v3566
      %3568 = vmatmul.bf16.gmra.mxu0 %v3252
      %v3569 = vpop.f32.mrf.mxu0
      %v3570 = vadd.f32 0.0, %v3569
      %v3571 = vpop.f32.mrf.mxu0
      %v3572 = vadd.f32 0.0, %v3571
      %3573 = vmatmul.bf16.gmra.mxu0 %v3253
      %v3574 = vpop.f32.mrf.mxu0
      %v3575 = vadd.f32 0.0, %v3574
      %v3576 = vpop.f32.mrf.mxu0
      %v3577 = vadd.f32 0.0, %v3576
      %3578 = vmatmul.bf16.gmra.mxu0 %v3254
      %v3579 = vpop.f32.mrf.mxu0
      %v3580 = vadd.f32 0.0, %v3579
      %v3581 = vpop.f32.mrf.mxu0
      %v3582 = vadd.f32 0.0, %v3581
      %3583 = vmatmul.bf16.gmra.mxu0 %v3255
      %v3584 = vpop.f32.mrf.mxu0
      %v3585 = vadd.f32 0.0, %v3584
      %v3586 = vpop.f32.mrf.mxu0
      %v3587 = vadd.f32 0.0, %v3586
      %3588 = vmatmul.bf16.gmra.mxu0 %v3256
      %v3589 = vpop.f32.mrf.mxu0
      %v3590 = vadd.f32 0.0, %v3589
      %v3591 = vpop.f32.mrf.mxu0
      %v3592 = vadd.f32 0.0, %v3591
      %3593 = vmatmul.bf16.gmra.mxu0 %v3257
      %v3594 = vpop.f32.mrf.mxu0
      %v3595 = vadd.f32 0.0, %v3594
      %v3596 = vpop.f32.mrf.mxu0
      %v3597 = vadd.f32 0.0, %v3596
      %3598 = vmatmul.bf16.gmra.mxu0 %v3258
      %v3599 = vpop.f32.mrf.mxu0
      %v3600 = vadd.f32 0.0, %v3599
      %v3601 = vpop.f32.mrf.mxu0
      %v3602 = vadd.f32 0.0, %v3601
      %3603 = vmatmul.bf16.gmra.mxu0 %v3259
      %v3604 = vpop.f32.mrf.mxu0
      %v3605 = vadd.f32 0.0, %v3604
      %v3606 = vpop.f32.mrf.mxu0
      %v3607 = vadd.f32 0.0, %v3606
      %3608 = vmatmul.bf16.gmra.mxu0 %v3260
      %v3609 = vpop.f32.mrf.mxu0
      %v3610 = vadd.f32 0.0, %v3609
      %v3611 = vpop.f32.mrf.mxu0
      %v3612 = vadd.f32 0.0, %v3611
      %3613 = vmatmul.bf16.gmra.mxu0 %v3261
      %v3614 = vpop.f32.mrf.mxu0
      %v3615 = vadd.f32 0.0, %v3614
      %v3616 = vpop.f32.mrf.mxu0
      %v3617 = vadd.f32 0.0, %v3616
      %3618 = vmatmul.bf16.gmra.mxu0 %v3262
      %v3619 = vpop.f32.mrf.mxu0
      %v3620 = vadd.f32 0.0, %v3619
      %v3621 = vpop.f32.mrf.mxu0
      %v3622 = vadd.f32 0.0, %v3621
      %3623 = vmatmul.bf16.gmra.mxu0 %v3263
      %v3624 = vpop.f32.mrf.mxu0
      %v3625 = vadd.f32 0.0, %v3624
      %v3626 = vpop.f32.mrf.mxu0
      %v3627 = vadd.f32 0.0, %v3626
      %3628 = vmatmul.bf16.gmra.mxu0 %v3264
      %v3629 = vpop.f32.mrf.mxu0
      %v3630 = vadd.f32 0.0, %v3629
      %v3631 = vpop.f32.mrf.mxu0
      %v3632 = vadd.f32 0.0, %v3631
      %3633 = vmatmul.bf16.gmra.mxu0 %v3265
      %v3634 = vpop.f32.mrf.mxu0
      %v3635 = vadd.f32 0.0, %v3634
      %v3636 = vpop.f32.mrf.mxu0
      %v3637 = vadd.f32 0.0, %v3636
      %3638 = vmatmul.bf16.gmra.mxu0 %v3266
      %v3639 = vpop.f32.mrf.mxu0
      %v3640 = vadd.f32 0.0, %v3639
      %v3641 = vpop.f32.mrf.mxu0
      %v3642 = vadd.f32 0.0, %v3641
      %3643 = vmatmul.bf16.gmra.mxu0 %v3267
      %v3644 = vpop.f32.mrf.mxu0
      %v3645 = vadd.f32 0.0, %v3644
      %v3646 = vpop.f32.mrf.mxu0
      %v3647 = vadd.f32 0.0, %v3646
      %3648 = vmatmul.bf16.gmra.mxu0 %v3268
      %v3649 = vpop.f32.mrf.mxu0
      %v3650 = vadd.f32 0.0, %v3649
      %v3651 = vpop.f32.mrf.mxu0
      %v3652 = vadd.f32 0.0, %v3651
      %3653 = vmatmul.bf16.gmra.mxu0 %v3269
      %v3654 = vpop.f32.mrf.mxu0
      %v3655 = vadd.f32 0.0, %v3654
      %v3656 = vpop.f32.mrf.mxu0
      %v3657 = vadd.f32 0.0, %v3656
      %3658 = vmatmul.bf16.gmra.mxu0 %v3270
      %v3659 = vpop.f32.mrf.mxu0
      %v3660 = vadd.f32 0.0, %v3659
      %v3661 = vpop.f32.mrf.mxu0
      %v3662 = vadd.f32 0.0, %v3661
      %3663 = vmatmul.bf16.gmra.mxu0 %v3271
      %v3664 = vpop.f32.mrf.mxu0
      %v3665 = vadd.f32 0.0, %v3664
      %v3666 = vpop.f32.mrf.mxu0
      %v3667 = vadd.f32 0.0, %v3666
      %3668 = vmatmul.bf16.gmra.mxu0 %v3272
      %v3669 = vpop.f32.mrf.mxu0
      %v3670 = vadd.f32 0.0, %v3669
      %v3671 = vpop.f32.mrf.mxu0
      %v3672 = vadd.f32 0.0, %v3671
      %3673 = vmatmul.bf16.gmra.mxu0 %v3273
      %v3674 = vpop.f32.mrf.mxu0
      %v3675 = vadd.f32 0.0, %v3674
      %v3676 = vpop.f32.mrf.mxu0
      %v3677 = vadd.f32 0.0, %v3676
      %3678 = vmatmul.bf16.gmra.mxu0 %v3274
      %v3679 = vpop.f32.mrf.mxu0
      %v3680 = vadd.f32 0.0, %v3679
      %v3681 = vpop.f32.mrf.mxu0
      %v3682 = vadd.f32 0.0, %v3681
      %3683 = vmatmul.bf16.gmra.mxu0 %v3275
      %v3684 = vpop.f32.mrf.mxu0
      %v3685 = vadd.f32 0.0, %v3684
      %v3686 = vpop.f32.mrf.mxu0
      %v3687 = vadd.f32 0.0, %v3686
      %3688 = vmatmul.bf16.gmra.mxu0 %v3276
      %v3689 = vpop.f32.mrf.mxu0
      %v3690 = vadd.f32 0.0, %v3689
      %v3691 = vpop.f32.mrf.mxu0
      %v3692 = vadd.f32 0.0, %v3691
      %3693 = vmatmul.bf16.gmra.mxu0 %v3277
      %v3694 = vpop.f32.mrf.mxu0
      %v3695 = vadd.f32 0.0, %v3694
      %v3696 = vpop.f32.mrf.mxu0
      %v3697 = vadd.f32 0.0, %v3696
      %3698 = vmatmul.bf16.gmra.mxu0 %v3278
      %v3699 = vpop.f32.mrf.mxu0
      %v3700 = vadd.f32 0.0, %v3699
      %v3701 = vpop.f32.mrf.mxu0
      %v3702 = vadd.f32 0.0, %v3701
      %3703 = vmatmul.bf16.gmra.mxu0 %v3279
      %v3704 = vpop.f32.mrf.mxu0
      %v3705 = vadd.f32 0.0, %v3704
      %v3706 = vpop.f32.mrf.mxu0
      %v3707 = vadd.f32 0.0, %v3706
      %3708 = vmatmul.bf16.gmra.mxu0 %v3280
      %v3709 = vpop.f32.mrf.mxu0
      %v3710 = vadd.f32 0.0, %v3709
      %v3711 = vpop.f32.mrf.mxu0
      %v3712 = vadd.f32 0.0, %v3711
      %3713 = vmatmul.bf16.gmra.mxu0 %v3281
      %v3714 = vpop.f32.mrf.mxu0
      %v3715 = vadd.f32 0.0, %v3714
      %v3716 = vpop.f32.mrf.mxu0
      %v3717 = vadd.f32 0.0, %v3716
      %3718 = vmatmul.bf16.gmra.mxu0 %v3282
      %v3719 = vpop.f32.mrf.mxu0
      %v3720 = vadd.f32 0.0, %v3719
      %v3721 = vpop.f32.mrf.mxu0
      %v3722 = vadd.f32 0.0, %v3721
      %3723 = vmatmul.bf16.gmra.mxu0 %v3283
      %v3724 = vpop.f32.mrf.mxu0
      %v3725 = vadd.f32 0.0, %v3724
      %v3726 = vpop.f32.mrf.mxu0
      %v3727 = vadd.f32 0.0, %v3726
      %3728 = vmatmul.bf16.gmra.mxu0 %v3284
      %v3729 = vpop.f32.mrf.mxu0
      %v3730 = vadd.f32 0.0, %v3729
      %v3731 = vpop.f32.mrf.mxu0
      %v3732 = vadd.f32 0.0, %v3731
      %3733 = vmatmul.bf16.gmra.mxu0 %v3285
      %v3734 = vpop.f32.mrf.mxu0
      %v3735 = vadd.f32 0.0, %v3734
      %v3736 = vpop.f32.mrf.mxu0
      %v3737 = vadd.f32 0.0, %v3736
      %3738 = vmatmul.bf16.gmra.mxu0 %v3286
      %v3739 = vpop.f32.mrf.mxu0
      %v3740 = vadd.f32 0.0, %v3739
      %v3741 = vpop.f32.mrf.mxu0
      %v3742 = vadd.f32 0.0, %v3741
      %3743 = vmatmul.bf16.gmra.mxu0 %v3287
      %v3744 = vpop.f32.mrf.mxu0
      %v3745 = vadd.f32 0.0, %v3744
      %v3746 = vpop.f32.mrf.mxu0
      %v3747 = vadd.f32 0.0, %v3746
      %3748 = vmatmul.bf16.gmra.mxu0 %v3288
      %v3749 = vpop.f32.mrf.mxu0
      %v3750 = vadd.f32 0.0, %v3749
      %v3751 = vpop.f32.mrf.mxu0
      %v3752 = vadd.f32 0.0, %v3751
      %3753 = vmatmul.bf16.gmra.mxu0 %v3289
      %v3754 = vpop.f32.mrf.mxu0
      %v3755 = vadd.f32 0.0, %v3754
      %v3756 = vpop.f32.mrf.mxu0
      %v3757 = vadd.f32 0.0, %v3756
      %3758 = vmatmul.bf16.gmra.mxu0 %v3290
      %v3759 = vpop.f32.mrf.mxu0
      %v3760 = vadd.f32 0.0, %v3759
      %v3761 = vpop.f32.mrf.mxu0
      %v3762 = vadd.f32 0.0, %v3761
      %3763 = vmatmul.bf16.gmra.mxu0 %v3291
      %v3764 = vpop.f32.mrf.mxu0
      %v3765 = vadd.f32 0.0, %v3764
      %v3766 = vpop.f32.mrf.mxu0
      %v3767 = vadd.f32 0.0, %v3766
      %3768 = vmatmul.bf16.gmra.mxu0 %v3292
      %v3769 = vpop.f32.mrf.mxu0
      %v3770 = vadd.f32 0.0, %v3769
      %v3771 = vpop.f32.mrf.mxu0
      %v3772 = vadd.f32 0.0, %v3771
      %3773 = vmatmul.bf16.gmra.mxu0 %v3293
      %v3774 = vpop.f32.mrf.mxu0
      %v3775 = vadd.f32 0.0, %v3774
      %v3776 = vpop.f32.mrf.mxu0
      %v3777 = vadd.f32 0.0, %v3776
      %3778 = vmatmul.bf16.gmra.mxu0 %v3294
      %v3779 = vpop.f32.mrf.mxu0
      %v3780 = vadd.f32 0.0, %v3779
      %v3781 = vpop.f32.mrf.mxu0
      %v3782 = vadd.f32 0.0, %v3781
      %3783 = vmatmul.bf16.gmra.mxu0 %v3295
      %v3784 = vpop.f32.mrf.mxu0
      %v3785 = vadd.f32 0.0, %v3784
      %v3786 = vpop.f32.mrf.mxu0
      %v3787 = vadd.f32 0.0, %v3786
      %3788 = vmatmul.bf16.gmra.mxu0 %v3296
      %v3789 = vpop.f32.mrf.mxu0
      %v3790 = vadd.f32 0.0, %v3789
      %v3791 = vpop.f32.mrf.mxu0
      %v3792 = vadd.f32 0.0, %v3791
      %3793 = vmatmul.bf16.gmra.mxu0 %v3297
      %v3794 = vpop.f32.mrf.mxu0
      %v3795 = vadd.f32 0.0, %v3794
      %v3796 = vpop.f32.mrf.mxu0
      %v3797 = vadd.f32 0.0, %v3796
      %3798 = vmatmul.bf16.gmra.mxu0 %v3298
      %v3799 = vpop.f32.mrf.mxu0
      %v3800 = vadd.f32 0.0, %v3799
      %v3801 = vpop.f32.mrf.mxu0
      %v3802 = vadd.f32 0.0, %v3801
      %3803 = vmatmul.bf16.gmra.mxu0 %v3299
      %v3804 = vpop.f32.mrf.mxu0
      %v3805 = vadd.f32 0.0, %v3804
      %v3806 = vpop.f32.mrf.mxu0
      %v3807 = vadd.f32 0.0, %v3806
      %3808 = vmatmul.bf16.gmra.mxu0 %v3300
      %v3809 = vpop.f32.mrf.mxu0
      %v3810 = vadd.f32 0.0, %v3809
      %v3811 = vpop.f32.mrf.mxu0
      %v3812 = vadd.f32 0.0, %v3811
      %3813 = vmatmul.bf16.gmra.mxu0 %v3301
      %v3814 = vpop.f32.mrf.mxu0
      %v3815 = vadd.f32 0.0, %v3814
      %v3816 = vpop.f32.mrf.mxu0
      %v3817 = vadd.f32 0.0, %v3816
      %3818 = vmatmul.bf16.gmra.mxu0 %v3302
      %v3819 = vpop.f32.mrf.mxu0
      %v3820 = vadd.f32 0.0, %v3819
      %v3821 = vpop.f32.mrf.mxu0
      %v3822 = vadd.f32 0.0, %v3821
      %3823 = vmatmul.bf16.gmra.mxu0 %v3303
      %v3824 = vpop.f32.mrf.mxu0
      %v3825 = vadd.f32 0.0, %v3824
      %v3826 = vpop.f32.mrf.mxu0
      %v3827 = vadd.f32 0.0, %v3826
      %3828 = vmatmul.bf16.gmra.mxu0 %v3304
      %v3829 = vpop.f32.mrf.mxu0
      %v3830 = vadd.f32 0.0, %v3829
      %v3831 = vpop.f32.mrf.mxu0
      %v3832 = vadd.f32 0.0, %v3831
      %3833 = vmatmul.bf16.gmra.mxu0 %v3305
      %v3834 = vpop.f32.mrf.mxu0
      %v3835 = vadd.f32 0.0, %v3834
      %v3836 = vpop.f32.mrf.mxu0
      %v3837 = vadd.f32 0.0, %v3836
      %3838 = vmatmul.bf16.gmra.mxu0 %v3306
      %v3839 = vpop.f32.mrf.mxu0
      %v3840 = vadd.f32 0.0, %v3839
      %v3841 = vpop.f32.mrf.mxu0
      %v3842 = vadd.f32 0.0, %v3841
      %3843 = vmatmul.bf16.gmra.mxu0 %v3307
      %v3844 = vpop.f32.mrf.mxu0
      %v3845 = vadd.f32 0.0, %v3844
      %v3846 = vpop.f32.mrf.mxu0
      %v3847 = vadd.f32 0.0, %v3846
      %3848 = vmatmul.bf16.gmra.mxu0 %v3308
      %v3849 = vpop.f32.mrf.mxu0
      %v3850 = vadd.f32 0.0, %v3849
      %v3851 = vpop.f32.mrf.mxu0
      %v3852 = vadd.f32 0.0, %v3851
      %3853 = vmatmul.bf16.gmra.mxu0 %v3309
      %v3854 = vpop.f32.mrf.mxu0
      %v3855 = vadd.f32 0.0, %v3854
      %v3856 = vpop.f32.mrf.mxu0
      %v3857 = vadd.f32 0.0, %v3856
      %3858 = vmatmul.bf16.gmra.mxu0 %v3310
      %v3859 = vpop.f32.mrf.mxu0
      %v3860 = vadd.f32 0.0, %v3859
      %v3861 = vpop.f32.mrf.mxu0
      %v3862 = vadd.f32 0.0, %v3861
      %3863 = vmatmul.bf16.gmra.mxu0 %v3311
      %v3864 = vpop.f32.mrf.mxu0
      %v3865 = vadd.f32 0.0, %v3864
      %v3866 = vpop.f32.mrf.mxu0
      %v3867 = vadd.f32 0.0, %v3866
      %3868 = vmatmul.bf16.gmra.mxu0 %v3312
      %v3869 = vpop.f32.mrf.mxu0
      %v3870 = vadd.f32 0.0, %v3869
      %v3871 = vpop.f32.mrf.mxu0
      %v3872 = vadd.f32 0.0, %v3871
      %3873 = vmatmul.bf16.gmra.mxu0 %v3313
      %v3874 = vpop.f32.mrf.mxu0
      %v3875 = vadd.f32 0.0, %v3874
      %v3876 = vpop.f32.mrf.mxu0
      %v3877 = vadd.f32 0.0, %v3876
      %3878 = vmatmul.bf16.gmra.mxu0 %v3314
      %v3879 = vpop.f32.mrf.mxu0
      %v3880 = vadd.f32 0.0, %v3879
      %v3881 = vpop.f32.mrf.mxu0
      %v3882 = vadd.f32 0.0, %v3881
      %3883 = vmatmul.bf16.gmra.mxu0 %v3315
      %v3884 = vpop.f32.mrf.mxu0
      %v3885 = vadd.f32 0.0, %v3884
      %v3886 = vpop.f32.mrf.mxu0
      %v3887 = vadd.f32 0.0, %v3886
      %3888 = vmatmul.bf16.gmra.mxu0 %v3316
      %v3889 = vpop.f32.mrf.mxu0
      %v3890 = vadd.f32 0.0, %v3889
      %v3891 = vpop.f32.mrf.mxu0
      %v3892 = vadd.f32 0.0, %v3891
      %3893 = vmatmul.bf16.gmra.mxu0 %v3317
      %v3894 = vpop.f32.mrf.mxu0
      %v3895 = vadd.f32 0.0, %v3894
      %v3896 = vpop.f32.mrf.mxu0
      %v3897 = vadd.f32 0.0, %v3896
      %3898 = vmatmul.bf16.gmra.mxu0 %v3318
      %v3899 = vpop.f32.mrf.mxu0
      %v3900 = vadd.f32 0.0, %v3899
      %v3901 = vpop.f32.mrf.mxu0
      %v3902 = vadd.f32 0.0, %v3901
      %3903 = vmatmul.bf16.gmra.mxu0 %v3319
      %v3904 = vpop.f32.mrf.mxu0
      %v3905 = vadd.f32 0.0, %v3904
      %v3906 = vpop.f32.mrf.mxu0
      %v3907 = vadd.f32 0.0, %v3906
      %3908 = vmatmul.bf16.gmra.mxu0 %v3320
      %v3909 = vpop.f32.mrf.mxu0
      %v3910 = vadd.f32 0.0, %v3909
      %v3911 = vpop.f32.mrf.mxu0
      %v3912 = vadd.f32 0.0, %v3911
      %3913 = vmatmul.bf16.gmra.mxu0 %v3321
      %v3914 = vpop.f32.mrf.mxu0
      %v3915 = vadd.f32 0.0, %v3914
      %v3916 = vpop.f32.mrf.mxu0
      %v3917 = vadd.f32 0.0, %v3916
      %3918 = vmatmul.bf16.gmra.mxu0 %v3322
      %v3919 = vpop.f32.mrf.mxu0
      %v3920 = vadd.f32 0.0, %v3919
      %v3921 = vpop.f32.mrf.mxu0
      %v3922 = vadd.f32 0.0, %v3921
      %3923 = vmatmul.bf16.gmra.mxu0 %v3323
      %v3924 = vpop.f32.mrf.mxu0
      %v3925 = vadd.f32 0.0, %v3924
      %v3926 = vpop.f32.mrf.mxu0
      %v3927 = vadd.f32 0.0, %v3926
      %3928 = vmatmul.bf16.gmra.mxu0 %v3324
      %v3929 = vpop.f32.mrf.mxu0
      %v3930 = vadd.f32 0.0, %v3929
      %v3931 = vpop.f32.mrf.mxu0
      %v3932 = vadd.f32 0.0, %v3931
      %3933 = vmatmul.bf16.gmra.mxu0 %v3325
      %v3934 = vpop.f32.mrf.mxu0
      %v3935 = vadd.f32 0.0, %v3934
      %v3936 = vpop.f32.mrf.mxu0
      %v3937 = vadd.f32 0.0, %v3936
      %3938 = vmatmul.bf16.gmra.mxu0 %v3326
      %v3939 = vpop.f32.mrf.mxu0
      %v3940 = vadd.f32 0.0, %v3939
      %v3941 = vpop.f32.mrf.mxu0
      %v3942 = vadd.f32 0.0, %v3941
      %3943 = vmatmul.bf16.gmra.mxu0 %v3327
      %v3944 = vpop.f32.mrf.mxu0
      %v3945 = vadd.f32 0.0, %v3944
      %v3946 = vpop.f32.mrf.mxu0
      %v3947 = vadd.f32 0.0, %v3946
      %3948 = vmatmul.bf16.gmra.mxu0 %v3328
      %v3949 = vpop.f32.mrf.mxu0
      %v3950 = vadd.f32 0.0, %v3949
      %v3951 = vpop.f32.mrf.mxu0
      %v3952 = vadd.f32 0.0, %v3951
      %3953 = vmatmul.bf16.gmra.mxu0 %v3329
      %v3954 = vpop.f32.mrf.mxu0
      %v3955 = vadd.f32 0.0, %v3954
      %v3956 = vpop.f32.mrf.mxu0
      %v3957 = vadd.f32 0.0, %v3956
      %3958 = vmatmul.bf16.gmra.mxu0 %v3330
      %v3959 = vpop.f32.mrf.mxu0
      %v3960 = vadd.f32 0.0, %v3959
      %v3961 = vpop.f32.mrf.mxu0
      %v3962 = vadd.f32 0.0, %v3961
      %3963 = vmatmul.bf16.gmra.mxu0 %v3331
      %v3964 = vpop.f32.mrf.mxu0
      %v3965 = vadd.f32 0.0, %v3964
      %v3966 = vpop.f32.mrf.mxu0
      %v3967 = vadd.f32 0.0, %v3966
      %3968 = vmatmul.bf16.gmra.mxu0 %v3332
      %v3969 = vpop.f32.mrf.mxu0
      %v3970 = vadd.f32 0.0, %v3969
      %v3971 = vpop.f32.mrf.mxu0
      %v3972 = vadd.f32 0.0, %v3971
      %3973 = vmatmul.bf16.gmra.mxu0 %v3333
      %v3974 = vpop.f32.mrf.mxu0
      %v3975 = vadd.f32 0.0, %v3974
      %v3976 = vpop.f32.mrf.mxu0
      %v3977 = vadd.f32 0.0, %v3976
      %3978 = vmatmul.bf16.gmra.mxu0 %v3334
      %v3979 = vpop.f32.mrf.mxu0
      %v3980 = vadd.f32 0.0, %v3979
      %v3981 = vpop.f32.mrf.mxu0
      %v3982 = vadd.f32 0.0, %v3981
      %3983 = vmatmul.bf16.gmra.mxu0 %v3335
      %v3984 = vpop.f32.mrf.mxu0
      %v3985 = vadd.f32 0.0, %v3984
      %v3986 = vpop.f32.mrf.mxu0
      %v3987 = vadd.f32 0.0, %v3986
      %3988 = vmatmul.bf16.gmra.mxu0 %v3336
      %v3989 = vpop.f32.mrf.mxu0
      %v3990 = vadd.f32 0.0, %v3989
      %v3991 = vpop.f32.mrf.mxu0
      %v3992 = vadd.f32 0.0, %v3991
      %3993 = vmatmul.bf16.gmra.mxu0 %v3337
      %v3994 = vpop.f32.mrf.mxu0
      %v3995 = vadd.f32 0.0, %v3994
      %v3996 = vpop.f32.mrf.mxu0
      %v3997 = vadd.f32 0.0, %v3996
      %3998 = vmatmul.bf16.gmra.mxu0 %v3338
      %v3999 = vpop.f32.mrf.mxu0
      %v4000 = vadd.f32 0.0, %v3999
      %v4001 = vpop.f32.mrf.mxu0
      %v4002 = vadd.f32 0.0, %v4001
      %4003 = vmatmul.bf16.gmra.mxu0 %v3339
      %v4004 = vpop.f32.mrf.mxu0
      %v4005 = vadd.f32 0.0, %v4004
      %v4006 = vpop.f32.mrf.mxu0
      %v4007 = vadd.f32 0.0, %v4006
      %4008 = vmatmul.bf16.gmra.mxu0 %v3340
      %v4009 = vpop.f32.mrf.mxu0
      %v4010 = vadd.f32 0.0, %v4009
      %v4011 = vpop.f32.mrf.mxu0
      %v4012 = vadd.f32 0.0, %v4011
      %4013 = vmatmul.bf16.gmra.mxu0 %v3341
      %v4014 = vpop.f32.mrf.mxu0
      %v4015 = vadd.f32 0.0, %v4014
      %v4016 = vpop.f32.mrf.mxu0
      %v4017 = vadd.f32 0.0, %v4016
      %4018 = vmatmul.bf16.gmra.mxu0 %v3342
      %v4019 = vpop.f32.mrf.mxu0
      %v4020 = vadd.f32 0.0, %v4019
      %v4021 = vpop.f32.mrf.mxu0
      %v4022 = vadd.f32 0.0, %v4021
      %4023 = vmatmul.bf16.gmra.mxu0 %v3343
      %v4024 = vpop.f32.mrf.mxu0
      %v4025 = vadd.f32 0.0, %v4024
      %v4026 = vpop.f32.mrf.mxu0
      %v4027 = vadd.f32 0.0, %v4026
      %4028 = vmatmul.bf16.gmra.mxu0 %v3344
      %v4029 = vpop.f32.mrf.mxu0
      %v4030 = vadd.f32 0.0, %v4029
      %v4031 = vpop.f32.mrf.mxu0
      %v4032 = vadd.f32 0.0, %v4031
      %4033 = vmatmul.bf16.gmra.mxu0 %v3345
      %v4034 = vpop.f32.mrf.mxu0
      %v4035 = vadd.f32 0.0, %v4034
      %v4036 = vpop.f32.mrf.mxu0
      %v4037 = vadd.f32 0.0, %v4036
      %4038 = vmatmul.bf16.gmra.mxu0 %v3346
      %v4039 = vpop.f32.mrf.mxu0
      %v4040 = vadd.f32 0.0, %v4039
      %v4041 = vpop.f32.mrf.mxu0
      %v4042 = vadd.f32 0.0, %v4041
      %4043 = vmatmul.bf16.gmra.mxu0 %v3347
      %v4044 = vpop.f32.mrf.mxu0
      %v4045 = vadd.f32 0.0, %v4044
      %v4046 = vpop.f32.mrf.mxu0
      %v4047 = vadd.f32 0.0, %v4046
      %4048 = vmatmul.bf16.gmra.mxu0 %v3348
      %v4049 = vpop.f32.mrf.mxu0
      %v4050 = vadd.f32 0.0, %v4049
      %v4051 = vpop.f32.mrf.mxu0
      %v4052 = vadd.f32 0.0, %v4051
      %4053 = vmatmul.bf16.gmra.mxu0 %v3349
      %v4054 = vpop.f32.mrf.mxu0
      %v4055 = vadd.f32 0.0, %v4054
      %v4056 = vpop.f32.mrf.mxu0
      %v4057 = vadd.f32 0.0, %v4056
      %4058 = vmatmul.bf16.gmra.mxu0 %v3350
      %v4059 = vpop.f32.mrf.mxu0
      %v4060 = vadd.f32 0.0, %v4059
      %v4061 = vpop.f32.mrf.mxu0
      %v4062 = vadd.f32 0.0, %v4061
      %4063 = vmatmul.bf16.gmra.mxu0 %v3351
      %v4064 = vpop.f32.mrf.mxu0
      %v4065 = vadd.f32 0.0, %v4064
      %v4066 = vpop.f32.mrf.mxu0
      %v4067 = vadd.f32 0.0, %v4066
      %4068 = vmatmul.bf16.gmra.mxu0 %v3352
      %v4069 = vpop.f32.mrf.mxu0
      %v4070 = vadd.f32 0.0, %v4069
      %v4071 = vpop.f32.mrf.mxu0
      %v4072 = vadd.f32 0.0, %v4071
      %4073 = vmatmul.bf16.gmra.mxu0 %v3353
      %v4074 = vpop.f32.mrf.mxu0
      %v4075 = vadd.f32 0.0, %v4074
      %v4076 = vpop.f32.mrf.mxu0
      %v4077 = vadd.f32 0.0, %v4076
      %4078 = vmatmul.bf16.gmra.mxu0 %v3354
      %v4079 = vpop.f32.mrf.mxu0
      %v4080 = vadd.f32 0.0, %v4079
      %v4081 = vpop.f32.mrf.mxu0
      %v4082 = vadd.f32 0.0, %v4081
      %4083 = vmatmul.bf16.gmra.mxu0 %v3355
      %v4084 = vpop.f32.mrf.mxu0
      %v4085 = vadd.f32 0.0, %v4084
      %v4086 = vpop.f32.mrf.mxu0
      %v4087 = vadd.f32 0.0, %v4086
      %4088 = vmatmul.bf16.gmra.mxu0 %v3356
      %v4089 = vpop.f32.mrf.mxu0
      %v4090 = vadd.f32 0.0, %v4089
      %v4091 = vpop.f32.mrf.mxu0
      %v4092 = vadd.f32 0.0, %v4091
      %4093 = vmatmul.bf16.gmra.mxu0 %v3357
      %v4094 = vpop.f32.mrf.mxu0
      %v4095 = vadd.f32 0.0, %v4094
      %v4096 = vpop.f32.mrf.mxu0
      %v4097 = vadd.f32 0.0, %v4096
      %4098 = vmatmul.bf16.gmra.mxu0 %v3358
      %v4099 = vpop.f32.mrf.mxu0
      %v4100 = vadd.f32 0.0, %v4099
      %v4101 = vpop.f32.mrf.mxu0
      %v4102 = vadd.f32 0.0, %v4101
      %4103 = vmatmul.bf16.gmra.mxu0 %v3359
      %v4104 = vpop.f32.mrf.mxu0
      %v4105 = vadd.f32 0.0, %v4104
      %v4106 = vpop.f32.mrf.mxu0
      %v4107 = vadd.f32 0.0, %v4106
      %4108 = vmatmul.bf16.gmra.mxu0 %v3360
      %v4109 = vpop.f32.mrf.mxu0
      %v4110 = vadd.f32 0.0, %v4109
      %v4111 = vpop.f32.mrf.mxu0
      %v4112 = vadd.f32 0.0, %v4111
      %4113 = vmatmul.bf16.gmra.mxu0 %v3361
      %v4114 = vpop.f32.mrf.mxu0
      %v4115 = vadd.f32 0.0, %v4114
      %v4116 = vpop.f32.mrf.mxu0
      %v4117 = vadd.f32 0.0, %v4116
      %4118 = vmatmul.bf16.gmra.mxu0 %v3362
      %v4119 = vpop.f32.mrf.mxu0
      %v4120 = vadd.f32 0.0, %v4119
      %v4121 = vpop.f32.mrf.mxu0
      %v4122 = vadd.f32 0.0, %v4121
      %4123 = vmatmul.bf16.gmra.mxu0 %v3363
      %v4124 = vpop.f32.mrf.mxu0
      %v4125 = vadd.f32 0.0, %v4124
      %v4126 = vpop.f32.mrf.mxu0
      %v4127 = vadd.f32 0.0, %v4126
      %4128 = vmatmul.bf16.gmra.mxu0 %v3364
      %v4129 = vpop.f32.mrf.mxu0
      %v4130 = vadd.f32 0.0, %v4129
      %v4131 = vpop.f32.mrf.mxu0
      %v4132 = vadd.f32 0.0, %v4131
      %4133 = vmatmul.bf16.gmra.mxu0 %v3365
      %v4134 = vpop.f32.mrf.mxu0
      %v4135 = vadd.f32 0.0, %v4134
      %v4136 = vpop.f32.mrf.mxu0
      %v4137 = vadd.f32 0.0, %v4136
      %4138 = vmatmul.bf16.gmra.mxu0 %v3366
      %v4139 = vpop.f32.mrf.mxu0
      %v4140 = vadd.f32 0.0, %v4139
      %v4141 = vpop.f32.mrf.mxu0
      %v4142 = vadd.f32 0.0, %v4141
      %4143 = vmatmul.bf16.gmra.mxu0 %v3367
      %v4144 = vpop.f32.mrf.mxu0
      %v4145 = vadd.f32 0.0, %v4144
      %v4146 = vpop.f32.mrf.mxu0
      %v4147 = vadd.f32 0.0, %v4146
      %4148 = vmatmul.bf16.gmra.mxu0 %v3368
      %v4149 = vpop.f32.mrf.mxu0
      %v4150 = vadd.f32 0.0, %v4149
      %v4151 = vpop.f32.mrf.mxu0
      %v4152 = vadd.f32 0.0, %v4151
      %4153 = vmatmul.bf16.gmra.mxu0 %v3369
      %v4154 = vpop.f32.mrf.mxu0
      %v4155 = vadd.f32 0.0, %v4154
      %v4156 = vpop.f32.mrf.mxu0
      %v4157 = vadd.f32 0.0, %v4156
      %4158 = vmatmul.bf16.gmra.mxu0 %v3370
      %v4159 = vpop.f32.mrf.mxu0
      %v4160 = vadd.f32 0.0, %v4159
      %v4161 = vpop.f32.mrf.mxu0
      %v4162 = vadd.f32 0.0, %v4161
      %4163 = vmatmul.bf16.gmra.mxu0 %v3371
      %v4164 = vpop.f32.mrf.mxu0
      %v4165 = vadd.f32 0.0, %v4164
      %v4166 = vpop.f32.mrf.mxu0
      %v4167 = vadd.f32 0.0, %v4166
      %4168 = vmatmul.bf16.gmra.mxu0 %v3372
      %v4169 = vpop.f32.mrf.mxu0
      %v4170 = vadd.f32 0.0, %v4169
      %v4171 = vpop.f32.mrf.mxu0
      %v4172 = vadd.f32 0.0, %v4171
      %4173 = vmatmul.bf16.gmra.mxu0 %v3373
      %v4174 = vpop.f32.mrf.mxu0
      %v4175 = vadd.f32 0.0, %v4174
      %v4176 = vpop.f32.mrf.mxu0
      %v4177 = vadd.f32 0.0, %v4176
      %4178 = vmatmul.bf16.gmra.mxu0 %v3374
      %v4179 = vpop.f32.mrf.mxu0
      %v4180 = vadd.f32 0.0, %v4179
      %v4181 = vpop.f32.mrf.mxu0
      %v4182 = vadd.f32 0.0, %v4181
      %4183 = vmatmul.bf16.gmra.mxu0 %v3375
      %v4184 = vpop.f32.mrf.mxu0
      %v4185 = vadd.f32 0.0, %v4184
      %v4186 = vpop.f32.mrf.mxu0
      %v4187 = vadd.f32 0.0, %v4186
      %4188 = vmatmul.bf16.gmra.mxu0 %v3376
      %v4189 = vpop.f32.mrf.mxu0
      %v4190 = vadd.f32 0.0, %v4189
      %v4191 = vpop.f32.mrf.mxu0
      %v4192 = vadd.f32 0.0, %v4191
      %4193 = vmatmul.bf16.gmra.mxu0 %v3377
      %v4194 = vpop.f32.mrf.mxu0
      %v4195 = vadd.f32 0.0, %v4194
      %v4196 = vpop.f32.mrf.mxu0
      %v4197 = vadd.f32 0.0, %v4196
      %4198 = vmatmul.bf16.gmra.mxu0 %v3378
      %v4199 = vpop.f32.mrf.mxu0
      %v4200 = vadd.f32 0.0, %v4199
      %v4201 = vpop.f32.mrf.mxu0
      %v4202 = vadd.f32 0.0, %v4201
      %4203 = vdwg.mxu0
      %v4204 = vpack.c.bf16 %v3565, %v3565
      %v4205 = vpack.c.bf16 %v3567, %v3567
      %v4206 = vpack.c.bf16 %v3570, %v3570
      %v4207 = vpack.c.bf16 %v3572, %v3572
      %v4208 = vpack.c.bf16 %v3575, %v3575
      %v4209 = vpack.c.bf16 %v3577, %v3577
      %v4210 = vpack.c.bf16 %v3580, %v3580
      %v4211 = vpack.c.bf16 %v3582, %v3582
      %v4212 = vpack.c.bf16 %v3585, %v3585
      %v4213 = vpack.c.bf16 %v3587, %v3587
      %v4214 = vpack.c.bf16 %v3590, %v3590
      %v4215 = vpack.c.bf16 %v3592, %v3592
      %v4216 = vpack.c.bf16 %v3595, %v3595
      %v4217 = vpack.c.bf16 %v3597, %v3597
      %v4218 = vpack.c.bf16 %v3600, %v3600
      %v4219 = vpack.c.bf16 %v3602, %v3602
      %v4220 = vpack.c.bf16 %v3605, %v3605
      %v4221 = vpack.c.bf16 %v3607, %v3607
      %v4222 = vpack.c.bf16 %v3610, %v3610
      %v4223 = vpack.c.bf16 %v3612, %v3612
      %v4224 = vpack.c.bf16 %v3615, %v3615
      %v4225 = vpack.c.bf16 %v3617, %v3617
      %v4226 = vpack.c.bf16 %v3620, %v3620
      %v4227 = vpack.c.bf16 %v3622, %v3622
      %v4228 = vpack.c.bf16 %v3625, %v3625
      %v4229 = vpack.c.bf16 %v3627, %v3627
      %v4230 = vpack.c.bf16 %v3630, %v3630
      %v4231 = vpack.c.bf16 %v3632, %v3632
      %v4232 = vpack.c.bf16 %v3635, %v3635
      %v4233 = vpack.c.bf16 %v3637, %v3637
      %v4234 = vpack.c.bf16 %v3640, %v3640
      %v4235 = vpack.c.bf16 %v3642, %v3642
      %v4236 = vpack.c.bf16 %v3645, %v3645
      %v4237 = vpack.c.bf16 %v3647, %v3647
      %v4238 = vpack.c.bf16 %v3650, %v3650
      %v4239 = vpack.c.bf16 %v3652, %v3652
      %v4240 = vpack.c.bf16 %v3655, %v3655
      %v4241 = vpack.c.bf16 %v3657, %v3657
      %v4242 = vpack.c.bf16 %v3660, %v3660
      %v4243 = vpack.c.bf16 %v3662, %v3662
      %v4244 = vpack.c.bf16 %v3665, %v3665
      %v4245 = vpack.c.bf16 %v3667, %v3667
      %v4246 = vpack.c.bf16 %v3670, %v3670
      %v4247 = vpack.c.bf16 %v3672, %v3672
      %v4248 = vpack.c.bf16 %v3675, %v3675
      %v4249 = vpack.c.bf16 %v3677, %v3677
      %v4250 = vpack.c.bf16 %v3680, %v3680
      %v4251 = vpack.c.bf16 %v3682, %v3682
      %v4252 = vpack.c.bf16 %v3685, %v3685
      %v4253 = vpack.c.bf16 %v3687, %v3687
      %v4254 = vpack.c.bf16 %v3690, %v3690
      %v4255 = vpack.c.bf16 %v3692, %v3692
      %v4256 = vpack.c.bf16 %v3695, %v3695
      %v4257 = vpack.c.bf16 %v3697, %v3697
      %v4258 = vpack.c.bf16 %v3700, %v3700
      %v4259 = vpack.c.bf16 %v3702, %v3702
      %v4260 = vpack.c.bf16 %v3705, %v3705
      %v4261 = vpack.c.bf16 %v3707, %v3707
      %v4262 = vpack.c.bf16 %v3710, %v3710
      %v4263 = vpack.c.bf16 %v3712, %v3712
      %v4264 = vpack.c.bf16 %v3715, %v3715
      %v4265 = vpack.c.bf16 %v3717, %v3717
      %v4266 = vpack.c.bf16 %v3720, %v3720
      %v4267 = vpack.c.bf16 %v3722, %v3722
      %v4268 = vpack.c.bf16 %v3725, %v3725
      %v4269 = vpack.c.bf16 %v3727, %v3727
      %v4270 = vpack.c.bf16 %v3730, %v3730
      %v4271 = vpack.c.bf16 %v3732, %v3732
      %v4272 = vpack.c.bf16 %v3735, %v3735
      %v4273 = vpack.c.bf16 %v3737, %v3737
      %v4274 = vpack.c.bf16 %v3740, %v3740
      %v4275 = vpack.c.bf16 %v3742, %v3742
      %v4276 = vpack.c.bf16 %v3745, %v3745
      %v4277 = vpack.c.bf16 %v3747, %v3747
      %v4278 = vpack.c.bf16 %v3750, %v3750
      %v4279 = vpack.c.bf16 %v3752, %v3752
      %v4280 = vpack.c.bf16 %v3755, %v3755
      %v4281 = vpack.c.bf16 %v3757, %v3757
      %v4282 = vpack.c.bf16 %v3760, %v3760
      %v4283 = vpack.c.bf16 %v3762, %v3762
      %v4284 = vpack.c.bf16 %v3765, %v3765
      %v4285 = vpack.c.bf16 %v3767, %v3767
      %v4286 = vpack.c.bf16 %v3770, %v3770
      %v4287 = vpack.c.bf16 %v3772, %v3772
      %v4288 = vpack.c.bf16 %v3775, %v3775
      %v4289 = vpack.c.bf16 %v3777, %v3777
      %v4290 = vpack.c.bf16 %v3780, %v3780
      %v4291 = vpack.c.bf16 %v3782, %v3782
      %v4292 = vpack.c.bf16 %v3785, %v3785
      %v4293 = vpack.c.bf16 %v3787, %v3787
      %v4294 = vpack.c.bf16 %v3790, %v3790
      %v4295 = vpack.c.bf16 %v3792, %v3792
      %v4296 = vpack.c.bf16 %v3795, %v3795
      %v4297 = vpack.c.bf16 %v3797, %v3797
      %v4298 = vpack.c.bf16 %v3800, %v3800
      %v4299 = vpack.c.bf16 %v3802, %v3802
      %v4300 = vpack.c.bf16 %v3805, %v3805
      %v4301 = vpack.c.bf16 %v3807, %v3807
      %v4302 = vpack.c.bf16 %v3810, %v3810
      %v4303 = vpack.c.bf16 %v3812, %v3812
      %v4304 = vpack.c.bf16 %v3815, %v3815
      %v4305 = vpack.c.bf16 %v3817, %v3817
      %v4306 = vpack.c.bf16 %v3820, %v3820
      %v4307 = vpack.c.bf16 %v3822, %v3822
      %v4308 = vpack.c.bf16 %v3825, %v3825
      %v4309 = vpack.c.bf16 %v3827, %v3827
      %v4310 = vpack.c.bf16 %v3830, %v3830
      %v4311 = vpack.c.bf16 %v3832, %v3832
      %v4312 = vpack.c.bf16 %v3835, %v3835
      %v4313 = vpack.c.bf16 %v3837, %v3837
      %v4314 = vpack.c.bf16 %v3840, %v3840
      %v4315 = vpack.c.bf16 %v3842, %v3842
      %v4316 = vpack.c.bf16 %v3845, %v3845
      %v4317 = vpack.c.bf16 %v3847, %v3847
      %v4318 = vpack.c.bf16 %v3850, %v3850
      %v4319 = vpack.c.bf16 %v3852, %v3852
      %v4320 = vpack.c.bf16 %v3855, %v3855
      %v4321 = vpack.c.bf16 %v3857, %v3857
      %v4322 = vpack.c.bf16 %v3860, %v3860
      %v4323 = vpack.c.bf16 %v3862, %v3862
      %v4324 = vpack.c.bf16 %v3865, %v3865
      %v4325 = vpack.c.bf16 %v3867, %v3867
      %v4326 = vpack.c.bf16 %v3870, %v3870
      %v4327 = vpack.c.bf16 %v3872, %v3872
      %v4328 = vpack.c.bf16 %v3875, %v3875
      %v4329 = vpack.c.bf16 %v3877, %v3877
      %v4330 = vpack.c.bf16 %v3880, %v3880
      %v4331 = vpack.c.bf16 %v3882, %v3882
      %v4332 = vpack.c.bf16 %v3885, %v3885
      %v4333 = vpack.c.bf16 %v3887, %v3887
      %v4334 = vpack.c.bf16 %v3890, %v3890
      %v4335 = vpack.c.bf16 %v3892, %v3892
      %v4336 = vpack.c.bf16 %v3895, %v3895
      %v4337 = vpack.c.bf16 %v3897, %v3897
      %v4338 = vpack.c.bf16 %v3900, %v3900
      %v4339 = vpack.c.bf16 %v3902, %v3902
      %v4340 = vpack.c.bf16 %v3905, %v3905
      %v4341 = vpack.c.bf16 %v3907, %v3907
      %v4342 = vpack.c.bf16 %v3910, %v3910
      %v4343 = vpack.c.bf16 %v3912, %v3912
      %v4344 = vpack.c.bf16 %v3915, %v3915
      %v4345 = vpack.c.bf16 %v3917, %v3917
      %v4346 = vpack.c.bf16 %v3920, %v3920
      %v4347 = vpack.c.bf16 %v3922, %v3922
      %v4348 = vpack.c.bf16 %v3925, %v3925
      %v4349 = vpack.c.bf16 %v3927, %v3927
      %v4350 = vpack.c.bf16 %v3930, %v3930
      %v4351 = vpack.c.bf16 %v3932, %v3932
      %v4352 = vpack.c.bf16 %v3935, %v3935
      %v4353 = vpack.c.bf16 %v3937, %v3937
      %v4354 = vpack.c.bf16 %v3940, %v3940
      %v4355 = vpack.c.bf16 %v3942, %v3942
      %v4356 = vpack.c.bf16 %v3945, %v3945
      %v4357 = vpack.c.bf16 %v3947, %v3947
      %v4358 = vpack.c.bf16 %v3950, %v3950
      %v4359 = vpack.c.bf16 %v3952, %v3952
      %v4360 = vpack.c.bf16 %v3955, %v3955
      %v4361 = vpack.c.bf16 %v3957, %v3957
      %v4362 = vpack.c.bf16 %v3960, %v3960
      %v4363 = vpack.c.bf16 %v3962, %v3962
      %v4364 = vpack.c.bf16 %v3965, %v3965
      %v4365 = vpack.c.bf16 %v3967, %v3967
      %v4366 = vpack.c.bf16 %v3970, %v3970
      %v4367 = vpack.c.bf16 %v3972, %v3972
      %v4368 = vpack.c.bf16 %v3975, %v3975
      %v4369 = vpack.c.bf16 %v3977, %v3977
      %v4370 = vpack.c.bf16 %v3980, %v3980
      %v4371 = vpack.c.bf16 %v3982, %v3982
      %v4372 = vpack.c.bf16 %v3985, %v3985
      %v4373 = vpack.c.bf16 %v3987, %v3987
      %v4374 = vpack.c.bf16 %v3990, %v3990
      %v4375 = vpack.c.bf16 %v3992, %v3992
      %v4376 = vpack.c.bf16 %v3995, %v3995
      %v4377 = vpack.c.bf16 %v3997, %v3997
      %v4378 = vpack.c.bf16 %v4000, %v4000
      %v4379 = vpack.c.bf16 %v4002, %v4002
      %v4380 = vpack.c.bf16 %v4005, %v4005
      %v4381 = vpack.c.bf16 %v4007, %v4007
      %v4382 = vpack.c.bf16 %v4010, %v4010
      %v4383 = vpack.c.bf16 %v4012, %v4012
      %v4384 = vpack.c.bf16 %v4015, %v4015
      %v4385 = vpack.c.bf16 %v4017, %v4017
      %v4386 = vpack.c.bf16 %v4020, %v4020
      %v4387 = vpack.c.bf16 %v4022, %v4022
      %v4388 = vpack.c.bf16 %v4025, %v4025
      %v4389 = vpack.c.bf16 %v4027, %v4027
      %v4390 = vpack.c.bf16 %v4030, %v4030
      %v4391 = vpack.c.bf16 %v4032, %v4032
      %v4392 = vpack.c.bf16 %v4035, %v4035
      %v4393 = vpack.c.bf16 %v4037, %v4037
      %v4394 = vpack.c.bf16 %v4040, %v4040
      %v4395 = vpack.c.bf16 %v4042, %v4042
      %v4396 = vpack.c.bf16 %v4045, %v4045
      %v4397 = vpack.c.bf16 %v4047, %v4047
      %v4398 = vpack.c.bf16 %v4050, %v4050
      %v4399 = vpack.c.bf16 %v4052, %v4052
      %v4400 = vpack.c.bf16 %v4055, %v4055
      %v4401 = vpack.c.bf16 %v4057, %v4057
      %v4402 = vpack.c.bf16 %v4060, %v4060
      %v4403 = vpack.c.bf16 %v4062, %v4062
      %v4404 = vpack.c.bf16 %v4065, %v4065
      %v4405 = vpack.c.bf16 %v4067, %v4067
      %v4406 = vpack.c.bf16 %v4070, %v4070
      %v4407 = vpack.c.bf16 %v4072, %v4072
      %v4408 = vpack.c.bf16 %v4075, %v4075
      %v4409 = vpack.c.bf16 %v4077, %v4077
      %v4410 = vpack.c.bf16 %v4080, %v4080
      %v4411 = vpack.c.bf16 %v4082, %v4082
      %v4412 = vpack.c.bf16 %v4085, %v4085
      %v4413 = vpack.c.bf16 %v4087, %v4087
      %v4414 = vpack.c.bf16 %v4090, %v4090
      %v4415 = vpack.c.bf16 %v4092, %v4092
      %v4416 = vpack.c.bf16 %v4095, %v4095
      %v4417 = vpack.c.bf16 %v4097, %v4097
      %v4418 = vpack.c.bf16 %v4100, %v4100
      %v4419 = vpack.c.bf16 %v4102, %v4102
      %v4420 = vpack.c.bf16 %v4105, %v4105
      %v4421 = vpack.c.bf16 %v4107, %v4107
      %v4422 = vpack.c.bf16 %v4110, %v4110
      %v4423 = vpack.c.bf16 %v4112, %v4112
      %v4424 = vpack.c.bf16 %v4115, %v4115
      %v4425 = vpack.c.bf16 %v4117, %v4117
      %v4426 = vpack.c.bf16 %v4120, %v4120
      %v4427 = vpack.c.bf16 %v4122, %v4122
      %v4428 = vpack.c.bf16 %v4125, %v4125
      %v4429 = vpack.c.bf16 %v4127, %v4127
      %v4430 = vpack.c.bf16 %v4130, %v4130
      %v4431 = vpack.c.bf16 %v4132, %v4132
      %v4432 = vpack.c.bf16 %v4135, %v4135
      %v4433 = vpack.c.bf16 %v4137, %v4137
      %v4434 = vpack.c.bf16 %v4140, %v4140
      %v4435 = vpack.c.bf16 %v4142, %v4142
      %v4436 = vpack.c.bf16 %v4145, %v4145
      %v4437 = vpack.c.bf16 %v4147, %v4147
      %v4438 = vpack.c.bf16 %v4150, %v4150
      %v4439 = vpack.c.bf16 %v4152, %v4152
      %v4440 = vpack.c.bf16 %v4155, %v4155
      %v4441 = vpack.c.bf16 %v4157, %v4157
      %v4442 = vpack.c.bf16 %v4160, %v4160
      %v4443 = vpack.c.bf16 %v4162, %v4162
      %v4444 = vpack.c.bf16 %v4165, %v4165
      %v4445 = vpack.c.bf16 %v4167, %v4167
      %v4446 = vpack.c.bf16 %v4170, %v4170
      %v4447 = vpack.c.bf16 %v4172, %v4172
      %v4448 = vpack.c.bf16 %v4175, %v4175
      %v4449 = vpack.c.bf16 %v4177, %v4177
      %v4450 = vpack.c.bf16 %v4180, %v4180
      %v4451 = vpack.c.bf16 %v4182, %v4182
      %v4452 = vpack.c.bf16 %v4185, %v4185
      %v4453 = vpack.c.bf16 %v4187, %v4187
      %v4454 = vpack.c.bf16 %v4190, %v4190
      %v4455 = vpack.c.bf16 %v4192, %v4192
      %v4456 = vpack.c.bf16 %v4195, %v4195
      %v4457 = vpack.c.bf16 %v4197, %v4197
      %v4458 = vpack.c.bf16 %v4200, %v4200
      %v4459 = vpack.c.bf16 %v4202, %v4202
      %s4460 = scalar_lea.vmem %s213, 1024
      %4461 = vst [vmem:[%s4460] sm:$0xf] %v4204
      %4462 = vst [vmem:[%s4460 + $0x4] sm:$0xf] %v4205
      %4463 = vst [vmem:[%s4460 + $0x8] sm:$0xf] %v4206
      %4464 = vst [vmem:[%s4460 + $0xc] sm:$0xf] %v4207
      %4465 = vst [vmem:[%s4460 + $0x10] sm:$0xf] %v4208
      %4466 = vst [vmem:[%s4460 + $0x14] sm:$0xf] %v4209
      %4467 = vst [vmem:[%s4460 + $0x18] sm:$0xf] %v4210
      %4468 = vst [vmem:[%s4460 + $0x1c] sm:$0xf] %v4211
      %4469 = vst [vmem:[%s4460 + $0x20] sm:$0xf] %v4212
      %4470 = vst [vmem:[%s4460 + $0x24] sm:$0xf] %v4213
      %4471 = vst [vmem:[%s4460 + $0x28] sm:$0xf] %v4214
      %4472 = vst [vmem:[%s4460 + $0x2c] sm:$0xf] %v4215
      %4473 = vst [vmem:[%s4460 + $0x30] sm:$0xf] %v4216
      %4474 = vst [vmem:[%s4460 + $0x34] sm:$0xf] %v4217
      %4475 = vst [vmem:[%s4460 + $0x38] sm:$0xf] %v4218
      %4476 = vst [vmem:[%s4460 + $0x3c] sm:$0xf] %v4219
      %4477 = vst [vmem:[%s4460 + $0x40] sm:$0xf] %v4220
      %4478 = vst [vmem:[%s4460 + $0x44] sm:$0xf] %v4221
      %4479 = vst [vmem:[%s4460 + $0x48] sm:$0xf] %v4222
      %4480 = vst [vmem:[%s4460 + $0x4c] sm:$0xf] %v4223
      %4481 = vst [vmem:[%s4460 + $0x50] sm:$0xf] %v4224
      %4482 = vst [vmem:[%s4460 + $0x54] sm:$0xf] %v4225
      %4483 = vst [vmem:[%s4460 + $0x58] sm:$0xf] %v4226
      %4484 = vst [vmem:[%s4460 + $0x5c] sm:$0xf] %v4227
      %4485 = vst [vmem:[%s4460 + $0x60] sm:$0xf] %v4228
      %4486 = vst [vmem:[%s4460 + $0x64] sm:$0xf] %v4229
      %4487 = vst [vmem:[%s4460 + $0x68] sm:$0xf] %v4230
      %4488 = vst [vmem:[%s4460 + $0x6c] sm:$0xf] %v4231
      %4489 = vst [vmem:[%s4460 + $0x70] sm:$0xf] %v4232
      %4490 = vst [vmem:[%s4460 + $0x74] sm:$0xf] %v4233
      %4491 = vst [vmem:[%s4460 + $0x78] sm:$0xf] %v4234
      %4492 = vst [vmem:[%s4460 + $0x7c] sm:$0xf] %v4235
      %4493 = vst [vmem:[%s4460 + $0x80] sm:$0xf] %v4236
      %4494 = vst [vmem:[%s4460 + $0x84] sm:$0xf] %v4237
      %4495 = vst [vmem:[%s4460 + $0x88] sm:$0xf] %v4238
      %4496 = vst [vmem:[%s4460 + $0x8c] sm:$0xf] %v4239
      %4497 = vst [vmem:[%s4460 + $0x90] sm:$0xf] %v4240
      %4498 = vst [vmem:[%s4460 + $0x94] sm:$0xf] %v4241
      %4499 = vst [vmem:[%s4460 + $0x98] sm:$0xf] %v4242
      %4500 = vst [vmem:[%s4460 + $0x9c] sm:$0xf] %v4243
      %4501 = vst [vmem:[%s4460 + $0xa0] sm:$0xf] %v4244
      %4502 = vst [vmem:[%s4460 + $0xa4] sm:$0xf] %v4245
      %4503 = vst [vmem:[%s4460 + $0xa8] sm:$0xf] %v4246
      %4504 = vst [vmem:[%s4460 + $0xac] sm:$0xf] %v4247
      %4505 = vst [vmem:[%s4460 + $0xb0] sm:$0xf] %v4248
      %4506 = vst [vmem:[%s4460 + $0xb4] sm:$0xf] %v4249
      %4507 = vst [vmem:[%s4460 + $0xb8] sm:$0xf] %v4250
      %4508 = vst [vmem:[%s4460 + $0xbc] sm:$0xf] %v4251
      %4509 = vst [vmem:[%s4460 + $0xc0] sm:$0xf] %v4252
      %4510 = vst [vmem:[%s4460 + $0xc4] sm:$0xf] %v4253
      %4511 = vst [vmem:[%s4460 + $0xc8] sm:$0xf] %v4254
      %4512 = vst [vmem:[%s4460 + $0xcc] sm:$0xf] %v4255
      %4513 = vst [vmem:[%s4460 + $0xd0] sm:$0xf] %v4256
      %4514 = vst [vmem:[%s4460 + $0xd4] sm:$0xf] %v4257
      %4515 = vst [vmem:[%s4460 + $0xd8] sm:$0xf] %v4258
      %4516 = vst [vmem:[%s4460 + $0xdc] sm:$0xf] %v4259
      %4517 = vst [vmem:[%s4460 + $0xe0] sm:$0xf] %v4260
      %4518 = vst [vmem:[%s4460 + $0xe4] sm:$0xf] %v4261
      %4519 = vst [vmem:[%s4460 + $0xe8] sm:$0xf] %v4262
      %4520 = vst [vmem:[%s4460 + $0xec] sm:$0xf] %v4263
      %4521 = vst [vmem:[%s4460 + $0xf0] sm:$0xf] %v4264
      %4522 = vst [vmem:[%s4460 + $0xf4] sm:$0xf] %v4265
      %4523 = vst [vmem:[%s4460 + $0xf8] sm:$0xf] %v4266
      %4524 = vst [vmem:[%s4460 + $0xfc] sm:$0xf] %v4267
      %4525 = vst [vmem:[%s4460 + $0x100] sm:$0xf] %v4268
      %4526 = vst [vmem:[%s4460 + $0x104] sm:$0xf] %v4269
      %4527 = vst [vmem:[%s4460 + $0x108] sm:$0xf] %v4270
      %4528 = vst [vmem:[%s4460 + $0x10c] sm:$0xf] %v4271
      %4529 = vst [vmem:[%s4460 + $0x110] sm:$0xf] %v4272
      %4530 = vst [vmem:[%s4460 + $0x114] sm:$0xf] %v4273
      %4531 = vst [vmem:[%s4460 + $0x118] sm:$0xf] %v4274
      %4532 = vst [vmem:[%s4460 + $0x11c] sm:$0xf] %v4275
      %4533 = vst [vmem:[%s4460 + $0x120] sm:$0xf] %v4276
      %4534 = vst [vmem:[%s4460 + $0x124] sm:$0xf] %v4277
      %4535 = vst [vmem:[%s4460 + $0x128] sm:$0xf] %v4278
      %4536 = vst [vmem:[%s4460 + $0x12c] sm:$0xf] %v4279
      %4537 = vst [vmem:[%s4460 + $0x130] sm:$0xf] %v4280
      %4538 = vst [vmem:[%s4460 + $0x134] sm:$0xf] %v4281
      %4539 = vst [vmem:[%s4460 + $0x138] sm:$0xf] %v4282
      %4540 = vst [vmem:[%s4460 + $0x13c] sm:$0xf] %v4283
      %4541 = vst [vmem:[%s4460 + $0x140] sm:$0xf] %v4284
      %4542 = vst [vmem:[%s4460 + $0x144] sm:$0xf] %v4285
      %4543 = vst [vmem:[%s4460 + $0x148] sm:$0xf] %v4286
      %4544 = vst [vmem:[%s4460 + $0x14c] sm:$0xf] %v4287
      %4545 = vst [vmem:[%s4460 + $0x150] sm:$0xf] %v4288
      %4546 = vst [vmem:[%s4460 + $0x154] sm:$0xf] %v4289
      %4547 = vst [vmem:[%s4460 + $0x158] sm:$0xf] %v4290
      %4548 = vst [vmem:[%s4460 + $0x15c] sm:$0xf] %v4291
      %4549 = vst [vmem:[%s4460 + $0x160] sm:$0xf] %v4292
      %4550 = vst [vmem:[%s4460 + $0x164] sm:$0xf] %v4293
      %4551 = vst [vmem:[%s4460 + $0x168] sm:$0xf] %v4294
      %4552 = vst [vmem:[%s4460 + $0x16c] sm:$0xf] %v4295
      %4553 = vst [vmem:[%s4460 + $0x170] sm:$0xf] %v4296
      %4554 = vst [vmem:[%s4460 + $0x174] sm:$0xf] %v4297
      %4555 = vst [vmem:[%s4460 + $0x178] sm:$0xf] %v4298
      %4556 = vst [vmem:[%s4460 + $0x17c] sm:$0xf] %v4299
      %4557 = vst [vmem:[%s4460 + $0x180] sm:$0xf] %v4300
      %4558 = vst [vmem:[%s4460 + $0x184] sm:$0xf] %v4301
      %4559 = vst [vmem:[%s4460 + $0x188] sm:$0xf] %v4302
      %4560 = vst [vmem:[%s4460 + $0x18c] sm:$0xf] %v4303
      %4561 = vst [vmem:[%s4460 + $0x190] sm:$0xf] %v4304
      %4562 = vst [vmem:[%s4460 + $0x194] sm:$0xf] %v4305
      %4563 = vst [vmem:[%s4460 + $0x198] sm:$0xf] %v4306
      %4564 = vst [vmem:[%s4460 + $0x19c] sm:$0xf] %v4307
      %4565 = vst [vmem:[%s4460 + $0x1a0] sm:$0xf] %v4308
      %4566 = vst [vmem:[%s4460 + $0x1a4] sm:$0xf] %v4309
      %4567 = vst [vmem:[%s4460 + $0x1a8] sm:$0xf] %v4310
      %4568 = vst [vmem:[%s4460 + $0x1ac] sm:$0xf] %v4311
      %4569 = vst [vmem:[%s4460 + $0x1b0] sm:$0xf] %v4312
      %4570 = vst [vmem:[%s4460 + $0x1b4] sm:$0xf] %v4313
      %4571 = vst [vmem:[%s4460 + $0x1b8] sm:$0xf] %v4314
      %4572 = vst [vmem:[%s4460 + $0x1bc] sm:$0xf] %v4315
      %4573 = vst [vmem:[%s4460 + $0x1c0] sm:$0xf] %v4316
      %4574 = vst [vmem:[%s4460 + $0x1c4] sm:$0xf] %v4317
      %4575 = vst [vmem:[%s4460 + $0x1c8] sm:$0xf] %v4318
      %4576 = vst [vmem:[%s4460 + $0x1cc] sm:$0xf] %v4319
      %4577 = vst [vmem:[%s4460 + $0x1d0] sm:$0xf] %v4320
      %4578 = vst [vmem:[%s4460 + $0x1d4] sm:$0xf] %v4321
      %4579 = vst [vmem:[%s4460 + $0x1d8] sm:$0xf] %v4322
      %4580 = vst [vmem:[%s4460 + $0x1dc] sm:$0xf] %v4323
      %4581 = vst [vmem:[%s4460 + $0x1e0] sm:$0xf] %v4324
      %4582 = vst [vmem:[%s4460 + $0x1e4] sm:$0xf] %v4325
      %4583 = vst [vmem:[%s4460 + $0x1e8] sm:$0xf] %v4326
      %4584 = vst [vmem:[%s4460 + $0x1ec] sm:$0xf] %v4327
      %4585 = vst [vmem:[%s4460 + $0x1f0] sm:$0xf] %v4328
      %4586 = vst [vmem:[%s4460 + $0x1f4] sm:$0xf] %v4329
      %4587 = vst [vmem:[%s4460 + $0x1f8] sm:$0xf] %v4330
      %4588 = vst [vmem:[%s4460 + $0x1fc] sm:$0xf] %v4331
      %4589 = vst [vmem:[%s4460 + $0x200] sm:$0xf] %v4332
      %4590 = vst [vmem:[%s4460 + $0x204] sm:$0xf] %v4333
      %4591 = vst [vmem:[%s4460 + $0x208] sm:$0xf] %v4334
      %4592 = vst [vmem:[%s4460 + $0x20c] sm:$0xf] %v4335
      %4593 = vst [vmem:[%s4460 + $0x210] sm:$0xf] %v4336
      %4594 = vst [vmem:[%s4460 + $0x214] sm:$0xf] %v4337
      %4595 = vst [vmem:[%s4460 + $0x218] sm:$0xf] %v4338
      %4596 = vst [vmem:[%s4460 + $0x21c] sm:$0xf] %v4339
      %4597 = vst [vmem:[%s4460 + $0x220] sm:$0xf] %v4340
      %4598 = vst [vmem:[%s4460 + $0x224] sm:$0xf] %v4341
      %4599 = vst [vmem:[%s4460 + $0x228] sm:$0xf] %v4342
      %4600 = vst [vmem:[%s4460 + $0x22c] sm:$0xf] %v4343
      %4601 = vst [vmem:[%s4460 + $0x230] sm:$0xf] %v4344
      %4602 = vst [vmem:[%s4460 + $0x234] sm:$0xf] %v4345
      %4603 = vst [vmem:[%s4460 + $0x238] sm:$0xf] %v4346
      %4604 = vst [vmem:[%s4460 + $0x23c] sm:$0xf] %v4347
      %4605 = vst [vmem:[%s4460 + $0x240] sm:$0xf] %v4348
      %4606 = vst [vmem:[%s4460 + $0x244] sm:$0xf] %v4349
      %4607 = vst [vmem:[%s4460 + $0x248] sm:$0xf] %v4350
      %4608 = vst [vmem:[%s4460 + $0x24c] sm:$0xf] %v4351
      %4609 = vst [vmem:[%s4460 + $0x250] sm:$0xf] %v4352
      %4610 = vst [vmem:[%s4460 + $0x254] sm:$0xf] %v4353
      %4611 = vst [vmem:[%s4460 + $0x258] sm:$0xf] %v4354
      %4612 = vst [vmem:[%s4460 + $0x25c] sm:$0xf] %v4355
      %4613 = vst [vmem:[%s4460 + $0x260] sm:$0xf] %v4356
      %4614 = vst [vmem:[%s4460 + $0x264] sm:$0xf] %v4357
      %4615 = vst [vmem:[%s4460 + $0x268] sm:$0xf] %v4358
      %4616 = vst [vmem:[%s4460 + $0x26c] sm:$0xf] %v4359
      %4617 = vst [vmem:[%s4460 + $0x270] sm:$0xf] %v4360
      %4618 = vst [vmem:[%s4460 + $0x274] sm:$0xf] %v4361
      %4619 = vst [vmem:[%s4460 + $0x278] sm:$0xf] %v4362
      %4620 = vst [vmem:[%s4460 + $0x27c] sm:$0xf] %v4363
      %4621 = vst [vmem:[%s4460 + $0x280] sm:$0xf] %v4364
      %4622 = vst [vmem:[%s4460 + $0x284] sm:$0xf] %v4365
      %4623 = vst [vmem:[%s4460 + $0x288] sm:$0xf] %v4366
      %4624 = vst [vmem:[%s4460 + $0x28c] sm:$0xf] %v4367
      %4625 = vst [vmem:[%s4460 + $0x290] sm:$0xf] %v4368
      %4626 = vst [vmem:[%s4460 + $0x294] sm:$0xf] %v4369
      %4627 = vst [vmem:[%s4460 + $0x298] sm:$0xf] %v4370
      %4628 = vst [vmem:[%s4460 + $0x29c] sm:$0xf] %v4371
      %4629 = vst [vmem:[%s4460 + $0x2a0] sm:$0xf] %v4372
      %4630 = vst [vmem:[%s4460 + $0x2a4] sm:$0xf] %v4373
      %4631 = vst [vmem:[%s4460 + $0x2a8] sm:$0xf] %v4374
      %4632 = vst [vmem:[%s4460 + $0x2ac] sm:$0xf] %v4375
      %4633 = vst [vmem:[%s4460 + $0x2b0] sm:$0xf] %v4376
      %4634 = vst [vmem:[%s4460 + $0x2b4] sm:$0xf] %v4377
      %4635 = vst [vmem:[%s4460 + $0x2b8] sm:$0xf] %v4378
      %4636 = vst [vmem:[%s4460 + $0x2bc] sm:$0xf] %v4379
      %4637 = vst [vmem:[%s4460 + $0x2c0] sm:$0xf] %v4380
      %4638 = vst [vmem:[%s4460 + $0x2c4] sm:$0xf] %v4381
      %4639 = vst [vmem:[%s4460 + $0x2c8] sm:$0xf] %v4382
      %4640 = vst [vmem:[%s4460 + $0x2cc] sm:$0xf] %v4383
      %4641 = vst [vmem:[%s4460 + $0x2d0] sm:$0xf] %v4384
      %4642 = vst [vmem:[%s4460 + $0x2d4] sm:$0xf] %v4385
      %4643 = vst [vmem:[%s4460 + $0x2d8] sm:$0xf] %v4386
      %4644 = vst [vmem:[%s4460 + $0x2dc] sm:$0xf] %v4387
      %4645 = vst [vmem:[%s4460 + $0x2e0] sm:$0xf] %v4388
      %4646 = vst [vmem:[%s4460 + $0x2e4] sm:$0xf] %v4389
      %4647 = vst [vmem:[%s4460 + $0x2e8] sm:$0xf] %v4390
      %4648 = vst [vmem:[%s4460 + $0x2ec] sm:$0xf] %v4391
      %4649 = vst [vmem:[%s4460 + $0x2f0] sm:$0xf] %v4392
      %4650 = vst [vmem:[%s4460 + $0x2f4] sm:$0xf] %v4393
      %4651 = vst [vmem:[%s4460 + $0x2f8] sm:$0xf] %v4394
      %4652 = vst [vmem:[%s4460 + $0x2fc] sm:$0xf] %v4395
      %4653 = vst [vmem:[%s4460 + $0x300] sm:$0xf] %v4396
      %4654 = vst [vmem:[%s4460 + $0x304] sm:$0xf] %v4397
      %4655 = vst [vmem:[%s4460 + $0x308] sm:$0xf] %v4398
      %4656 = vst [vmem:[%s4460 + $0x30c] sm:$0xf] %v4399
      %4657 = vst [vmem:[%s4460 + $0x310] sm:$0xf] %v4400
      %4658 = vst [vmem:[%s4460 + $0x314] sm:$0xf] %v4401
      %4659 = vst [vmem:[%s4460 + $0x318] sm:$0xf] %v4402
      %4660 = vst [vmem:[%s4460 + $0x31c] sm:$0xf] %v4403
      %4661 = vst [vmem:[%s4460 + $0x320] sm:$0xf] %v4404
      %4662 = vst [vmem:[%s4460 + $0x324] sm:$0xf] %v4405
      %4663 = vst [vmem:[%s4460 + $0x328] sm:$0xf] %v4406
      %4664 = vst [vmem:[%s4460 + $0x32c] sm:$0xf] %v4407
      %4665 = vst [vmem:[%s4460 + $0x330] sm:$0xf] %v4408
      %4666 = vst [vmem:[%s4460 + $0x334] sm:$0xf] %v4409
      %4667 = vst [vmem:[%s4460 + $0x338] sm:$0xf] %v4410
      %4668 = vst [vmem:[%s4460 + $0x33c] sm:$0xf] %v4411
      %4669 = vst [vmem:[%s4460 + $0x340] sm:$0xf] %v4412
      %4670 = vst [vmem:[%s4460 + $0x344] sm:$0xf] %v4413
      %4671 = vst [vmem:[%s4460 + $0x348] sm:$0xf] %v4414
      %4672 = vst [vmem:[%s4460 + $0x34c] sm:$0xf] %v4415
      %4673 = vst [vmem:[%s4460 + $0x350] sm:$0xf] %v4416
      %4674 = vst [vmem:[%s4460 + $0x354] sm:$0xf] %v4417
      %4675 = vst [vmem:[%s4460 + $0x358] sm:$0xf] %v4418
      %4676 = vst [vmem:[%s4460 + $0x35c] sm:$0xf] %v4419
      %4677 = vst [vmem:[%s4460 + $0x360] sm:$0xf] %v4420
      %4678 = vst [vmem:[%s4460 + $0x364] sm:$0xf] %v4421
      %4679 = vst [vmem:[%s4460 + $0x368] sm:$0xf] %v4422
      %4680 = vst [vmem:[%s4460 + $0x36c] sm:$0xf] %v4423
      %4681 = vst [vmem:[%s4460 + $0x370] sm:$0xf] %v4424
      %4682 = vst [vmem:[%s4460 + $0x374] sm:$0xf] %v4425
      %4683 = vst [vmem:[%s4460 + $0x378] sm:$0xf] %v4426
      %4684 = vst [vmem:[%s4460 + $0x37c] sm:$0xf] %v4427
      %4685 = vst [vmem:[%s4460 + $0x380] sm:$0xf] %v4428
      %4686 = vst [vmem:[%s4460 + $0x384] sm:$0xf] %v4429
      %4687 = vst [vmem:[%s4460 + $0x388] sm:$0xf] %v4430
      %4688 = vst [vmem:[%s4460 + $0x38c] sm:$0xf] %v4431
      %4689 = vst [vmem:[%s4460 + $0x390] sm:$0xf] %v4432
      %4690 = vst [vmem:[%s4460 + $0x394] sm:$0xf] %v4433
      %4691 = vst [vmem:[%s4460 + $0x398] sm:$0xf] %v4434
      %4692 = vst [vmem:[%s4460 + $0x39c] sm:$0xf] %v4435
      %4693 = vst [vmem:[%s4460 + $0x3a0] sm:$0xf] %v4436
      %4694 = vst [vmem:[%s4460 + $0x3a4] sm:$0xf] %v4437
      %4695 = vst [vmem:[%s4460 + $0x3a8] sm:$0xf] %v4438
      %4696 = vst [vmem:[%s4460 + $0x3ac] sm:$0xf] %v4439
      %4697 = vst [vmem:[%s4460 + $0x3b0] sm:$0xf] %v4440
      %4698 = vst [vmem:[%s4460 + $0x3b4] sm:$0xf] %v4441
      %4699 = vst [vmem:[%s4460 + $0x3b8] sm:$0xf] %v4442
      %4700 = vst [vmem:[%s4460 + $0x3bc] sm:$0xf] %v4443
      %4701 = vst [vmem:[%s4460 + $0x3c0] sm:$0xf] %v4444
      %4702 = vst [vmem:[%s4460 + $0x3c4] sm:$0xf] %v4445
      %4703 = vst [vmem:[%s4460 + $0x3c8] sm:$0xf] %v4446
      %4704 = vst [vmem:[%s4460 + $0x3cc] sm:$0xf] %v4447
      %4705 = vst [vmem:[%s4460 + $0x3d0] sm:$0xf] %v4448
      %4706 = vst [vmem:[%s4460 + $0x3d4] sm:$0xf] %v4449
      %4707 = vst [vmem:[%s4460 + $0x3d8] sm:$0xf] %v4450
      %4708 = vst [vmem:[%s4460 + $0x3dc] sm:$0xf] %v4451
      %4709 = vst [vmem:[%s4460 + $0x3e0] sm:$0xf] %v4452
      %4710 = vst [vmem:[%s4460 + $0x3e4] sm:$0xf] %v4453
      %4711 = vst [vmem:[%s4460 + $0x3e8] sm:$0xf] %v4454
      %4712 = vst [vmem:[%s4460 + $0x3ec] sm:$0xf] %v4455
      %4713 = vst [vmem:[%s4460 + $0x3f0] sm:$0xf] %v4456
      %4714 = vst [vmem:[%s4460 + $0x3f4] sm:$0xf] %v4457
      %4715 = vst [vmem:[%s4460 + $0x3f8] sm:$0xf] %v4458
      %4716 = vst [vmem:[%s4460 + $0x3fc] sm:$0xf] %v4459
      %s4717 = smul.u32 2, %s17
      %s4718 = smul.u32 256, %s18
      %p4719 = scmp.lt.s32.totalorder %s4717, 3
      %s4720 = scalar_select %p4719, %s4717, 3
      %p4721 = scmp.lt.s32.totalorder %s4718, 255
      %s4722 = scalar_select %p4721, %s4718, 255
      %s4723 = smul.addr %s4720, 256
      %s4724 = sadd.s32 %s4722, %s4723
      %s4725 = smul.addr %s4724, 4
      %s4726 = scalar_lea.vmem %s2, %s4725
      // Predicated region
      $region29: #{generator_forward.9} parent=27 // pred_check
        %p4727 = pneg %p99
      $region30: #{generator_forward.9} parent=27 // pred_check_branch
        %4729 = sbr.rel (%p4727) target = $region32
      $region31: #{generator_forward.9} parent=27 // pred_region
        %s4730 = smul.u32 2, %s17
        %s4731 = smul.u32 256, %s18
      $region32: #{generator_forward.9} parent=27 // pred_fallthru
        _
    $region28: #{generator_forward.9} parent=5 // pred_fallthru
      _
    %p4732 = scmp.le.s32.totalorder 2, %s8
    // Predicated region
    $region33: #{generator_forward.9} parent=5 // pred_check
      %p4733 = pneg %p4732
    $region34: #{generator_forward.9} parent=5 // pred_check_branch
      %4735 = sbr.rel (%p4733) target = $region36
    $region35: #{generator_forward.9} parent=5 // pred_region
      %s4736 = ssub.s32 %s8, 2
      // Predicated region
      $region37: #{generator_forward.9} parent=35 // pred_check
        %p4737 = pneg %p105
      $region38: #{generator_forward.9} parent=35 // pred_check_branch
        %4739 = sbr.rel (%p4737) target = $region40
      $region39: #{generator_forward.9} parent=35 // pred_region
        %s4740 = smul.u32 2, %s19
        %s4741 = smul.u32 256, %s20
        %p4742 = scmp.lt.s32.totalorder %s4740, 3
        %s4743 = scalar_select %p4742, %s4740, 3
        %p4744 = scmp.lt.s32.totalorder %s4741, 255
        %s4745 = scalar_select %p4744, %s4741, 255
        %s4746 = smul.addr %s4743, 256
        %s4747 = sadd.s32 %s4745, %s4746
        %s4748 = smul.addr %s4747, 4
        %s4749 = scalar_lea.vmem %s2, %s4748
      $region40: #{generator_forward.9} parent=35 // pred_fallthru
        _
    $region36: #{generator_forward.9} parent=5 // pred_fallthru
      _
  $region6: #{generator_forward.9} parent=0 // loop_footer
    %s12 = sadd.s32 1, %s8
  $region7: #{generator_forward.9} parent=0 // loop_footer_branch
    %7 = sbr.rel target = $region3
  $region8: #{generator_forward.9} parent=0 // loop_exit
    _

</llo_original>
